<compile_context>
chip_gen: v7x
topology: tpu7x:2x2x1
jax: 0.10.0
libtpu: 0.0.40
codegen_flags: <defaults>
</compile_context>

<pallas_src>
import jax
import jax.numpy as jnp
from jax.experimental import pallas as pl
from jax.experimental.pallas import tpu as pltpu

# ----------------------------- LeNet5 geometry --------------------------------
C_IN, OC1, OC2 = 3, 6, 16          # conv1: 3->6, conv2: 6->16
KH = KW = 7                        # 7x7 kernels, stride 1, padding 1
H_IN = W_IN = 32                   # canonical LeNet5 input (gives 16x5x5 = 400)
K1 = C_IN * KH * KW                # 147  im2col features for conv1
CH1 = H_IN + 2 - KH + 1            # 28   conv1 output h/w
PH1 = CH1 // 2                     # 14   pool1 output h/w
PW_PAD = 16                        # pool1 row width padded 14 -> 16 (multiple of 8)
NROW1 = PH1 * PW_PAD               # 224  rows per 2x2 pool-window-offset group
PAD2 = PH1 + 2                     # 16   conv2 input h (padding=1)
SCR_COLS = 32                      # scratch width: left pad 7 + 16 data cols + taps, mult of 8
CH2 = PH1 + 2 - KH + 1             # 10   conv2 output h/w
PH2 = CH2 // 2                     # 5    pool2 output h/w
CW2_PAD = 16                       # conv2 output columns computed per row (>=10, mult of 8)
LANES = 128
assert CH1 % 2 == 0 and CH2 % 2 == 0   # even conv outputs -> exact 2x2/2 max-pool


# ----------------------------------------------------------------------------
# Fused Pallas kernel: (conv1 -> pool -> relu) -> (conv2 -> pool(row part) -> relu)
# one grid step per image.
# ----------------------------------------------------------------------------
def _lenet5_fused_kernel(p_ref, w1_ref, b1_ref, w2_ref, b2_ref, o_ref, act_ref):
    # ---- Block 1: conv1 as ONE MXU matmul over im2col patches -------------------
    # p_ref[0]: (4, 224, 147); axis0 = the 4 offsets of the 2x2 pool window,
    # rows are (ph, pw_padded) pooled-output positions, 147 = C*KH*KW patch features.
    p = p_ref[0].reshape(4 * NROW1, K1)                                    # (896, 147) bf16
    y = jnp.dot(p, w1_ref[...], preferred_element_type=jnp.float32)       # (896, 128) f32
    y = jnp.max(y.reshape(4, NROW1, LANES), axis=0)                        # 2x2 max-pool
    a1 = jnp.maximum(y + b1_ref[...], 0.0)                                 # bias + ReLU
    a1 = a1.reshape(PH1, PW_PAD, LANES)[:, :PH1, :OC1]                     # (14, 14, 6)

    # ---- stage the zero-padded (padding=1) block-1 activation in VMEM -----------
    # layout: rows 1..14 valid (0/15 = zero border), cols 8..21 valid (7/22 = border).
    act_ref[...] = jnp.zeros((PAD2, SCR_COLS, OC1), jnp.float32)
    act_ref[1:1 + PH1, 8:8 + PH1, :] = a1

    # ---- Block 2: conv2 accumulated tap-by-tap on the MXU (K = 6 per tap) --------
    acc = jnp.zeros((CH2 * CW2_PAD, LANES), jnp.float32)                   # (160, 128)
    for t in range(KH * KW):
        i, j = t // KW, t % KW
        tap = act_ref[i:i + CH2, 7 + j:7 + j + CW2_PAD, :]                 # (10, 16, 6)
        lhs = tap.reshape(CH2 * CW2_PAD, OC1).astype(jnp.bfloat16)
        acc = acc + jnp.dot(lhs, w2_ref[t], preferred_element_type=jnp.float32)

    # ---- 2x2 max-pool over row pairs, bias + ReLU (column pairs finished on host)
    y2 = jnp.max(acc.reshape(PH2, 2, CW2_PAD, LANES), axis=1)              # (5, 16, 128)
    o_ref[0] = jnp.maximum(y2 + b2_ref[...], 0.0)


# ----------------------------------------------------------------------------
# Host-side glue (a handful of XLA ops; everything heavy lives in the kernel)
# ----------------------------------------------------------------------------
def _prep_block1_patches(x):
    """im2col for conv1 (single fused XLA op), regrouped by 2x2 pool-window offset."""
    B = x.shape[0]
    pat = jax.lax.conv_general_dilated_patches(
        x, filter_shape=(KH, KW), window_strides=(1, 1),
        padding=((1, 1), (1, 1)), dimension_numbers=("NCHW", "OIHW", "NCHW"))
    pat = pat.transpose(0, 2, 3, 1)                                        # (B, 28, 28, 147)
    groups = []
    for r in range(2):
        for s in range(2):
            g = pat[:, r::2, s::2, :]                                      # (B, 14, 14, 147)
            g = jnp.pad(g, ((0, 0), (0, 0), (0, PW_PAD - PH1), (0, 0)))    # pad pw 14 -> 16
            groups.append(g.reshape(B, NROW1, K1))
    return jnp.stack(groups, axis=1).astype(jnp.bfloat16)                  # (B, 4, 224, 147)


def _prep_params(params):
    # Flatten conv1's weight with conv_general_dilated_patches itself so the K
    # ordering is guaranteed to match the patch features (no layout assumption).
    w1p = jax.lax.conv_general_dilated_patches(
        params["w1"], filter_shape=(KH, KW), window_strides=(1, 1),
        padding=((0, 0), (0, 0)), dimension_numbers=("NCHW", "OIHW", "NCHW"))
    w1_flat = w1p.reshape(OC1, K1).T                                       # (147, 6)
    w1_flat = jnp.pad(w1_flat, ((0, 0), (0, LANES - OC1))).astype(jnp.bfloat16)
    b1 = jnp.pad(params["b1"], (0, LANES - OC1)).reshape(1, LANES).astype(jnp.float32)

    # conv2 weight per kernel tap: (49, C=6, OC padded to 128 lanes)
    w2_taps = params["w2"].transpose(2, 3, 1, 0).reshape(KH * KW, OC1, OC2)
    w2_taps = jnp.pad(w2_taps, ((0, 0), (0, 0), (0, LANES - OC2))).astype(jnp.bfloat16)
    b2 = jnp.pad(params["b2"], (0, LANES - OC2)).reshape(1, LANES).astype(jnp.float32)
    return w1_flat, b1, w2_taps, b2


@jax.jit
def lenet5_forward(x, params):
    # TODO(synk): fc1/fc2/fc3 exist in __init__ but are never used in forward(); not applied.
    B, C, H, W = x.shape
    assert (C, H, W) == (C_IN, H_IN, W_IN)
    patches = _prep_block1_patches(x)
    w1_flat, b1, w2_taps, b2 = _prep_params(params)

    out = pl.pallas_call(
        _lenet5_fused_kernel,
        grid=(B,),
        in_specs=[
            pl.BlockSpec((1, 4, NROW1, K1), lambda b: (b, 0, 0, 0)),
            pl.BlockSpec((K1, LANES), lambda b: (0, 0)),
            pl.BlockSpec((1, LANES), lambda b: (0, 0)),
            pl.BlockSpec((KH * KW, OC1, LANES), lambda b: (0, 0, 0)),
            pl.BlockSpec((1, LANES), lambda b: (0, 0)),
        ],
        out_specs=pl.BlockSpec((1, PH2, CW2_PAD, LANES), lambda b: (b, 0, 0, 0)),
        out_shape=jax.ShapeDtypeStruct((B, PH2, CW2_PAD, LANES), jnp.float32),
        scratch_shapes=[pltpu.VMEM((PAD2, SCR_COLS, OC1), jnp.float32)],
        compiler_params=pltpu.CompilerParams(
            dimension_semantics=("parallel",)),
    )(patches, w1_flat, b1, w2_taps, b2)

    # finish block-2's 2x2 pooling along columns + slice off lane padding -> NCHW
    out = out[:, :, :CH2, :OC2]                                           # (B, 5, 10, 16)
    out = jnp.maximum(out[:, :, 0::2, :], out[:, :, 1::2, :])             # (B, 5, 5, 16)
    return out.transpose(0, 3, 1, 2)                                      # (B, 16, 5, 5)


# ----------------------------------------------------------------------------
# Pure-JAX reference (f32) for correctness check
# ----------------------------------------------------------------------------
def _reference(x, params):
    def conv(x, w, b):
        y = jax.lax.conv_general_dilated(
            x, w, window_strides=(1, 1), padding=((1, 1), (1, 1)),
            dimension_numbers=("NCHW", "OIHW", "NCHW"))
        return y + b[None, :, None, None]

    def pool(y):
        return jax.lax.reduce_window(y, -jnp.inf, jax.lax.max,
                                     (1, 1, 2, 2), (1, 1, 2, 2), "VALID")

    x = jnp.maximum(pool(conv(x, params["w1"], params["b1"])), 0.0)
    x = jnp.maximum(pool(conv(x, params["w2"], params["b2"])), 0.0)
    return x


if __name__ == "__main__":
    key = jax.random.PRNGKey(0)
    kx, k1, k2, k3, k4 = jax.random.split(key, 5)

    # Classic LeNet5 input: B x 3 x 32 x 32 (gives 16x5x5 after the two blocks)
    x = jax.random.normal(kx, (2, 3, 32, 32), dtype=jnp.float32)
    params = {
        "w1": 0.05 * jax.random.normal(k1, (6, 3, 7, 7), dtype=jnp.float32),
        "b1": 0.05 * jax.random.normal(k2, (6,), dtype=jnp.float32),
        "w2": 0.05 * jax.random.normal(k3, (16, 6, 7, 7), dtype=jnp.float32),
        "b2": 0.05 * jax.random.normal(k4, (16,), dtype=jnp.float32),
    }

    out = jax.block_until_ready(lenet5_forward(x, params))
    assert out.shape == (2, 16, 5, 5), out.shape

    ref = jax.block_until_ready(_reference(x, params))
    max_err = float(jnp.max(jnp.abs(out - ref)))
    # bf16 matmul operands with f32 accumulation -> compare with a bf16-level tolerance
    assert jnp.allclose(out, ref, atol=5e-2, rtol=5e-2), max_err

    print("KERNEL_OK")
</pallas_src>

<mosaic_0001>
module attributes {stable_mosaic.version = 11 : i64} {
  func.func @_lenet5_fused_kernel(%arg0: i32, %arg1: memref<1x4x224x147xbf16, #tpu.memory_space<vmem>>, %arg2: memref<147x128xbf16, #tpu.memory_space<vmem>>, %arg3: memref<1x128xf32, #tpu.memory_space<vmem>>, %arg4: memref<49x6x128xbf16, #tpu.memory_space<vmem>>, %arg5: memref<1x128xf32, #tpu.memory_space<vmem>>, %arg6: memref<1x5x16x128xf32, #tpu.memory_space<vmem>>, %arg7: memref<16x32x6xf32, #tpu.memory_space<vmem>>) attributes {dimension_semantics = [#tpu.dimension_semantics<parallel>], iteration_bounds = array<i64: 2>, scalar_prefetch = 0 : i64, scratch_operands = 1 : i64, tpu.core_type = #tpu.core_type<tc>, window_params = [{transform_indices = @transform_0, window_bounds = array<i64: 1, 4, 224, 147>}, {pipeline_mode = #tpu.pipeline_mode<synchronous>, transform_indices = @transform_1, window_bounds = array<i64: 147, 128>}, {pipeline_mode = #tpu.pipeline_mode<synchronous>, transform_indices = @transform_2, window_bounds = array<i64: 1, 128>}, {pipeline_mode = #tpu.pipeline_mode<synchronous>, transform_indices = @transform_3, window_bounds = array<i64: 49, 6, 128>}, {pipeline_mode = #tpu.pipeline_mode<synchronous>, transform_indices = @transform_4, window_bounds = array<i64: 1, 128>}, {transform_indices = @transform_5, window_bounds = array<i64: 1, 5, 16, 128>}]} {
    %c0 = arith.constant 0 : index
    %c0_0 = arith.constant 0 : index
    %c0_1 = arith.constant 0 : index
    %c0_2 = arith.constant 0 : index
    %0 = vector.load %arg1[%c0, %c0_0, %c0_1, %c0_2] : memref<1x4x224x147xbf16, #tpu.memory_space<vmem>>, vector<1x4x224x147xbf16>
    %1 = vector.shape_cast %0 : vector<1x4x224x147xbf16> to vector<4x224x147xbf16>
    %2 = vector.shape_cast %1 : vector<4x224x147xbf16> to vector<896x147xbf16>
    %c0_3 = arith.constant 0 : index
    %c0_4 = arith.constant 0 : index
    %3 = vector.load %arg2[%c0_3, %c0_4] : memref<147x128xbf16, #tpu.memory_space<vmem>>, vector<147x128xbf16>
    %cst = arith.constant dense<0.000000e+00> : vector<896x128xf32>
    %4 = tpu.matmul %2, %3, %cst {dimension_numbers = #tpu.dot_dimension_numbers<[1], [0], [0], [1], [0, 0, 1, 1], [], []>} : vector<896x147xbf16>, vector<147x128xbf16>, vector<896x128xf32> -> vector<896x128xf32>
    %5 = vector.shape_cast %4 : vector<896x128xf32> to vector<4x224x128xf32>
    %cst_5 = arith.constant dense<0xFF800000> : vector<224x128xf32>
    %6 = vector.multi_reduction <maximumf>, %5, %cst_5 [0] : vector<4x224x128xf32> to vector<224x128xf32>
    %c0_6 = arith.constant 0 : index
    %c0_7 = arith.constant 0 : index
    %7 = vector.load %arg3[%c0_6, %c0_7] : memref<1x128xf32, #tpu.memory_space<vmem>>, vector<1x128xf32>
    %8 = vector.broadcast %7 : vector<1x128xf32> to vector<224x128xf32>
    %9 = arith.addf %6, %8 : vector<224x128xf32>
    %cst_8 = arith.constant 0.000000e+00 : f32
    %10 = vector.broadcast %cst_8 : f32 to vector<224x128xf32>
    %11 = arith.maximumf %9, %10 : vector<224x128xf32>
    %12 = vector.shape_cast %11 : vector<224x128xf32> to vector<14x16x128xf32>
    %13 = vector.extract_strided_slice %12 {offsets = [0, 0, 0], sizes = [14, 14, 6], strides = [1, 1, 1]} : vector<14x16x128xf32> to vector<14x14x6xf32>
    %cst_9 = arith.constant 0.000000e+00 : f32
    %14 = vector.broadcast %cst_9 : f32 to vector<16x32x6xf32>
    %c0_10 = arith.constant 0 : index
    %c0_11 = arith.constant 0 : index
    %c0_12 = arith.constant 0 : index
    %15 = vector.load %arg7[%c0_10, %c0_11, %c0_12] : memref<16x32x6xf32, #tpu.memory_space<vmem>>, vector<16x32x6xf32>
    tpu.vector_store %arg7[%c0_10, %c0_11, %c0_12], %14 {strides = array<i32>} : memref<16x32x6xf32, #tpu.memory_space<vmem>>, vector<16x32x6xf32>,
    %c1 = arith.constant 1 : index
    %c8 = arith.constant 8 : index
    %c0_13 = arith.constant 0 : index
    %16 = vector.load %arg7[%c1, %c8, %c0_13] : memref<16x32x6xf32, #tpu.memory_space<vmem>>, vector<14x14x6xf32>
    tpu.vector_store %arg7[%c1, %c8, %c0_13], %13 {strides = array<i32>} : memref<16x32x6xf32, #tpu.memory_space<vmem>>, vector<14x14x6xf32>,
    %cst_14 = arith.constant 0.000000e+00 : f32
    %17 = vector.broadcast %cst_14 : f32 to vector<160x128xf32>
    %c0_15 = arith.constant 0 : index
    %c7 = arith.constant 7 : index
    %c0_16 = arith.constant 0 : index
    %18 = vector.load %arg7[%c0_15, %c7, %c0_16] : memref<16x32x6xf32, #tpu.memory_space<vmem>>, vector<10x16x6xf32>
    %19 = vector.shape_cast %18 : vector<10x16x6xf32> to vector<160x6xf32>
    %20 = arith.truncf %19 : vector<160x6xf32> to vector<160x6xbf16>
    %c0_17 = arith.constant 0 : index
    %c0_18 = arith.constant 0 : index
    %c0_19 = arith.constant 0 : index
    %21 = vector.load %arg4[%c0_17, %c0_18, %c0_19] : memref<49x6x128xbf16, #tpu.memory_space<vmem>>, vector<1x6x128xbf16>
    %22 = vector.shape_cast %21 : vector<1x6x128xbf16> to vector<6x128xbf16>
    %cst_20 = arith.constant dense<0.000000e+00> : vector<160x128xf32>
    %23 = tpu.matmul %20, %22, %cst_20 {dimension_numbers = #tpu.dot_dimension_numbers<[1], [0], [0], [1], [0, 0, 1, 1], [], []>} : vector<160x6xbf16>, vector<6x128xbf16>, vector<160x128xf32> -> vector<160x128xf32>
    %24 = arith.addf %17, %23 : vector<160x128xf32>
    %c0_21 = arith.constant 0 : index
    %c8_22 = arith.constant 8 : index
    %c0_23 = arith.constant 0 : index
    %25 = vector.load %arg7[%c0_21, %c8_22, %c0_23] : memref<16x32x6xf32, #tpu.memory_space<vmem>>, vector<10x16x6xf32>
    %26 = vector.shape_cast %25 : vector<10x16x6xf32> to vector<160x6xf32>
    %27 = arith.truncf %26 : vector<160x6xf32> to vector<160x6xbf16>
    %c1_24 = arith.constant 1 : index
    %c0_25 = arith.constant 0 : index
    %c0_26 = arith.constant 0 : index
    %28 = vector.load %arg4[%c1_24, %c0_25, %c0_26] : memref<49x6x128xbf16, #tpu.memory_space<vmem>>, vector<1x6x128xbf16>
    %29 = vector.shape_cast %28 : vector<1x6x128xbf16> to vector<6x128xbf16>
    %cst_27 = arith.constant dense<0.000000e+00> : vector<160x128xf32>
    %30 = tpu.matmul %27, %29, %cst_27 {dimension_numbers = #tpu.dot_dimension_numbers<[1], [0], [0], [1], [0, 0, 1, 1], [], []>} : vector<160x6xbf16>, vector<6x128xbf16>, vector<160x128xf32> -> vector<160x128xf32>
    %31 = arith.addf %24, %30 : vector<160x128xf32>
    %c0_28 = arith.constant 0 : index
    %c9 = arith.constant 9 : index
    %c0_29 = arith.constant 0 : index
    %32 = vector.load %arg7[%c0_28, %c9, %c0_29] : memref<16x32x6xf32, #tpu.memory_space<vmem>>, vector<10x16x6xf32>
    %33 = vector.shape_cast %32 : vector<10x16x6xf32> to vector<160x6xf32>
    %34 = arith.truncf %33 : vector<160x6xf32> to vector<160x6xbf16>
    %c2 = arith.constant 2 : index
    %c0_30 = arith.constant 0 : index
    %c0_31 = arith.constant 0 : index
    %35 = vector.load %arg4[%c2, %c0_30, %c0_31] : memref<49x6x128xbf16, #tpu.memory_space<vmem>>, vector<1x6x128xbf16>
    %36 = vector.shape_cast %35 : vector<1x6x128xbf16> to vector<6x128xbf16>
    %cst_32 = arith.constant dense<0.000000e+00> : vector<160x128xf32>
    %37 = tpu.matmul %34, %36, %cst_32 {dimension_numbers = #tpu.dot_dimension_numbers<[1], [0], [0], [1], [0, 0, 1, 1], [], []>} : vector<160x6xbf16>, vector<6x128xbf16>, vector<160x128xf32> -> vector<160x128xf32>
    %38 = arith.addf %31, %37 : vector<160x128xf32>
    %c0_33 = arith.constant 0 : index
    %c10 = arith.constant 10 : index
    %c0_34 = arith.constant 0 : index
    %39 = vector.load %arg7[%c0_33, %c10, %c0_34] : memref<16x32x6xf32, #tpu.memory_space<vmem>>, vector<10x16x6xf32>
    %40 = vector.shape_cast %39 : vector<10x16x6xf32> to vector<160x6xf32>
    %41 = arith.truncf %40 : vector<160x6xf32> to vector<160x6xbf16>
    %c3 = arith.constant 3 : index
    %c0_35 = arith.constant 0 : index
    %c0_36 = arith.constant 0 : index
    %42 = vector.load %arg4[%c3, %c0_35, %c0_36] : memref<49x6x128xbf16, #tpu.memory_space<vmem>>, vector<1x6x128xbf16>
    %43 = vector.shape_cast %42 : vector<1x6x128xbf16> to vector<6x128xbf16>
    %cst_37 = arith.constant dense<0.000000e+00> : vector<160x128xf32>
    %44 = tpu.matmul %41, %43, %cst_37 {dimension_numbers = #tpu.dot_dimension_numbers<[1], [0], [0], [1], [0, 0, 1, 1], [], []>} : vector<160x6xbf16>, vector<6x128xbf16>, vector<160x128xf32> -> vector<160x128xf32>
    %45 = arith.addf %38, %44 : vector<160x128xf32>
    %c0_38 = arith.constant 0 : index
    %c11 = arith.constant 11 : index
    %c0_39 = arith.constant 0 : index
    %46 = vector.load %arg7[%c0_38, %c11, %c0_39] : memref<16x32x6xf32, #tpu.memory_space<vmem>>, vector<10x16x6xf32>
    %47 = vector.shape_cast %46 : vector<10x16x6xf32> to vector<160x6xf32>
    %48 = arith.truncf %47 : vector<160x6xf32> to vector<160x6xbf16>
    %c4 = arith.constant 4 : index
    %c0_40 = arith.constant 0 : index
    %c0_41 = arith.constant 0 : index
    %49 = vector.load %arg4[%c4, %c0_40, %c0_41] : memref<49x6x128xbf16, #tpu.memory_space<vmem>>, vector<1x6x128xbf16>
    %50 = vector.shape_cast %49 : vector<1x6x128xbf16> to vector<6x128xbf16>
    %cst_42 = arith.constant dense<0.000000e+00> : vector<160x128xf32>
    %51 = tpu.matmul %48, %50, %cst_42 {dimension_numbers = #tpu.dot_dimension_numbers<[1], [0], [0], [1], [0, 0, 1, 1], [], []>} : vector<160x6xbf16>, vector<6x128xbf16>, vector<160x128xf32> -> vector<160x128xf32>
    %52 = arith.addf %45, %51 : vector<160x128xf32>
    %c0_43 = arith.constant 0 : index
    %c12 = arith.constant 12 : index
    %c0_44 = arith.constant 0 : index
    %53 = vector.load %arg7[%c0_43, %c12, %c0_44] : memref<16x32x6xf32, #tpu.memory_space<vmem>>, vector<10x16x6xf32>
    %54 = vector.shape_cast %53 : vector<10x16x6xf32> to vector<160x6xf32>
    %55 = arith.truncf %54 : vector<160x6xf32> to vector<160x6xbf16>
    %c5 = arith.constant 5 : index
    %c0_45 = arith.constant 0 : index
    %c0_46 = arith.constant 0 : index
    %56 = vector.load %arg4[%c5, %c0_45, %c0_46] : memref<49x6x128xbf16, #tpu.memory_space<vmem>>, vector<1x6x128xbf16>
    %57 = vector.shape_cast %56 : vector<1x6x128xbf16> to vector<6x128xbf16>
    %cst_47 = arith.constant dense<0.000000e+00> : vector<160x128xf32>
    %58 = tpu.matmul %55, %57, %cst_47 {dimension_numbers = #tpu.dot_dimension_numbers<[1], [0], [0], [1], [0, 0, 1, 1], [], []>} : vector<160x6xbf16>, vector<6x128xbf16>, vector<160x128xf32> -> vector<160x128xf32>
    %59 = arith.addf %52, %58 : vector<160x128xf32>
    %c0_48 = arith.constant 0 : index
    %c13 = arith.constant 13 : index
    %c0_49 = arith.constant 0 : index
    %60 = vector.load %arg7[%c0_48, %c13, %c0_49] : memref<16x32x6xf32, #tpu.memory_space<vmem>>, vector<10x16x6xf32>
    %61 = vector.shape_cast %60 : vector<10x16x6xf32> to vector<160x6xf32>
    %62 = arith.truncf %61 : vector<160x6xf32> to vector<160x6xbf16>
    %c6 = arith.constant 6 : index
    %c0_50 = arith.constant 0 : index
    %c0_51 = arith.constant 0 : index
    %63 = vector.load %arg4[%c6, %c0_50, %c0_51] : memref<49x6x128xbf16, #tpu.memory_space<vmem>>, vector<1x6x128xbf16>
    %64 = vector.shape_cast %63 : vector<1x6x128xbf16> to vector<6x128xbf16>
    %cst_52 = arith.constant dense<0.000000e+00> : vector<160x128xf32>
    %65 = tpu.matmul %62, %64, %cst_52 {dimension_numbers = #tpu.dot_dimension_numbers<[1], [0], [0], [1], [0, 0, 1, 1], [], []>} : vector<160x6xbf16>, vector<6x128xbf16>, vector<160x128xf32> -> vector<160x128xf32>
    %66 = arith.addf %59, %65 : vector<160x128xf32>
    %c1_53 = arith.constant 1 : index
    %c7_54 = arith.constant 7 : index
    %c0_55 = arith.constant 0 : index
    %67 = vector.load %arg7[%c1_53, %c7_54, %c0_55] : memref<16x32x6xf32, #tpu.memory_space<vmem>>, vector<10x16x6xf32>
    %68 = vector.shape_cast %67 : vector<10x16x6xf32> to vector<160x6xf32>
    %69 = arith.truncf %68 : vector<160x6xf32> to vector<160x6xbf16>
    %c7_56 = arith.constant 7 : index
    %c0_57 = arith.constant 0 : index
    %c0_58 = arith.constant 0 : index
    %70 = vector.load %arg4[%c7_56, %c0_57, %c0_58] : memref<49x6x128xbf16, #tpu.memory_space<vmem>>, vector<1x6x128xbf16>
    %71 = vector.shape_cast %70 : vector<1x6x128xbf16> to vector<6x128xbf16>
    %cst_59 = arith.constant dense<0.000000e+00> : vector<160x128xf32>
    %72 = tpu.matmul %69, %71, %cst_59 {dimension_numbers = #tpu.dot_dimension_numbers<[1], [0], [0], [1], [0, 0, 1, 1], [], []>} : vector<160x6xbf16>, vector<6x128xbf16>, vector<160x128xf32> -> vector<160x128xf32>
    %73 = arith.addf %66, %72 : vector<160x128xf32>
    %c1_60 = arith.constant 1 : index
    %c8_61 = arith.constant 8 : index
    %c0_62 = arith.constant 0 : index
    %74 = vector.load %arg7[%c1_60, %c8_61, %c0_62] : memref<16x32x6xf32, #tpu.memory_space<vmem>>, vector<10x16x6xf32>
    %75 = vector.shape_cast %74 : vector<10x16x6xf32> to vector<160x6xf32>
    %76 = arith.truncf %75 : vector<160x6xf32> to vector<160x6xbf16>
    %c8_63 = arith.constant 8 : index
    %c0_64 = arith.constant 0 : index
    %c0_65 = arith.constant 0 : index
    %77 = vector.load %arg4[%c8_63, %c0_64, %c0_65] : memref<49x6x128xbf16, #tpu.memory_space<vmem>>, vector<1x6x128xbf16>
    %78 = vector.shape_cast %77 : vector<1x6x128xbf16> to vector<6x128xbf16>
    %cst_66 = arith.constant dense<0.000000e+00> : vector<160x128xf32>
    %79 = tpu.matmul %76, %78, %cst_66 {dimension_numbers = #tpu.dot_dimension_numbers<[1], [0], [0], [1], [0, 0, 1, 1], [], []>} : vector<160x6xbf16>, vector<6x128xbf16>, vector<160x128xf32> -> vector<160x128xf32>
    %80 = arith.addf %73, %79 : vector<160x128xf32>
    %c1_67 = arith.constant 1 : index
    %c9_68 = arith.constant 9 : index
    %c0_69 = arith.constant 0 : index
    %81 = vector.load %arg7[%c1_67, %c9_68, %c0_69] : memref<16x32x6xf32, #tpu.memory_space<vmem>>, vector<10x16x6xf32>
    %82 = vector.shape_cast %81 : vector<10x16x6xf32> to vector<160x6xf32>
    %83 = arith.truncf %82 : vector<160x6xf32> to vector<160x6xbf16>
    %c9_70 = arith.constant 9 : index
    %c0_71 = arith.constant 0 : index
    %c0_72 = arith.constant 0 : index
    %84 = vector.load %arg4[%c9_70, %c0_71, %c0_72] : memref<49x6x128xbf16, #tpu.memory_space<vmem>>, vector<1x6x128xbf16>
    %85 = vector.shape_cast %84 : vector<1x6x128xbf16> to vector<6x128xbf16>
    %cst_73 = arith.constant dense<0.000000e+00> : vector<160x128xf32>
    %86 = tpu.matmul %83, %85, %cst_73 {dimension_numbers = #tpu.dot_dimension_numbers<[1], [0], [0], [1], [0, 0, 1, 1], [], []>} : vector<160x6xbf16>, vector<6x128xbf16>, vector<160x128xf32> -> vector<160x128xf32>
    %87 = arith.addf %80, %86 : vector<160x128xf32>
    %c1_74 = arith.constant 1 : index
    %c10_75 = arith.constant 10 : index
    %c0_76 = arith.constant 0 : index
    %88 = vector.load %arg7[%c1_74, %c10_75, %c0_76] : memref<16x32x6xf32, #tpu.memory_space<vmem>>, vector<10x16x6xf32>
    %89 = vector.shape_cast %88 : vector<10x16x6xf32> to vector<160x6xf32>
    %90 = arith.truncf %89 : vector<160x6xf32> to vector<160x6xbf16>
    %c10_77 = arith.constant 10 : index
    %c0_78 = arith.constant 0 : index
    %c0_79 = arith.constant 0 : index
    %91 = vector.load %arg4[%c10_77, %c0_78, %c0_79] : memref<49x6x128xbf16, #tpu.memory_space<vmem>>, vector<1x6x128xbf16>
    %92 = vector.shape_cast %91 : vector<1x6x128xbf16> to vector<6x128xbf16>
    %cst_80 = arith.constant dense<0.000000e+00> : vector<160x128xf32>
    %93 = tpu.matmul %90, %92, %cst_80 {dimension_numbers = #tpu.dot_dimension_numbers<[1], [0], [0], [1], [0, 0, 1, 1], [], []>} : vector<160x6xbf16>, vector<6x128xbf16>, vector<160x128xf32> -> vector<160x128xf32>
    %94 = arith.addf %87, %93 : vector<160x128xf32>
    %c1_81 = arith.constant 1 : index
    %c11_82 = arith.constant 11 : index
    %c0_83 = arith.constant 0 : index
    %95 = vector.load %arg7[%c1_81, %c11_82, %c0_83] : memref<16x32x6xf32, #tpu.memory_space<vmem>>, vector<10x16x6xf32>
    %96 = vector.shape_cast %95 : vector<10x16x6xf32> to vector<160x6xf32>
    %97 = arith.truncf %96 : vector<160x6xf32> to vector<160x6xbf16>
    %c11_84 = arith.constant 11 : index
    %c0_85 = arith.constant 0 : index
    %c0_86 = arith.constant 0 : index
    %98 = vector.load %arg4[%c11_84, %c0_85, %c0_86] : memref<49x6x128xbf16, #tpu.memory_space<vmem>>, vector<1x6x128xbf16>
    %99 = vector.shape_cast %98 : vector<1x6x128xbf16> to vector<6x128xbf16>
    %cst_87 = arith.constant dense<0.000000e+00> : vector<160x128xf32>
    %100 = tpu.matmul %97, %99, %cst_87 {dimension_numbers = #tpu.dot_dimension_numbers<[1], [0], [0], [1], [0, 0, 1, 1], [], []>} : vector<160x6xbf16>, vector<6x128xbf16>, vector<160x128xf32> -> vector<160x128xf32>
    %101 = arith.addf %94, %100 : vector<160x128xf32>
    %c1_88 = arith.constant 1 : index
    %c12_89 = arith.constant 12 : index
    %c0_90 = arith.constant 0 : index
    %102 = vector.load %arg7[%c1_88, %c12_89, %c0_90] : memref<16x32x6xf32, #tpu.memory_space<vmem>>, vector<10x16x6xf32>
    %103 = vector.shape_cast %102 : vector<10x16x6xf32> to vector<160x6xf32>
    %104 = arith.truncf %103 : vector<160x6xf32> to vector<160x6xbf16>
    %c12_91 = arith.constant 12 : index
    %c0_92 = arith.constant 0 : index
    %c0_93 = arith.constant 0 : index
    %105 = vector.load %arg4[%c12_91, %c0_92, %c0_93] : memref<49x6x128xbf16, #tpu.memory_space<vmem>>, vector<1x6x128xbf16>
    %106 = vector.shape_cast %105 : vector<1x6x128xbf16> to vector<6x128xbf16>
    %cst_94 = arith.constant dense<0.000000e+00> : vector<160x128xf32>
    %107 = tpu.matmul %104, %106, %cst_94 {dimension_numbers = #tpu.dot_dimension_numbers<[1], [0], [0], [1], [0, 0, 1, 1], [], []>} : vector<160x6xbf16>, vector<6x128xbf16>, vector<160x128xf32> -> vector<160x128xf32>
    %108 = arith.addf %101, %107 : vector<160x128xf32>
    %c1_95 = arith.constant 1 : index
    %c13_96 = arith.constant 13 : index
    %c0_97 = arith.constant 0 : index
    %109 = vector.load %arg7[%c1_95, %c13_96, %c0_97] : memref<16x32x6xf32, #tpu.memory_space<vmem>>, vector<10x16x6xf32>
    %110 = vector.shape_cast %109 : vector<10x16x6xf32> to vector<160x6xf32>
    %111 = arith.truncf %110 : vector<160x6xf32> to vector<160x6xbf16>
    %c13_98 = arith.constant 13 : index
    %c0_99 = arith.constant 0 : index
    %c0_100 = arith.constant 0 : index
    %112 = vector.load %arg4[%c13_98, %c0_99, %c0_100] : memref<49x6x128xbf16, #tpu.memory_space<vmem>>, vector<1x6x128xbf16>
    %113 = vector.shape_cast %112 : vector<1x6x128xbf16> to vector<6x128xbf16>
    %cst_101 = arith.constant dense<0.000000e+00> : vector<160x128xf32>
    %114 = tpu.matmul %111, %113, %cst_101 {dimension_numbers = #tpu.dot_dimension_numbers<[1], [0], [0], [1], [0, 0, 1, 1], [], []>} : vector<160x6xbf16>, vector<6x128xbf16>, vector<160x128xf32> -> vector<160x128xf32>
    %115 = arith.addf %108, %114 : vector<160x128xf32>
    %c2_102 = arith.constant 2 : index
    %c7_103 = arith.constant 7 : index
    %c0_104 = arith.constant 0 : index
    %116 = vector.load %arg7[%c2_102, %c7_103, %c0_104] : memref<16x32x6xf32, #tpu.memory_space<vmem>>, vector<10x16x6xf32>
    %117 = vector.shape_cast %116 : vector<10x16x6xf32> to vector<160x6xf32>
    %118 = arith.truncf %117 : vector<160x6xf32> to vector<160x6xbf16>
    %c14 = arith.constant 14 : index
    %c0_105 = arith.constant 0 : index
    %c0_106 = arith.constant 0 : index
    %119 = vector.load %arg4[%c14, %c0_105, %c0_106] : memref<49x6x128xbf16, #tpu.memory_space<vmem>>, vector<1x6x128xbf16>
    %120 = vector.shape_cast %119 : vector<1x6x128xbf16> to vector<6x128xbf16>
    %cst_107 = arith.constant dense<0.000000e+00> : vector<160x128xf32>
    %121 = tpu.matmul %118, %120, %cst_107 {dimension_numbers = #tpu.dot_dimension_numbers<[1], [0], [0], [1], [0, 0, 1, 1], [], []>} : vector<160x6xbf16>, vector<6x128xbf16>, vector<160x128xf32> -> vector<160x128xf32>
    %122 = arith.addf %115, %121 : vector<160x128xf32>
    %c2_108 = arith.constant 2 : index
    %c8_109 = arith.constant 8 : index
    %c0_110 = arith.constant 0 : index
    %123 = vector.load %arg7[%c2_108, %c8_109, %c0_110] : memref<16x32x6xf32, #tpu.memory_space<vmem>>, vector<10x16x6xf32>
    %124 = vector.shape_cast %123 : vector<10x16x6xf32> to vector<160x6xf32>
    %125 = arith.truncf %124 : vector<160x6xf32> to vector<160x6xbf16>
    %c15 = arith.constant 15 : index
    %c0_111 = arith.constant 0 : index
    %c0_112 = arith.constant 0 : index
    %126 = vector.load %arg4[%c15, %c0_111, %c0_112] : memref<49x6x128xbf16, #tpu.memory_space<vmem>>, vector<1x6x128xbf16>
    %127 = vector.shape_cast %126 : vector<1x6x128xbf16> to vector<6x128xbf16>
    %cst_113 = arith.constant dense<0.000000e+00> : vector<160x128xf32>
    %128 = tpu.matmul %125, %127, %cst_113 {dimension_numbers = #tpu.dot_dimension_numbers<[1], [0], [0], [1], [0, 0, 1, 1], [], []>} : vector<160x6xbf16>, vector<6x128xbf16>, vector<160x128xf32> -> vector<160x128xf32>
    %129 = arith.addf %122, %128 : vector<160x128xf32>
    %c2_114 = arith.constant 2 : index
    %c9_115 = arith.constant 9 : index
    %c0_116 = arith.constant 0 : index
    %130 = vector.load %arg7[%c2_114, %c9_115, %c0_116] : memref<16x32x6xf32, #tpu.memory_space<vmem>>, vector<10x16x6xf32>
    %131 = vector.shape_cast %130 : vector<10x16x6xf32> to vector<160x6xf32>
    %132 = arith.truncf %131 : vector<160x6xf32> to vector<160x6xbf16>
    %c16 = arith.constant 16 : index
    %c0_117 = arith.constant 0 : index
    %c0_118 = arith.constant 0 : index
    %133 = vector.load %arg4[%c16, %c0_117, %c0_118] : memref<49x6x128xbf16, #tpu.memory_space<vmem>>, vector<1x6x128xbf16>
    %134 = vector.shape_cast %133 : vector<1x6x128xbf16> to vector<6x128xbf16>
    %cst_119 = arith.constant dense<0.000000e+00> : vector<160x128xf32>
    %135 = tpu.matmul %132, %134, %cst_119 {dimension_numbers = #tpu.dot_dimension_numbers<[1], [0], [0], [1], [0, 0, 1, 1], [], []>} : vector<160x6xbf16>, vector<6x128xbf16>, vector<160x128xf32> -> vector<160x128xf32>
    %136 = arith.addf %129, %135 : vector<160x128xf32>
    %c2_120 = arith.constant 2 : index
    %c10_121 = arith.constant 10 : index
    %c0_122 = arith.constant 0 : index
    %137 = vector.load %arg7[%c2_120, %c10_121, %c0_122] : memref<16x32x6xf32, #tpu.memory_space<vmem>>, vector<10x16x6xf32>
    %138 = vector.shape_cast %137 : vector<10x16x6xf32> to vector<160x6xf32>
    %139 = arith.truncf %138 : vector<160x6xf32> to vector<160x6xbf16>
    %c17 = arith.constant 17 : index
    %c0_123 = arith.constant 0 : index
    %c0_124 = arith.constant 0 : index
    %140 = vector.load %arg4[%c17, %c0_123, %c0_124] : memref<49x6x128xbf16, #tpu.memory_space<vmem>>, vector<1x6x128xbf16>
    %141 = vector.shape_cast %140 : vector<1x6x128xbf16> to vector<6x128xbf16>
    %cst_125 = arith.constant dense<0.000000e+00> : vector<160x128xf32>
    %142 = tpu.matmul %139, %141, %cst_125 {dimension_numbers = #tpu.dot_dimension_numbers<[1], [0], [0], [1], [0, 0, 1, 1], [], []>} : vector<160x6xbf16>, vector<6x128xbf16>, vector<160x128xf32> -> vector<160x128xf32>
    %143 = arith.addf %136, %142 : vector<160x128xf32>
    %c2_126 = arith.constant 2 : index
    %c11_127 = arith.constant 11 : index
    %c0_128 = arith.constant 0 : index
    %144 = vector.load %arg7[%c2_126, %c11_127, %c0_128] : memref<16x32x6xf32, #tpu.memory_space<vmem>>, vector<10x16x6xf32>
    %145 = vector.shape_cast %144 : vector<10x16x6xf32> to vector<160x6xf32>
    %146 = arith.truncf %145 : vector<160x6xf32> to vector<160x6xbf16>
    %c18 = arith.constant 18 : index
    %c0_129 = arith.constant 0 : index
    %c0_130 = arith.constant 0 : index
    %147 = vector.load %arg4[%c18, %c0_129, %c0_130] : memref<49x6x128xbf16, #tpu.memory_space<vmem>>, vector<1x6x128xbf16>
    %148 = vector.shape_cast %147 : vector<1x6x128xbf16> to vector<6x128xbf16>
    %cst_131 = arith.constant dense<0.000000e+00> : vector<160x128xf32>
    %149 = tpu.matmul %146, %148, %cst_131 {dimension_numbers = #tpu.dot_dimension_numbers<[1], [0], [0], [1], [0, 0, 1, 1], [], []>} : vector<160x6xbf16>, vector<6x128xbf16>, vector<160x128xf32> -> vector<160x128xf32>
    %150 = arith.addf %143, %149 : vector<160x128xf32>
    %c2_132 = arith.constant 2 : index
    %c12_133 = arith.constant 12 : index
    %c0_134 = arith.constant 0 : index
    %151 = vector.load %arg7[%c2_132, %c12_133, %c0_134] : memref<16x32x6xf32, #tpu.memory_space<vmem>>, vector<10x16x6xf32>
    %152 = vector.shape_cast %151 : vector<10x16x6xf32> to vector<160x6xf32>
    %153 = arith.truncf %152 : vector<160x6xf32> to vector<160x6xbf16>
    %c19 = arith.constant 19 : index
    %c0_135 = arith.constant 0 : index
    %c0_136 = arith.constant 0 : index
    %154 = vector.load %arg4[%c19, %c0_135, %c0_136] : memref<49x6x128xbf16, #tpu.memory_space<vmem>>, vector<1x6x128xbf16>
    %155 = vector.shape_cast %154 : vector<1x6x128xbf16> to vector<6x128xbf16>
    %cst_137 = arith.constant dense<0.000000e+00> : vector<160x128xf32>
    %156 = tpu.matmul %153, %155, %cst_137 {dimension_numbers = #tpu.dot_dimension_numbers<[1], [0], [0], [1], [0, 0, 1, 1], [], []>} : vector<160x6xbf16>, vector<6x128xbf16>, vector<160x128xf32> -> vector<160x128xf32>
    %157 = arith.addf %150, %156 : vector<160x128xf32>
    %c2_138 = arith.constant 2 : index
    %c13_139 = arith.constant 13 : index
    %c0_140 = arith.constant 0 : index
    %158 = vector.load %arg7[%c2_138, %c13_139, %c0_140] : memref<16x32x6xf32, #tpu.memory_space<vmem>>, vector<10x16x6xf32>
    %159 = vector.shape_cast %158 : vector<10x16x6xf32> to vector<160x6xf32>
    %160 = arith.truncf %159 : vector<160x6xf32> to vector<160x6xbf16>
    %c20 = arith.constant 20 : index
    %c0_141 = arith.constant 0 : index
    %c0_142 = arith.constant 0 : index
    %161 = vector.load %arg4[%c20, %c0_141, %c0_142] : memref<49x6x128xbf16, #tpu.memory_space<vmem>>, vector<1x6x128xbf16>
    %162 = vector.shape_cast %161 : vector<1x6x128xbf16> to vector<6x128xbf16>
    %cst_143 = arith.constant dense<0.000000e+00> : vector<160x128xf32>
    %163 = tpu.matmul %160, %162, %cst_143 {dimension_numbers = #tpu.dot_dimension_numbers<[1], [0], [0], [1], [0, 0, 1, 1], [], []>} : vector<160x6xbf16>, vector<6x128xbf16>, vector<160x128xf32> -> vector<160x128xf32>
    %164 = arith.addf %157, %163 : vector<160x128xf32>
    %c3_144 = arith.constant 3 : index
    %c7_145 = arith.constant 7 : index
    %c0_146 = arith.constant 0 : index
    %165 = vector.load %arg7[%c3_144, %c7_145, %c0_146] : memref<16x32x6xf32, #tpu.memory_space<vmem>>, vector<10x16x6xf32>
    %166 = vector.shape_cast %165 : vector<10x16x6xf32> to vector<160x6xf32>
    %167 = arith.truncf %166 : vector<160x6xf32> to vector<160x6xbf16>
    %c21 = arith.constant 21 : index
    %c0_147 = arith.constant 0 : index
    %c0_148 = arith.constant 0 : index
    %168 = vector.load %arg4[%c21, %c0_147, %c0_148] : memref<49x6x128xbf16, #tpu.memory_space<vmem>>, vector<1x6x128xbf16>
    %169 = vector.shape_cast %168 : vector<1x6x128xbf16> to vector<6x128xbf16>
    %cst_149 = arith.constant dense<0.000000e+00> : vector<160x128xf32>
    %170 = tpu.matmul %167, %169, %cst_149 {dimension_numbers = #tpu.dot_dimension_numbers<[1], [0], [0], [1], [0, 0, 1, 1], [], []>} : vector<160x6xbf16>, vector<6x128xbf16>, vector<160x128xf32> -> vector<160x128xf32>
    %171 = arith.addf %164, %170 : vector<160x128xf32>
    %c3_150 = arith.constant 3 : index
    %c8_151 = arith.constant 8 : index
    %c0_152 = arith.constant 0 : index
    %172 = vector.load %arg7[%c3_150, %c8_151, %c0_152] : memref<16x32x6xf32, #tpu.memory_space<vmem>>, vector<10x16x6xf32>
    %173 = vector.shape_cast %172 : vector<10x16x6xf32> to vector<160x6xf32>
    %174 = arith.truncf %173 : vector<160x6xf32> to vector<160x6xbf16>
    %c22 = arith.constant 22 : index
    %c0_153 = arith.constant 0 : index
    %c0_154 = arith.constant 0 : index
    %175 = vector.load %arg4[%c22, %c0_153, %c0_154] : memref<49x6x128xbf16, #tpu.memory_space<vmem>>, vector<1x6x128xbf16>
    %176 = vector.shape_cast %175 : vector<1x6x128xbf16> to vector<6x128xbf16>
    %cst_155 = arith.constant dense<0.000000e+00> : vector<160x128xf32>
    %177 = tpu.matmul %174, %176, %cst_155 {dimension_numbers = #tpu.dot_dimension_numbers<[1], [0], [0], [1], [0, 0, 1, 1], [], []>} : vector<160x6xbf16>, vector<6x128xbf16>, vector<160x128xf32> -> vector<160x128xf32>
    %178 = arith.addf %171, %177 : vector<160x128xf32>
    %c3_156 = arith.constant 3 : index
    %c9_157 = arith.constant 9 : index
    %c0_158 = arith.constant 0 : index
    %179 = vector.load %arg7[%c3_156, %c9_157, %c0_158] : memref<16x32x6xf32, #tpu.memory_space<vmem>>, vector<10x16x6xf32>
    %180 = vector.shape_cast %179 : vector<10x16x6xf32> to vector<160x6xf32>
    %181 = arith.truncf %180 : vector<160x6xf32> to vector<160x6xbf16>
    %c23 = arith.constant 23 : index
    %c0_159 = arith.constant 0 : index
    %c0_160 = arith.constant 0 : index
    %182 = vector.load %arg4[%c23, %c0_159, %c0_160] : memref<49x6x128xbf16, #tpu.memory_space<vmem>>, vector<1x6x128xbf16>
    %183 = vector.shape_cast %182 : vector<1x6x128xbf16> to vector<6x128xbf16>
    %cst_161 = arith.constant dense<0.000000e+00> : vector<160x128xf32>
    %184 = tpu.matmul %181, %183, %cst_161 {dimension_numbers = #tpu.dot_dimension_numbers<[1], [0], [0], [1], [0, 0, 1, 1], [], []>} : vector<160x6xbf16>, vector<6x128xbf16>, vector<160x128xf32> -> vector<160x128xf32>
    %185 = arith.addf %178, %184 : vector<160x128xf32>
    %c3_162 = arith.constant 3 : index
    %c10_163 = arith.constant 10 : index
    %c0_164 = arith.constant 0 : index
    %186 = vector.load %arg7[%c3_162, %c10_163, %c0_164] : memref<16x32x6xf32, #tpu.memory_space<vmem>>, vector<10x16x6xf32>
    %187 = vector.shape_cast %186 : vector<10x16x6xf32> to vector<160x6xf32>
    %188 = arith.truncf %187 : vector<160x6xf32> to vector<160x6xbf16>
    %c24 = arith.constant 24 : index
    %c0_165 = arith.constant 0 : index
    %c0_166 = arith.constant 0 : index
    %189 = vector.load %arg4[%c24, %c0_165, %c0_166] : memref<49x6x128xbf16, #tpu.memory_space<vmem>>, vector<1x6x128xbf16>
    %190 = vector.shape_cast %189 : vector<1x6x128xbf16> to vector<6x128xbf16>
    %cst_167 = arith.constant dense<0.000000e+00> : vector<160x128xf32>
    %191 = tpu.matmul %188, %190, %cst_167 {dimension_numbers = #tpu.dot_dimension_numbers<[1], [0], [0], [1], [0, 0, 1, 1], [], []>} : vector<160x6xbf16>, vector<6x128xbf16>, vector<160x128xf32> -> vector<160x128xf32>
    %192 = arith.addf %185, %191 : vector<160x128xf32>
    %c3_168 = arith.constant 3 : index
    %c11_169 = arith.constant 11 : index
    %c0_170 = arith.constant 0 : index
    %193 = vector.load %arg7[%c3_168, %c11_169, %c0_170] : memref<16x32x6xf32, #tpu.memory_space<vmem>>, vector<10x16x6xf32>
    %194 = vector.shape_cast %193 : vector<10x16x6xf32> to vector<160x6xf32>
    %195 = arith.truncf %194 : vector<160x6xf32> to vector<160x6xbf16>
    %c25 = arith.constant 25 : index
    %c0_171 = arith.constant 0 : index
    %c0_172 = arith.constant 0 : index
    %196 = vector.load %arg4[%c25, %c0_171, %c0_172] : memref<49x6x128xbf16, #tpu.memory_space<vmem>>, vector<1x6x128xbf16>
    %197 = vector.shape_cast %196 : vector<1x6x128xbf16> to vector<6x128xbf16>
    %cst_173 = arith.constant dense<0.000000e+00> : vector<160x128xf32>
    %198 = tpu.matmul %195, %197, %cst_173 {dimension_numbers = #tpu.dot_dimension_numbers<[1], [0], [0], [1], [0, 0, 1, 1], [], []>} : vector<160x6xbf16>, vector<6x128xbf16>, vector<160x128xf32> -> vector<160x128xf32>
    %199 = arith.addf %192, %198 : vector<160x128xf32>
    %c3_174 = arith.constant 3 : index
    %c12_175 = arith.constant 12 : index
    %c0_176 = arith.constant 0 : index
    %200 = vector.load %arg7[%c3_174, %c12_175, %c0_176] : memref<16x32x6xf32, #tpu.memory_space<vmem>>, vector<10x16x6xf32>
    %201 = vector.shape_cast %200 : vector<10x16x6xf32> to vector<160x6xf32>
    %202 = arith.truncf %201 : vector<160x6xf32> to vector<160x6xbf16>
    %c26 = arith.constant 26 : index
    %c0_177 = arith.constant 0 : index
    %c0_178 = arith.constant 0 : index
    %203 = vector.load %arg4[%c26, %c0_177, %c0_178] : memref<49x6x128xbf16, #tpu.memory_space<vmem>>, vector<1x6x128xbf16>
    %204 = vector.shape_cast %203 : vector<1x6x128xbf16> to vector<6x128xbf16>
    %cst_179 = arith.constant dense<0.000000e+00> : vector<160x128xf32>
    %205 = tpu.matmul %202, %204, %cst_179 {dimension_numbers = #tpu.dot_dimension_numbers<[1], [0], [0], [1], [0, 0, 1, 1], [], []>} : vector<160x6xbf16>, vector<6x128xbf16>, vector<160x128xf32> -> vector<160x128xf32>
    %206 = arith.addf %199, %205 : vector<160x128xf32>
    %c3_180 = arith.constant 3 : index
    %c13_181 = arith.constant 13 : index
    %c0_182 = arith.constant 0 : index
    %207 = vector.load %arg7[%c3_180, %c13_181, %c0_182] : memref<16x32x6xf32, #tpu.memory_space<vmem>>, vector<10x16x6xf32>
    %208 = vector.shape_cast %207 : vector<10x16x6xf32> to vector<160x6xf32>
    %209 = arith.truncf %208 : vector<160x6xf32> to vector<160x6xbf16>
    %c27 = arith.constant 27 : index
    %c0_183 = arith.constant 0 : index
    %c0_184 = arith.constant 0 : index
    %210 = vector.load %arg4[%c27, %c0_183, %c0_184] : memref<49x6x128xbf16, #tpu.memory_space<vmem>>, vector<1x6x128xbf16>
    %211 = vector.shape_cast %210 : vector<1x6x128xbf16> to vector<6x128xbf16>
    %cst_185 = arith.constant dense<0.000000e+00> : vector<160x128xf32>
    %212 = tpu.matmul %209, %211, %cst_185 {dimension_numbers = #tpu.dot_dimension_numbers<[1], [0], [0], [1], [0, 0, 1, 1], [], []>} : vector<160x6xbf16>, vector<6x128xbf16>, vector<160x128xf32> -> vector<160x128xf32>
    %213 = arith.addf %206, %212 : vector<160x128xf32>
    %c4_186 = arith.constant 4 : index
    %c7_187 = arith.constant 7 : index
    %c0_188 = arith.constant 0 : index
    %214 = vector.load %arg7[%c4_186, %c7_187, %c0_188] : memref<16x32x6xf32, #tpu.memory_space<vmem>>, vector<10x16x6xf32>
    %215 = vector.shape_cast %214 : vector<10x16x6xf32> to vector<160x6xf32>
    %216 = arith.truncf %215 : vector<160x6xf32> to vector<160x6xbf16>
    %c28 = arith.constant 28 : index
    %c0_189 = arith.constant 0 : index
    %c0_190 = arith.constant 0 : index
    %217 = vector.load %arg4[%c28, %c0_189, %c0_190] : memref<49x6x128xbf16, #tpu.memory_space<vmem>>, vector<1x6x128xbf16>
    %218 = vector.shape_cast %217 : vector<1x6x128xbf16> to vector<6x128xbf16>
    %cst_191 = arith.constant dense<0.000000e+00> : vector<160x128xf32>
    %219 = tpu.matmul %216, %218, %cst_191 {dimension_numbers = #tpu.dot_dimension_numbers<[1], [0], [0], [1], [0, 0, 1, 1], [], []>} : vector<160x6xbf16>, vector<6x128xbf16>, vector<160x128xf32> -> vector<160x128xf32>
    %220 = arith.addf %213, %219 : vector<160x128xf32>
    %c4_192 = arith.constant 4 : index
    %c8_193 = arith.constant 8 : index
    %c0_194 = arith.constant 0 : index
    %221 = vector.load %arg7[%c4_192, %c8_193, %c0_194] : memref<16x32x6xf32, #tpu.memory_space<vmem>>, vector<10x16x6xf32>
    %222 = vector.shape_cast %221 : vector<10x16x6xf32> to vector<160x6xf32>
    %223 = arith.truncf %222 : vector<160x6xf32> to vector<160x6xbf16>
    %c29 = arith.constant 29 : index
    %c0_195 = arith.constant 0 : index
    %c0_196 = arith.constant 0 : index
    %224 = vector.load %arg4[%c29, %c0_195, %c0_196] : memref<49x6x128xbf16, #tpu.memory_space<vmem>>, vector<1x6x128xbf16>
    %225 = vector.shape_cast %224 : vector<1x6x128xbf16> to vector<6x128xbf16>
    %cst_197 = arith.constant dense<0.000000e+00> : vector<160x128xf32>
    %226 = tpu.matmul %223, %225, %cst_197 {dimension_numbers = #tpu.dot_dimension_numbers<[1], [0], [0], [1], [0, 0, 1, 1], [], []>} : vector<160x6xbf16>, vector<6x128xbf16>, vector<160x128xf32> -> vector<160x128xf32>
    %227 = arith.addf %220, %226 : vector<160x128xf32>
    %c4_198 = arith.constant 4 : index
    %c9_199 = arith.constant 9 : index
    %c0_200 = arith.constant 0 : index
    %228 = vector.load %arg7[%c4_198, %c9_199, %c0_200] : memref<16x32x6xf32, #tpu.memory_space<vmem>>, vector<10x16x6xf32>
    %229 = vector.shape_cast %228 : vector<10x16x6xf32> to vector<160x6xf32>
    %230 = arith.truncf %229 : vector<160x6xf32> to vector<160x6xbf16>
    %c30 = arith.constant 30 : index
    %c0_201 = arith.constant 0 : index
    %c0_202 = arith.constant 0 : index
    %231 = vector.load %arg4[%c30, %c0_201, %c0_202] : memref<49x6x128xbf16, #tpu.memory_space<vmem>>, vector<1x6x128xbf16>
    %232 = vector.shape_cast %231 : vector<1x6x128xbf16> to vector<6x128xbf16>
    %cst_203 = arith.constant dense<0.000000e+00> : vector<160x128xf32>
    %233 = tpu.matmul %230, %232, %cst_203 {dimension_numbers = #tpu.dot_dimension_numbers<[1], [0], [0], [1], [0, 0, 1, 1], [], []>} : vector<160x6xbf16>, vector<6x128xbf16>, vector<160x128xf32> -> vector<160x128xf32>
    %234 = arith.addf %227, %233 : vector<160x128xf32>
    %c4_204 = arith.constant 4 : index
    %c10_205 = arith.constant 10 : index
    %c0_206 = arith.constant 0 : index
    %235 = vector.load %arg7[%c4_204, %c10_205, %c0_206] : memref<16x32x6xf32, #tpu.memory_space<vmem>>, vector<10x16x6xf32>
    %236 = vector.shape_cast %235 : vector<10x16x6xf32> to vector<160x6xf32>
    %237 = arith.truncf %236 : vector<160x6xf32> to vector<160x6xbf16>
    %c31 = arith.constant 31 : index
    %c0_207 = arith.constant 0 : index
    %c0_208 = arith.constant 0 : index
    %238 = vector.load %arg4[%c31, %c0_207, %c0_208] : memref<49x6x128xbf16, #tpu.memory_space<vmem>>, vector<1x6x128xbf16>
    %239 = vector.shape_cast %238 : vector<1x6x128xbf16> to vector<6x128xbf16>
    %cst_209 = arith.constant dense<0.000000e+00> : vector<160x128xf32>
    %240 = tpu.matmul %237, %239, %cst_209 {dimension_numbers = #tpu.dot_dimension_numbers<[1], [0], [0], [1], [0, 0, 1, 1], [], []>} : vector<160x6xbf16>, vector<6x128xbf16>, vector<160x128xf32> -> vector<160x128xf32>
    %241 = arith.addf %234, %240 : vector<160x128xf32>
    %c4_210 = arith.constant 4 : index
    %c11_211 = arith.constant 11 : index
    %c0_212 = arith.constant 0 : index
    %242 = vector.load %arg7[%c4_210, %c11_211, %c0_212] : memref<16x32x6xf32, #tpu.memory_space<vmem>>, vector<10x16x6xf32>
    %243 = vector.shape_cast %242 : vector<10x16x6xf32> to vector<160x6xf32>
    %244 = arith.truncf %243 : vector<160x6xf32> to vector<160x6xbf16>
    %c32 = arith.constant 32 : index
    %c0_213 = arith.constant 0 : index
    %c0_214 = arith.constant 0 : index
    %245 = vector.load %arg4[%c32, %c0_213, %c0_214] : memref<49x6x128xbf16, #tpu.memory_space<vmem>>, vector<1x6x128xbf16>
    %246 = vector.shape_cast %245 : vector<1x6x128xbf16> to vector<6x128xbf16>
    %cst_215 = arith.constant dense<0.000000e+00> : vector<160x128xf32>
    %247 = tpu.matmul %244, %246, %cst_215 {dimension_numbers = #tpu.dot_dimension_numbers<[1], [0], [0], [1], [0, 0, 1, 1], [], []>} : vector<160x6xbf16>, vector<6x128xbf16>, vector<160x128xf32> -> vector<160x128xf32>
    %248 = arith.addf %241, %247 : vector<160x128xf32>
    %c4_216 = arith.constant 4 : index
    %c12_217 = arith.constant 12 : index
    %c0_218 = arith.constant 0 : index
    %249 = vector.load %arg7[%c4_216, %c12_217, %c0_218] : memref<16x32x6xf32, #tpu.memory_space<vmem>>, vector<10x16x6xf32>
    %250 = vector.shape_cast %249 : vector<10x16x6xf32> to vector<160x6xf32>
    %251 = arith.truncf %250 : vector<160x6xf32> to vector<160x6xbf16>
    %c33 = arith.constant 33 : index
    %c0_219 = arith.constant 0 : index
    %c0_220 = arith.constant 0 : index
    %252 = vector.load %arg4[%c33, %c0_219, %c0_220] : memref<49x6x128xbf16, #tpu.memory_space<vmem>>, vector<1x6x128xbf16>
    %253 = vector.shape_cast %252 : vector<1x6x128xbf16> to vector<6x128xbf16>
    %cst_221 = arith.constant dense<0.000000e+00> : vector<160x128xf32>
    %254 = tpu.matmul %251, %253, %cst_221 {dimension_numbers = #tpu.dot_dimension_numbers<[1], [0], [0], [1], [0, 0, 1, 1], [], []>} : vector<160x6xbf16>, vector<6x128xbf16>, vector<160x128xf32> -> vector<160x128xf32>
    %255 = arith.addf %248, %254 : vector<160x128xf32>
    %c4_222 = arith.constant 4 : index
    %c13_223 = arith.constant 13 : index
    %c0_224 = arith.constant 0 : index
    %256 = vector.load %arg7[%c4_222, %c13_223, %c0_224] : memref<16x32x6xf32, #tpu.memory_space<vmem>>, vector<10x16x6xf32>
    %257 = vector.shape_cast %256 : vector<10x16x6xf32> to vector<160x6xf32>
    %258 = arith.truncf %257 : vector<160x6xf32> to vector<160x6xbf16>
    %c34 = arith.constant 34 : index
    %c0_225 = arith.constant 0 : index
    %c0_226 = arith.constant 0 : index
    %259 = vector.load %arg4[%c34, %c0_225, %c0_226] : memref<49x6x128xbf16, #tpu.memory_space<vmem>>, vector<1x6x128xbf16>
    %260 = vector.shape_cast %259 : vector<1x6x128xbf16> to vector<6x128xbf16>
    %cst_227 = arith.constant dense<0.000000e+00> : vector<160x128xf32>
    %261 = tpu.matmul %258, %260, %cst_227 {dimension_numbers = #tpu.dot_dimension_numbers<[1], [0], [0], [1], [0, 0, 1, 1], [], []>} : vector<160x6xbf16>, vector<6x128xbf16>, vector<160x128xf32> -> vector<160x128xf32>
    %262 = arith.addf %255, %261 : vector<160x128xf32>
    %c5_228 = arith.constant 5 : index
    %c7_229 = arith.constant 7 : index
    %c0_230 = arith.constant 0 : index
    %263 = vector.load %arg7[%c5_228, %c7_229, %c0_230] : memref<16x32x6xf32, #tpu.memory_space<vmem>>, vector<10x16x6xf32>
    %264 = vector.shape_cast %263 : vector<10x16x6xf32> to vector<160x6xf32>
    %265 = arith.truncf %264 : vector<160x6xf32> to vector<160x6xbf16>
    %c35 = arith.constant 35 : index
    %c0_231 = arith.constant 0 : index
    %c0_232 = arith.constant 0 : index
    %266 = vector.load %arg4[%c35, %c0_231, %c0_232] : memref<49x6x128xbf16, #tpu.memory_space<vmem>>, vector<1x6x128xbf16>
    %267 = vector.shape_cast %266 : vector<1x6x128xbf16> to vector<6x128xbf16>
    %cst_233 = arith.constant dense<0.000000e+00> : vector<160x128xf32>
    %268 = tpu.matmul %265, %267, %cst_233 {dimension_numbers = #tpu.dot_dimension_numbers<[1], [0], [0], [1], [0, 0, 1, 1], [], []>} : vector<160x6xbf16>, vector<6x128xbf16>, vector<160x128xf32> -> vector<160x128xf32>
    %269 = arith.addf %262, %268 : vector<160x128xf32>
    %c5_234 = arith.constant 5 : index
    %c8_235 = arith.constant 8 : index
    %c0_236 = arith.constant 0 : index
    %270 = vector.load %arg7[%c5_234, %c8_235, %c0_236] : memref<16x32x6xf32, #tpu.memory_space<vmem>>, vector<10x16x6xf32>
    %271 = vector.shape_cast %270 : vector<10x16x6xf32> to vector<160x6xf32>
    %272 = arith.truncf %271 : vector<160x6xf32> to vector<160x6xbf16>
    %c36 = arith.constant 36 : index
    %c0_237 = arith.constant 0 : index
    %c0_238 = arith.constant 0 : index
    %273 = vector.load %arg4[%c36, %c0_237, %c0_238] : memref<49x6x128xbf16, #tpu.memory_space<vmem>>, vector<1x6x128xbf16>
    %274 = vector.shape_cast %273 : vector<1x6x128xbf16> to vector<6x128xbf16>
    %cst_239 = arith.constant dense<0.000000e+00> : vector<160x128xf32>
    %275 = tpu.matmul %272, %274, %cst_239 {dimension_numbers = #tpu.dot_dimension_numbers<[1], [0], [0], [1], [0, 0, 1, 1], [], []>} : vector<160x6xbf16>, vector<6x128xbf16>, vector<160x128xf32> -> vector<160x128xf32>
    %276 = arith.addf %269, %275 : vector<160x128xf32>
    %c5_240 = arith.constant 5 : index
    %c9_241 = arith.constant 9 : index
    %c0_242 = arith.constant 0 : index
    %277 = vector.load %arg7[%c5_240, %c9_241, %c0_242] : memref<16x32x6xf32, #tpu.memory_space<vmem>>, vector<10x16x6xf32>
    %278 = vector.shape_cast %277 : vector<10x16x6xf32> to vector<160x6xf32>
    %279 = arith.truncf %278 : vector<160x6xf32> to vector<160x6xbf16>
    %c37 = arith.constant 37 : index
    %c0_243 = arith.constant 0 : index
    %c0_244 = arith.constant 0 : index
    %280 = vector.load %arg4[%c37, %c0_243, %c0_244] : memref<49x6x128xbf16, #tpu.memory_space<vmem>>, vector<1x6x128xbf16>
    %281 = vector.shape_cast %280 : vector<1x6x128xbf16> to vector<6x128xbf16>
    %cst_245 = arith.constant dense<0.000000e+00> : vector<160x128xf32>
    %282 = tpu.matmul %279, %281, %cst_245 {dimension_numbers = #tpu.dot_dimension_numbers<[1], [0], [0], [1], [0, 0, 1, 1], [], []>} : vector<160x6xbf16>, vector<6x128xbf16>, vector<160x128xf32> -> vector<160x128xf32>
    %283 = arith.addf %276, %282 : vector<160x128xf32>
    %c5_246 = arith.constant 5 : index
    %c10_247 = arith.constant 10 : index
    %c0_248 = arith.constant 0 : index
    %284 = vector.load %arg7[%c5_246, %c10_247, %c0_248] : memref<16x32x6xf32, #tpu.memory_space<vmem>>, vector<10x16x6xf32>
    %285 = vector.shape_cast %284 : vector<10x16x6xf32> to vector<160x6xf32>
    %286 = arith.truncf %285 : vector<160x6xf32> to vector<160x6xbf16>
    %c38 = arith.constant 38 : index
    %c0_249 = arith.constant 0 : index
    %c0_250 = arith.constant 0 : index
    %287 = vector.load %arg4[%c38, %c0_249, %c0_250] : memref<49x6x128xbf16, #tpu.memory_space<vmem>>, vector<1x6x128xbf16>
    %288 = vector.shape_cast %287 : vector<1x6x128xbf16> to vector<6x128xbf16>
    %cst_251 = arith.constant dense<0.000000e+00> : vector<160x128xf32>
    %289 = tpu.matmul %286, %288, %cst_251 {dimension_numbers = #tpu.dot_dimension_numbers<[1], [0], [0], [1], [0, 0, 1, 1], [], []>} : vector<160x6xbf16>, vector<6x128xbf16>, vector<160x128xf32> -> vector<160x128xf32>
    %290 = arith.addf %283, %289 : vector<160x128xf32>
    %c5_252 = arith.constant 5 : index
    %c11_253 = arith.constant 11 : index
    %c0_254 = arith.constant 0 : index
    %291 = vector.load %arg7[%c5_252, %c11_253, %c0_254] : memref<16x32x6xf32, #tpu.memory_space<vmem>>, vector<10x16x6xf32>
    %292 = vector.shape_cast %291 : vector<10x16x6xf32> to vector<160x6xf32>
    %293 = arith.truncf %292 : vector<160x6xf32> to vector<160x6xbf16>
    %c39 = arith.constant 39 : index
    %c0_255 = arith.constant 0 : index
    %c0_256 = arith.constant 0 : index
    %294 = vector.load %arg4[%c39, %c0_255, %c0_256] : memref<49x6x128xbf16, #tpu.memory_space<vmem>>, vector<1x6x128xbf16>
    %295 = vector.shape_cast %294 : vector<1x6x128xbf16> to vector<6x128xbf16>
    %cst_257 = arith.constant dense<0.000000e+00> : vector<160x128xf32>
    %296 = tpu.matmul %293, %295, %cst_257 {dimension_numbers = #tpu.dot_dimension_numbers<[1], [0], [0], [1], [0, 0, 1, 1], [], []>} : vector<160x6xbf16>, vector<6x128xbf16>, vector<160x128xf32> -> vector<160x128xf32>
    %297 = arith.addf %290, %296 : vector<160x128xf32>
    %c5_258 = arith.constant 5 : index
    %c12_259 = arith.constant 12 : index
    %c0_260 = arith.constant 0 : index
    %298 = vector.load %arg7[%c5_258, %c12_259, %c0_260] : memref<16x32x6xf32, #tpu.memory_space<vmem>>, vector<10x16x6xf32>
    %299 = vector.shape_cast %298 : vector<10x16x6xf32> to vector<160x6xf32>
    %300 = arith.truncf %299 : vector<160x6xf32> to vector<160x6xbf16>
    %c40 = arith.constant 40 : index
    %c0_261 = arith.constant 0 : index
    %c0_262 = arith.constant 0 : index
    %301 = vector.load %arg4[%c40, %c0_261, %c0_262] : memref<49x6x128xbf16, #tpu.memory_space<vmem>>, vector<1x6x128xbf16>
    %302 = vector.shape_cast %301 : vector<1x6x128xbf16> to vector<6x128xbf16>
    %cst_263 = arith.constant dense<0.000000e+00> : vector<160x128xf32>
    %303 = tpu.matmul %300, %302, %cst_263 {dimension_numbers = #tpu.dot_dimension_numbers<[1], [0], [0], [1], [0, 0, 1, 1], [], []>} : vector<160x6xbf16>, vector<6x128xbf16>, vector<160x128xf32> -> vector<160x128xf32>
    %304 = arith.addf %297, %303 : vector<160x128xf32>
    %c5_264 = arith.constant 5 : index
    %c13_265 = arith.constant 13 : index
    %c0_266 = arith.constant 0 : index
    %305 = vector.load %arg7[%c5_264, %c13_265, %c0_266] : memref<16x32x6xf32, #tpu.memory_space<vmem>>, vector<10x16x6xf32>
    %306 = vector.shape_cast %305 : vector<10x16x6xf32> to vector<160x6xf32>
    %307 = arith.truncf %306 : vector<160x6xf32> to vector<160x6xbf16>
    %c41 = arith.constant 41 : index
    %c0_267 = arith.constant 0 : index
    %c0_268 = arith.constant 0 : index
    %308 = vector.load %arg4[%c41, %c0_267, %c0_268] : memref<49x6x128xbf16, #tpu.memory_space<vmem>>, vector<1x6x128xbf16>
    %309 = vector.shape_cast %308 : vector<1x6x128xbf16> to vector<6x128xbf16>
    %cst_269 = arith.constant dense<0.000000e+00> : vector<160x128xf32>
    %310 = tpu.matmul %307, %309, %cst_269 {dimension_numbers = #tpu.dot_dimension_numbers<[1], [0], [0], [1], [0, 0, 1, 1], [], []>} : vector<160x6xbf16>, vector<6x128xbf16>, vector<160x128xf32> -> vector<160x128xf32>
    %311 = arith.addf %304, %310 : vector<160x128xf32>
    %c6_270 = arith.constant 6 : index
    %c7_271 = arith.constant 7 : index
    %c0_272 = arith.constant 0 : index
    %312 = vector.load %arg7[%c6_270, %c7_271, %c0_272] : memref<16x32x6xf32, #tpu.memory_space<vmem>>, vector<10x16x6xf32>
    %313 = vector.shape_cast %312 : vector<10x16x6xf32> to vector<160x6xf32>
    %314 = arith.truncf %313 : vector<160x6xf32> to vector<160x6xbf16>
    %c42 = arith.constant 42 : index
    %c0_273 = arith.constant 0 : index
    %c0_274 = arith.constant 0 : index
    %315 = vector.load %arg4[%c42, %c0_273, %c0_274] : memref<49x6x128xbf16, #tpu.memory_space<vmem>>, vector<1x6x128xbf16>
    %316 = vector.shape_cast %315 : vector<1x6x128xbf16> to vector<6x128xbf16>
    %cst_275 = arith.constant dense<0.000000e+00> : vector<160x128xf32>
    %317 = tpu.matmul %314, %316, %cst_275 {dimension_numbers = #tpu.dot_dimension_numbers<[1], [0], [0], [1], [0, 0, 1, 1], [], []>} : vector<160x6xbf16>, vector<6x128xbf16>, vector<160x128xf32> -> vector<160x128xf32>
    %318 = arith.addf %311, %317 : vector<160x128xf32>
    %c6_276 = arith.constant 6 : index
    %c8_277 = arith.constant 8 : index
    %c0_278 = arith.constant 0 : index
    %319 = vector.load %arg7[%c6_276, %c8_277, %c0_278] : memref<16x32x6xf32, #tpu.memory_space<vmem>>, vector<10x16x6xf32>
    %320 = vector.shape_cast %319 : vector<10x16x6xf32> to vector<160x6xf32>
    %321 = arith.truncf %320 : vector<160x6xf32> to vector<160x6xbf16>
    %c43 = arith.constant 43 : index
    %c0_279 = arith.constant 0 : index
    %c0_280 = arith.constant 0 : index
    %322 = vector.load %arg4[%c43, %c0_279, %c0_280] : memref<49x6x128xbf16, #tpu.memory_space<vmem>>, vector<1x6x128xbf16>
    %323 = vector.shape_cast %322 : vector<1x6x128xbf16> to vector<6x128xbf16>
    %cst_281 = arith.constant dense<0.000000e+00> : vector<160x128xf32>
    %324 = tpu.matmul %321, %323, %cst_281 {dimension_numbers = #tpu.dot_dimension_numbers<[1], [0], [0], [1], [0, 0, 1, 1], [], []>} : vector<160x6xbf16>, vector<6x128xbf16>, vector<160x128xf32> -> vector<160x128xf32>
    %325 = arith.addf %318, %324 : vector<160x128xf32>
    %c6_282 = arith.constant 6 : index
    %c9_283 = arith.constant 9 : index
    %c0_284 = arith.constant 0 : index
    %326 = vector.load %arg7[%c6_282, %c9_283, %c0_284] : memref<16x32x6xf32, #tpu.memory_space<vmem>>, vector<10x16x6xf32>
    %327 = vector.shape_cast %326 : vector<10x16x6xf32> to vector<160x6xf32>
    %328 = arith.truncf %327 : vector<160x6xf32> to vector<160x6xbf16>
    %c44 = arith.constant 44 : index
    %c0_285 = arith.constant 0 : index
    %c0_286 = arith.constant 0 : index
    %329 = vector.load %arg4[%c44, %c0_285, %c0_286] : memref<49x6x128xbf16, #tpu.memory_space<vmem>>, vector<1x6x128xbf16>
    %330 = vector.shape_cast %329 : vector<1x6x128xbf16> to vector<6x128xbf16>
    %cst_287 = arith.constant dense<0.000000e+00> : vector<160x128xf32>
    %331 = tpu.matmul %328, %330, %cst_287 {dimension_numbers = #tpu.dot_dimension_numbers<[1], [0], [0], [1], [0, 0, 1, 1], [], []>} : vector<160x6xbf16>, vector<6x128xbf16>, vector<160x128xf32> -> vector<160x128xf32>
    %332 = arith.addf %325, %331 : vector<160x128xf32>
    %c6_288 = arith.constant 6 : index
    %c10_289 = arith.constant 10 : index
    %c0_290 = arith.constant 0 : index
    %333 = vector.load %arg7[%c6_288, %c10_289, %c0_290] : memref<16x32x6xf32, #tpu.memory_space<vmem>>, vector<10x16x6xf32>
    %334 = vector.shape_cast %333 : vector<10x16x6xf32> to vector<160x6xf32>
    %335 = arith.truncf %334 : vector<160x6xf32> to vector<160x6xbf16>
    %c45 = arith.constant 45 : index
    %c0_291 = arith.constant 0 : index
    %c0_292 = arith.constant 0 : index
    %336 = vector.load %arg4[%c45, %c0_291, %c0_292] : memref<49x6x128xbf16, #tpu.memory_space<vmem>>, vector<1x6x128xbf16>
    %337 = vector.shape_cast %336 : vector<1x6x128xbf16> to vector<6x128xbf16>
    %cst_293 = arith.constant dense<0.000000e+00> : vector<160x128xf32>
    %338 = tpu.matmul %335, %337, %cst_293 {dimension_numbers = #tpu.dot_dimension_numbers<[1], [0], [0], [1], [0, 0, 1, 1], [], []>} : vector<160x6xbf16>, vector<6x128xbf16>, vector<160x128xf32> -> vector<160x128xf32>
    %339 = arith.addf %332, %338 : vector<160x128xf32>
    %c6_294 = arith.constant 6 : index
    %c11_295 = arith.constant 11 : index
    %c0_296 = arith.constant 0 : index
    %340 = vector.load %arg7[%c6_294, %c11_295, %c0_296] : memref<16x32x6xf32, #tpu.memory_space<vmem>>, vector<10x16x6xf32>
    %341 = vector.shape_cast %340 : vector<10x16x6xf32> to vector<160x6xf32>
    %342 = arith.truncf %341 : vector<160x6xf32> to vector<160x6xbf16>
    %c46 = arith.constant 46 : index
    %c0_297 = arith.constant 0 : index
    %c0_298 = arith.constant 0 : index
    %343 = vector.load %arg4[%c46, %c0_297, %c0_298] : memref<49x6x128xbf16, #tpu.memory_space<vmem>>, vector<1x6x128xbf16>
    %344 = vector.shape_cast %343 : vector<1x6x128xbf16> to vector<6x128xbf16>
    %cst_299 = arith.constant dense<0.000000e+00> : vector<160x128xf32>
    %345 = tpu.matmul %342, %344, %cst_299 {dimension_numbers = #tpu.dot_dimension_numbers<[1], [0], [0], [1], [0, 0, 1, 1], [], []>} : vector<160x6xbf16>, vector<6x128xbf16>, vector<160x128xf32> -> vector<160x128xf32>
    %346 = arith.addf %339, %345 : vector<160x128xf32>
    %c6_300 = arith.constant 6 : index
    %c12_301 = arith.constant 12 : index
    %c0_302 = arith.constant 0 : index
    %347 = vector.load %arg7[%c6_300, %c12_301, %c0_302] : memref<16x32x6xf32, #tpu.memory_space<vmem>>, vector<10x16x6xf32>
    %348 = vector.shape_cast %347 : vector<10x16x6xf32> to vector<160x6xf32>
    %349 = arith.truncf %348 : vector<160x6xf32> to vector<160x6xbf16>
    %c47 = arith.constant 47 : index
    %c0_303 = arith.constant 0 : index
    %c0_304 = arith.constant 0 : index
    %350 = vector.load %arg4[%c47, %c0_303, %c0_304] : memref<49x6x128xbf16, #tpu.memory_space<vmem>>, vector<1x6x128xbf16>
    %351 = vector.shape_cast %350 : vector<1x6x128xbf16> to vector<6x128xbf16>
    %cst_305 = arith.constant dense<0.000000e+00> : vector<160x128xf32>
    %352 = tpu.matmul %349, %351, %cst_305 {dimension_numbers = #tpu.dot_dimension_numbers<[1], [0], [0], [1], [0, 0, 1, 1], [], []>} : vector<160x6xbf16>, vector<6x128xbf16>, vector<160x128xf32> -> vector<160x128xf32>
    %353 = arith.addf %346, %352 : vector<160x128xf32>
    %c6_306 = arith.constant 6 : index
    %c13_307 = arith.constant 13 : index
    %c0_308 = arith.constant 0 : index
    %354 = vector.load %arg7[%c6_306, %c13_307, %c0_308] : memref<16x32x6xf32, #tpu.memory_space<vmem>>, vector<10x16x6xf32>
    %355 = vector.shape_cast %354 : vector<10x16x6xf32> to vector<160x6xf32>
    %356 = arith.truncf %355 : vector<160x6xf32> to vector<160x6xbf16>
    %c48 = arith.constant 48 : index
    %c0_309 = arith.constant 0 : index
    %c0_310 = arith.constant 0 : index
    %357 = vector.load %arg4[%c48, %c0_309, %c0_310] : memref<49x6x128xbf16, #tpu.memory_space<vmem>>, vector<1x6x128xbf16>
    %358 = vector.shape_cast %357 : vector<1x6x128xbf16> to vector<6x128xbf16>
    %cst_311 = arith.constant dense<0.000000e+00> : vector<160x128xf32>
    %359 = tpu.matmul %356, %358, %cst_311 {dimension_numbers = #tpu.dot_dimension_numbers<[1], [0], [0], [1], [0, 0, 1, 1], [], []>} : vector<160x6xbf16>, vector<6x128xbf16>, vector<160x128xf32> -> vector<160x128xf32>
    %360 = arith.addf %353, %359 : vector<160x128xf32>
    %361 = vector.shape_cast %360 : vector<160x128xf32> to vector<5x2x16x128xf32>
    %cst_312 = arith.constant dense<0xFF800000> : vector<5x16x128xf32>
    %362 = vector.multi_reduction <maximumf>, %361, %cst_312 [1] : vector<5x2x16x128xf32> to vector<5x16x128xf32>
    %c0_313 = arith.constant 0 : index
    %c0_314 = arith.constant 0 : index
    %363 = vector.load %arg5[%c0_313, %c0_314] : memref<1x128xf32, #tpu.memory_space<vmem>>, vector<1x128xf32>
    %364 = vector.shape_cast %363 : vector<1x128xf32> to vector<1x1x128xf32>
    %365 = vector.broadcast %364 : vector<1x1x128xf32> to vector<5x16x128xf32>
    %366 = arith.addf %362, %365 : vector<5x16x128xf32>
    %cst_315 = arith.constant 0.000000e+00 : f32
    %367 = vector.broadcast %cst_315 : f32 to vector<5x16x128xf32>
    %368 = arith.maximumf %366, %367 : vector<5x16x128xf32>
    %c0_316 = arith.constant 0 : index
    %c0_317 = arith.constant 0 : index
    %c0_318 = arith.constant 0 : index
    %c0_319 = arith.constant 0 : index
    %369 = vector.load %arg6[%c0_316, %c0_317, %c0_318, %c0_319] : memref<1x5x16x128xf32, #tpu.memory_space<vmem>>, vector<1x5x16x128xf32>
    %370 = vector.shape_cast %369 : vector<1x5x16x128xf32> to vector<5x16x128xf32>
    %371 = vector.shape_cast %368 : vector<5x16x128xf32> to vector<1x5x16x128xf32>
    tpu.vector_store %arg6[%c0_316, %c0_317, %c0_318, %c0_319], %371 {strides = array<i32>} : memref<1x5x16x128xf32, #tpu.memory_space<vmem>>, vector<1x5x16x128xf32>,
    return
  }
  func.func @transform_0(%arg0: i32) -> (i32, i32, i32, i32) {
    %c0_i32 = arith.constant 0 : i32
    %c0_i32_0 = arith.constant 0 : i32
    %c0_i32_1 = arith.constant 0 : i32
    %c0_i32_2 = arith.constant 0 : i32
    return %arg0, %c0_i32, %c0_i32_0, %c0_i32_1 : i32, i32, i32, i32
  }
  func.func @transform_1(%arg0: i32) -> (i32, i32) {
    %c0_i32 = arith.constant 0 : i32
    %c0_i32_0 = arith.constant 0 : i32
    %c0_i32_1 = arith.constant 0 : i32
    return %c0_i32, %c0_i32_0 : i32, i32
  }
  func.func @transform_2(%arg0: i32) -> (i32, i32) {
    %c0_i32 = arith.constant 0 : i32
    %c0_i32_0 = arith.constant 0 : i32
    %c0_i32_1 = arith.constant 0 : i32
    return %c0_i32, %c0_i32_0 : i32, i32
  }
  func.func @transform_3(%arg0: i32) -> (i32, i32, i32) {
    %c0_i32 = arith.constant 0 : i32
    %c0_i32_0 = arith.constant 0 : i32
    %c0_i32_1 = arith.constant 0 : i32
    %c0_i32_2 = arith.constant 0 : i32
    return %c0_i32, %c0_i32_0, %c0_i32_1 : i32, i32, i32
  }
  func.func @transform_4(%arg0: i32) -> (i32, i32) {
    %c0_i32 = arith.constant 0 : i32
    %c0_i32_0 = arith.constant 0 : i32
    %c0_i32_1 = arith.constant 0 : i32
    return %c0_i32, %c0_i32_0 : i32, i32
  }
  func.func @transform_5(%arg0: i32) -> (i32, i32, i32, i32) {
    %c0_i32 = arith.constant 0 : i32
    %c0_i32_0 = arith.constant 0 : i32
    %c0_i32_1 = arith.constant 0 : i32
    %c0_i32_2 = arith.constant 0 : i32
    return %arg0, %c0_i32, %c0_i32_0, %c0_i32_1 : i32, i32, i32, i32
  }
}

</mosaic_0001>

<llo_original>
// kernel: lenet5_forward.1
$region0: #{lenet5_forward.1}
  #allocation0 [shape = 'u32[]', space=smem, size = 0x4, offset = 0x4, fixed_abs, tag = 'smem constant byte address 0x4 - core index']
  #allocation1 [shape = 'u32[144,128]{1,0:T(1,128)}', space=vmem, size = 0x12000, scoped, tag = 'internal scratch']
  #allocation2 [shape = 'f32[16,32,6]{2,1,0:T(8,128)}', space=vmem, size = 0x40000, scoped, tag = 'scratch operand']
  %s0 = inlined_call_operand.vmem [shape: bf16[2,4,224,147], index: 0, kind: input, shape index: {}]
  %s1 = inlined_call_operand.vmem [shape: bf16[147,128], index: 1, kind: input, shape index: {}]
  %s2 = inlined_call_operand.vmem [shape: f32[1,128], index: 2, kind: input, shape index: {}]
  %s3 = inlined_call_operand.vmem [shape: bf16[49,6,128], index: 3, kind: input, shape index: {}]
  %s4 = inlined_call_operand.vmem [shape: f32[1,128], index: 4, kind: input, shape index: {}]
  %s5 = inlined_call_operand.vmem [shape: f32[2,5,16,128], index: 5, kind: output, shape index: {}]
  %s6 = sld [smem:[#allocation0]]
  $region53: #{lenet5_forward.1} parent=0
    _
  %s8 = ssub.s32 1, %s6
  %s9 = scalar_select 0, %s8, %s6
  loop: start=0, step=1, limit=4
  $region2: #{lenet5_forward.1} parent=0 // loop_pre_header
    _
  $region3: #{lenet5_forward.1} parent=0 // loop_header
    %s11 = sphi 0, %s15
    %p12 = scmp.ge.s32.totalorder %s11, 4
    %s21 = sphi 0, %s23
    %s24 = sphi 0, %s21
    %s25 = sphi 0, %s24
    %s41 = sphi 0, %s25
    %s45 = sphi 0, %s45
    %s47 = sphi 0, %s45
    %s48 = sphi 0, %s47
    %s62 = sphi 0, %s48
    %s66 = sphi 0, %s66
    %s68 = sphi 0, %s66
    %s69 = sphi 0, %s68
    %s83 = sphi 0, %s69
    %s87 = sphi 0, %s87
    %s89 = sphi 0, %s87
    %s90 = sphi 0, %s89
    %s104 = sphi 0, %s90
    %s108 = sphi 0, %s108
    %s110 = sphi 0, %s108
    %s111 = sphi 0, %s110
    %s125 = sphi 0, %s111
    %s131 = sphi 0, %s133
    %s134 = sphi 0, %s131
    %s135 = sphi 0, %s134
    %s151 = sphi 0, %s135
  $region4: #{lenet5_forward.1} parent=0 // loop_header_branch
    %14 = sbr.rel (%p12) target = $region8
  $region5: #{lenet5_forward.1} parent=0 // loop_body
    %s16 = ssub.s32 %s11, 1
    %s17 = ssub.s32 %s11, 2
    %s18 = sadd.s32 %s11, 1
    %s19 = ssub.s32 %s11, %s18
    %p20 = scmp.eq.s32.totalorder %s19, 0
    %s22 = sadd.s32 %s21, 1
    %s23 = scalar_select %p20, %s21, %s22
    %p26 = pneg %p20
    %p27 = scmp.eq.s32.totalorder %s11, 1
    %p28 = por %p26, %p27
    %p29 = scmp.ne.s32.totalorder %s21, %s24
    %p30 = scmp.eq.s32.totalorder %s11, 0
    %p31 = por %p29, %p30
    %p32 = scmp.ne.s32.totalorder %s21, %s24
    %p33 = scmp.eq.s32.totalorder %s16, 1
    %p34 = por %p32, %p33
    %p35 = scmp.ne.s32.totalorder %s24, %s25
    %p36 = scmp.eq.s32.totalorder %s16, 0
    %p37 = por %p35, %p36
    %p38 = scmp.ne.s32.totalorder %s24, %s25
    %p39 = scmp.eq.s32.totalorder %s17, 1
    %p40 = por %p38, %p39
    %p42 = scmp.ne.s32.totalorder %s25, %s41
    %p43 = scmp.eq.s32.totalorder %s17, 0
    %p44 = por %p42, %p43
    %s46 = sadd.s32 %s45, 1
    %p49 = scmp.eq.s32.totalorder %s11, 1
    %p50 = scmp.ne.s32.totalorder %s45, %s47
    %p51 = scmp.eq.s32.totalorder %s11, 0
    %p52 = por %p50, %p51
    %p53 = scmp.ne.s32.totalorder %s45, %s47
    %p54 = scmp.eq.s32.totalorder %s16, 1
    %p55 = por %p53, %p54
    %p56 = scmp.ne.s32.totalorder %s47, %s48
    %p57 = scmp.eq.s32.totalorder %s16, 0
    %p58 = por %p56, %p57
    %p59 = scmp.ne.s32.totalorder %s47, %s48
    %p60 = scmp.eq.s32.totalorder %s17, 1
    %p61 = por %p59, %p60
    %p63 = scmp.ne.s32.totalorder %s48, %s62
    %p64 = scmp.eq.s32.totalorder %s17, 0
    %p65 = por %p63, %p64
    %s67 = sadd.s32 %s66, 1
    %p70 = scmp.eq.s32.totalorder %s11, 1
    %p71 = scmp.ne.s32.totalorder %s66, %s68
    %p72 = scmp.eq.s32.totalorder %s11, 0
    %p73 = por %p71, %p72
    %p74 = scmp.ne.s32.totalorder %s66, %s68
    %p75 = scmp.eq.s32.totalorder %s16, 1
    %p76 = por %p74, %p75
    %p77 = scmp.ne.s32.totalorder %s68, %s69
    %p78 = scmp.eq.s32.totalorder %s16, 0
    %p79 = por %p77, %p78
    %p80 = scmp.ne.s32.totalorder %s68, %s69
    %p81 = scmp.eq.s32.totalorder %s17, 1
    %p82 = por %p80, %p81
    %p84 = scmp.ne.s32.totalorder %s69, %s83
    %p85 = scmp.eq.s32.totalorder %s17, 0
    %p86 = por %p84, %p85
    %s88 = sadd.s32 %s87, 1
    %p91 = scmp.eq.s32.totalorder %s11, 1
    %p92 = scmp.ne.s32.totalorder %s87, %s89
    %p93 = scmp.eq.s32.totalorder %s11, 0
    %p94 = por %p92, %p93
    %p95 = scmp.ne.s32.totalorder %s87, %s89
    %p96 = scmp.eq.s32.totalorder %s16, 1
    %p97 = por %p95, %p96
    %p98 = scmp.ne.s32.totalorder %s89, %s90
    %p99 = scmp.eq.s32.totalorder %s16, 0
    %p100 = por %p98, %p99
    %p101 = scmp.ne.s32.totalorder %s89, %s90
    %p102 = scmp.eq.s32.totalorder %s17, 1
    %p103 = por %p101, %p102
    %p105 = scmp.ne.s32.totalorder %s90, %s104
    %p106 = scmp.eq.s32.totalorder %s17, 0
    %p107 = por %p105, %p106
    %s109 = sadd.s32 %s108, 1
    %p112 = scmp.eq.s32.totalorder %s11, 1
    %p113 = scmp.ne.s32.totalorder %s108, %s110
    %p114 = scmp.eq.s32.totalorder %s11, 0
    %p115 = por %p113, %p114
    %p116 = scmp.ne.s32.totalorder %s108, %s110
    %p117 = scmp.eq.s32.totalorder %s16, 1
    %p118 = por %p116, %p117
    %p119 = scmp.ne.s32.totalorder %s110, %s111
    %p120 = scmp.eq.s32.totalorder %s16, 0
    %p121 = por %p119, %p120
    %p122 = scmp.ne.s32.totalorder %s110, %s111
    %p123 = scmp.eq.s32.totalorder %s17, 1
    %p124 = por %p122, %p123
    %p126 = scmp.ne.s32.totalorder %s111, %s125
    %p127 = scmp.eq.s32.totalorder %s17, 0
    %p128 = por %p126, %p127
    %s129 = ssub.s32 %s11, %s18
    %p130 = scmp.eq.s32.totalorder %s129, 0
    %s132 = sadd.s32 %s131, 1
    %s133 = scalar_select %p130, %s131, %s132
    %p136 = pneg %p130
    %p137 = scmp.eq.s32.totalorder %s11, 1
    %p138 = por %p136, %p137
    %p139 = scmp.ne.s32.totalorder %s131, %s134
    %p140 = scmp.eq.s32.totalorder %s11, 0
    %p141 = por %p139, %p140
    %p142 = scmp.ne.s32.totalorder %s131, %s134
    %p143 = scmp.eq.s32.totalorder %s16, 1
    %p144 = por %p142, %p143
    %p145 = scmp.ne.s32.totalorder %s134, %s135
    %p146 = scmp.eq.s32.totalorder %s16, 0
    %p147 = por %p145, %p146
    %p148 = scmp.ne.s32.totalorder %s134, %s135
    %p149 = scmp.eq.s32.totalorder %s17, 1
    %p150 = por %p148, %p149
    %p152 = scmp.ne.s32.totalorder %s135, %s151
    %p153 = scmp.eq.s32.totalorder %s17, 0
    %p154 = por %p152, %p153
    %p155 = scmp.le.s32.totalorder 1, %s11
    %p156 = scmp.lt.s32.totalorder %s11, 3
    %p157 = pnand %p155, %p156
    %p158 = pneg %p157
    // Predicated region
    $region9: #{lenet5_forward.1} parent=5 // pred_check
      _
    $region10: #{lenet5_forward.1} parent=5 // pred_check_branch
      %160 = sbr.rel (%p157) target = $region12
    $region11: #{lenet5_forward.1} parent=5 // pred_region
      %s161 = ssub.s32 %s11, 1
      // Predicated region
      $region13: #{lenet5_forward.1} parent=11 // pred_check
        %p162 = pneg %p58
      $region14: #{lenet5_forward.1} parent=11 // pred_check_branch
        %164 = sbr.rel (%p162) target = $region16
      $region15: #{lenet5_forward.1} parent=11 // pred_region
        _
      $region16: #{lenet5_forward.1} parent=11 // pred_fallthru
        _
      // Predicated region
      $region17: #{lenet5_forward.1} parent=11 // pred_check
        %p165 = pneg %p79
      $region18: #{lenet5_forward.1} parent=11 // pred_check_branch
        %167 = sbr.rel (%p165) target = $region20
      $region19: #{lenet5_forward.1} parent=11 // pred_region
        _
      $region20: #{lenet5_forward.1} parent=11 // pred_fallthru
        _
      // Predicated region
      $region21: #{lenet5_forward.1} parent=11 // pred_check
        %p168 = pneg %p100
      $region22: #{lenet5_forward.1} parent=11 // pred_check_branch
        %170 = sbr.rel (%p168) target = $region24
      $region23: #{lenet5_forward.1} parent=11 // pred_region
        _
      $region24: #{lenet5_forward.1} parent=11 // pred_fallthru
        _
      // Predicated region
      $region25: #{lenet5_forward.1} parent=11 // pred_check
        %p171 = pneg %p121
      $region26: #{lenet5_forward.1} parent=11 // pred_check_branch
        %173 = sbr.rel (%p171) target = $region28
      $region27: #{lenet5_forward.1} parent=11 // pred_region
        _
      $region28: #{lenet5_forward.1} parent=11 // pred_fallthru
        _
    $region12: #{lenet5_forward.1} parent=5 // pred_fallthru
      _
    %p174 = scmp.lt.s32.totalorder %s11, 2
    // Predicated region
    $region29: #{lenet5_forward.1} parent=5 // pred_check
      %p175 = pneg %p174
    $region30: #{lenet5_forward.1} parent=5 // pred_check_branch
      %177 = sbr.rel (%p175) target = $region32
    $region31: #{lenet5_forward.1} parent=5 // pred_region
      // Predicated region
      $region33: #{lenet5_forward.1} parent=31 // pred_check
        %p178 = pneg %p31
      $region34: #{lenet5_forward.1} parent=31 // pred_check_branch
        %180 = sbr.rel (%p178) target = $region36
      $region35: #{lenet5_forward.1} parent=31 // pred_region
        %p181 = scmp.lt.s32.totalorder %s11, 1
        %s182 = scalar_select %p181, %s11, 1
        %s183 = smul.addr %s182, 224
        %s184 = smul.addr %s183, 4
        %s185 = scalar_lea.vmem %s0, %s184
      $region36: #{lenet5_forward.1} parent=31 // pred_fallthru
        _
    $region32: #{lenet5_forward.1} parent=5 // pred_fallthru
      _
    %p186 = scmp.le.s32.totalorder 1, %s11
    %p187 = scmp.lt.s32.totalorder %s11, 3
    %p188 = pnand %p186, %p187
    %p189 = pneg %p188
    // Predicated region
    $region37: #{lenet5_forward.1} parent=5 // pred_check
      _
    $region38: #{lenet5_forward.1} parent=5 // pred_check_branch
      %191 = sbr.rel (%p188) target = $region40
    $region39: #{lenet5_forward.1} parent=5 // pred_region
      %s192 = ssub.s32 %s11, 1
      %p193 = scmp.lt.s32.totalorder %s16, 1
      %s194 = scalar_select %p193, %s16, 1
      %s195 = smul.addr %s194, 224
      %s196 = smul.addr %s195, 4
      %s197 = scalar_lea.vmem %s0, %s196
      %p198 = pneg %p37
      %p199 = pneg %p34
      %p200 = pneg %p58
      %p201 = pneg %p55
      %p202 = pneg %p79
      %p203 = pneg %p76
      %p204 = pneg %p100
      %p205 = pneg %p97
      %p206 = pneg %p121
      %p207 = pneg %p118
      %p208 = pneg %p147
      %p209 = pneg %p144
      %p210 = scmp.lt.s32.totalorder %s16, 1
      %s211 = scalar_select %p210, %s16, 1
      %s212 = smul.addr %s211, 10
      %s213 = smul.addr %s212, 8
      %s214 = scalar_lea.vmem %s5, %s213
      %p215 = scmp.lt.s32.totalorder %s16, 1
      %s216 = scalar_select %p215, %s16, 1
      %s217 = smul.addr %s216, 224
      %s218 = smul.addr %s217, 4
      %s219 = scalar_lea.vmem %s0, %s218
      %p220 = scmp.lt.s32.totalorder %s16, 1
      %s221 = scalar_select %p220, %s16, 1
      %s222 = smul.addr %s221, 10
      %s223 = smul.addr %s222, 8
      %s224 = scalar_lea.vmem %s5, %s223
      %v226 = vld [vmem:[%s219] sm:$0xff]
      %v227 = vld [vmem:[%s219 + $0x8] sm:$0xff]
      %v228 = vld [vmem:[%s219 + $0x10] sm:$0xff]
      %v229 = vld [vmem:[%s219 + $0x18] sm:$0xff]
      %v230 = vld [vmem:[%s219 + $0x20] sm:$0xff]
      %v231 = vld [vmem:[%s219 + $0x28] sm:$0xff]
      %v232 = vld [vmem:[%s219 + $0x30] sm:$0xff]
      %v233 = vld [vmem:[%s219 + $0x38] sm:$0xff]
      %v234 = vld [vmem:[%s219 + $0x40] sm:$0xff]
      %v235 = vld [vmem:[%s219 + $0x48] sm:$0xff]
      %v236 = vld [vmem:[%s219 + $0x50] sm:$0xff]
      %v237 = vld [vmem:[%s219 + $0x58] sm:$0xff]
      %v238 = vld [vmem:[%s219 + $0x60] sm:$0xff]
      %v239 = vld [vmem:[%s219 + $0x68] sm:$0xff]
      %v240 = vld [vmem:[%s219 + $0x70] sm:$0xff]
      %v241 = vld [vmem:[%s219 + $0x78] sm:$0xff]
      %v242 = vld [vmem:[%s219 + $0x80] sm:$0xff]
      %v243 = vld [vmem:[%s219 + $0x88] sm:$0xff]
      %v244 = vld [vmem:[%s219 + $0x90] sm:$0xff]
      %v245 = vld [vmem:[%s219 + $0x98] sm:$0xff]
      %v246 = vld [vmem:[%s219 + $0xa0] sm:$0xff]
      %v247 = vld [vmem:[%s219 + $0xa8] sm:$0xff]
      %v248 = vld [vmem:[%s219 + $0xb0] sm:$0xff]
      %v249 = vld [vmem:[%s219 + $0xb8] sm:$0xff]
      %v250 = vld [vmem:[%s219 + $0xc0] sm:$0xff]
      %v251 = vld [vmem:[%s219 + $0xc8] sm:$0xff]
      %v252 = vld [vmem:[%s219 + $0xd0] sm:$0xff]
      %v253 = vld [vmem:[%s219 + $0xd8] sm:$0xff]
      %v254 = vld [vmem:[%s219 + $0xe0] sm:$0xff]
      %v255 = vld [vmem:[%s219 + $0xe8] sm:$0xff]
      %v256 = vld [vmem:[%s219 + $0xf0] sm:$0xff]
      %v257 = vld [vmem:[%s219 + $0xf8] sm:$0xff]
      %v258 = vld [vmem:[%s219 + $0x100] sm:$0xff]
      %v259 = vld [vmem:[%s219 + $0x108] sm:$0xff]
      %v260 = vld [vmem:[%s219 + $0x110] sm:$0xff]
      %v261 = vld [vmem:[%s219 + $0x118] sm:$0xff]
      %v262 = vld [vmem:[%s219 + $0x120] sm:$0xff]
      %v263 = vld [vmem:[%s219 + $0x128] sm:$0xff]
      %v264 = vld [vmem:[%s219 + $0x130] sm:$0xff]
      %v265 = vld [vmem:[%s219 + $0x138] sm:$0xff]
      %v266 = vld [vmem:[%s219 + $0x140] sm:$0xff]
      %v267 = vld [vmem:[%s219 + $0x148] sm:$0xff]
      %v268 = vld [vmem:[%s219 + $0x150] sm:$0xff]
      %v269 = vld [vmem:[%s219 + $0x158] sm:$0xff]
      %v270 = vld [vmem:[%s219 + $0x160] sm:$0xff]
      %v271 = vld [vmem:[%s219 + $0x168] sm:$0xff]
      %v272 = vld [vmem:[%s219 + $0x170] sm:$0xff]
      %v273 = vld [vmem:[%s219 + $0x178] sm:$0xff]
      %v274 = vld [vmem:[%s219 + $0x180] sm:$0xff]
      %v275 = vld [vmem:[%s219 + $0x188] sm:$0xff]
      %v276 = vld [vmem:[%s219 + $0x190] sm:$0xff]
      %v277 = vld [vmem:[%s219 + $0x198] sm:$0xff]
      %v278 = vld [vmem:[%s219 + $0x1a0] sm:$0xff]
      %v279 = vld [vmem:[%s219 + $0x1a8] sm:$0xff]
      %v280 = vld [vmem:[%s219 + $0x1b0] sm:$0xff]
      %v281 = vld [vmem:[%s219 + $0x1b8] sm:$0xff]
      %v282 = vld [vmem:[%s219 + $0x1c0] sm:$0xff]
      %v283 = vld [vmem:[%s219 + $0x1c8] sm:$0xff]
      %v284 = vld [vmem:[%s219 + $0x1d0] sm:$0xff]
      %v285 = vld [vmem:[%s219 + $0x1d8] sm:$0xff]
      %v286 = vld [vmem:[%s219 + $0x1e0] sm:$0xff]
      %v287 = vld [vmem:[%s219 + $0x1e8] sm:$0xff]
      %v288 = vld [vmem:[%s219 + $0x1f0] sm:$0xff]
      %v289 = vld [vmem:[%s219 + $0x1f8] sm:$0xff]
      %v290 = vld [vmem:[%s219 + $0x200] sm:$0xff]
      %v291 = vld [vmem:[%s219 + $0x208] sm:$0xff]
      %v292 = vld [vmem:[%s219 + $0x210] sm:$0xff]
      %v293 = vld [vmem:[%s219 + $0x218] sm:$0xff]
      %v294 = vld [vmem:[%s219 + $0x220] sm:$0xff]
      %v295 = vld [vmem:[%s219 + $0x228] sm:$0xff]
      %v296 = vld [vmem:[%s219 + $0x230] sm:$0xff]
      %v297 = vld [vmem:[%s219 + $0x238] sm:$0xff]
      %v298 = vld [vmem:[%s219 + $0x240] sm:$0xff]
      %v299 = vld [vmem:[%s219 + $0x248] sm:$0xff]
      %v300 = vld [vmem:[%s219 + $0x250] sm:$0xff]
      %v301 = vld [vmem:[%s219 + $0x258] sm:$0xff]
      %v302 = vld [vmem:[%s219 + $0x260] sm:$0xff]
      %v303 = vld [vmem:[%s219 + $0x268] sm:$0xff]
      %v304 = vld [vmem:[%s219 + $0x270] sm:$0xff]
      %v305 = vld [vmem:[%s219 + $0x278] sm:$0xff]
      %v306 = vld [vmem:[%s219 + $0x280] sm:$0xff]
      %v307 = vld [vmem:[%s219 + $0x288] sm:$0xff]
      %v308 = vld [vmem:[%s219 + $0x290] sm:$0xff]
      %v309 = vld [vmem:[%s219 + $0x298] sm:$0xff]
      %v310 = vld [vmem:[%s219 + $0x2a0] sm:$0xff]
      %v311 = vld [vmem:[%s219 + $0x2a8] sm:$0xff]
      %v312 = vld [vmem:[%s219 + $0x2b0] sm:$0xff]
      %v313 = vld [vmem:[%s219 + $0x2b8] sm:$0xff]
      %v314 = vld [vmem:[%s219 + $0x2c0] sm:$0xff]
      %v315 = vld [vmem:[%s219 + $0x2c8] sm:$0xff]
      %v316 = vld [vmem:[%s219 + $0x2d0] sm:$0xff]
      %v317 = vld [vmem:[%s219 + $0x2d8] sm:$0xff]
      %v318 = vld [vmem:[%s219 + $0x2e0] sm:$0xff]
      %v319 = vld [vmem:[%s219 + $0x2e8] sm:$0xff]
      %v320 = vld [vmem:[%s219 + $0x2f0] sm:$0xff]
      %v321 = vld [vmem:[%s219 + $0x2f8] sm:$0xff]
      %v322 = vld [vmem:[%s219 + $0x300] sm:$0xff]
      %v323 = vld [vmem:[%s219 + $0x308] sm:$0xff]
      %v324 = vld [vmem:[%s219 + $0x310] sm:$0xff]
      %v325 = vld [vmem:[%s219 + $0x318] sm:$0xff]
      %v326 = vld [vmem:[%s219 + $0x320] sm:$0xff]
      %v327 = vld [vmem:[%s219 + $0x328] sm:$0xff]
      %v328 = vld [vmem:[%s219 + $0x330] sm:$0xff]
      %v329 = vld [vmem:[%s219 + $0x338] sm:$0xff]
      %v330 = vld [vmem:[%s219 + $0x340] sm:$0xff]
      %v331 = vld [vmem:[%s219 + $0x348] sm:$0xff]
      %v332 = vld [vmem:[%s219 + $0x350] sm:$0xff]
      %v333 = vld [vmem:[%s219 + $0x358] sm:$0xff]
      %v334 = vld [vmem:[%s219 + $0x360] sm:$0xff]
      %v335 = vld [vmem:[%s219 + $0x368] sm:$0xff]
      %v336 = vld [vmem:[%s219 + $0x370] sm:$0xff]
      %v337 = vld [vmem:[%s219 + $0x378] sm:$0xff]
      %v338 = vld [vmem:[%s1] sm:$0xf]
      %v339 = vld [vmem:[%s1 + $0x4] sm:$0xf]
      %v340 = vld [vmem:[%s1 + $0x8] sm:$0xf]
      %v341 = vld [vmem:[%s1 + $0xc] sm:$0xf]
      %v342 = vld [vmem:[%s1 + $0x10] sm:$0xf]
      %v343 = vld [vmem:[%s1 + $0x14] sm:$0xf]
      %v344 = vld [vmem:[%s1 + $0x18] sm:$0xf]
      %v345 = vld [vmem:[%s1 + $0x1c] sm:$0xf]
      %v346 = vld [vmem:[%s1 + $0x20] sm:$0xf]
      %v347 = vld [vmem:[%s1 + $0x24] sm:$0xf]
      %v348 = vld [vmem:[%s1 + $0x28] sm:$0xf]
      %v349 = vld [vmem:[%s1 + $0x2c] sm:$0xf]
      %v350 = vld [vmem:[%s1 + $0x30] sm:$0xf]
      %v351 = vld [vmem:[%s1 + $0x34] sm:$0xf]
      %v352 = vld [vmem:[%s1 + $0x38] sm:$0xf]
      %v353 = vld [vmem:[%s1 + $0x3c] sm:$0xf]
      %v354 = vld [vmem:[%s1 + $0x40] sm:$0xf]
      %v355 = vld [vmem:[%s1 + $0x44] sm:$0xf]
      %v356 = vld [vmem:[%s1 + $0x48] sm:$0x3]
      %v469 = vunpack.c.l.b16 %v226
      %v470 = vunpack.c.h.b16 %v226
      %v471 = vunpack.c.l.b16 %v227
      %v472 = vunpack.c.h.b16 %v227
      %v473 = vunpack.c.l.b16 %v228
      %v474 = vunpack.c.h.b16 %v228
      %v475 = vunpack.c.l.b16 %v229
      %v476 = vunpack.c.h.b16 %v229
      %v477 = vunpack.c.l.b16 %v230
      %v478 = vunpack.c.h.b16 %v230
      %v479 = vunpack.c.l.b16 %v231
      %v480 = vunpack.c.h.b16 %v231
      %v481 = vunpack.c.l.b16 %v232
      %v482 = vunpack.c.h.b16 %v232
      %v483 = vunpack.c.l.b16 %v233
      %v484 = vunpack.c.h.b16 %v233
      %v485 = vunpack.c.l.b16 %v234
      %v486 = vunpack.c.h.b16 %v234
      %v487 = vunpack.c.l.b16 %v235
      %v488 = vunpack.c.h.b16 %v235
      %v489 = vunpack.c.l.b16 %v236
      %v490 = vunpack.c.h.b16 %v236
      %v491 = vunpack.c.l.b16 %v237
      %v492 = vunpack.c.h.b16 %v237
      %v493 = vunpack.c.l.b16 %v238
      %v494 = vunpack.c.h.b16 %v238
      %v495 = vunpack.c.l.b16 %v239
      %v496 = vunpack.c.h.b16 %v239
      %v497 = vunpack.c.l.b16 %v240
      %v498 = vunpack.c.h.b16 %v240
      %v499 = vunpack.c.l.b16 %v241
      %v500 = vunpack.c.h.b16 %v241
      %v501 = vunpack.c.l.b16 %v242
      %v502 = vunpack.c.h.b16 %v242
      %v503 = vunpack.c.l.b16 %v243
      %v504 = vunpack.c.h.b16 %v243
      %v505 = vunpack.c.l.b16 %v244
      %v506 = vunpack.c.h.b16 %v244
      %v507 = vunpack.c.l.b16 %v245
      %v508 = vunpack.c.h.b16 %v245
      %v509 = vunpack.c.l.b16 %v246
      %v510 = vunpack.c.h.b16 %v246
      %v511 = vunpack.c.l.b16 %v247
      %v512 = vunpack.c.h.b16 %v247
      %v513 = vunpack.c.l.b16 %v248
      %v514 = vunpack.c.h.b16 %v248
      %v515 = vunpack.c.l.b16 %v249
      %v516 = vunpack.c.h.b16 %v249
      %v517 = vunpack.c.l.b16 %v250
      %v518 = vunpack.c.h.b16 %v250
      %v519 = vunpack.c.l.b16 %v251
      %v520 = vunpack.c.h.b16 %v251
      %v521 = vunpack.c.l.b16 %v252
      %v522 = vunpack.c.h.b16 %v252
      %v523 = vunpack.c.l.b16 %v253
      %v524 = vunpack.c.h.b16 %v253
      %v525 = vunpack.c.l.b16 %v254
      %v526 = vunpack.c.h.b16 %v254
      %v527 = vunpack.c.l.b16 %v255
      %v528 = vunpack.c.h.b16 %v255
      %v529 = vunpack.c.l.b16 %v256
      %v530 = vunpack.c.h.b16 %v256
      %v531 = vunpack.c.l.b16 %v257
      %v532 = vunpack.c.h.b16 %v257
      %v533 = vunpack.c.l.b16 %v258
      %v534 = vunpack.c.h.b16 %v258
      %v535 = vunpack.c.l.b16 %v259
      %v536 = vunpack.c.h.b16 %v259
      %v537 = vunpack.c.l.b16 %v260
      %v538 = vunpack.c.h.b16 %v260
      %v539 = vunpack.c.l.b16 %v261
      %v540 = vunpack.c.h.b16 %v261
      %v541 = vunpack.c.l.b16 %v262
      %v542 = vunpack.c.h.b16 %v262
      %v543 = vunpack.c.l.b16 %v263
      %v544 = vunpack.c.h.b16 %v263
      %v545 = vunpack.c.l.b16 %v264
      %v546 = vunpack.c.h.b16 %v264
      %v547 = vunpack.c.l.b16 %v265
      %v548 = vunpack.c.h.b16 %v265
      %v549 = vunpack.c.l.b16 %v266
      %v550 = vunpack.c.h.b16 %v266
      %v551 = vunpack.c.l.b16 %v267
      %v552 = vunpack.c.h.b16 %v267
      %v553 = vunpack.c.l.b16 %v268
      %v554 = vunpack.c.h.b16 %v268
      %v555 = vunpack.c.l.b16 %v269
      %v556 = vunpack.c.h.b16 %v269
      %v557 = vunpack.c.l.b16 %v270
      %v558 = vunpack.c.h.b16 %v270
      %v559 = vunpack.c.l.b16 %v271
      %v560 = vunpack.c.h.b16 %v271
      %v561 = vunpack.c.l.b16 %v272
      %v562 = vunpack.c.h.b16 %v272
      %v563 = vunpack.c.l.b16 %v273
      %v564 = vunpack.c.h.b16 %v273
      %v565 = vunpack.c.l.b16 %v274
      %v566 = vunpack.c.h.b16 %v274
      %v567 = vunpack.c.l.b16 %v275
      %v568 = vunpack.c.h.b16 %v275
      %v569 = vunpack.c.l.b16 %v276
      %v570 = vunpack.c.h.b16 %v276
      %v571 = vunpack.c.l.b16 %v277
      %v572 = vunpack.c.h.b16 %v277
      %v573 = vunpack.c.l.b16 %v278
      %v574 = vunpack.c.h.b16 %v278
      %v575 = vunpack.c.l.b16 %v279
      %v576 = vunpack.c.h.b16 %v279
      %v577 = vunpack.c.l.b16 %v280
      %v578 = vunpack.c.h.b16 %v280
      %v579 = vunpack.c.l.b16 %v281
      %v580 = vunpack.c.h.b16 %v281
      %v581 = vunpack.c.l.b16 %v282
      %v582 = vunpack.c.h.b16 %v282
      %v583 = vunpack.c.l.b16 %v283
      %v584 = vunpack.c.h.b16 %v283
      %v585 = vunpack.c.l.b16 %v284
      %v586 = vunpack.c.h.b16 %v284
      %v587 = vunpack.c.l.b16 %v285
      %v588 = vunpack.c.h.b16 %v285
      %v589 = vunpack.c.l.b16 %v286
      %v590 = vunpack.c.h.b16 %v286
      %v591 = vunpack.c.l.b16 %v287
      %v592 = vunpack.c.h.b16 %v287
      %v593 = vunpack.c.l.b16 %v288
      %v594 = vunpack.c.h.b16 %v288
      %v595 = vunpack.c.l.b16 %v289
      %v596 = vunpack.c.h.b16 %v289
      %v597 = vunpack.c.l.b16 %v290
      %v598 = vunpack.c.h.b16 %v290
      %v599 = vunpack.c.l.b16 %v291
      %v600 = vunpack.c.h.b16 %v291
      %v601 = vunpack.c.l.b16 %v292
      %v602 = vunpack.c.h.b16 %v292
      %v603 = vunpack.c.l.b16 %v293
      %v604 = vunpack.c.h.b16 %v293
      %v605 = vunpack.c.l.b16 %v294
      %v606 = vunpack.c.h.b16 %v294
      %v607 = vunpack.c.l.b16 %v295
      %v608 = vunpack.c.h.b16 %v295
      %v609 = vunpack.c.l.b16 %v296
      %v610 = vunpack.c.h.b16 %v296
      %v611 = vunpack.c.l.b16 %v297
      %v612 = vunpack.c.h.b16 %v297
      %v613 = vunpack.c.l.b16 %v298
      %v614 = vunpack.c.h.b16 %v298
      %v615 = vunpack.c.l.b16 %v299
      %v616 = vunpack.c.h.b16 %v299
      %v617 = vunpack.c.l.b16 %v300
      %v618 = vunpack.c.h.b16 %v300
      %v619 = vunpack.c.l.b16 %v301
      %v620 = vunpack.c.h.b16 %v301
      %v621 = vunpack.c.l.b16 %v302
      %v622 = vunpack.c.h.b16 %v302
      %v623 = vunpack.c.l.b16 %v303
      %v624 = vunpack.c.h.b16 %v303
      %v625 = vunpack.c.l.b16 %v304
      %v626 = vunpack.c.h.b16 %v304
      %v627 = vunpack.c.l.b16 %v305
      %v628 = vunpack.c.h.b16 %v305
      %v629 = vunpack.c.l.b16 %v306
      %v630 = vunpack.c.h.b16 %v306
      %v631 = vunpack.c.l.b16 %v307
      %v632 = vunpack.c.h.b16 %v307
      %v633 = vunpack.c.l.b16 %v308
      %v634 = vunpack.c.h.b16 %v308
      %v635 = vunpack.c.l.b16 %v309
      %v636 = vunpack.c.h.b16 %v309
      %v637 = vunpack.c.l.b16 %v310
      %v638 = vunpack.c.h.b16 %v310
      %v639 = vunpack.c.l.b16 %v311
      %v640 = vunpack.c.h.b16 %v311
      %v641 = vunpack.c.l.b16 %v312
      %v642 = vunpack.c.h.b16 %v312
      %v643 = vunpack.c.l.b16 %v313
      %v644 = vunpack.c.h.b16 %v313
      %v645 = vunpack.c.l.b16 %v314
      %v646 = vunpack.c.h.b16 %v314
      %v647 = vunpack.c.l.b16 %v315
      %v648 = vunpack.c.h.b16 %v315
      %v649 = vunpack.c.l.b16 %v316
      %v650 = vunpack.c.h.b16 %v316
      %v651 = vunpack.c.l.b16 %v317
      %v652 = vunpack.c.h.b16 %v317
      %v653 = vunpack.c.l.b16 %v318
      %v654 = vunpack.c.h.b16 %v318
      %v655 = vunpack.c.l.b16 %v319
      %v656 = vunpack.c.h.b16 %v319
      %v657 = vunpack.c.l.b16 %v320
      %v658 = vunpack.c.h.b16 %v320
      %v659 = vunpack.c.l.b16 %v321
      %v660 = vunpack.c.h.b16 %v321
      %v661 = vunpack.c.l.b16 %v322
      %v662 = vunpack.c.h.b16 %v322
      %v663 = vunpack.c.l.b16 %v323
      %v664 = vunpack.c.h.b16 %v323
      %v665 = vunpack.c.l.b16 %v324
      %v666 = vunpack.c.h.b16 %v324
      %v667 = vunpack.c.l.b16 %v325
      %v668 = vunpack.c.h.b16 %v325
      %v669 = vunpack.c.l.b16 %v326
      %v670 = vunpack.c.h.b16 %v326
      %v671 = vunpack.c.l.b16 %v327
      %v672 = vunpack.c.h.b16 %v327
      %v673 = vunpack.c.l.b16 %v328
      %v674 = vunpack.c.h.b16 %v328
      %v675 = vunpack.c.l.b16 %v329
      %v676 = vunpack.c.h.b16 %v329
      %v677 = vunpack.c.l.b16 %v330
      %v678 = vunpack.c.h.b16 %v330
      %v679 = vunpack.c.l.b16 %v331
      %v680 = vunpack.c.h.b16 %v331
      %v681 = vunpack.c.l.b16 %v332
      %v682 = vunpack.c.h.b16 %v332
      %v683 = vunpack.c.l.b16 %v333
      %v684 = vunpack.c.h.b16 %v333
      %v685 = vunpack.c.l.b16 %v334
      %v686 = vunpack.c.h.b16 %v334
      %v687 = vunpack.c.l.b16 %v335
      %v688 = vunpack.c.h.b16 %v335
      %v689 = vunpack.c.l.b16 %v336
      %v690 = vunpack.c.h.b16 %v336
      %v691 = vunpack.c.l.b16 %v337
      %v692 = vunpack.c.h.b16 %v337
      %v693 = vpack.c.b16 %v471, %v469
      %v694 = vpack.c.b16 %v472, %v470
      %v695 = vpack.c.b16 %v475, %v473
      %v696 = vpack.c.b16 %v476, %v474
      %v697 = vpack.c.b16 %v479, %v477
      %v698 = vpack.c.b16 %v480, %v478
      %v699 = vpack.c.b16 %v483, %v481
      %v700 = vpack.c.b16 %v484, %v482
      %v701 = vpack.c.b16 %v487, %v485
      %v702 = vpack.c.b16 %v488, %v486
      %v703 = vpack.c.b16 %v491, %v489
      %v704 = vpack.c.b16 %v492, %v490
      %v705 = vpack.c.b16 %v495, %v493
      %v706 = vpack.c.b16 %v496, %v494
      %v707 = vpack.c.b16 %v499, %v497
      %v708 = vpack.c.b16 %v500, %v498
      %v709 = vpack.c.b16 %v503, %v501
      %v710 = vpack.c.b16 %v504, %v502
      %v711 = vpack.c.b16 %v507, %v505
      %v712 = vpack.c.b16 %v508, %v506
      %v713 = vpack.c.b16 %v511, %v509
      %v714 = vpack.c.b16 %v512, %v510
      %v715 = vpack.c.b16 %v515, %v513
      %v716 = vpack.c.b16 %v516, %v514
      %v717 = vpack.c.b16 %v519, %v517
      %v718 = vpack.c.b16 %v520, %v518
      %v719 = vpack.c.b16 %v523, %v521
      %v720 = vpack.c.b16 %v524, %v522
      %v721 = vpack.c.b16 %v527, %v525
      %v722 = vpack.c.b16 %v528, %v526
      %v723 = vpack.c.b16 %v531, %v529
      %v724 = vpack.c.b16 %v532, %v530
      %v725 = vpack.c.b16 %v535, %v533
      %v726 = vpack.c.b16 %v536, %v534
      %v727 = vpack.c.b16 %v539, %v537
      %v728 = vpack.c.b16 %v540, %v538
      %v729 = vpack.c.b16 %v543, %v541
      %v730 = vpack.c.b16 %v544, %v542
      %v731 = vpack.c.b16 %v547, %v545
      %v732 = vpack.c.b16 %v548, %v546
      %v733 = vpack.c.b16 %v551, %v549
      %v734 = vpack.c.b16 %v552, %v550
      %v735 = vpack.c.b16 %v555, %v553
      %v736 = vpack.c.b16 %v556, %v554
      %v737 = vpack.c.b16 %v559, %v557
      %v738 = vpack.c.b16 %v560, %v558
      %v739 = vpack.c.b16 %v563, %v561
      %v740 = vpack.c.b16 %v564, %v562
      %v741 = vpack.c.b16 %v567, %v565
      %v742 = vpack.c.b16 %v568, %v566
      %v743 = vpack.c.b16 %v571, %v569
      %v744 = vpack.c.b16 %v572, %v570
      %v745 = vpack.c.b16 %v575, %v573
      %v746 = vpack.c.b16 %v576, %v574
      %v747 = vpack.c.b16 %v579, %v577
      %v748 = vpack.c.b16 %v580, %v578
      %v749 = vpack.c.b16 %v583, %v581
      %v750 = vpack.c.b16 %v584, %v582
      %v751 = vpack.c.b16 %v587, %v585
      %v752 = vpack.c.b16 %v588, %v586
      %v753 = vpack.c.b16 %v591, %v589
      %v754 = vpack.c.b16 %v592, %v590
      %v755 = vpack.c.b16 %v595, %v593
      %v756 = vpack.c.b16 %v596, %v594
      %v757 = vpack.c.b16 %v599, %v597
      %v758 = vpack.c.b16 %v600, %v598
      %v759 = vpack.c.b16 %v603, %v601
      %v760 = vpack.c.b16 %v604, %v602
      %v761 = vpack.c.b16 %v607, %v605
      %v762 = vpack.c.b16 %v608, %v606
      %v763 = vpack.c.b16 %v611, %v609
      %v764 = vpack.c.b16 %v612, %v610
      %v765 = vpack.c.b16 %v615, %v613
      %v766 = vpack.c.b16 %v616, %v614
      %v767 = vpack.c.b16 %v619, %v617
      %v768 = vpack.c.b16 %v620, %v618
      %v769 = vpack.c.b16 %v623, %v621
      %v770 = vpack.c.b16 %v624, %v622
      %v771 = vpack.c.b16 %v627, %v625
      %v772 = vpack.c.b16 %v628, %v626
      %v773 = vpack.c.b16 %v631, %v629
      %v774 = vpack.c.b16 %v632, %v630
      %v775 = vpack.c.b16 %v635, %v633
      %v776 = vpack.c.b16 %v636, %v634
      %v777 = vpack.c.b16 %v639, %v637
      %v778 = vpack.c.b16 %v640, %v638
      %v779 = vpack.c.b16 %v643, %v641
      %v780 = vpack.c.b16 %v644, %v642
      %v781 = vpack.c.b16 %v647, %v645
      %v782 = vpack.c.b16 %v648, %v646
      %v783 = vpack.c.b16 %v651, %v649
      %v784 = vpack.c.b16 %v652, %v650
      %v785 = vpack.c.b16 %v655, %v653
      %v786 = vpack.c.b16 %v656, %v654
      %v787 = vpack.c.b16 %v659, %v657
      %v788 = vpack.c.b16 %v660, %v658
      %v789 = vpack.c.b16 %v663, %v661
      %v790 = vpack.c.b16 %v664, %v662
      %v791 = vpack.c.b16 %v667, %v665
      %v792 = vpack.c.b16 %v668, %v666
      %v793 = vpack.c.b16 %v671, %v669
      %v794 = vpack.c.b16 %v672, %v670
      %v795 = vpack.c.b16 %v675, %v673
      %v796 = vpack.c.b16 %v676, %v674
      %v797 = vpack.c.b16 %v679, %v677
      %v798 = vpack.c.b16 %v680, %v678
      %v799 = vpack.c.b16 %v683, %v681
      %v800 = vpack.c.b16 %v684, %v682
      %v801 = vpack.c.b16 %v687, %v685
      %v802 = vpack.c.b16 %v688, %v686
      %v803 = vpack.c.b16 %v691, %v689
      %v804 = vpack.c.b16 %v692, %v690
      %v880 = vunpack.c.l.b16 %v338
      %v881 = vunpack.c.l.b16 %v339
      %v882 = vunpack.c.l.b16 %v340
      %v883 = vunpack.c.l.b16 %v341
      %v884 = vunpack.c.l.b16 %v342
      %v885 = vunpack.c.l.b16 %v343
      %v886 = vunpack.c.l.b16 %v344
      %v887 = vunpack.c.l.b16 %v345
      %v888 = vunpack.c.l.b16 %v346
      %v889 = vunpack.c.l.b16 %v347
      %v890 = vunpack.c.l.b16 %v348
      %v891 = vunpack.c.l.b16 %v349
      %v892 = vunpack.c.l.b16 %v350
      %v893 = vunpack.c.l.b16 %v351
      %v894 = vunpack.c.l.b16 %v352
      %v895 = vunpack.c.l.b16 %v353
      %v896 = vunpack.c.l.b16 %v354
      %v897 = vunpack.c.l.b16 %v355
      %v898 = vunpack.c.l.b16 %v356
      %v899 = vpack.c.b16 %v881, %v880
      %v900 = vpack.c.b16 %v883, %v882
      %v901 = vpack.c.b16 %v885, %v884
      %v902 = vpack.c.b16 %v887, %v886
      %v903 = vpack.c.b16 %v889, %v888
      %v904 = vpack.c.b16 %v891, %v890
      %v905 = vpack.c.b16 %v893, %v892
      %v906 = vpack.c.b16 %v895, %v894
      %v907 = vpack.c.b16 %v897, %v896
      %v908 = vpack.c.b16 %v898, %v898
      %vm918 = vcmask 154624
      %v920 = vsel %vm918, %v694, 0
      %v923 = vsel %vm918, %v696, 0
      %v926 = vsel %vm918, %v698, 0
      %v929 = vsel %vm918, %v700, 0
      %v932 = vsel %vm918, %v702, 0
      %v935 = vsel %vm918, %v704, 0
      %v938 = vsel %vm918, %v706, 0
      %v941 = vsel %vm918, %v708, 0
      %v944 = vsel %vm918, %v710, 0
      %v947 = vsel %vm918, %v712, 0
      %v950 = vsel %vm918, %v714, 0
      %v953 = vsel %vm918, %v716, 0
      %v956 = vsel %vm918, %v718, 0
      %v959 = vsel %vm918, %v720, 0
      %v962 = vsel %vm918, %v722, 0
      %v965 = vsel %vm918, %v724, 0
      %v968 = vsel %vm918, %v726, 0
      %v971 = vsel %vm918, %v728, 0
      %v974 = vsel %vm918, %v730, 0
      %v977 = vsel %vm918, %v732, 0
      %v980 = vsel %vm918, %v734, 0
      %v983 = vsel %vm918, %v736, 0
      %v986 = vsel %vm918, %v738, 0
      %v989 = vsel %vm918, %v740, 0
      %v992 = vsel %vm918, %v742, 0
      %v995 = vsel %vm918, %v744, 0
      %v998 = vsel %vm918, %v746, 0
      %v1001 = vsel %vm918, %v748, 0
      %v1004 = vsel %vm918, %v750, 0
      %v1007 = vsel %vm918, %v752, 0
      %v1010 = vsel %vm918, %v754, 0
      %v1013 = vsel %vm918, %v756, 0
      %v1016 = vsel %vm918, %v758, 0
      %v1019 = vsel %vm918, %v760, 0
      %v1022 = vsel %vm918, %v762, 0
      %v1025 = vsel %vm918, %v764, 0
      %v1028 = vsel %vm918, %v766, 0
      %v1031 = vsel %vm918, %v768, 0
      %v1034 = vsel %vm918, %v770, 0
      %v1037 = vsel %vm918, %v772, 0
      %v1040 = vsel %vm918, %v774, 0
      %v1043 = vsel %vm918, %v776, 0
      %v1046 = vsel %vm918, %v778, 0
      %v1049 = vsel %vm918, %v780, 0
      %v1052 = vsel %vm918, %v782, 0
      %v1055 = vsel %vm918, %v784, 0
      %v1058 = vsel %vm918, %v786, 0
      %v1061 = vsel %vm918, %v788, 0
      %v1064 = vsel %vm918, %v790, 0
      %v1067 = vsel %vm918, %v792, 0
      %v1070 = vsel %vm918, %v794, 0
      %v1073 = vsel %vm918, %v796, 0
      %v1076 = vsel %vm918, %v798, 0
      %v1079 = vsel %vm918, %v800, 0
      %v1082 = vsel %vm918, %v802, 0
      %v1085 = vsel %vm918, %v804, 0
      %vm1087 = vcmask 1040384
      %vm1088 = vcmask 1041408
      %v1089 = vsel %vm1087, 4294967295, 65535
      %v1090 = vsel %vm1088, %v1089, 0
      %v1092 = vand.u32 %v908, %v1090
      %1094 = vmatprep.subr.bf16.mxu0 0
      %1095 = vmatpush1.bf16.msra.mxu0 %v899
      %1096 = vmatprep.subr.bf16.mxu0 0
      %1097 = vmatpush1.bf16.msra.mxu0 %v900
      %1098 = vmatprep.subr.bf16.mxu0 0
      %1099 = vmatpush1.bf16.msra.mxu0 %v901
      %1100 = vmatprep.subr.bf16.mxu0 0
      %1101 = vmatpush1.bf16.msra.mxu0 %v902
      %1102 = vmatprep.subr.bf16.mxu0 0
      %1103 = vmatpush1.bf16.msra.mxu0 %v903
      %1104 = vmatprep.subr.bf16.mxu0 0
      %1105 = vmatpush1.bf16.msra.mxu0 %v904
      %1106 = vmatprep.subr.bf16.mxu0 0
      %1107 = vmatpush1.bf16.msra.mxu0 %v905
      %1108 = vmatprep.subr.bf16.mxu0 0
      %1109 = vmatpush1.bf16.msra.mxu0 %v906
      %1110 = vmatprep.subr.bf16.mxu0 0
      %1111 = vmatpush1.bf16.msra.mxu0 %v907
      %1112 = vmatprep.subr.bf16.mxu0 0
      %1113 = vmatpush1.bf16.msra.mxu0 %v1092
      %1114 = vmatprep.subr.bf16.mxu0 0
      %1115 = vmatpush1.bf16.msra.mxu0 0
      %1116 = vmatprep.subr.bf16.mxu0 0
      %1117 = vmatpush1.bf16.msra.mxu0 0
      %1118 = vmatprep.subr.bf16.mxu0 0
      %1119 = vmatpush1.bf16.msra.mxu0 0
      %1120 = vmatprep.subr.bf16.mxu0 0
      %1121 = vmatpush1.bf16.msra.mxu0 0
      %1122 = vmatprep.subr.bf16.mxu0 0
      %1123 = vmatpush1.bf16.msra.mxu0 0
      %1124 = vmatprep.subr.bf16.mxu0 0
      %1125 = vmatpush1.bf16.msra.mxu0 0
      %1126 = vmatprep.mubr.bf16.mxu0 %v920
      %1127 = vmatmul.mubr.bf16.gmra.mrb[0].mxu0 %v693
      %v1128 = vpop.f32.mrb[0].mxu0
      %v1129 = vadd.f32 0.0, %v1128
      %v1130 = vpop.f32.mrb[0].mxu0
      %v1131 = vpop.f32.mrb[0].mxu0
      %v1132 = vadd.f32 0.0, %v1131
      %v1133 = vpop.f32.mrb[0].mxu0
      %1134 = vmatprep.mubr.bf16.mxu0 %v923
      %1135 = vmatmul.mubr.bf16.gmra.mrb[0].mxu0 %v695
      %v1136 = vpop.f32.mrb[0].mxu0
      %v1137 = vadd.f32 0.0, %v1136
      %v1138 = vpop.f32.mrb[0].mxu0
      %v1139 = vpop.f32.mrb[0].mxu0
      %v1140 = vadd.f32 0.0, %v1139
      %v1141 = vpop.f32.mrb[0].mxu0
      %1142 = vmatprep.mubr.bf16.mxu0 %v926
      %1143 = vmatmul.mubr.bf16.gmra.mrb[0].mxu0 %v697
      %v1144 = vpop.f32.mrb[0].mxu0
      %v1145 = vadd.f32 0.0, %v1144
      %v1146 = vpop.f32.mrb[0].mxu0
      %v1147 = vpop.f32.mrb[0].mxu0
      %v1148 = vadd.f32 0.0, %v1147
      %v1149 = vpop.f32.mrb[0].mxu0
      %1150 = vmatprep.mubr.bf16.mxu0 %v929
      %1151 = vmatmul.mubr.bf16.gmra.mrb[0].mxu0 %v699
      %v1152 = vpop.f32.mrb[0].mxu0
      %v1153 = vadd.f32 0.0, %v1152
      %v1154 = vpop.f32.mrb[0].mxu0
      %v1155 = vpop.f32.mrb[0].mxu0
      %v1156 = vadd.f32 0.0, %v1155
      %v1157 = vpop.f32.mrb[0].mxu0
      %1158 = vmatprep.mubr.bf16.mxu0 %v932
      %1159 = vmatmul.mubr.bf16.gmra.mrb[0].mxu0 %v701
      %v1160 = vpop.f32.mrb[0].mxu0
      %v1161 = vadd.f32 0.0, %v1160
      %v1162 = vpop.f32.mrb[0].mxu0
      %v1163 = vpop.f32.mrb[0].mxu0
      %v1164 = vadd.f32 0.0, %v1163
      %v1165 = vpop.f32.mrb[0].mxu0
      %1166 = vmatprep.mubr.bf16.mxu0 %v935
      %1167 = vmatmul.mubr.bf16.gmra.mrb[0].mxu0 %v703
      %v1168 = vpop.f32.mrb[0].mxu0
      %v1169 = vadd.f32 0.0, %v1168
      %v1170 = vpop.f32.mrb[0].mxu0
      %v1171 = vpop.f32.mrb[0].mxu0
      %v1172 = vadd.f32 0.0, %v1171
      %v1173 = vpop.f32.mrb[0].mxu0
      %1174 = vmatprep.mubr.bf16.mxu0 %v938
      %1175 = vmatmul.mubr.bf16.gmra.mrb[0].mxu0 %v705
      %v1176 = vpop.f32.mrb[0].mxu0
      %v1177 = vadd.f32 0.0, %v1176
      %v1178 = vpop.f32.mrb[0].mxu0
      %v1179 = vpop.f32.mrb[0].mxu0
      %v1180 = vadd.f32 0.0, %v1179
      %v1181 = vpop.f32.mrb[0].mxu0
      %1182 = vmatprep.mubr.bf16.mxu0 %v941
      %1183 = vmatmul.mubr.bf16.gmra.mrb[0].mxu0 %v707
      %v1184 = vpop.f32.mrb[0].mxu0
      %v1185 = vadd.f32 0.0, %v1184
      %v1186 = vpop.f32.mrb[0].mxu0
      %v1187 = vpop.f32.mrb[0].mxu0
      %v1188 = vadd.f32 0.0, %v1187
      %v1189 = vpop.f32.mrb[0].mxu0
      %1190 = vmatprep.mubr.bf16.mxu0 %v944
      %1191 = vmatmul.mubr.bf16.gmra.mrb[0].mxu0 %v709
      %v1192 = vpop.f32.mrb[0].mxu0
      %v1193 = vadd.f32 0.0, %v1192
      %v1194 = vpop.f32.mrb[0].mxu0
      %v1195 = vpop.f32.mrb[0].mxu0
      %v1196 = vadd.f32 0.0, %v1195
      %v1197 = vpop.f32.mrb[0].mxu0
      %1198 = vmatprep.mubr.bf16.mxu0 %v947
      %1199 = vmatmul.mubr.bf16.gmra.mrb[0].mxu0 %v711
      %v1200 = vpop.f32.mrb[0].mxu0
      %v1201 = vadd.f32 0.0, %v1200
      %v1202 = vpop.f32.mrb[0].mxu0
      %v1203 = vpop.f32.mrb[0].mxu0
      %v1204 = vadd.f32 0.0, %v1203
      %v1205 = vpop.f32.mrb[0].mxu0
      %1206 = vmatprep.mubr.bf16.mxu0 %v950
      %1207 = vmatmul.mubr.bf16.gmra.mrb[0].mxu0 %v713
      %v1208 = vpop.f32.mrb[0].mxu0
      %v1209 = vadd.f32 0.0, %v1208
      %v1210 = vpop.f32.mrb[0].mxu0
      %v1211 = vpop.f32.mrb[0].mxu0
      %v1212 = vadd.f32 0.0, %v1211
      %v1213 = vpop.f32.mrb[0].mxu0
      %1214 = vmatprep.mubr.bf16.mxu0 %v953
      %1215 = vmatmul.mubr.bf16.gmra.mrb[0].mxu0 %v715
      %v1216 = vpop.f32.mrb[0].mxu0
      %v1217 = vadd.f32 0.0, %v1216
      %v1218 = vpop.f32.mrb[0].mxu0
      %v1219 = vpop.f32.mrb[0].mxu0
      %v1220 = vadd.f32 0.0, %v1219
      %v1221 = vpop.f32.mrb[0].mxu0
      %1222 = vmatprep.mubr.bf16.mxu0 %v956
      %1223 = vmatmul.mubr.bf16.gmra.mrb[0].mxu0 %v717
      %v1224 = vpop.f32.mrb[0].mxu0
      %v1225 = vadd.f32 0.0, %v1224
      %v1226 = vpop.f32.mrb[0].mxu0
      %v1227 = vpop.f32.mrb[0].mxu0
      %v1228 = vadd.f32 0.0, %v1227
      %v1229 = vpop.f32.mrb[0].mxu0
      %1230 = vmatprep.mubr.bf16.mxu0 %v959
      %1231 = vmatmul.mubr.bf16.gmra.mrb[0].mxu0 %v719
      %v1232 = vpop.f32.mrb[0].mxu0
      %v1233 = vadd.f32 0.0, %v1232
      %v1234 = vpop.f32.mrb[0].mxu0
      %v1235 = vpop.f32.mrb[0].mxu0
      %v1236 = vadd.f32 0.0, %v1235
      %v1237 = vpop.f32.mrb[0].mxu0
      %1238 = vmatprep.mubr.bf16.mxu0 %v962
      %1239 = vmatmul.mubr.bf16.gmra.mrb[0].mxu0 %v721
      %v1240 = vpop.f32.mrb[0].mxu0
      %v1241 = vadd.f32 0.0, %v1240
      %v1242 = vpop.f32.mrb[0].mxu0
      %v1243 = vpop.f32.mrb[0].mxu0
      %v1244 = vadd.f32 0.0, %v1243
      %v1245 = vpop.f32.mrb[0].mxu0
      %1246 = vmatprep.mubr.bf16.mxu0 %v965
      %1247 = vmatmul.mubr.bf16.gmra.mrb[0].mxu0 %v723
      %v1248 = vpop.f32.mrb[0].mxu0
      %v1249 = vadd.f32 0.0, %v1248
      %v1250 = vpop.f32.mrb[0].mxu0
      %v1251 = vpop.f32.mrb[0].mxu0
      %v1252 = vadd.f32 0.0, %v1251
      %v1253 = vpop.f32.mrb[0].mxu0
      %1254 = vmatprep.mubr.bf16.mxu0 %v968
      %1255 = vmatmul.mubr.bf16.gmra.mrb[0].mxu0 %v725
      %v1256 = vpop.f32.mrb[0].mxu0
      %v1257 = vadd.f32 0.0, %v1256
      %v1258 = vpop.f32.mrb[0].mxu0
      %v1259 = vpop.f32.mrb[0].mxu0
      %v1260 = vadd.f32 0.0, %v1259
      %v1261 = vpop.f32.mrb[0].mxu0
      %1262 = vmatprep.mubr.bf16.mxu0 %v971
      %1263 = vmatmul.mubr.bf16.gmra.mrb[0].mxu0 %v727
      %v1264 = vpop.f32.mrb[0].mxu0
      %v1265 = vadd.f32 0.0, %v1264
      %v1266 = vpop.f32.mrb[0].mxu0
      %v1267 = vpop.f32.mrb[0].mxu0
      %v1268 = vadd.f32 0.0, %v1267
      %v1269 = vpop.f32.mrb[0].mxu0
      %1270 = vmatprep.mubr.bf16.mxu0 %v974
      %1271 = vmatmul.mubr.bf16.gmra.mrb[0].mxu0 %v729
      %v1272 = vpop.f32.mrb[0].mxu0
      %v1273 = vadd.f32 0.0, %v1272
      %v1274 = vpop.f32.mrb[0].mxu0
      %v1275 = vpop.f32.mrb[0].mxu0
      %v1276 = vadd.f32 0.0, %v1275
      %v1277 = vpop.f32.mrb[0].mxu0
      %1278 = vmatprep.mubr.bf16.mxu0 %v977
      %1279 = vmatmul.mubr.bf16.gmra.mrb[0].mxu0 %v731
      %v1280 = vpop.f32.mrb[0].mxu0
      %v1281 = vadd.f32 0.0, %v1280
      %v1282 = vpop.f32.mrb[0].mxu0
      %v1283 = vpop.f32.mrb[0].mxu0
      %v1284 = vadd.f32 0.0, %v1283
      %v1285 = vpop.f32.mrb[0].mxu0
      %1286 = vmatprep.mubr.bf16.mxu0 %v980
      %1287 = vmatmul.mubr.bf16.gmra.mrb[0].mxu0 %v733
      %v1288 = vpop.f32.mrb[0].mxu0
      %v1289 = vadd.f32 0.0, %v1288
      %v1290 = vpop.f32.mrb[0].mxu0
      %v1291 = vpop.f32.mrb[0].mxu0
      %v1292 = vadd.f32 0.0, %v1291
      %v1293 = vpop.f32.mrb[0].mxu0
      %1294 = vmatprep.mubr.bf16.mxu0 %v983
      %1295 = vmatmul.mubr.bf16.gmra.mrb[0].mxu0 %v735
      %v1296 = vpop.f32.mrb[0].mxu0
      %v1297 = vadd.f32 0.0, %v1296
      %v1298 = vpop.f32.mrb[0].mxu0
      %v1299 = vpop.f32.mrb[0].mxu0
      %v1300 = vadd.f32 0.0, %v1299
      %v1301 = vpop.f32.mrb[0].mxu0
      %1302 = vmatprep.mubr.bf16.mxu0 %v986
      %1303 = vmatmul.mubr.bf16.gmra.mrb[0].mxu0 %v737
      %v1304 = vpop.f32.mrb[0].mxu0
      %v1305 = vadd.f32 0.0, %v1304
      %v1306 = vpop.f32.mrb[0].mxu0
      %v1307 = vpop.f32.mrb[0].mxu0
      %v1308 = vadd.f32 0.0, %v1307
      %v1309 = vpop.f32.mrb[0].mxu0
      %1310 = vmatprep.mubr.bf16.mxu0 %v989
      %1311 = vmatmul.mubr.bf16.gmra.mrb[0].mxu0 %v739
      %v1312 = vpop.f32.mrb[0].mxu0
      %v1313 = vadd.f32 0.0, %v1312
      %v1314 = vpop.f32.mrb[0].mxu0
      %v1315 = vpop.f32.mrb[0].mxu0
      %v1316 = vadd.f32 0.0, %v1315
      %v1317 = vpop.f32.mrb[0].mxu0
      %1318 = vmatprep.mubr.bf16.mxu0 %v992
      %1319 = vmatmul.mubr.bf16.gmra.mrb[0].mxu0 %v741
      %v1320 = vpop.f32.mrb[0].mxu0
      %v1321 = vadd.f32 0.0, %v1320
      %v1322 = vpop.f32.mrb[0].mxu0
      %v1323 = vpop.f32.mrb[0].mxu0
      %v1324 = vadd.f32 0.0, %v1323
      %v1325 = vpop.f32.mrb[0].mxu0
      %1326 = vmatprep.mubr.bf16.mxu0 %v995
      %1327 = vmatmul.mubr.bf16.gmra.mrb[0].mxu0 %v743
      %v1328 = vpop.f32.mrb[0].mxu0
      %v1329 = vadd.f32 0.0, %v1328
      %v1330 = vpop.f32.mrb[0].mxu0
      %v1331 = vpop.f32.mrb[0].mxu0
      %v1332 = vadd.f32 0.0, %v1331
      %v1333 = vpop.f32.mrb[0].mxu0
      %1334 = vmatprep.mubr.bf16.mxu0 %v998
      %1335 = vmatmul.mubr.bf16.gmra.mrb[0].mxu0 %v745
      %v1336 = vpop.f32.mrb[0].mxu0
      %v1337 = vadd.f32 0.0, %v1336
      %v1338 = vpop.f32.mrb[0].mxu0
      %v1339 = vpop.f32.mrb[0].mxu0
      %v1340 = vadd.f32 0.0, %v1339
      %v1341 = vpop.f32.mrb[0].mxu0
      %1342 = vmatprep.mubr.bf16.mxu0 %v1001
      %1343 = vmatmul.mubr.bf16.gmra.mrb[0].mxu0 %v747
      %v1344 = vpop.f32.mrb[0].mxu0
      %v1345 = vadd.f32 0.0, %v1344
      %v1346 = vpop.f32.mrb[0].mxu0
      %v1347 = vpop.f32.mrb[0].mxu0
      %v1348 = vadd.f32 0.0, %v1347
      %v1349 = vpop.f32.mrb[0].mxu0
      %1350 = vmatprep.mubr.bf16.mxu0 %v1004
      %1351 = vmatmul.mubr.bf16.gmra.mrb[0].mxu0 %v749
      %v1352 = vpop.f32.mrb[0].mxu0
      %v1353 = vadd.f32 0.0, %v1352
      %v1354 = vpop.f32.mrb[0].mxu0
      %v1355 = vpop.f32.mrb[0].mxu0
      %v1356 = vadd.f32 0.0, %v1355
      %v1357 = vpop.f32.mrb[0].mxu0
      %1358 = vmatprep.mubr.bf16.mxu0 %v1007
      %1359 = vmatmul.mubr.bf16.gmra.mrb[0].mxu0 %v751
      %v1360 = vpop.f32.mrb[0].mxu0
      %v1361 = vadd.f32 0.0, %v1360
      %v1362 = vpop.f32.mrb[0].mxu0
      %v1363 = vpop.f32.mrb[0].mxu0
      %v1364 = vadd.f32 0.0, %v1363
      %v1365 = vpop.f32.mrb[0].mxu0
      %1366 = vmatprep.mubr.bf16.mxu0 %v1010
      %1367 = vmatmul.mubr.bf16.gmra.mrb[0].mxu0 %v753
      %v1368 = vpop.f32.mrb[0].mxu0
      %v1369 = vadd.f32 0.0, %v1368
      %v1370 = vpop.f32.mrb[0].mxu0
      %v1371 = vpop.f32.mrb[0].mxu0
      %v1372 = vadd.f32 0.0, %v1371
      %v1373 = vpop.f32.mrb[0].mxu0
      %1374 = vmatprep.mubr.bf16.mxu0 %v1013
      %1375 = vmatmul.mubr.bf16.gmra.mrb[0].mxu0 %v755
      %v1376 = vpop.f32.mrb[0].mxu0
      %v1377 = vadd.f32 0.0, %v1376
      %v1378 = vpop.f32.mrb[0].mxu0
      %v1379 = vpop.f32.mrb[0].mxu0
      %v1380 = vadd.f32 0.0, %v1379
      %v1381 = vpop.f32.mrb[0].mxu0
      %1382 = vmatprep.mubr.bf16.mxu0 %v1016
      %1383 = vmatmul.mubr.bf16.gmra.mrb[0].mxu0 %v757
      %v1384 = vpop.f32.mrb[0].mxu0
      %v1385 = vadd.f32 0.0, %v1384
      %v1386 = vpop.f32.mrb[0].mxu0
      %v1387 = vpop.f32.mrb[0].mxu0
      %v1388 = vadd.f32 0.0, %v1387
      %v1389 = vpop.f32.mrb[0].mxu0
      %1390 = vmatprep.mubr.bf16.mxu0 %v1019
      %1391 = vmatmul.mubr.bf16.gmra.mrb[0].mxu0 %v759
      %v1392 = vpop.f32.mrb[0].mxu0
      %v1393 = vadd.f32 0.0, %v1392
      %v1394 = vpop.f32.mrb[0].mxu0
      %v1395 = vpop.f32.mrb[0].mxu0
      %v1396 = vadd.f32 0.0, %v1395
      %v1397 = vpop.f32.mrb[0].mxu0
      %1398 = vmatprep.mubr.bf16.mxu0 %v1022
      %1399 = vmatmul.mubr.bf16.gmra.mrb[0].mxu0 %v761
      %v1400 = vpop.f32.mrb[0].mxu0
      %v1401 = vadd.f32 0.0, %v1400
      %v1402 = vpop.f32.mrb[0].mxu0
      %v1403 = vpop.f32.mrb[0].mxu0
      %v1404 = vadd.f32 0.0, %v1403
      %v1405 = vpop.f32.mrb[0].mxu0
      %1406 = vmatprep.mubr.bf16.mxu0 %v1025
      %1407 = vmatmul.mubr.bf16.gmra.mrb[0].mxu0 %v763
      %v1408 = vpop.f32.mrb[0].mxu0
      %v1409 = vadd.f32 0.0, %v1408
      %v1410 = vpop.f32.mrb[0].mxu0
      %v1411 = vpop.f32.mrb[0].mxu0
      %v1412 = vadd.f32 0.0, %v1411
      %v1413 = vpop.f32.mrb[0].mxu0
      %1414 = vmatprep.mubr.bf16.mxu0 %v1028
      %1415 = vmatmul.mubr.bf16.gmra.mrb[0].mxu0 %v765
      %v1416 = vpop.f32.mrb[0].mxu0
      %v1417 = vadd.f32 0.0, %v1416
      %v1418 = vpop.f32.mrb[0].mxu0
      %v1419 = vpop.f32.mrb[0].mxu0
      %v1420 = vadd.f32 0.0, %v1419
      %v1421 = vpop.f32.mrb[0].mxu0
      %1422 = vmatprep.mubr.bf16.mxu0 %v1031
      %1423 = vmatmul.mubr.bf16.gmra.mrb[0].mxu0 %v767
      %v1424 = vpop.f32.mrb[0].mxu0
      %v1425 = vadd.f32 0.0, %v1424
      %v1426 = vpop.f32.mrb[0].mxu0
      %v1427 = vpop.f32.mrb[0].mxu0
      %v1428 = vadd.f32 0.0, %v1427
      %v1429 = vpop.f32.mrb[0].mxu0
      %1430 = vmatprep.mubr.bf16.mxu0 %v1034
      %1431 = vmatmul.mubr.bf16.gmra.mrb[0].mxu0 %v769
      %v1432 = vpop.f32.mrb[0].mxu0
      %v1433 = vadd.f32 0.0, %v1432
      %v1434 = vpop.f32.mrb[0].mxu0
      %v1435 = vpop.f32.mrb[0].mxu0
      %v1436 = vadd.f32 0.0, %v1435
      %v1437 = vpop.f32.mrb[0].mxu0
      %1438 = vmatprep.mubr.bf16.mxu0 %v1037
      %1439 = vmatmul.mubr.bf16.gmra.mrb[0].mxu0 %v771
      %v1440 = vpop.f32.mrb[0].mxu0
      %v1441 = vadd.f32 0.0, %v1440
      %v1442 = vpop.f32.mrb[0].mxu0
      %v1443 = vpop.f32.mrb[0].mxu0
      %v1444 = vadd.f32 0.0, %v1443
      %v1445 = vpop.f32.mrb[0].mxu0
      %1446 = vmatprep.mubr.bf16.mxu0 %v1040
      %1447 = vmatmul.mubr.bf16.gmra.mrb[0].mxu0 %v773
      %v1448 = vpop.f32.mrb[0].mxu0
      %v1449 = vadd.f32 0.0, %v1448
      %v1450 = vpop.f32.mrb[0].mxu0
      %v1451 = vpop.f32.mrb[0].mxu0
      %v1452 = vadd.f32 0.0, %v1451
      %v1453 = vpop.f32.mrb[0].mxu0
      %1454 = vmatprep.mubr.bf16.mxu0 %v1043
      %1455 = vmatmul.mubr.bf16.gmra.mrb[0].mxu0 %v775
      %v1456 = vpop.f32.mrb[0].mxu0
      %v1457 = vadd.f32 0.0, %v1456
      %v1458 = vpop.f32.mrb[0].mxu0
      %v1459 = vpop.f32.mrb[0].mxu0
      %v1460 = vadd.f32 0.0, %v1459
      %v1461 = vpop.f32.mrb[0].mxu0
      %1462 = vmatprep.mubr.bf16.mxu0 %v1046
      %1463 = vmatmul.mubr.bf16.gmra.mrb[0].mxu0 %v777
      %v1464 = vpop.f32.mrb[0].mxu0
      %v1465 = vadd.f32 0.0, %v1464
      %v1466 = vpop.f32.mrb[0].mxu0
      %v1467 = vpop.f32.mrb[0].mxu0
      %v1468 = vadd.f32 0.0, %v1467
      %v1469 = vpop.f32.mrb[0].mxu0
      %1470 = vmatprep.mubr.bf16.mxu0 %v1049
      %1471 = vmatmul.mubr.bf16.gmra.mrb[0].mxu0 %v779
      %v1472 = vpop.f32.mrb[0].mxu0
      %v1473 = vadd.f32 0.0, %v1472
      %v1474 = vpop.f32.mrb[0].mxu0
      %v1475 = vpop.f32.mrb[0].mxu0
      %v1476 = vadd.f32 0.0, %v1475
      %v1477 = vpop.f32.mrb[0].mxu0
      %1478 = vmatprep.mubr.bf16.mxu0 %v1052
      %1479 = vmatmul.mubr.bf16.gmra.mrb[0].mxu0 %v781
      %v1480 = vpop.f32.mrb[0].mxu0
      %v1481 = vadd.f32 0.0, %v1480
      %v1482 = vpop.f32.mrb[0].mxu0
      %v1483 = vpop.f32.mrb[0].mxu0
      %v1484 = vadd.f32 0.0, %v1483
      %v1485 = vpop.f32.mrb[0].mxu0
      %1486 = vmatprep.mubr.bf16.mxu0 %v1055
      %1487 = vmatmul.mubr.bf16.gmra.mrb[0].mxu0 %v783
      %v1488 = vpop.f32.mrb[0].mxu0
      %v1489 = vadd.f32 0.0, %v1488
      %v1490 = vpop.f32.mrb[0].mxu0
      %v1491 = vpop.f32.mrb[0].mxu0
      %v1492 = vadd.f32 0.0, %v1491
      %v1493 = vpop.f32.mrb[0].mxu0
      %1494 = vmatprep.mubr.bf16.mxu0 %v1058
      %1495 = vmatmul.mubr.bf16.gmra.mrb[0].mxu0 %v785
      %v1496 = vpop.f32.mrb[0].mxu0
      %v1497 = vadd.f32 0.0, %v1496
      %v1498 = vpop.f32.mrb[0].mxu0
      %v1499 = vpop.f32.mrb[0].mxu0
      %v1500 = vadd.f32 0.0, %v1499
      %v1501 = vpop.f32.mrb[0].mxu0
      %1502 = vmatprep.mubr.bf16.mxu0 %v1061
      %1503 = vmatmul.mubr.bf16.gmra.mrb[0].mxu0 %v787
      %v1504 = vpop.f32.mrb[0].mxu0
      %v1505 = vadd.f32 0.0, %v1504
      %v1506 = vpop.f32.mrb[0].mxu0
      %v1507 = vpop.f32.mrb[0].mxu0
      %v1508 = vadd.f32 0.0, %v1507
      %v1509 = vpop.f32.mrb[0].mxu0
      %1510 = vmatprep.mubr.bf16.mxu0 %v1064
      %1511 = vmatmul.mubr.bf16.gmra.mrb[0].mxu0 %v789
      %v1512 = vpop.f32.mrb[0].mxu0
      %v1513 = vadd.f32 0.0, %v1512
      %v1514 = vpop.f32.mrb[0].mxu0
      %v1515 = vpop.f32.mrb[0].mxu0
      %v1516 = vadd.f32 0.0, %v1515
      %v1517 = vpop.f32.mrb[0].mxu0
      %1518 = vmatprep.mubr.bf16.mxu0 %v1067
      %1519 = vmatmul.mubr.bf16.gmra.mrb[0].mxu0 %v791
      %v1520 = vpop.f32.mrb[0].mxu0
      %v1521 = vadd.f32 0.0, %v1520
      %v1522 = vpop.f32.mrb[0].mxu0
      %v1523 = vpop.f32.mrb[0].mxu0
      %v1524 = vadd.f32 0.0, %v1523
      %v1525 = vpop.f32.mrb[0].mxu0
      %1526 = vmatprep.mubr.bf16.mxu0 %v1070
      %1527 = vmatmul.mubr.bf16.gmra.mrb[0].mxu0 %v793
      %v1528 = vpop.f32.mrb[0].mxu0
      %v1529 = vadd.f32 0.0, %v1528
      %v1530 = vpop.f32.mrb[0].mxu0
      %v1531 = vpop.f32.mrb[0].mxu0
      %v1532 = vadd.f32 0.0, %v1531
      %v1533 = vpop.f32.mrb[0].mxu0
      %1534 = vmatprep.mubr.bf16.mxu0 %v1073
      %1535 = vmatmul.mubr.bf16.gmra.mrb[0].mxu0 %v795
      %v1536 = vpop.f32.mrb[0].mxu0
      %v1537 = vadd.f32 0.0, %v1536
      %v1538 = vpop.f32.mrb[0].mxu0
      %v1539 = vpop.f32.mrb[0].mxu0
      %v1540 = vadd.f32 0.0, %v1539
      %v1541 = vpop.f32.mrb[0].mxu0
      %1542 = vmatprep.mubr.bf16.mxu0 %v1076
      %1543 = vmatmul.mubr.bf16.gmra.mrb[0].mxu0 %v797
      %v1544 = vpop.f32.mrb[0].mxu0
      %v1545 = vadd.f32 0.0, %v1544
      %v1546 = vpop.f32.mrb[0].mxu0
      %v1547 = vpop.f32.mrb[0].mxu0
      %v1548 = vadd.f32 0.0, %v1547
      %v1549 = vpop.f32.mrb[0].mxu0
      %1550 = vmatprep.mubr.bf16.mxu0 %v1079
      %1551 = vmatmul.mubr.bf16.gmra.mrb[0].mxu0 %v799
      %v1552 = vpop.f32.mrb[0].mxu0
      %v1553 = vadd.f32 0.0, %v1552
      %v1554 = vpop.f32.mrb[0].mxu0
      %v1555 = vpop.f32.mrb[0].mxu0
      %v1556 = vadd.f32 0.0, %v1555
      %v1557 = vpop.f32.mrb[0].mxu0
      %1558 = vmatprep.mubr.bf16.mxu0 %v1082
      %1559 = vmatmul.mubr.bf16.gmra.mrb[0].mxu0 %v801
      %v1560 = vpop.f32.mrb[0].mxu0
      %v1561 = vadd.f32 0.0, %v1560
      %v1562 = vpop.f32.mrb[0].mxu0
      %v1563 = vpop.f32.mrb[0].mxu0
      %v1564 = vadd.f32 0.0, %v1563
      %v1565 = vpop.f32.mrb[0].mxu0
      %1566 = vmatprep.mubr.bf16.mxu0 %v1085
      %1567 = vmatmul.mubr.bf16.gmra.mrb[0].mxu0 %v803
      %v1568 = vpop.f32.mrb[0].mxu0
      %v1569 = vadd.f32 0.0, %v1568
      %v1570 = vpop.f32.mrb[0].mxu0
      %v1571 = vpop.f32.mrb[0].mxu0
      %v1572 = vadd.f32 0.0, %v1571
      %v1573 = vpop.f32.mrb[0].mxu0
      %1574 = vdwg.mxu0
      %v1575 = vmax.f32 %v1129, %v1241
      %v1576 = vmax.f32 %v1575, %v1353
      %v1577 = vmax.f32 %v1576, %v1465
      %v1578 = vmax.f32 %v1132, %v1244
      %v1579 = vmax.f32 %v1578, %v1356
      %v1580 = vmax.f32 %v1579, %v1468
      %v1581 = vmax.f32 %v1137, %v1249
      %v1582 = vmax.f32 %v1581, %v1361
      %v1583 = vmax.f32 %v1582, %v1473
      %v1584 = vmax.f32 %v1140, %v1252
      %v1585 = vmax.f32 %v1584, %v1364
      %v1586 = vmax.f32 %v1585, %v1476
      %v1587 = vmax.f32 %v1145, %v1257
      %v1588 = vmax.f32 %v1587, %v1369
      %v1589 = vmax.f32 %v1588, %v1481
      %v1590 = vmax.f32 %v1148, %v1260
      %v1591 = vmax.f32 %v1590, %v1372
      %v1592 = vmax.f32 %v1591, %v1484
      %v1593 = vmax.f32 %v1153, %v1265
      %v1594 = vmax.f32 %v1593, %v1377
      %v1595 = vmax.f32 %v1594, %v1489
      %v1596 = vmax.f32 %v1156, %v1268
      %v1597 = vmax.f32 %v1596, %v1380
      %v1598 = vmax.f32 %v1597, %v1492
      %v1599 = vmax.f32 %v1161, %v1273
      %v1600 = vmax.f32 %v1599, %v1385
      %v1601 = vmax.f32 %v1600, %v1497
      %v1602 = vmax.f32 %v1164, %v1276
      %v1603 = vmax.f32 %v1602, %v1388
      %v1604 = vmax.f32 %v1603, %v1500
      %v1605 = vmax.f32 %v1169, %v1281
      %v1606 = vmax.f32 %v1605, %v1393
      %v1607 = vmax.f32 %v1606, %v1505
      %v1608 = vmax.f32 %v1172, %v1284
      %v1609 = vmax.f32 %v1608, %v1396
      %v1610 = vmax.f32 %v1609, %v1508
      %v1611 = vmax.f32 %v1177, %v1289
      %v1612 = vmax.f32 %v1611, %v1401
      %v1613 = vmax.f32 %v1612, %v1513
      %v1614 = vmax.f32 %v1180, %v1292
      %v1615 = vmax.f32 %v1614, %v1404
      %v1616 = vmax.f32 %v1615, %v1516
      %v1617 = vmax.f32 %v1185, %v1297
      %v1618 = vmax.f32 %v1617, %v1409
      %v1619 = vmax.f32 %v1618, %v1521
      %v1620 = vmax.f32 %v1188, %v1300
      %v1621 = vmax.f32 %v1620, %v1412
      %v1622 = vmax.f32 %v1621, %v1524
      %v1623 = vmax.f32 %v1193, %v1305
      %v1624 = vmax.f32 %v1623, %v1417
      %v1625 = vmax.f32 %v1624, %v1529
      %v1626 = vmax.f32 %v1196, %v1308
      %v1627 = vmax.f32 %v1626, %v1420
      %v1628 = vmax.f32 %v1627, %v1532
      %v1629 = vmax.f32 %v1201, %v1313
      %v1630 = vmax.f32 %v1629, %v1425
      %v1631 = vmax.f32 %v1630, %v1537
      %v1632 = vmax.f32 %v1204, %v1316
      %v1633 = vmax.f32 %v1632, %v1428
      %v1634 = vmax.f32 %v1633, %v1540
      %v1635 = vmax.f32 %v1209, %v1321
      %v1636 = vmax.f32 %v1635, %v1433
      %v1637 = vmax.f32 %v1636, %v1545
      %v1638 = vmax.f32 %v1212, %v1324
      %v1639 = vmax.f32 %v1638, %v1436
      %v1640 = vmax.f32 %v1639, %v1548
      %v1641 = vmax.f32 %v1217, %v1329
      %v1642 = vmax.f32 %v1641, %v1441
      %v1643 = vmax.f32 %v1642, %v1553
      %v1644 = vmax.f32 %v1220, %v1332
      %v1645 = vmax.f32 %v1644, %v1444
      %v1646 = vmax.f32 %v1645, %v1556
      %v1647 = vmax.f32 %v1225, %v1337
      %v1648 = vmax.f32 %v1647, %v1449
      %v1649 = vmax.f32 %v1648, %v1561
      %v1650 = vmax.f32 %v1228, %v1340
      %v1651 = vmax.f32 %v1650, %v1452
      %v1652 = vmax.f32 %v1651, %v1564
      %v1653 = vmax.f32 %v1233, %v1345
      %v1654 = vmax.f32 %v1653, %v1457
      %v1655 = vmax.f32 %v1654, %v1569
      %v1656 = vmax.f32 %v1236, %v1348
      %v1657 = vmax.f32 %v1656, %v1460
      %v1658 = vmax.f32 %v1657, %v1572
      %v1659 = vld [vmem:[%s2] sm:$0x1]
      %v1661 = vlaneseq
      %v1662 = vshrl.u32 %v1661, 7
      %v1663 = vsub.s32 0, %v1662
      %v1664 = vrot.slane %v1659, %v1663
      %v1666 = vadd.f32 %v1577, %v1664
      %v1667 = vadd.f32 %v1580, %v1664
      %v1668 = vadd.f32 %v1583, %v1664
      %v1669 = vadd.f32 %v1586, %v1664
      %v1670 = vadd.f32 %v1589, %v1664
      %v1671 = vadd.f32 %v1592, %v1664
      %v1672 = vadd.f32 %v1595, %v1664
      %v1673 = vadd.f32 %v1598, %v1664
      %v1674 = vadd.f32 %v1601, %v1664
      %v1675 = vadd.f32 %v1604, %v1664
      %v1676 = vadd.f32 %v1607, %v1664
      %v1677 = vadd.f32 %v1610, %v1664
      %v1678 = vadd.f32 %v1613, %v1664
      %v1679 = vadd.f32 %v1616, %v1664
      %v1680 = vadd.f32 %v1619, %v1664
      %v1681 = vadd.f32 %v1622, %v1664
      %v1682 = vadd.f32 %v1625, %v1664
      %v1683 = vadd.f32 %v1628, %v1664
      %v1684 = vadd.f32 %v1631, %v1664
      %v1685 = vadd.f32 %v1634, %v1664
      %v1686 = vadd.f32 %v1637, %v1664
      %v1687 = vadd.f32 %v1640, %v1664
      %v1688 = vadd.f32 %v1643, %v1664
      %v1689 = vadd.f32 %v1646, %v1664
      %v1690 = vadd.f32 %v1649, %v1664
      %v1691 = vadd.f32 %v1652, %v1664
      %v1692 = vadd.f32 %v1655, %v1664
      %v1693 = vadd.f32 %v1658, %v1664
      %v1694 = vmax.f32 %v1666, 0.0
      %v1695 = vmax.f32 %v1667, 0.0
      %v1696 = vmax.f32 %v1668, 0.0
      %v1697 = vmax.f32 %v1669, 0.0
      %v1698 = vmax.f32 %v1670, 0.0
      %v1699 = vmax.f32 %v1671, 0.0
      %v1700 = vmax.f32 %v1672, 0.0
      %v1701 = vmax.f32 %v1673, 0.0
      %v1702 = vmax.f32 %v1674, 0.0
      %v1703 = vmax.f32 %v1675, 0.0
      %v1704 = vmax.f32 %v1676, 0.0
      %v1705 = vmax.f32 %v1677, 0.0
      %v1706 = vmax.f32 %v1678, 0.0
      %v1707 = vmax.f32 %v1679, 0.0
      %v1708 = vmax.f32 %v1680, 0.0
      %v1709 = vmax.f32 %v1681, 0.0
      %v1710 = vmax.f32 %v1682, 0.0
      %v1711 = vmax.f32 %v1683, 0.0
      %v1712 = vmax.f32 %v1684, 0.0
      %v1713 = vmax.f32 %v1685, 0.0
      %v1714 = vmax.f32 %v1686, 0.0
      %v1715 = vmax.f32 %v1687, 0.0
      %v1716 = vmax.f32 %v1688, 0.0
      %v1717 = vmax.f32 %v1689, 0.0
      %v1718 = vmax.f32 %v1690, 0.0
      %v1719 = vmax.f32 %v1691, 0.0
      %v1720 = vmax.f32 %v1692, 0.0
      %v1721 = vmax.f32 %v1693, 0.0
      %vm1722 = vcmask 48128
      %1723 = vst.msk [vmem:[#allocation2] sm:$0xff] %vm1722, 0.0
      %1724 = vst.msk [vmem:[#allocation2 + $0x8] sm:$0xff] %vm1722, 0.0
      %1725 = vst.msk [vmem:[#allocation2 + $0x10] sm:$0xff] %vm1722, 0.0
      %1726 = vst.msk [vmem:[#allocation2 + $0x18] sm:$0xff] %vm1722, 0.0
      %1727 = vst.msk [vmem:[#allocation2 + $0x20] sm:$0xff] %vm1722, 0.0
      %1728 = vst.msk [vmem:[#allocation2 + $0x28] sm:$0xff] %vm1722, 0.0
      %1729 = vst.msk [vmem:[#allocation2 + $0x30] sm:$0xff] %vm1722, 0.0
      %1730 = vst.msk [vmem:[#allocation2 + $0x38] sm:$0xff] %vm1722, 0.0
      %1731 = vst.msk [vmem:[#allocation2 + $0x40] sm:$0xff] %vm1722, 0.0
      %1732 = vst.msk [vmem:[#allocation2 + $0x48] sm:$0xff] %vm1722, 0.0
      %1733 = vst.msk [vmem:[#allocation2 + $0x50] sm:$0xff] %vm1722, 0.0
      %1734 = vst.msk [vmem:[#allocation2 + $0x58] sm:$0xff] %vm1722, 0.0
      %1735 = vst.msk [vmem:[#allocation2 + $0x60] sm:$0xff] %vm1722, 0.0
      %1736 = vst.msk [vmem:[#allocation2 + $0x68] sm:$0xff] %vm1722, 0.0
      %1737 = vst.msk [vmem:[#allocation2 + $0x70] sm:$0xff] %vm1722, 0.0
      %1738 = vst.msk [vmem:[#allocation2 + $0x78] sm:$0xff] %vm1722, 0.0
      %1739 = vst.msk [vmem:[#allocation2 + $0x80] sm:$0xff] %vm1722, 0.0
      %1740 = vst.msk [vmem:[#allocation2 + $0x88] sm:$0xff] %vm1722, 0.0
      %1741 = vst.msk [vmem:[#allocation2 + $0x90] sm:$0xff] %vm1722, 0.0
      %1742 = vst.msk [vmem:[#allocation2 + $0x98] sm:$0xff] %vm1722, 0.0
      %1743 = vst.msk [vmem:[#allocation2 + $0xa0] sm:$0xff] %vm1722, 0.0
      %1744 = vst.msk [vmem:[#allocation2 + $0xa8] sm:$0xff] %vm1722, 0.0
      %1745 = vst.msk [vmem:[#allocation2 + $0xb0] sm:$0xff] %vm1722, 0.0
      %1746 = vst.msk [vmem:[#allocation2 + $0xb8] sm:$0xff] %vm1722, 0.0
      %1747 = vst.msk [vmem:[#allocation2 + $0xc0] sm:$0xff] %vm1722, 0.0
      %1748 = vst.msk [vmem:[#allocation2 + $0xc8] sm:$0xff] %vm1722, 0.0
      %1749 = vst.msk [vmem:[#allocation2 + $0xd0] sm:$0xff] %vm1722, 0.0
      %1750 = vst.msk [vmem:[#allocation2 + $0xd8] sm:$0xff] %vm1722, 0.0
      %1751 = vst.msk [vmem:[#allocation2 + $0xe0] sm:$0xff] %vm1722, 0.0
      %1752 = vst.msk [vmem:[#allocation2 + $0xe8] sm:$0xff] %vm1722, 0.0
      %1753 = vst.msk [vmem:[#allocation2 + $0xf0] sm:$0xff] %vm1722, 0.0
      %1754 = vst.msk [vmem:[#allocation2 + $0xf8] sm:$0xff] %vm1722, 0.0
      %1755 = vst.msk [vmem:[#allocation2 + $0x100] sm:$0xff] %vm1722, 0.0
      %1756 = vst.msk [vmem:[#allocation2 + $0x108] sm:$0xff] %vm1722, 0.0
      %1757 = vst.msk [vmem:[#allocation2 + $0x110] sm:$0xff] %vm1722, 0.0
      %1758 = vst.msk [vmem:[#allocation2 + $0x118] sm:$0xff] %vm1722, 0.0
      %1759 = vst.msk [vmem:[#allocation2 + $0x120] sm:$0xff] %vm1722, 0.0
      %1760 = vst.msk [vmem:[#allocation2 + $0x128] sm:$0xff] %vm1722, 0.0
      %1761 = vst.msk [vmem:[#allocation2 + $0x130] sm:$0xff] %vm1722, 0.0
      %1762 = vst.msk [vmem:[#allocation2 + $0x138] sm:$0xff] %vm1722, 0.0
      %1763 = vst.msk [vmem:[#allocation2 + $0x140] sm:$0xff] %vm1722, 0.0
      %1764 = vst.msk [vmem:[#allocation2 + $0x148] sm:$0xff] %vm1722, 0.0
      %1765 = vst.msk [vmem:[#allocation2 + $0x150] sm:$0xff] %vm1722, 0.0
      %1766 = vst.msk [vmem:[#allocation2 + $0x158] sm:$0xff] %vm1722, 0.0
      %1767 = vst.msk [vmem:[#allocation2 + $0x160] sm:$0xff] %vm1722, 0.0
      %1768 = vst.msk [vmem:[#allocation2 + $0x168] sm:$0xff] %vm1722, 0.0
      %1769 = vst.msk [vmem:[#allocation2 + $0x170] sm:$0xff] %vm1722, 0.0
      %1770 = vst.msk [vmem:[#allocation2 + $0x178] sm:$0xff] %vm1722, 0.0
      %1771 = vst.msk [vmem:[#allocation2 + $0x180] sm:$0xff] %vm1722, 0.0
      %1772 = vst.msk [vmem:[#allocation2 + $0x188] sm:$0xff] %vm1722, 0.0
      %1773 = vst.msk [vmem:[#allocation2 + $0x190] sm:$0xff] %vm1722, 0.0
      %1774 = vst.msk [vmem:[#allocation2 + $0x198] sm:$0xff] %vm1722, 0.0
      %1775 = vst.msk [vmem:[#allocation2 + $0x1a0] sm:$0xff] %vm1722, 0.0
      %1776 = vst.msk [vmem:[#allocation2 + $0x1a8] sm:$0xff] %vm1722, 0.0
      %1777 = vst.msk [vmem:[#allocation2 + $0x1b0] sm:$0xff] %vm1722, 0.0
      %1778 = vst.msk [vmem:[#allocation2 + $0x1b8] sm:$0xff] %vm1722, 0.0
      %1779 = vst.msk [vmem:[#allocation2 + $0x1c0] sm:$0xff] %vm1722, 0.0
      %1780 = vst.msk [vmem:[#allocation2 + $0x1c8] sm:$0xff] %vm1722, 0.0
      %1781 = vst.msk [vmem:[#allocation2 + $0x1d0] sm:$0xff] %vm1722, 0.0
      %1782 = vst.msk [vmem:[#allocation2 + $0x1d8] sm:$0xff] %vm1722, 0.0
      %1783 = vst.msk [vmem:[#allocation2 + $0x1e0] sm:$0xff] %vm1722, 0.0
      %1784 = vst.msk [vmem:[#allocation2 + $0x1e8] sm:$0xff] %vm1722, 0.0
      %1785 = vst.msk [vmem:[#allocation2 + $0x1f0] sm:$0xff] %vm1722, 0.0
      %1786 = vst.msk [vmem:[#allocation2 + $0x1f8] sm:$0xff] %vm1722, 0.0
      %s1787 = scalar_lea.vmem [#allocation2], 32
      %1788 = vst.msk [vmem:[%s1787 + $0x8] sm:$0xff] %vm1722, %v1694
      %vm1789 = vcmask 46080
      %1790 = vst.msk [vmem:[%s1787 + $0x10] sm:$0x3f] %vm1789, %v1695
      %1791 = vst.msk [vmem:[%s1787 + $0x28] sm:$0xff] %vm1722, %v1696
      %1792 = vst.msk [vmem:[%s1787 + $0x30] sm:$0x3f] %vm1789, %v1697
      %1793 = vst.msk [vmem:[%s1787 + $0x48] sm:$0xff] %vm1722, %v1698
      %1794 = vst.msk [vmem:[%s1787 + $0x50] sm:$0x3f] %vm1789, %v1699
      %1795 = vst.msk [vmem:[%s1787 + $0x68] sm:$0xff] %vm1722, %v1700
      %1796 = vst.msk [vmem:[%s1787 + $0x70] sm:$0x3f] %vm1789, %v1701
      %1797 = vst.msk [vmem:[%s1787 + $0x88] sm:$0xff] %vm1722, %v1702
      %1798 = vst.msk [vmem:[%s1787 + $0x90] sm:$0x3f] %vm1789, %v1703
      %1799 = vst.msk [vmem:[%s1787 + $0xa8] sm:$0xff] %vm1722, %v1704
      %1800 = vst.msk [vmem:[%s1787 + $0xb0] sm:$0x3f] %vm1789, %v1705
      %1801 = vst.msk [vmem:[%s1787 + $0xc8] sm:$0xff] %vm1722, %v1706
      %1802 = vst.msk [vmem:[%s1787 + $0xd0] sm:$0x3f] %vm1789, %v1707
      %1803 = vst.msk [vmem:[%s1787 + $0xe8] sm:$0xff] %vm1722, %v1708
      %1804 = vst.msk [vmem:[%s1787 + $0xf0] sm:$0x3f] %vm1789, %v1709
      %1805 = vst.msk [vmem:[%s1787 + $0x108] sm:$0xff] %vm1722, %v1710
      %1806 = vst.msk [vmem:[%s1787 + $0x110] sm:$0x3f] %vm1789, %v1711
      %1807 = vst.msk [vmem:[%s1787 + $0x128] sm:$0xff] %vm1722, %v1712
      %1808 = vst.msk [vmem:[%s1787 + $0x130] sm:$0x3f] %vm1789, %v1713
      %1809 = vst.msk [vmem:[%s1787 + $0x148] sm:$0xff] %vm1722, %v1714
      %1810 = vst.msk [vmem:[%s1787 + $0x150] sm:$0x3f] %vm1789, %v1715
      %1811 = vst.msk [vmem:[%s1787 + $0x168] sm:$0xff] %vm1722, %v1716
      %1812 = vst.msk [vmem:[%s1787 + $0x170] sm:$0x3f] %vm1789, %v1717
      %1813 = vst.msk [vmem:[%s1787 + $0x188] sm:$0xff] %vm1722, %v1718
      %1814 = vst.msk [vmem:[%s1787 + $0x190] sm:$0x3f] %vm1789, %v1719
      %1815 = vst.msk [vmem:[%s1787 + $0x1a8] sm:$0xff] %vm1722, %v1720
      %1816 = vst.msk [vmem:[%s1787 + $0x1b0] sm:$0x3f] %vm1789, %v1721
      %v1817 = vld [vmem:[#allocation2 + $0x7] sm:$0xff]
      %v1818 = vld [vmem:[#allocation2 + $0xf] sm:$0xff]
      %v1819 = vld [vmem:[#allocation2 + $0x27] sm:$0xff]
      %v1820 = vld [vmem:[#allocation2 + $0x2f] sm:$0xff]
      %v1821 = vld [vmem:[#allocation2 + $0x47] sm:$0xff]
      %v1822 = vld [vmem:[#allocation2 + $0x4f] sm:$0xff]
      %v1823 = vld [vmem:[#allocation2 + $0x67] sm:$0xff]
      %v1824 = vld [vmem:[#allocation2 + $0x6f] sm:$0xff]
      %v1825 = vld [vmem:[#allocation2 + $0x87] sm:$0xff]
      %v1826 = vld [vmem:[#allocation2 + $0x8f] sm:$0xff]
      %v1827 = vld [vmem:[#allocation2 + $0xa7] sm:$0xff]
      %v1828 = vld [vmem:[#allocation2 + $0xaf] sm:$0xff]
      %v1829 = vld [vmem:[#allocation2 + $0xc7] sm:$0xff]
      %v1830 = vld [vmem:[#allocation2 + $0xcf] sm:$0xff]
      %v1831 = vld [vmem:[#allocation2 + $0xe7] sm:$0xff]
      %v1832 = vld [vmem:[#allocation2 + $0xef] sm:$0xff]
      %v1833 = vld [vmem:[#allocation2 + $0x107] sm:$0xff]
      %v1834 = vld [vmem:[#allocation2 + $0x10f] sm:$0xff]
      %v1835 = vld [vmem:[#allocation2 + $0x127] sm:$0xff]
      %v1836 = vld [vmem:[#allocation2 + $0x12f] sm:$0xff]
      %v1837 = vpack.c.bf16 %v1818, %v1817
      %v1838 = vpack.c.bf16 %v1820, %v1819
      %v1839 = vpack.c.bf16 %v1822, %v1821
      %v1840 = vpack.c.bf16 %v1824, %v1823
      %v1841 = vpack.c.bf16 %v1826, %v1825
      %v1842 = vpack.c.bf16 %v1828, %v1827
      %v1843 = vpack.c.bf16 %v1830, %v1829
      %v1844 = vpack.c.bf16 %v1832, %v1831
      %v1845 = vpack.c.bf16 %v1834, %v1833
      %v1846 = vpack.c.bf16 %v1836, %v1835
      %v1847 = vld [vmem:[%s3] sm:$0x7]
      %v1848 = vld [vmem:[#allocation2 + $0x8] sm:$0xff]
      %v1849 = vld [vmem:[#allocation2 + $0x10] sm:$0xff]
      %v1850 = vld [vmem:[#allocation2 + $0x28] sm:$0xff]
      %v1851 = vld [vmem:[#allocation2 + $0x30] sm:$0xff]
      %v1852 = vld [vmem:[#allocation2 + $0x48] sm:$0xff]
      %v1853 = vld [vmem:[#allocation2 + $0x50] sm:$0xff]
      %v1854 = vld [vmem:[#allocation2 + $0x68] sm:$0xff]
      %v1855 = vld [vmem:[#allocation2 + $0x70] sm:$0xff]
      %v1856 = vld [vmem:[#allocation2 + $0x88] sm:$0xff]
      %v1857 = vld [vmem:[#allocation2 + $0x90] sm:$0xff]
      %v1858 = vld [vmem:[#allocation2 + $0xa8] sm:$0xff]
      %v1859 = vld [vmem:[#allocation2 + $0xb0] sm:$0xff]
      %v1860 = vld [vmem:[#allocation2 + $0xc8] sm:$0xff]
      %v1861 = vld [vmem:[#allocation2 + $0xd0] sm:$0xff]
      %v1862 = vld [vmem:[#allocation2 + $0xe8] sm:$0xff]
      %v1863 = vld [vmem:[#allocation2 + $0xf0] sm:$0xff]
      %v1864 = vld [vmem:[#allocation2 + $0x108] sm:$0xff]
      %v1865 = vld [vmem:[#allocation2 + $0x110] sm:$0xff]
      %v1866 = vld [vmem:[#allocation2 + $0x128] sm:$0xff]
      %v1867 = vld [vmem:[#allocation2 + $0x130] sm:$0xff]
      %v1868 = vpack.c.bf16 %v1849, %v1848
      %v1869 = vpack.c.bf16 %v1851, %v1850
      %v1870 = vpack.c.bf16 %v1853, %v1852
      %v1871 = vpack.c.bf16 %v1855, %v1854
      %v1872 = vpack.c.bf16 %v1857, %v1856
      %v1873 = vpack.c.bf16 %v1859, %v1858
      %v1874 = vpack.c.bf16 %v1861, %v1860
      %v1875 = vpack.c.bf16 %v1863, %v1862
      %v1876 = vpack.c.bf16 %v1865, %v1864
      %v1877 = vpack.c.bf16 %v1867, %v1866
      %s1878 = scalar_lea.vmem %s3, 4
      %v1879 = vld [vmem:[%s1878] sm:$0x7]
      %v1881 = vsel %vm1722, %v1868, 0
      %v1884 = vsel %vm1722, %v1869, 0
      %v1887 = vsel %vm1722, %v1870, 0
      %v1890 = vsel %vm1722, %v1871, 0
      %v1893 = vsel %vm1722, %v1872, 0
      %v1896 = vsel %vm1722, %v1873, 0
      %v1899 = vsel %vm1722, %v1874, 0
      %v1902 = vsel %vm1722, %v1875, 0
      %v1905 = vsel %vm1722, %v1876, 0
      %v1908 = vsel %vm1722, %v1877, 0
      %vm1910 = vcmask 1042432
      %v1912 = vsel %vm1910, %v1879, 0
      %1914 = vmatprep.subr.bf16.mxu0 0
      %1915 = vmatpush1.bf16.msra.mxu0 %v1912
      %1916 = vmatprep.subr.bf16.mxu0 0
      %1917 = vmatpush1.bf16.msra.mxu0 0
      %1918 = vmatprep.subr.bf16.mxu0 0
      %1919 = vmatpush1.bf16.msra.mxu0 0
      %1920 = vmatprep.subr.bf16.mxu0 0
      %1921 = vmatpush1.bf16.msra.mxu0 0
      %1922 = vmatprep.subr.bf16.mxu0 0
      %1923 = vmatpush1.bf16.msra.mxu0 0
      %1924 = vmatprep.subr.bf16.mxu0 0
      %1925 = vmatpush1.bf16.msra.mxu0 0
      %1926 = vmatprep.subr.bf16.mxu0 0
      %1927 = vmatpush1.bf16.msra.mxu0 0
      %1928 = vmatprep.subr.bf16.mxu0 0
      %1929 = vmatpush1.bf16.msra.mxu0 0
      %1930 = vmatprep.subr.bf16.mxu0 0
      %1931 = vmatpush1.bf16.msra.mxu0 0
      %1932 = vmatprep.subr.bf16.mxu0 0
      %1933 = vmatpush1.bf16.msra.mxu0 0
      %1934 = vmatprep.subr.bf16.mxu0 0
      %1935 = vmatpush1.bf16.msra.mxu0 0
      %1936 = vmatprep.subr.bf16.mxu0 0
      %1937 = vmatpush1.bf16.msra.mxu0 0
      %1938 = vmatprep.subr.bf16.mxu0 0
      %1939 = vmatpush1.bf16.msra.mxu0 0
      %1940 = vmatprep.subr.bf16.mxu0 0
      %1941 = vmatpush1.bf16.msra.mxu0 0
      %1942 = vmatprep.subr.bf16.mxu0 0
      %1943 = vmatpush1.bf16.msra.mxu0 0
      %1944 = vmatprep.subr.bf16.mxu0 0
      %1945 = vmatpush1.bf16.msra.mxu0 0
      %1946 = vmatprep.mubr.bf16.mxu0 0
      %1947 = vmatmul.mubr.bf16.gmra.mrb[0].mxu0 %v1881
      %v1948 = vpop.f32.mrb[0].mxu0
      %v1949 = vadd.f32 0.0, %v1948
      %v1950 = vpop.f32.mrb[0].mxu0
      %v1951 = vpop.f32.mrb[0].mxu0
      %v1952 = vadd.f32 0.0, %v1951
      %v1953 = vpop.f32.mrb[0].mxu0
      %1954 = vmatprep.mubr.bf16.mxu0 0
      %1955 = vmatmul.mubr.bf16.gmra.mrb[0].mxu0 %v1884
      %v1956 = vpop.f32.mrb[0].mxu0
      %v1957 = vadd.f32 0.0, %v1956
      %v1958 = vpop.f32.mrb[0].mxu0
      %v1959 = vpop.f32.mrb[0].mxu0
      %v1960 = vadd.f32 0.0, %v1959
      %v1961 = vpop.f32.mrb[0].mxu0
      %1962 = vmatprep.mubr.bf16.mxu0 0
      %1963 = vmatmul.mubr.bf16.gmra.mrb[0].mxu0 %v1887
      %v1964 = vpop.f32.mrb[0].mxu0
      %v1965 = vadd.f32 0.0, %v1964
      %v1966 = vpop.f32.mrb[0].mxu0
      %v1967 = vpop.f32.mrb[0].mxu0
      %v1968 = vadd.f32 0.0, %v1967
      %v1969 = vpop.f32.mrb[0].mxu0
      %1970 = vmatprep.mubr.bf16.mxu0 0
      %1971 = vmatmul.mubr.bf16.gmra.mrb[0].mxu0 %v1890
      %v1972 = vpop.f32.mrb[0].mxu0
      %v1973 = vadd.f32 0.0, %v1972
      %v1974 = vpop.f32.mrb[0].mxu0
      %v1975 = vpop.f32.mrb[0].mxu0
      %v1976 = vadd.f32 0.0, %v1975
      %v1977 = vpop.f32.mrb[0].mxu0
      %1978 = vmatprep.mubr.bf16.mxu0 0
      %1979 = vmatmul.mubr.bf16.gmra.mrb[0].mxu0 %v1893
      %v1980 = vpop.f32.mrb[0].mxu0
      %v1981 = vadd.f32 0.0, %v1980
      %v1982 = vpop.f32.mrb[0].mxu0
      %v1983 = vpop.f32.mrb[0].mxu0
      %v1984 = vadd.f32 0.0, %v1983
      %v1985 = vpop.f32.mrb[0].mxu0
      %1986 = vmatprep.mubr.bf16.mxu0 0
      %1987 = vmatmul.mubr.bf16.gmra.mrb[0].mxu0 %v1896
      %v1988 = vpop.f32.mrb[0].mxu0
      %v1989 = vadd.f32 0.0, %v1988
      %v1990 = vpop.f32.mrb[0].mxu0
      %v1991 = vpop.f32.mrb[0].mxu0
      %v1992 = vadd.f32 0.0, %v1991
      %v1993 = vpop.f32.mrb[0].mxu0
      %1994 = vmatprep.mubr.bf16.mxu0 0
      %1995 = vmatmul.mubr.bf16.gmra.mrb[0].mxu0 %v1899
      %v1996 = vpop.f32.mrb[0].mxu0
      %v1997 = vadd.f32 0.0, %v1996
      %v1998 = vpop.f32.mrb[0].mxu0
      %v1999 = vpop.f32.mrb[0].mxu0
      %v2000 = vadd.f32 0.0, %v1999
      %v2001 = vpop.f32.mrb[0].mxu0
      %2002 = vmatprep.mubr.bf16.mxu0 0
      %2003 = vmatmul.mubr.bf16.gmra.mrb[0].mxu0 %v1902
      %v2004 = vpop.f32.mrb[0].mxu0
      %v2005 = vadd.f32 0.0, %v2004
      %v2006 = vpop.f32.mrb[0].mxu0
      %v2007 = vpop.f32.mrb[0].mxu0
      %v2008 = vadd.f32 0.0, %v2007
      %v2009 = vpop.f32.mrb[0].mxu0
      %2010 = vmatprep.mubr.bf16.mxu0 0
      %2011 = vmatmul.mubr.bf16.gmra.mrb[0].mxu0 %v1905
      %v2012 = vpop.f32.mrb[0].mxu0
      %v2013 = vadd.f32 0.0, %v2012
      %v2014 = vpop.f32.mrb[0].mxu0
      %v2015 = vpop.f32.mrb[0].mxu0
      %v2016 = vadd.f32 0.0, %v2015
      %v2017 = vpop.f32.mrb[0].mxu0
      %2018 = vmatprep.mubr.bf16.mxu0 0
      %2019 = vmatmul.mubr.bf16.gmra.mrb[0].mxu0 %v1908
      %v2020 = vpop.f32.mrb[0].mxu0
      %v2021 = vadd.f32 0.0, %v2020
      %v2022 = vpop.f32.mrb[0].mxu0
      %v2023 = vpop.f32.mrb[0].mxu0
      %v2024 = vadd.f32 0.0, %v2023
      %v2025 = vpop.f32.mrb[0].mxu0
      %2026 = vdwg.mxu0
      %v2028 = vsel %vm1722, %v1837, 0
      %v2031 = vsel %vm1722, %v1838, 0
      %v2034 = vsel %vm1722, %v1839, 0
      %v2037 = vsel %vm1722, %v1840, 0
      %v2040 = vsel %vm1722, %v1841, 0
      %v2043 = vsel %vm1722, %v1842, 0
      %v2046 = vsel %vm1722, %v1843, 0
      %v2049 = vsel %vm1722, %v1844, 0
      %v2052 = vsel %vm1722, %v1845, 0
      %v2055 = vsel %vm1722, %v1846, 0
      %v2058 = vsel %vm1910, %v1847, 0
      %2060 = vmatprep.subr.bf16.mxu0 0
      %2061 = vmatpush1.bf16.msra.mxu0 %v2058
      %2062 = vmatprep.subr.bf16.mxu0 0
      %2063 = vmatpush1.bf16.msra.mxu0 0
      %2064 = vmatprep.subr.bf16.mxu0 0
      %2065 = vmatpush1.bf16.msra.mxu0 0
      %2066 = vmatprep.subr.bf16.mxu0 0
      %2067 = vmatpush1.bf16.msra.mxu0 0
      %2068 = vmatprep.subr.bf16.mxu0 0
      %2069 = vmatpush1.bf16.msra.mxu0 0
      %2070 = vmatprep.subr.bf16.mxu0 0
      %2071 = vmatpush1.bf16.msra.mxu0 0
      %2072 = vmatprep.subr.bf16.mxu0 0
      %2073 = vmatpush1.bf16.msra.mxu0 0
      %2074 = vmatprep.subr.bf16.mxu0 0
      %2075 = vmatpush1.bf16.msra.mxu0 0
      %2076 = vmatprep.subr.bf16.mxu0 0
      %2077 = vmatpush1.bf16.msra.mxu0 0
      %2078 = vmatprep.subr.bf16.mxu0 0
      %2079 = vmatpush1.bf16.msra.mxu0 0
      %2080 = vmatprep.subr.bf16.mxu0 0
      %2081 = vmatpush1.bf16.msra.mxu0 0
      %2082 = vmatprep.subr.bf16.mxu0 0
      %2083 = vmatpush1.bf16.msra.mxu0 0
      %2084 = vmatprep.subr.bf16.mxu0 0
      %2085 = vmatpush1.bf16.msra.mxu0 0
      %2086 = vmatprep.subr.bf16.mxu0 0
      %2087 = vmatpush1.bf16.msra.mxu0 0
      %2088 = vmatprep.subr.bf16.mxu0 0
      %2089 = vmatpush1.bf16.msra.mxu0 0
      %2090 = vmatprep.subr.bf16.mxu0 0
      %2091 = vmatpush1.bf16.msra.mxu0 0
      %2092 = vmatprep.mubr.bf16.mxu0 0
      %2093 = vmatmul.mubr.bf16.gmra.mrb[0].mxu0 %v2028
      %v2094 = vpop.f32.mrb[0].mxu0
      %v2095 = vadd.f32 %v1949, %v2094
      %v2096 = vpop.f32.mrb[0].mxu0
      %v2097 = vpop.f32.mrb[0].mxu0
      %v2098 = vadd.f32 %v1952, %v2097
      %v2099 = vpop.f32.mrb[0].mxu0
      %2100 = vmatprep.mubr.bf16.mxu0 0
      %2101 = vmatmul.mubr.bf16.gmra.mrb[0].mxu0 %v2031
      %v2102 = vpop.f32.mrb[0].mxu0
      %v2103 = vadd.f32 %v1957, %v2102
      %v2104 = vpop.f32.mrb[0].mxu0
      %v2105 = vpop.f32.mrb[0].mxu0
      %v2106 = vadd.f32 %v1960, %v2105
      %v2107 = vpop.f32.mrb[0].mxu0
      %2108 = vmatprep.mubr.bf16.mxu0 0
      %2109 = vmatmul.mubr.bf16.gmra.mrb[0].mxu0 %v2034
      %v2110 = vpop.f32.mrb[0].mxu0
      %v2111 = vadd.f32 %v1965, %v2110
      %v2112 = vpop.f32.mrb[0].mxu0
      %v2113 = vpop.f32.mrb[0].mxu0
      %v2114 = vadd.f32 %v1968, %v2113
      %v2115 = vpop.f32.mrb[0].mxu0
      %2116 = vmatprep.mubr.bf16.mxu0 0
      %2117 = vmatmul.mubr.bf16.gmra.mrb[0].mxu0 %v2037
      %v2118 = vpop.f32.mrb[0].mxu0
      %v2119 = vadd.f32 %v1973, %v2118
      %v2120 = vpop.f32.mrb[0].mxu0
      %v2121 = vpop.f32.mrb[0].mxu0
      %v2122 = vadd.f32 %v1976, %v2121
      %v2123 = vpop.f32.mrb[0].mxu0
      %2124 = vmatprep.mubr.bf16.mxu0 0
      %2125 = vmatmul.mubr.bf16.gmra.mrb[0].mxu0 %v2040
      %v2126 = vpop.f32.mrb[0].mxu0
      %v2127 = vadd.f32 %v1981, %v2126
      %v2128 = vpop.f32.mrb[0].mxu0
      %v2129 = vpop.f32.mrb[0].mxu0
      %v2130 = vadd.f32 %v1984, %v2129
      %v2131 = vpop.f32.mrb[0].mxu0
      %2132 = vmatprep.mubr.bf16.mxu0 0
      %2133 = vmatmul.mubr.bf16.gmra.mrb[0].mxu0 %v2043
      %v2134 = vpop.f32.mrb[0].mxu0
      %v2135 = vadd.f32 %v1989, %v2134
      %v2136 = vpop.f32.mrb[0].mxu0
      %v2137 = vpop.f32.mrb[0].mxu0
      %v2138 = vadd.f32 %v1992, %v2137
      %v2139 = vpop.f32.mrb[0].mxu0
      %2140 = vmatprep.mubr.bf16.mxu0 0
      %2141 = vmatmul.mubr.bf16.gmra.mrb[0].mxu0 %v2046
      %v2142 = vpop.f32.mrb[0].mxu0
      %v2143 = vadd.f32 %v1997, %v2142
      %v2144 = vpop.f32.mrb[0].mxu0
      %v2145 = vpop.f32.mrb[0].mxu0
      %v2146 = vadd.f32 %v2000, %v2145
      %v2147 = vpop.f32.mrb[0].mxu0
      %2148 = vmatprep.mubr.bf16.mxu0 0
      %2149 = vmatmul.mubr.bf16.gmra.mrb[0].mxu0 %v2049
      %v2150 = vpop.f32.mrb[0].mxu0
      %v2151 = vadd.f32 %v2005, %v2150
      %v2152 = vpop.f32.mrb[0].mxu0
      %v2153 = vpop.f32.mrb[0].mxu0
      %v2154 = vadd.f32 %v2008, %v2153
      %v2155 = vpop.f32.mrb[0].mxu0
      %2156 = vmatprep.mubr.bf16.mxu0 0
      %2157 = vmatmul.mubr.bf16.gmra.mrb[0].mxu0 %v2052
      %v2158 = vpop.f32.mrb[0].mxu0
      %v2159 = vadd.f32 %v2013, %v2158
      %v2160 = vpop.f32.mrb[0].mxu0
      %v2161 = vpop.f32.mrb[0].mxu0
      %v2162 = vadd.f32 %v2016, %v2161
      %v2163 = vpop.f32.mrb[0].mxu0
      %2164 = vmatprep.mubr.bf16.mxu0 0
      %2165 = vmatmul.mubr.bf16.gmra.mrb[0].mxu0 %v2055
      %v2166 = vpop.f32.mrb[0].mxu0
      %v2167 = vadd.f32 %v2021, %v2166
      %v2168 = vpop.f32.mrb[0].mxu0
      %v2169 = vpop.f32.mrb[0].mxu0
      %v2170 = vadd.f32 %v2024, %v2169
      %v2171 = vpop.f32.mrb[0].mxu0
      %2172 = vdwg.mxu0
      %v2173 = vld [vmem:[#allocation2 + $0x9] sm:$0xff]
      %v2174 = vld [vmem:[#allocation2 + $0x11] sm:$0xff]
      %v2175 = vld [vmem:[#allocation2 + $0x29] sm:$0xff]
      %v2176 = vld [vmem:[#allocation2 + $0x31] sm:$0xff]
      %v2177 = vld [vmem:[#allocation2 + $0x49] sm:$0xff]
      %v2178 = vld [vmem:[#allocation2 + $0x51] sm:$0xff]
      %v2179 = vld [vmem:[#allocation2 + $0x69] sm:$0xff]
      %v2180 = vld [vmem:[#allocation2 + $0x71] sm:$0xff]
      %v2181 = vld [vmem:[#allocation2 + $0x89] sm:$0xff]
      %v2182 = vld [vmem:[#allocation2 + $0x91] sm:$0xff]
      %v2183 = vld [vmem:[#allocation2 + $0xa9] sm:$0xff]
      %v2184 = vld [vmem:[#allocation2 + $0xb1] sm:$0xff]
      %v2185 = vld [vmem:[#allocation2 + $0xc9] sm:$0xff]
      %v2186 = vld [vmem:[#allocation2 + $0xd1] sm:$0xff]
      %v2187 = vld [vmem:[#allocation2 + $0xe9] sm:$0xff]
      %v2188 = vld [vmem:[#allocation2 + $0xf1] sm:$0xff]
      %v2189 = vld [vmem:[#allocation2 + $0x109] sm:$0xff]
      %v2190 = vld [vmem:[#allocation2 + $0x111] sm:$0xff]
      %v2191 = vld [vmem:[#allocation2 + $0x129] sm:$0xff]
      %v2192 = vld [vmem:[#allocation2 + $0x131] sm:$0xff]
      %v2193 = vpack.c.bf16 %v2174, %v2173
      %v2194 = vpack.c.bf16 %v2176, %v2175
      %v2195 = vpack.c.bf16 %v2178, %v2177
      %v2196 = vpack.c.bf16 %v2180, %v2179
      %v2197 = vpack.c.bf16 %v2182, %v2181
      %v2198 = vpack.c.bf16 %v2184, %v2183
      %v2199 = vpack.c.bf16 %v2186, %v2185
      %v2200 = vpack.c.bf16 %v2188, %v2187
      %v2201 = vpack.c.bf16 %v2190, %v2189
      %v2202 = vpack.c.bf16 %v2192, %v2191
      %s2203 = scalar_lea.vmem %s3, 8
      %v2204 = vld [vmem:[%s2203] sm:$0x7]
      %v2206 = vsel %vm1722, %v2193, 0
      %v2209 = vsel %vm1722, %v2194, 0
      %v2212 = vsel %vm1722, %v2195, 0
      %v2215 = vsel %vm1722, %v2196, 0
      %v2218 = vsel %vm1722, %v2197, 0
      %v2221 = vsel %vm1722, %v2198, 0
      %v2224 = vsel %vm1722, %v2199, 0
      %v2227 = vsel %vm1722, %v2200, 0
      %v2230 = vsel %vm1722, %v2201, 0
      %v2233 = vsel %vm1722, %v2202, 0
      %v2236 = vsel %vm1910, %v2204, 0
      %2238 = vmatprep.subr.bf16.mxu0 0
      %2239 = vmatpush1.bf16.msra.mxu0 %v2236
      %2240 = vmatprep.subr.bf16.mxu0 0
      %2241 = vmatpush1.bf16.msra.mxu0 0
      %2242 = vmatprep.subr.bf16.mxu0 0
      %2243 = vmatpush1.bf16.msra.mxu0 0
      %2244 = vmatprep.subr.bf16.mxu0 0
      %2245 = vmatpush1.bf16.msra.mxu0 0
      %2246 = vmatprep.subr.bf16.mxu0 0
      %2247 = vmatpush1.bf16.msra.mxu0 0
      %2248 = vmatprep.subr.bf16.mxu0 0
      %2249 = vmatpush1.bf16.msra.mxu0 0
      %2250 = vmatprep.subr.bf16.mxu0 0
      %2251 = vmatpush1.bf16.msra.mxu0 0
      %2252 = vmatprep.subr.bf16.mxu0 0
      %2253 = vmatpush1.bf16.msra.mxu0 0
      %2254 = vmatprep.subr.bf16.mxu0 0
      %2255 = vmatpush1.bf16.msra.mxu0 0
      %2256 = vmatprep.subr.bf16.mxu0 0
      %2257 = vmatpush1.bf16.msra.mxu0 0
      %2258 = vmatprep.subr.bf16.mxu0 0
      %2259 = vmatpush1.bf16.msra.mxu0 0
      %2260 = vmatprep.subr.bf16.mxu0 0
      %2261 = vmatpush1.bf16.msra.mxu0 0
      %2262 = vmatprep.subr.bf16.mxu0 0
      %2263 = vmatpush1.bf16.msra.mxu0 0
      %2264 = vmatprep.subr.bf16.mxu0 0
      %2265 = vmatpush1.bf16.msra.mxu0 0
      %2266 = vmatprep.subr.bf16.mxu0 0
      %2267 = vmatpush1.bf16.msra.mxu0 0
      %2268 = vmatprep.subr.bf16.mxu0 0
      %2269 = vmatpush1.bf16.msra.mxu0 0
      %2270 = vmatprep.mubr.bf16.mxu0 0
      %2271 = vmatmul.mubr.bf16.gmra.mrb[0].mxu0 %v2206
      %v2272 = vpop.f32.mrb[0].mxu0
      %v2273 = vadd.f32 0.0, %v2272
      %v2274 = vpop.f32.mrb[0].mxu0
      %v2275 = vpop.f32.mrb[0].mxu0
      %v2276 = vadd.f32 0.0, %v2275
      %v2277 = vpop.f32.mrb[0].mxu0
      %2278 = vmatprep.mubr.bf16.mxu0 0
      %2279 = vmatmul.mubr.bf16.gmra.mrb[0].mxu0 %v2209
      %v2280 = vpop.f32.mrb[0].mxu0
      %v2281 = vadd.f32 0.0, %v2280
      %v2282 = vpop.f32.mrb[0].mxu0
      %v2283 = vpop.f32.mrb[0].mxu0
      %v2284 = vadd.f32 0.0, %v2283
      %v2285 = vpop.f32.mrb[0].mxu0
      %2286 = vmatprep.mubr.bf16.mxu0 0
      %2287 = vmatmul.mubr.bf16.gmra.mrb[0].mxu0 %v2212
      %v2288 = vpop.f32.mrb[0].mxu0
      %v2289 = vadd.f32 0.0, %v2288
      %v2290 = vpop.f32.mrb[0].mxu0
      %v2291 = vpop.f32.mrb[0].mxu0
      %v2292 = vadd.f32 0.0, %v2291
      %v2293 = vpop.f32.mrb[0].mxu0
      %2294 = vmatprep.mubr.bf16.mxu0 0
      %2295 = vmatmul.mubr.bf16.gmra.mrb[0].mxu0 %v2215
      %v2296 = vpop.f32.mrb[0].mxu0
      %v2297 = vadd.f32 0.0, %v2296
      %v2298 = vpop.f32.mrb[0].mxu0
      %v2299 = vpop.f32.mrb[0].mxu0
      %v2300 = vadd.f32 0.0, %v2299
      %v2301 = vpop.f32.mrb[0].mxu0
      %2302 = vmatprep.mubr.bf16.mxu0 0
      %2303 = vmatmul.mubr.bf16.gmra.mrb[0].mxu0 %v2218
      %v2304 = vpop.f32.mrb[0].mxu0
      %v2305 = vadd.f32 0.0, %v2304
      %v2306 = vpop.f32.mrb[0].mxu0
      %v2307 = vpop.f32.mrb[0].mxu0
      %v2308 = vadd.f32 0.0, %v2307
      %v2309 = vpop.f32.mrb[0].mxu0
      %2310 = vmatprep.mubr.bf16.mxu0 0
      %2311 = vmatmul.mubr.bf16.gmra.mrb[0].mxu0 %v2221
      %v2312 = vpop.f32.mrb[0].mxu0
      %v2313 = vadd.f32 0.0, %v2312
      %v2314 = vpop.f32.mrb[0].mxu0
      %v2315 = vpop.f32.mrb[0].mxu0
      %v2316 = vadd.f32 0.0, %v2315
      %v2317 = vpop.f32.mrb[0].mxu0
      %2318 = vmatprep.mubr.bf16.mxu0 0
      %2319 = vmatmul.mubr.bf16.gmra.mrb[0].mxu0 %v2224
      %v2320 = vpop.f32.mrb[0].mxu0
      %v2321 = vadd.f32 0.0, %v2320
      %v2322 = vpop.f32.mrb[0].mxu0
      %v2323 = vpop.f32.mrb[0].mxu0
      %v2324 = vadd.f32 0.0, %v2323
      %v2325 = vpop.f32.mrb[0].mxu0
      %2326 = vmatprep.mubr.bf16.mxu0 0
      %2327 = vmatmul.mubr.bf16.gmra.mrb[0].mxu0 %v2227
      %v2328 = vpop.f32.mrb[0].mxu0
      %v2329 = vadd.f32 0.0, %v2328
      %v2330 = vpop.f32.mrb[0].mxu0
      %v2331 = vpop.f32.mrb[0].mxu0
      %v2332 = vadd.f32 0.0, %v2331
      %v2333 = vpop.f32.mrb[0].mxu0
      %2334 = vmatprep.mubr.bf16.mxu0 0
      %2335 = vmatmul.mubr.bf16.gmra.mrb[0].mxu0 %v2230
      %v2336 = vpop.f32.mrb[0].mxu0
      %v2337 = vadd.f32 0.0, %v2336
      %v2338 = vpop.f32.mrb[0].mxu0
      %v2339 = vpop.f32.mrb[0].mxu0
      %v2340 = vadd.f32 0.0, %v2339
      %v2341 = vpop.f32.mrb[0].mxu0
      %2342 = vmatprep.mubr.bf16.mxu0 0
      %2343 = vmatmul.mubr.bf16.gmra.mrb[0].mxu0 %v2233
      %v2344 = vpop.f32.mrb[0].mxu0
      %v2345 = vadd.f32 0.0, %v2344
      %v2346 = vpop.f32.mrb[0].mxu0
      %v2347 = vpop.f32.mrb[0].mxu0
      %v2348 = vadd.f32 0.0, %v2347
      %v2349 = vpop.f32.mrb[0].mxu0
      %2350 = vdwg.mxu0
      %v2351 = vadd.f32 %v2095, %v2273
      %v2352 = vadd.f32 %v2098, %v2276
      %v2353 = vadd.f32 %v2103, %v2281
      %v2354 = vadd.f32 %v2106, %v2284
      %v2355 = vadd.f32 %v2111, %v2289
      %v2356 = vadd.f32 %v2114, %v2292
      %v2357 = vadd.f32 %v2119, %v2297
      %v2358 = vadd.f32 %v2122, %v2300
      %v2359 = vadd.f32 %v2127, %v2305
      %v2360 = vadd.f32 %v2130, %v2308
      %v2361 = vadd.f32 %v2135, %v2313
      %v2362 = vadd.f32 %v2138, %v2316
      %v2363 = vadd.f32 %v2143, %v2321
      %v2364 = vadd.f32 %v2146, %v2324
      %v2365 = vadd.f32 %v2151, %v2329
      %v2366 = vadd.f32 %v2154, %v2332
      %v2367 = vadd.f32 %v2159, %v2337
      %v2368 = vadd.f32 %v2162, %v2340
      %v2369 = vadd.f32 %v2167, %v2345
      %v2370 = vadd.f32 %v2170, %v2348
      %v2371 = vld [vmem:[#allocation2 + $0xa] sm:$0xff]
      %v2372 = vld [vmem:[#allocation2 + $0x12] sm:$0xff]
      %v2373 = vld [vmem:[#allocation2 + $0x2a] sm:$0xff]
      %v2374 = vld [vmem:[#allocation2 + $0x32] sm:$0xff]
      %v2375 = vld [vmem:[#allocation2 + $0x4a] sm:$0xff]
      %v2376 = vld [vmem:[#allocation2 + $0x52] sm:$0xff]
      %v2377 = vld [vmem:[#allocation2 + $0x6a] sm:$0xff]
      %v2378 = vld [vmem:[#allocation2 + $0x72] sm:$0xff]
      %v2379 = vld [vmem:[#allocation2 + $0x8a] sm:$0xff]
      %v2380 = vld [vmem:[#allocation2 + $0x92] sm:$0xff]
      %v2381 = vld [vmem:[#allocation2 + $0xaa] sm:$0xff]
      %v2382 = vld [vmem:[#allocation2 + $0xb2] sm:$0xff]
      %v2383 = vld [vmem:[#allocation2 + $0xca] sm:$0xff]
      %v2384 = vld [vmem:[#allocation2 + $0xd2] sm:$0xff]
      %v2385 = vld [vmem:[#allocation2 + $0xea] sm:$0xff]
      %v2386 = vld [vmem:[#allocation2 + $0xf2] sm:$0xff]
      %v2387 = vld [vmem:[#allocation2 + $0x10a] sm:$0xff]
      %v2388 = vld [vmem:[#allocation2 + $0x112] sm:$0xff]
      %v2389 = vld [vmem:[#allocation2 + $0x12a] sm:$0xff]
      %v2390 = vld [vmem:[#allocation2 + $0x132] sm:$0xff]
      %v2391 = vpack.c.bf16 %v2372, %v2371
      %v2392 = vpack.c.bf16 %v2374, %v2373
      %v2393 = vpack.c.bf16 %v2376, %v2375
      %v2394 = vpack.c.bf16 %v2378, %v2377
      %v2395 = vpack.c.bf16 %v2380, %v2379
      %v2396 = vpack.c.bf16 %v2382, %v2381
      %v2397 = vpack.c.bf16 %v2384, %v2383
      %v2398 = vpack.c.bf16 %v2386, %v2385
      %v2399 = vpack.c.bf16 %v2388, %v2387
      %v2400 = vpack.c.bf16 %v2390, %v2389
      %s2401 = scalar_lea.vmem %s3, 12
      %v2402 = vld [vmem:[%s2401] sm:$0x7]
      %v2404 = vsel %vm1722, %v2391, 0
      %v2407 = vsel %vm1722, %v2392, 0
      %v2410 = vsel %vm1722, %v2393, 0
      %v2413 = vsel %vm1722, %v2394, 0
      %v2416 = vsel %vm1722, %v2395, 0
      %v2419 = vsel %vm1722, %v2396, 0
      %v2422 = vsel %vm1722, %v2397, 0
      %v2425 = vsel %vm1722, %v2398, 0
      %v2428 = vsel %vm1722, %v2399, 0
      %v2431 = vsel %vm1722, %v2400, 0
      %v2434 = vsel %vm1910, %v2402, 0
      %2436 = vmatprep.subr.bf16.mxu0 0
      %2437 = vmatpush1.bf16.msra.mxu0 %v2434
      %2438 = vmatprep.subr.bf16.mxu0 0
      %2439 = vmatpush1.bf16.msra.mxu0 0
      %2440 = vmatprep.subr.bf16.mxu0 0
      %2441 = vmatpush1.bf16.msra.mxu0 0
      %2442 = vmatprep.subr.bf16.mxu0 0
      %2443 = vmatpush1.bf16.msra.mxu0 0
      %2444 = vmatprep.subr.bf16.mxu0 0
      %2445 = vmatpush1.bf16.msra.mxu0 0
      %2446 = vmatprep.subr.bf16.mxu0 0
      %2447 = vmatpush1.bf16.msra.mxu0 0
      %2448 = vmatprep.subr.bf16.mxu0 0
      %2449 = vmatpush1.bf16.msra.mxu0 0
      %2450 = vmatprep.subr.bf16.mxu0 0
      %2451 = vmatpush1.bf16.msra.mxu0 0
      %2452 = vmatprep.subr.bf16.mxu0 0
      %2453 = vmatpush1.bf16.msra.mxu0 0
      %2454 = vmatprep.subr.bf16.mxu0 0
      %2455 = vmatpush1.bf16.msra.mxu0 0
      %2456 = vmatprep.subr.bf16.mxu0 0
      %2457 = vmatpush1.bf16.msra.mxu0 0
      %2458 = vmatprep.subr.bf16.mxu0 0
      %2459 = vmatpush1.bf16.msra.mxu0 0
      %2460 = vmatprep.subr.bf16.mxu0 0
      %2461 = vmatpush1.bf16.msra.mxu0 0
      %2462 = vmatprep.subr.bf16.mxu0 0
      %2463 = vmatpush1.bf16.msra.mxu0 0
      %2464 = vmatprep.subr.bf16.mxu0 0
      %2465 = vmatpush1.bf16.msra.mxu0 0
      %2466 = vmatprep.subr.bf16.mxu0 0
      %2467 = vmatpush1.bf16.msra.mxu0 0
      %2468 = vmatprep.mubr.bf16.mxu0 0
      %2469 = vmatmul.mubr.bf16.gmra.mrb[0].mxu0 %v2404
      %v2470 = vpop.f32.mrb[0].mxu0
      %v2471 = vadd.f32 0.0, %v2470
      %v2472 = vpop.f32.mrb[0].mxu0
      %v2473 = vpop.f32.mrb[0].mxu0
      %v2474 = vadd.f32 0.0, %v2473
      %v2475 = vpop.f32.mrb[0].mxu0
      %2476 = vmatprep.mubr.bf16.mxu0 0
      %2477 = vmatmul.mubr.bf16.gmra.mrb[0].mxu0 %v2407
      %v2478 = vpop.f32.mrb[0].mxu0
      %v2479 = vadd.f32 0.0, %v2478
      %v2480 = vpop.f32.mrb[0].mxu0
      %v2481 = vpop.f32.mrb[0].mxu0
      %v2482 = vadd.f32 0.0, %v2481
      %v2483 = vpop.f32.mrb[0].mxu0
      %2484 = vmatprep.mubr.bf16.mxu0 0
      %2485 = vmatmul.mubr.bf16.gmra.mrb[0].mxu0 %v2410
      %v2486 = vpop.f32.mrb[0].mxu0
      %v2487 = vadd.f32 0.0, %v2486
      %v2488 = vpop.f32.mrb[0].mxu0
      %v2489 = vpop.f32.mrb[0].mxu0
      %v2490 = vadd.f32 0.0, %v2489
      %v2491 = vpop.f32.mrb[0].mxu0
      %2492 = vmatprep.mubr.bf16.mxu0 0
      %2493 = vmatmul.mubr.bf16.gmra.mrb[0].mxu0 %v2413
      %v2494 = vpop.f32.mrb[0].mxu0
      %v2495 = vadd.f32 0.0, %v2494
      %v2496 = vpop.f32.mrb[0].mxu0
      %v2497 = vpop.f32.mrb[0].mxu0
      %v2498 = vadd.f32 0.0, %v2497
      %v2499 = vpop.f32.mrb[0].mxu0
      %2500 = vmatprep.mubr.bf16.mxu0 0
      %2501 = vmatmul.mubr.bf16.gmra.mrb[0].mxu0 %v2416
      %v2502 = vpop.f32.mrb[0].mxu0
      %v2503 = vadd.f32 0.0, %v2502
      %v2504 = vpop.f32.mrb[0].mxu0
      %v2505 = vpop.f32.mrb[0].mxu0
      %v2506 = vadd.f32 0.0, %v2505
      %v2507 = vpop.f32.mrb[0].mxu0
      %2508 = vmatprep.mubr.bf16.mxu0 0
      %2509 = vmatmul.mubr.bf16.gmra.mrb[0].mxu0 %v2419
      %v2510 = vpop.f32.mrb[0].mxu0
      %v2511 = vadd.f32 0.0, %v2510
      %v2512 = vpop.f32.mrb[0].mxu0
      %v2513 = vpop.f32.mrb[0].mxu0
      %v2514 = vadd.f32 0.0, %v2513
      %v2515 = vpop.f32.mrb[0].mxu0
      %2516 = vmatprep.mubr.bf16.mxu0 0
      %2517 = vmatmul.mubr.bf16.gmra.mrb[0].mxu0 %v2422
      %v2518 = vpop.f32.mrb[0].mxu0
      %v2519 = vadd.f32 0.0, %v2518
      %v2520 = vpop.f32.mrb[0].mxu0
      %v2521 = vpop.f32.mrb[0].mxu0
      %v2522 = vadd.f32 0.0, %v2521
      %v2523 = vpop.f32.mrb[0].mxu0
      %2524 = vmatprep.mubr.bf16.mxu0 0
      %2525 = vmatmul.mubr.bf16.gmra.mrb[0].mxu0 %v2425
      %v2526 = vpop.f32.mrb[0].mxu0
      %v2527 = vadd.f32 0.0, %v2526
      %v2528 = vpop.f32.mrb[0].mxu0
      %v2529 = vpop.f32.mrb[0].mxu0
      %v2530 = vadd.f32 0.0, %v2529
      %v2531 = vpop.f32.mrb[0].mxu0
      %2532 = vmatprep.mubr.bf16.mxu0 0
      %2533 = vmatmul.mubr.bf16.gmra.mrb[0].mxu0 %v2428
      %v2534 = vpop.f32.mrb[0].mxu0
      %v2535 = vadd.f32 0.0, %v2534
      %v2536 = vpop.f32.mrb[0].mxu0
      %v2537 = vpop.f32.mrb[0].mxu0
      %v2538 = vadd.f32 0.0, %v2537
      %v2539 = vpop.f32.mrb[0].mxu0
      %2540 = vmatprep.mubr.bf16.mxu0 0
      %2541 = vmatmul.mubr.bf16.gmra.mrb[0].mxu0 %v2431
      %v2542 = vpop.f32.mrb[0].mxu0
      %v2543 = vadd.f32 0.0, %v2542
      %v2544 = vpop.f32.mrb[0].mxu0
      %v2545 = vpop.f32.mrb[0].mxu0
      %v2546 = vadd.f32 0.0, %v2545
      %v2547 = vpop.f32.mrb[0].mxu0
      %2548 = vdwg.mxu0
      %v2549 = vadd.f32 %v2351, %v2471
      %v2550 = vadd.f32 %v2352, %v2474
      %v2551 = vadd.f32 %v2353, %v2479
      %v2552 = vadd.f32 %v2354, %v2482
      %v2553 = vadd.f32 %v2355, %v2487
      %v2554 = vadd.f32 %v2356, %v2490
      %v2555 = vadd.f32 %v2357, %v2495
      %v2556 = vadd.f32 %v2358, %v2498
      %v2557 = vadd.f32 %v2359, %v2503
      %v2558 = vadd.f32 %v2360, %v2506
      %v2559 = vadd.f32 %v2361, %v2511
      %v2560 = vadd.f32 %v2362, %v2514
      %v2561 = vadd.f32 %v2363, %v2519
      %v2562 = vadd.f32 %v2364, %v2522
      %v2563 = vadd.f32 %v2365, %v2527
      %v2564 = vadd.f32 %v2366, %v2530
      %v2565 = vadd.f32 %v2367, %v2535
      %v2566 = vadd.f32 %v2368, %v2538
      %v2567 = vadd.f32 %v2369, %v2543
      %v2568 = vadd.f32 %v2370, %v2546
      %v2569 = vld [vmem:[#allocation2 + $0xb] sm:$0xff]
      %v2570 = vld [vmem:[#allocation2 + $0x13] sm:$0xff]
      %v2571 = vld [vmem:[#allocation2 + $0x2b] sm:$0xff]
      %v2572 = vld [vmem:[#allocation2 + $0x33] sm:$0xff]
      %v2573 = vld [vmem:[#allocation2 + $0x4b] sm:$0xff]
      %v2574 = vld [vmem:[#allocation2 + $0x53] sm:$0xff]
      %v2575 = vld [vmem:[#allocation2 + $0x6b] sm:$0xff]
      %v2576 = vld [vmem:[#allocation2 + $0x73] sm:$0xff]
      %v2577 = vld [vmem:[#allocation2 + $0x8b] sm:$0xff]
      %v2578 = vld [vmem:[#allocation2 + $0x93] sm:$0xff]
      %v2579 = vld [vmem:[#allocation2 + $0xab] sm:$0xff]
      %v2580 = vld [vmem:[#allocation2 + $0xb3] sm:$0xff]
      %v2581 = vld [vmem:[#allocation2 + $0xcb] sm:$0xff]
      %v2582 = vld [vmem:[#allocation2 + $0xd3] sm:$0xff]
      %v2583 = vld [vmem:[#allocation2 + $0xeb] sm:$0xff]
      %v2584 = vld [vmem:[#allocation2 + $0xf3] sm:$0xff]
      %v2585 = vld [vmem:[#allocation2 + $0x10b] sm:$0xff]
      %v2586 = vld [vmem:[#allocation2 + $0x113] sm:$0xff]
      %v2587 = vld [vmem:[#allocation2 + $0x12b] sm:$0xff]
      %v2588 = vld [vmem:[#allocation2 + $0x133] sm:$0xff]
      %v2589 = vpack.c.bf16 %v2570, %v2569
      %v2590 = vpack.c.bf16 %v2572, %v2571
      %v2591 = vpack.c.bf16 %v2574, %v2573
      %v2592 = vpack.c.bf16 %v2576, %v2575
      %v2593 = vpack.c.bf16 %v2578, %v2577
      %v2594 = vpack.c.bf16 %v2580, %v2579
      %v2595 = vpack.c.bf16 %v2582, %v2581
      %v2596 = vpack.c.bf16 %v2584, %v2583
      %v2597 = vpack.c.bf16 %v2586, %v2585
      %v2598 = vpack.c.bf16 %v2588, %v2587
      %s2599 = scalar_lea.vmem %s3, 16
      %v2600 = vld [vmem:[%s2599] sm:$0x7]
      %v2602 = vsel %vm1722, %v2589, 0
      %v2605 = vsel %vm1722, %v2590, 0
      %v2608 = vsel %vm1722, %v2591, 0
      %v2611 = vsel %vm1722, %v2592, 0
      %v2614 = vsel %vm1722, %v2593, 0
      %v2617 = vsel %vm1722, %v2594, 0
      %v2620 = vsel %vm1722, %v2595, 0
      %v2623 = vsel %vm1722, %v2596, 0
      %v2626 = vsel %vm1722, %v2597, 0
      %v2629 = vsel %vm1722, %v2598, 0
      %v2632 = vsel %vm1910, %v2600, 0
      %2634 = vmatprep.subr.bf16.mxu0 0
      %2635 = vmatpush1.bf16.msra.mxu0 %v2632
      %2636 = vmatprep.subr.bf16.mxu0 0
      %2637 = vmatpush1.bf16.msra.mxu0 0
      %2638 = vmatprep.subr.bf16.mxu0 0
      %2639 = vmatpush1.bf16.msra.mxu0 0
      %2640 = vmatprep.subr.bf16.mxu0 0
      %2641 = vmatpush1.bf16.msra.mxu0 0
      %2642 = vmatprep.subr.bf16.mxu0 0
      %2643 = vmatpush1.bf16.msra.mxu0 0
      %2644 = vmatprep.subr.bf16.mxu0 0
      %2645 = vmatpush1.bf16.msra.mxu0 0
      %2646 = vmatprep.subr.bf16.mxu0 0
      %2647 = vmatpush1.bf16.msra.mxu0 0
      %2648 = vmatprep.subr.bf16.mxu0 0
      %2649 = vmatpush1.bf16.msra.mxu0 0
      %2650 = vmatprep.subr.bf16.mxu0 0
      %2651 = vmatpush1.bf16.msra.mxu0 0
      %2652 = vmatprep.subr.bf16.mxu0 0
      %2653 = vmatpush1.bf16.msra.mxu0 0
      %2654 = vmatprep.subr.bf16.mxu0 0
      %2655 = vmatpush1.bf16.msra.mxu0 0
      %2656 = vmatprep.subr.bf16.mxu0 0
      %2657 = vmatpush1.bf16.msra.mxu0 0
      %2658 = vmatprep.subr.bf16.mxu0 0
      %2659 = vmatpush1.bf16.msra.mxu0 0
      %2660 = vmatprep.subr.bf16.mxu0 0
      %2661 = vmatpush1.bf16.msra.mxu0 0
      %2662 = vmatprep.subr.bf16.mxu0 0
      %2663 = vmatpush1.bf16.msra.mxu0 0
      %2664 = vmatprep.subr.bf16.mxu0 0
      %2665 = vmatpush1.bf16.msra.mxu0 0
      %2666 = vmatprep.mubr.bf16.mxu0 0
      %2667 = vmatmul.mubr.bf16.gmra.mrb[0].mxu0 %v2602
      %v2668 = vpop.f32.mrb[0].mxu0
      %v2669 = vadd.f32 0.0, %v2668
      %v2670 = vpop.f32.mrb[0].mxu0
      %v2671 = vpop.f32.mrb[0].mxu0
      %v2672 = vadd.f32 0.0, %v2671
      %v2673 = vpop.f32.mrb[0].mxu0
      %2674 = vmatprep.mubr.bf16.mxu0 0
      %2675 = vmatmul.mubr.bf16.gmra.mrb[0].mxu0 %v2605
      %v2676 = vpop.f32.mrb[0].mxu0
      %v2677 = vadd.f32 0.0, %v2676
      %v2678 = vpop.f32.mrb[0].mxu0
      %v2679 = vpop.f32.mrb[0].mxu0
      %v2680 = vadd.f32 0.0, %v2679
      %v2681 = vpop.f32.mrb[0].mxu0
      %2682 = vmatprep.mubr.bf16.mxu0 0
      %2683 = vmatmul.mubr.bf16.gmra.mrb[0].mxu0 %v2608
      %v2684 = vpop.f32.mrb[0].mxu0
      %v2685 = vadd.f32 0.0, %v2684
      %v2686 = vpop.f32.mrb[0].mxu0
      %v2687 = vpop.f32.mrb[0].mxu0
      %v2688 = vadd.f32 0.0, %v2687
      %v2689 = vpop.f32.mrb[0].mxu0
      %2690 = vmatprep.mubr.bf16.mxu0 0
      %2691 = vmatmul.mubr.bf16.gmra.mrb[0].mxu0 %v2611
      %v2692 = vpop.f32.mrb[0].mxu0
      %v2693 = vadd.f32 0.0, %v2692
      %v2694 = vpop.f32.mrb[0].mxu0
      %v2695 = vpop.f32.mrb[0].mxu0
      %v2696 = vadd.f32 0.0, %v2695
      %v2697 = vpop.f32.mrb[0].mxu0
      %2698 = vmatprep.mubr.bf16.mxu0 0
      %2699 = vmatmul.mubr.bf16.gmra.mrb[0].mxu0 %v2614
      %v2700 = vpop.f32.mrb[0].mxu0
      %v2701 = vadd.f32 0.0, %v2700
      %v2702 = vpop.f32.mrb[0].mxu0
      %v2703 = vpop.f32.mrb[0].mxu0
      %v2704 = vadd.f32 0.0, %v2703
      %v2705 = vpop.f32.mrb[0].mxu0
      %2706 = vmatprep.mubr.bf16.mxu0 0
      %2707 = vmatmul.mubr.bf16.gmra.mrb[0].mxu0 %v2617
      %v2708 = vpop.f32.mrb[0].mxu0
      %v2709 = vadd.f32 0.0, %v2708
      %v2710 = vpop.f32.mrb[0].mxu0
      %v2711 = vpop.f32.mrb[0].mxu0
      %v2712 = vadd.f32 0.0, %v2711
      %v2713 = vpop.f32.mrb[0].mxu0
      %2714 = vmatprep.mubr.bf16.mxu0 0
      %2715 = vmatmul.mubr.bf16.gmra.mrb[0].mxu0 %v2620
      %v2716 = vpop.f32.mrb[0].mxu0
      %v2717 = vadd.f32 0.0, %v2716
      %v2718 = vpop.f32.mrb[0].mxu0
      %v2719 = vpop.f32.mrb[0].mxu0
      %v2720 = vadd.f32 0.0, %v2719
      %v2721 = vpop.f32.mrb[0].mxu0
      %2722 = vmatprep.mubr.bf16.mxu0 0
      %2723 = vmatmul.mubr.bf16.gmra.mrb[0].mxu0 %v2623
      %v2724 = vpop.f32.mrb[0].mxu0
      %v2725 = vadd.f32 0.0, %v2724
      %v2726 = vpop.f32.mrb[0].mxu0
      %v2727 = vpop.f32.mrb[0].mxu0
      %v2728 = vadd.f32 0.0, %v2727
      %v2729 = vpop.f32.mrb[0].mxu0
      %2730 = vmatprep.mubr.bf16.mxu0 0
      %2731 = vmatmul.mubr.bf16.gmra.mrb[0].mxu0 %v2626
      %v2732 = vpop.f32.mrb[0].mxu0
      %v2733 = vadd.f32 0.0, %v2732
      %v2734 = vpop.f32.mrb[0].mxu0
      %v2735 = vpop.f32.mrb[0].mxu0
      %v2736 = vadd.f32 0.0, %v2735
      %v2737 = vpop.f32.mrb[0].mxu0
      %2738 = vmatprep.mubr.bf16.mxu0 0
      %2739 = vmatmul.mubr.bf16.gmra.mrb[0].mxu0 %v2629
      %v2740 = vpop.f32.mrb[0].mxu0
      %v2741 = vadd.f32 0.0, %v2740
      %v2742 = vpop.f32.mrb[0].mxu0
      %v2743 = vpop.f32.mrb[0].mxu0
      %v2744 = vadd.f32 0.0, %v2743
      %v2745 = vpop.f32.mrb[0].mxu0
      %2746 = vdwg.mxu0
      %v2747 = vadd.f32 %v2549, %v2669
      %v2748 = vadd.f32 %v2550, %v2672
      %v2749 = vadd.f32 %v2551, %v2677
      %v2750 = vadd.f32 %v2552, %v2680
      %v2751 = vadd.f32 %v2553, %v2685
      %v2752 = vadd.f32 %v2554, %v2688
      %v2753 = vadd.f32 %v2555, %v2693
      %v2754 = vadd.f32 %v2556, %v2696
      %v2755 = vadd.f32 %v2557, %v2701
      %v2756 = vadd.f32 %v2558, %v2704
      %v2757 = vadd.f32 %v2559, %v2709
      %v2758 = vadd.f32 %v2560, %v2712
      %v2759 = vadd.f32 %v2561, %v2717
      %v2760 = vadd.f32 %v2562, %v2720
      %v2761 = vadd.f32 %v2563, %v2725
      %v2762 = vadd.f32 %v2564, %v2728
      %v2763 = vadd.f32 %v2565, %v2733
      %v2764 = vadd.f32 %v2566, %v2736
      %v2765 = vadd.f32 %v2567, %v2741
      %v2766 = vadd.f32 %v2568, %v2744
      %v2767 = vld [vmem:[#allocation2 + $0xc] sm:$0xff]
      %v2768 = vld [vmem:[#allocation2 + $0x14] sm:$0xff]
      %v2769 = vld [vmem:[#allocation2 + $0x2c] sm:$0xff]
      %v2770 = vld [vmem:[#allocation2 + $0x34] sm:$0xff]
      %v2771 = vld [vmem:[#allocation2 + $0x4c] sm:$0xff]
      %v2772 = vld [vmem:[#allocation2 + $0x54] sm:$0xff]
      %v2773 = vld [vmem:[#allocation2 + $0x6c] sm:$0xff]
      %v2774 = vld [vmem:[#allocation2 + $0x74] sm:$0xff]
      %v2775 = vld [vmem:[#allocation2 + $0x8c] sm:$0xff]
      %v2776 = vld [vmem:[#allocation2 + $0x94] sm:$0xff]
      %v2777 = vld [vmem:[#allocation2 + $0xac] sm:$0xff]
      %v2778 = vld [vmem:[#allocation2 + $0xb4] sm:$0xff]
      %v2779 = vld [vmem:[#allocation2 + $0xcc] sm:$0xff]
      %v2780 = vld [vmem:[#allocation2 + $0xd4] sm:$0xff]
      %v2781 = vld [vmem:[#allocation2 + $0xec] sm:$0xff]
      %v2782 = vld [vmem:[#allocation2 + $0xf4] sm:$0xff]
      %v2783 = vld [vmem:[#allocation2 + $0x10c] sm:$0xff]
      %v2784 = vld [vmem:[#allocation2 + $0x114] sm:$0xff]
      %v2785 = vld [vmem:[#allocation2 + $0x12c] sm:$0xff]
      %v2786 = vld [vmem:[#allocation2 + $0x134] sm:$0xff]
      %v2787 = vpack.c.bf16 %v2768, %v2767
      %v2788 = vpack.c.bf16 %v2770, %v2769
      %v2789 = vpack.c.bf16 %v2772, %v2771
      %v2790 = vpack.c.bf16 %v2774, %v2773
      %v2791 = vpack.c.bf16 %v2776, %v2775
      %v2792 = vpack.c.bf16 %v2778, %v2777
      %v2793 = vpack.c.bf16 %v2780, %v2779
      %v2794 = vpack.c.bf16 %v2782, %v2781
      %v2795 = vpack.c.bf16 %v2784, %v2783
      %v2796 = vpack.c.bf16 %v2786, %v2785
      %s2797 = scalar_lea.vmem %s3, 20
      %v2798 = vld [vmem:[%s2797] sm:$0x7]
      %v2800 = vsel %vm1722, %v2787, 0
      %v2803 = vsel %vm1722, %v2788, 0
      %v2806 = vsel %vm1722, %v2789, 0
      %v2809 = vsel %vm1722, %v2790, 0
      %v2812 = vsel %vm1722, %v2791, 0
      %v2815 = vsel %vm1722, %v2792, 0
      %v2818 = vsel %vm1722, %v2793, 0
      %v2821 = vsel %vm1722, %v2794, 0
      %v2824 = vsel %vm1722, %v2795, 0
      %v2827 = vsel %vm1722, %v2796, 0
      %v2830 = vsel %vm1910, %v2798, 0
      %2832 = vmatprep.subr.bf16.mxu0 0
      %2833 = vmatpush1.bf16.msra.mxu0 %v2830
      %2834 = vmatprep.subr.bf16.mxu0 0
      %2835 = vmatpush1.bf16.msra.mxu0 0
      %2836 = vmatprep.subr.bf16.mxu0 0
      %2837 = vmatpush1.bf16.msra.mxu0 0
      %2838 = vmatprep.subr.bf16.mxu0 0
      %2839 = vmatpush1.bf16.msra.mxu0 0
      %2840 = vmatprep.subr.bf16.mxu0 0
      %2841 = vmatpush1.bf16.msra.mxu0 0
      %2842 = vmatprep.subr.bf16.mxu0 0
      %2843 = vmatpush1.bf16.msra.mxu0 0
      %2844 = vmatprep.subr.bf16.mxu0 0
      %2845 = vmatpush1.bf16.msra.mxu0 0
      %2846 = vmatprep.subr.bf16.mxu0 0
      %2847 = vmatpush1.bf16.msra.mxu0 0
      %2848 = vmatprep.subr.bf16.mxu0 0
      %2849 = vmatpush1.bf16.msra.mxu0 0
      %2850 = vmatprep.subr.bf16.mxu0 0
      %2851 = vmatpush1.bf16.msra.mxu0 0
      %2852 = vmatprep.subr.bf16.mxu0 0
      %2853 = vmatpush1.bf16.msra.mxu0 0
      %2854 = vmatprep.subr.bf16.mxu0 0
      %2855 = vmatpush1.bf16.msra.mxu0 0
      %2856 = vmatprep.subr.bf16.mxu0 0
      %2857 = vmatpush1.bf16.msra.mxu0 0
      %2858 = vmatprep.subr.bf16.mxu0 0
      %2859 = vmatpush1.bf16.msra.mxu0 0
      %2860 = vmatprep.subr.bf16.mxu0 0
      %2861 = vmatpush1.bf16.msra.mxu0 0
      %2862 = vmatprep.subr.bf16.mxu0 0
      %2863 = vmatpush1.bf16.msra.mxu0 0
      %2864 = vmatprep.mubr.bf16.mxu0 0
      %2865 = vmatmul.mubr.bf16.gmra.mrb[0].mxu0 %v2800
      %v2866 = vpop.f32.mrb[0].mxu0
      %v2867 = vadd.f32 0.0, %v2866
      %v2868 = vpop.f32.mrb[0].mxu0
      %v2869 = vpop.f32.mrb[0].mxu0
      %v2870 = vadd.f32 0.0, %v2869
      %v2871 = vpop.f32.mrb[0].mxu0
      %2872 = vmatprep.mubr.bf16.mxu0 0
      %2873 = vmatmul.mubr.bf16.gmra.mrb[0].mxu0 %v2803
      %v2874 = vpop.f32.mrb[0].mxu0
      %v2875 = vadd.f32 0.0, %v2874
      %v2876 = vpop.f32.mrb[0].mxu0
      %v2877 = vpop.f32.mrb[0].mxu0
      %v2878 = vadd.f32 0.0, %v2877
      %v2879 = vpop.f32.mrb[0].mxu0
      %2880 = vmatprep.mubr.bf16.mxu0 0
      %2881 = vmatmul.mubr.bf16.gmra.mrb[0].mxu0 %v2806
      %v2882 = vpop.f32.mrb[0].mxu0
      %v2883 = vadd.f32 0.0, %v2882
      %v2884 = vpop.f32.mrb[0].mxu0
      %v2885 = vpop.f32.mrb[0].mxu0
      %v2886 = vadd.f32 0.0, %v2885
      %v2887 = vpop.f32.mrb[0].mxu0
      %2888 = vmatprep.mubr.bf16.mxu0 0
      %2889 = vmatmul.mubr.bf16.gmra.mrb[0].mxu0 %v2809
      %v2890 = vpop.f32.mrb[0].mxu0
      %v2891 = vadd.f32 0.0, %v2890
      %v2892 = vpop.f32.mrb[0].mxu0
      %v2893 = vpop.f32.mrb[0].mxu0
      %v2894 = vadd.f32 0.0, %v2893
      %v2895 = vpop.f32.mrb[0].mxu0
      %2896 = vmatprep.mubr.bf16.mxu0 0
      %2897 = vmatmul.mubr.bf16.gmra.mrb[0].mxu0 %v2812
      %v2898 = vpop.f32.mrb[0].mxu0
      %v2899 = vadd.f32 0.0, %v2898
      %v2900 = vpop.f32.mrb[0].mxu0
      %v2901 = vpop.f32.mrb[0].mxu0
      %v2902 = vadd.f32 0.0, %v2901
      %v2903 = vpop.f32.mrb[0].mxu0
      %2904 = vmatprep.mubr.bf16.mxu0 0
      %2905 = vmatmul.mubr.bf16.gmra.mrb[0].mxu0 %v2815
      %v2906 = vpop.f32.mrb[0].mxu0
      %v2907 = vadd.f32 0.0, %v2906
      %v2908 = vpop.f32.mrb[0].mxu0
      %v2909 = vpop.f32.mrb[0].mxu0
      %v2910 = vadd.f32 0.0, %v2909
      %v2911 = vpop.f32.mrb[0].mxu0
      %2912 = vmatprep.mubr.bf16.mxu0 0
      %2913 = vmatmul.mubr.bf16.gmra.mrb[0].mxu0 %v2818
      %v2914 = vpop.f32.mrb[0].mxu0
      %v2915 = vadd.f32 0.0, %v2914
      %v2916 = vpop.f32.mrb[0].mxu0
      %v2917 = vpop.f32.mrb[0].mxu0
      %v2918 = vadd.f32 0.0, %v2917
      %v2919 = vpop.f32.mrb[0].mxu0
      %2920 = vmatprep.mubr.bf16.mxu0 0
      %2921 = vmatmul.mubr.bf16.gmra.mrb[0].mxu0 %v2821
      %v2922 = vpop.f32.mrb[0].mxu0
      %v2923 = vadd.f32 0.0, %v2922
      %v2924 = vpop.f32.mrb[0].mxu0
      %v2925 = vpop.f32.mrb[0].mxu0
      %v2926 = vadd.f32 0.0, %v2925
      %v2927 = vpop.f32.mrb[0].mxu0
      %2928 = vmatprep.mubr.bf16.mxu0 0
      %2929 = vmatmul.mubr.bf16.gmra.mrb[0].mxu0 %v2824
      %v2930 = vpop.f32.mrb[0].mxu0
      %v2931 = vadd.f32 0.0, %v2930
      %v2932 = vpop.f32.mrb[0].mxu0
      %v2933 = vpop.f32.mrb[0].mxu0
      %v2934 = vadd.f32 0.0, %v2933
      %v2935 = vpop.f32.mrb[0].mxu0
      %2936 = vmatprep.mubr.bf16.mxu0 0
      %2937 = vmatmul.mubr.bf16.gmra.mrb[0].mxu0 %v2827
      %v2938 = vpop.f32.mrb[0].mxu0
      %v2939 = vadd.f32 0.0, %v2938
      %v2940 = vpop.f32.mrb[0].mxu0
      %v2941 = vpop.f32.mrb[0].mxu0
      %v2942 = vadd.f32 0.0, %v2941
      %v2943 = vpop.f32.mrb[0].mxu0
      %2944 = vdwg.mxu0
      %v2945 = vadd.f32 %v2747, %v2867
      %v2946 = vadd.f32 %v2748, %v2870
      %v2947 = vadd.f32 %v2749, %v2875
      %v2948 = vadd.f32 %v2750, %v2878
      %v2949 = vadd.f32 %v2751, %v2883
      %v2950 = vadd.f32 %v2752, %v2886
      %v2951 = vadd.f32 %v2753, %v2891
      %v2952 = vadd.f32 %v2754, %v2894
      %v2953 = vadd.f32 %v2755, %v2899
      %v2954 = vadd.f32 %v2756, %v2902
      %v2955 = vadd.f32 %v2757, %v2907
      %v2956 = vadd.f32 %v2758, %v2910
      %v2957 = vadd.f32 %v2759, %v2915
      %v2958 = vadd.f32 %v2760, %v2918
      %v2959 = vadd.f32 %v2761, %v2923
      %v2960 = vadd.f32 %v2762, %v2926
      %v2961 = vadd.f32 %v2763, %v2931
      %v2962 = vadd.f32 %v2764, %v2934
      %v2963 = vadd.f32 %v2765, %v2939
      %v2964 = vadd.f32 %v2766, %v2942
      %v2965 = vld [vmem:[#allocation2 + $0xd] sm:$0xff]
      %v2966 = vld [vmem:[#allocation2 + $0x15] sm:$0xff]
      %v2967 = vld [vmem:[#allocation2 + $0x2d] sm:$0xff]
      %v2968 = vld [vmem:[#allocation2 + $0x35] sm:$0xff]
      %v2969 = vld [vmem:[#allocation2 + $0x4d] sm:$0xff]
      %v2970 = vld [vmem:[#allocation2 + $0x55] sm:$0xff]
      %v2971 = vld [vmem:[#allocation2 + $0x6d] sm:$0xff]
      %v2972 = vld [vmem:[#allocation2 + $0x75] sm:$0xff]
      %v2973 = vld [vmem:[#allocation2 + $0x8d] sm:$0xff]
      %v2974 = vld [vmem:[#allocation2 + $0x95] sm:$0xff]
      %v2975 = vld [vmem:[#allocation2 + $0xad] sm:$0xff]
      %v2976 = vld [vmem:[#allocation2 + $0xb5] sm:$0xff]
      %v2977 = vld [vmem:[#allocation2 + $0xcd] sm:$0xff]
      %v2978 = vld [vmem:[#allocation2 + $0xd5] sm:$0xff]
      %v2979 = vld [vmem:[#allocation2 + $0xed] sm:$0xff]
      %v2980 = vld [vmem:[#allocation2 + $0xf5] sm:$0xff]
      %v2981 = vld [vmem:[#allocation2 + $0x10d] sm:$0xff]
      %v2982 = vld [vmem:[#allocation2 + $0x115] sm:$0xff]
      %v2983 = vld [vmem:[#allocation2 + $0x12d] sm:$0xff]
      %v2984 = vld [vmem:[#allocation2 + $0x135] sm:$0xff]
      %v2985 = vpack.c.bf16 %v2966, %v2965
      %v2986 = vpack.c.bf16 %v2968, %v2967
      %v2987 = vpack.c.bf16 %v2970, %v2969
      %v2988 = vpack.c.bf16 %v2972, %v2971
      %v2989 = vpack.c.bf16 %v2974, %v2973
      %v2990 = vpack.c.bf16 %v2976, %v2975
      %v2991 = vpack.c.bf16 %v2978, %v2977
      %v2992 = vpack.c.bf16 %v2980, %v2979
      %v2993 = vpack.c.bf16 %v2982, %v2981
      %v2994 = vpack.c.bf16 %v2984, %v2983
      %s2995 = scalar_lea.vmem %s3, 24
      %v2996 = vld [vmem:[%s2995] sm:$0x7]
      %v2998 = vsel %vm1722, %v2985, 0
      %v3001 = vsel %vm1722, %v2986, 0
      %v3004 = vsel %vm1722, %v2987, 0
      %v3007 = vsel %vm1722, %v2988, 0
      %v3010 = vsel %vm1722, %v2989, 0
      %v3013 = vsel %vm1722, %v2990, 0
      %v3016 = vsel %vm1722, %v2991, 0
      %v3019 = vsel %vm1722, %v2992, 0
      %v3022 = vsel %vm1722, %v2993, 0
      %v3025 = vsel %vm1722, %v2994, 0
      %v3028 = vsel %vm1910, %v2996, 0
      %3030 = vmatprep.subr.bf16.mxu0 0
      %3031 = vmatpush1.bf16.msra.mxu0 %v3028
      %3032 = vmatprep.subr.bf16.mxu0 0
      %3033 = vmatpush1.bf16.msra.mxu0 0
      %3034 = vmatprep.subr.bf16.mxu0 0
      %3035 = vmatpush1.bf16.msra.mxu0 0
      %3036 = vmatprep.subr.bf16.mxu0 0
      %3037 = vmatpush1.bf16.msra.mxu0 0
      %3038 = vmatprep.subr.bf16.mxu0 0
      %3039 = vmatpush1.bf16.msra.mxu0 0
      %3040 = vmatprep.subr.bf16.mxu0 0
      %3041 = vmatpush1.bf16.msra.mxu0 0
      %3042 = vmatprep.subr.bf16.mxu0 0
      %3043 = vmatpush1.bf16.msra.mxu0 0
      %3044 = vmatprep.subr.bf16.mxu0 0
      %3045 = vmatpush1.bf16.msra.mxu0 0
      %3046 = vmatprep.subr.bf16.mxu0 0
      %3047 = vmatpush1.bf16.msra.mxu0 0
      %3048 = vmatprep.subr.bf16.mxu0 0
      %3049 = vmatpush1.bf16.msra.mxu0 0
      %3050 = vmatprep.subr.bf16.mxu0 0
      %3051 = vmatpush1.bf16.msra.mxu0 0
      %3052 = vmatprep.subr.bf16.mxu0 0
      %3053 = vmatpush1.bf16.msra.mxu0 0
      %3054 = vmatprep.subr.bf16.mxu0 0
      %3055 = vmatpush1.bf16.msra.mxu0 0
      %3056 = vmatprep.subr.bf16.mxu0 0
      %3057 = vmatpush1.bf16.msra.mxu0 0
      %3058 = vmatprep.subr.bf16.mxu0 0
      %3059 = vmatpush1.bf16.msra.mxu0 0
      %3060 = vmatprep.subr.bf16.mxu0 0
      %3061 = vmatpush1.bf16.msra.mxu0 0
      %3062 = vmatprep.mubr.bf16.mxu0 0
      %3063 = vmatmul.mubr.bf16.gmra.mrb[0].mxu0 %v2998
      %v3064 = vpop.f32.mrb[0].mxu0
      %v3065 = vadd.f32 0.0, %v3064
      %v3066 = vpop.f32.mrb[0].mxu0
      %v3067 = vpop.f32.mrb[0].mxu0
      %v3068 = vadd.f32 0.0, %v3067
      %v3069 = vpop.f32.mrb[0].mxu0
      %3070 = vmatprep.mubr.bf16.mxu0 0
      %3071 = vmatmul.mubr.bf16.gmra.mrb[0].mxu0 %v3001
      %v3072 = vpop.f32.mrb[0].mxu0
      %v3073 = vadd.f32 0.0, %v3072
      %v3074 = vpop.f32.mrb[0].mxu0
      %v3075 = vpop.f32.mrb[0].mxu0
      %v3076 = vadd.f32 0.0, %v3075
      %v3077 = vpop.f32.mrb[0].mxu0
      %3078 = vmatprep.mubr.bf16.mxu0 0
      %3079 = vmatmul.mubr.bf16.gmra.mrb[0].mxu0 %v3004
      %v3080 = vpop.f32.mrb[0].mxu0
      %v3081 = vadd.f32 0.0, %v3080
      %v3082 = vpop.f32.mrb[0].mxu0
      %v3083 = vpop.f32.mrb[0].mxu0
      %v3084 = vadd.f32 0.0, %v3083
      %v3085 = vpop.f32.mrb[0].mxu0
      %3086 = vmatprep.mubr.bf16.mxu0 0
      %3087 = vmatmul.mubr.bf16.gmra.mrb[0].mxu0 %v3007
      %v3088 = vpop.f32.mrb[0].mxu0
      %v3089 = vadd.f32 0.0, %v3088
      %v3090 = vpop.f32.mrb[0].mxu0
      %v3091 = vpop.f32.mrb[0].mxu0
      %v3092 = vadd.f32 0.0, %v3091
      %v3093 = vpop.f32.mrb[0].mxu0
      %3094 = vmatprep.mubr.bf16.mxu0 0
      %3095 = vmatmul.mubr.bf16.gmra.mrb[0].mxu0 %v3010
      %v3096 = vpop.f32.mrb[0].mxu0
      %v3097 = vadd.f32 0.0, %v3096
      %v3098 = vpop.f32.mrb[0].mxu0
      %v3099 = vpop.f32.mrb[0].mxu0
      %v3100 = vadd.f32 0.0, %v3099
      %v3101 = vpop.f32.mrb[0].mxu0
      %3102 = vmatprep.mubr.bf16.mxu0 0
      %3103 = vmatmul.mubr.bf16.gmra.mrb[0].mxu0 %v3013
      %v3104 = vpop.f32.mrb[0].mxu0
      %v3105 = vadd.f32 0.0, %v3104
      %v3106 = vpop.f32.mrb[0].mxu0
      %v3107 = vpop.f32.mrb[0].mxu0
      %v3108 = vadd.f32 0.0, %v3107
      %v3109 = vpop.f32.mrb[0].mxu0
      %3110 = vmatprep.mubr.bf16.mxu0 0
      %3111 = vmatmul.mubr.bf16.gmra.mrb[0].mxu0 %v3016
      %v3112 = vpop.f32.mrb[0].mxu0
      %v3113 = vadd.f32 0.0, %v3112
      %v3114 = vpop.f32.mrb[0].mxu0
      %v3115 = vpop.f32.mrb[0].mxu0
      %v3116 = vadd.f32 0.0, %v3115
      %v3117 = vpop.f32.mrb[0].mxu0
      %3118 = vmatprep.mubr.bf16.mxu0 0
      %3119 = vmatmul.mubr.bf16.gmra.mrb[0].mxu0 %v3019
      %v3120 = vpop.f32.mrb[0].mxu0
      %v3121 = vadd.f32 0.0, %v3120
      %v3122 = vpop.f32.mrb[0].mxu0
      %v3123 = vpop.f32.mrb[0].mxu0
      %v3124 = vadd.f32 0.0, %v3123
      %v3125 = vpop.f32.mrb[0].mxu0
      %3126 = vmatprep.mubr.bf16.mxu0 0
      %3127 = vmatmul.mubr.bf16.gmra.mrb[0].mxu0 %v3022
      %v3128 = vpop.f32.mrb[0].mxu0
      %v3129 = vadd.f32 0.0, %v3128
      %v3130 = vpop.f32.mrb[0].mxu0
      %v3131 = vpop.f32.mrb[0].mxu0
      %v3132 = vadd.f32 0.0, %v3131
      %v3133 = vpop.f32.mrb[0].mxu0
      %3134 = vmatprep.mubr.bf16.mxu0 0
      %3135 = vmatmul.mubr.bf16.gmra.mrb[0].mxu0 %v3025
      %v3136 = vpop.f32.mrb[0].mxu0
      %v3137 = vadd.f32 0.0, %v3136
      %v3138 = vpop.f32.mrb[0].mxu0
      %v3139 = vpop.f32.mrb[0].mxu0
      %v3140 = vadd.f32 0.0, %v3139
      %v3141 = vpop.f32.mrb[0].mxu0
      %3142 = vdwg.mxu0
      %v3143 = vadd.f32 %v2945, %v3065
      %v3144 = vadd.f32 %v2946, %v3068
      %v3145 = vadd.f32 %v2947, %v3073
      %v3146 = vadd.f32 %v2948, %v3076
      %v3147 = vadd.f32 %v2949, %v3081
      %v3148 = vadd.f32 %v2950, %v3084
      %v3149 = vadd.f32 %v2951, %v3089
      %v3150 = vadd.f32 %v2952, %v3092
      %v3151 = vadd.f32 %v2953, %v3097
      %v3152 = vadd.f32 %v2954, %v3100
      %v3153 = vadd.f32 %v2955, %v3105
      %v3154 = vadd.f32 %v2956, %v3108
      %v3155 = vadd.f32 %v2957, %v3113
      %v3156 = vadd.f32 %v2958, %v3116
      %v3157 = vadd.f32 %v2959, %v3121
      %v3158 = vadd.f32 %v2960, %v3124
      %v3159 = vadd.f32 %v2961, %v3129
      %v3160 = vadd.f32 %v2962, %v3132
      %v3161 = vadd.f32 %v2963, %v3137
      %v3162 = vadd.f32 %v2964, %v3140
      %v3163 = vld [vmem:[%s1787 + $0x7] sm:$0xff]
      %v3164 = vld [vmem:[%s1787 + $0xf] sm:$0xff]
      %v3165 = vld [vmem:[%s1787 + $0x27] sm:$0xff]
      %v3166 = vld [vmem:[%s1787 + $0x2f] sm:$0xff]
      %v3167 = vld [vmem:[%s1787 + $0x47] sm:$0xff]
      %v3168 = vld [vmem:[%s1787 + $0x4f] sm:$0xff]
      %v3169 = vld [vmem:[%s1787 + $0x67] sm:$0xff]
      %v3170 = vld [vmem:[%s1787 + $0x6f] sm:$0xff]
      %v3171 = vld [vmem:[%s1787 + $0x87] sm:$0xff]
      %v3172 = vld [vmem:[%s1787 + $0x8f] sm:$0xff]
      %v3173 = vld [vmem:[%s1787 + $0xa7] sm:$0xff]
      %v3174 = vld [vmem:[%s1787 + $0xaf] sm:$0xff]
      %v3175 = vld [vmem:[%s1787 + $0xc7] sm:$0xff]
      %v3176 = vld [vmem:[%s1787 + $0xcf] sm:$0xff]
      %v3177 = vld [vmem:[%s1787 + $0xe7] sm:$0xff]
      %v3178 = vld [vmem:[%s1787 + $0xef] sm:$0xff]
      %v3179 = vld [vmem:[%s1787 + $0x107] sm:$0xff]
      %v3180 = vld [vmem:[%s1787 + $0x10f] sm:$0xff]
      %v3181 = vld [vmem:[%s1787 + $0x127] sm:$0xff]
      %v3182 = vld [vmem:[%s1787 + $0x12f] sm:$0xff]
      %v3183 = vpack.c.bf16 %v3164, %v3163
      %v3184 = vpack.c.bf16 %v3166, %v3165
      %v3185 = vpack.c.bf16 %v3168, %v3167
      %v3186 = vpack.c.bf16 %v3170, %v3169
      %v3187 = vpack.c.bf16 %v3172, %v3171
      %v3188 = vpack.c.bf16 %v3174, %v3173
      %v3189 = vpack.c.bf16 %v3176, %v3175
      %v3190 = vpack.c.bf16 %v3178, %v3177
      %v3191 = vpack.c.bf16 %v3180, %v3179
      %v3192 = vpack.c.bf16 %v3182, %v3181
      %s3193 = scalar_lea.vmem %s3, 28
      %v3194 = vld [vmem:[%s3193] sm:$0x7]
      %v3196 = vsel %vm1722, %v3183, 0
      %v3199 = vsel %vm1722, %v3184, 0
      %v3202 = vsel %vm1722, %v3185, 0
      %v3205 = vsel %vm1722, %v3186, 0
      %v3208 = vsel %vm1722, %v3187, 0
      %v3211 = vsel %vm1722, %v3188, 0
      %v3214 = vsel %vm1722, %v3189, 0
      %v3217 = vsel %vm1722, %v3190, 0
      %v3220 = vsel %vm1722, %v3191, 0
      %v3223 = vsel %vm1722, %v3192, 0
      %v3226 = vsel %vm1910, %v3194, 0
      %3228 = vmatprep.subr.bf16.mxu0 0
      %3229 = vmatpush1.bf16.msra.mxu0 %v3226
      %3230 = vmatprep.subr.bf16.mxu0 0
      %3231 = vmatpush1.bf16.msra.mxu0 0
      %3232 = vmatprep.subr.bf16.mxu0 0
      %3233 = vmatpush1.bf16.msra.mxu0 0
      %3234 = vmatprep.subr.bf16.mxu0 0
      %3235 = vmatpush1.bf16.msra.mxu0 0
      %3236 = vmatprep.subr.bf16.mxu0 0
      %3237 = vmatpush1.bf16.msra.mxu0 0
      %3238 = vmatprep.subr.bf16.mxu0 0
      %3239 = vmatpush1.bf16.msra.mxu0 0
      %3240 = vmatprep.subr.bf16.mxu0 0
      %3241 = vmatpush1.bf16.msra.mxu0 0
      %3242 = vmatprep.subr.bf16.mxu0 0
      %3243 = vmatpush1.bf16.msra.mxu0 0
      %3244 = vmatprep.subr.bf16.mxu0 0
      %3245 = vmatpush1.bf16.msra.mxu0 0
      %3246 = vmatprep.subr.bf16.mxu0 0
      %3247 = vmatpush1.bf16.msra.mxu0 0
      %3248 = vmatprep.subr.bf16.mxu0 0
      %3249 = vmatpush1.bf16.msra.mxu0 0
      %3250 = vmatprep.subr.bf16.mxu0 0
      %3251 = vmatpush1.bf16.msra.mxu0 0
      %3252 = vmatprep.subr.bf16.mxu0 0
      %3253 = vmatpush1.bf16.msra.mxu0 0
      %3254 = vmatprep.subr.bf16.mxu0 0
      %3255 = vmatpush1.bf16.msra.mxu0 0
      %3256 = vmatprep.subr.bf16.mxu0 0
      %3257 = vmatpush1.bf16.msra.mxu0 0
      %3258 = vmatprep.subr.bf16.mxu0 0
      %3259 = vmatpush1.bf16.msra.mxu0 0
      %3260 = vmatprep.mubr.bf16.mxu0 0
      %3261 = vmatmul.mubr.bf16.gmra.mrb[0].mxu0 %v3196
      %v3262 = vpop.f32.mrb[0].mxu0
      %v3263 = vadd.f32 0.0, %v3262
      %v3264 = vpop.f32.mrb[0].mxu0
      %v3265 = vpop.f32.mrb[0].mxu0
      %v3266 = vadd.f32 0.0, %v3265
      %v3267 = vpop.f32.mrb[0].mxu0
      %3268 = vmatprep.mubr.bf16.mxu0 0
      %3269 = vmatmul.mubr.bf16.gmra.mrb[0].mxu0 %v3199
      %v3270 = vpop.f32.mrb[0].mxu0
      %v3271 = vadd.f32 0.0, %v3270
      %v3272 = vpop.f32.mrb[0].mxu0
      %v3273 = vpop.f32.mrb[0].mxu0
      %v3274 = vadd.f32 0.0, %v3273
      %v3275 = vpop.f32.mrb[0].mxu0
      %3276 = vmatprep.mubr.bf16.mxu0 0
      %3277 = vmatmul.mubr.bf16.gmra.mrb[0].mxu0 %v3202
      %v3278 = vpop.f32.mrb[0].mxu0
      %v3279 = vadd.f32 0.0, %v3278
      %v3280 = vpop.f32.mrb[0].mxu0
      %v3281 = vpop.f32.mrb[0].mxu0
      %v3282 = vadd.f32 0.0, %v3281
      %v3283 = vpop.f32.mrb[0].mxu0
      %3284 = vmatprep.mubr.bf16.mxu0 0
      %3285 = vmatmul.mubr.bf16.gmra.mrb[0].mxu0 %v3205
      %v3286 = vpop.f32.mrb[0].mxu0
      %v3287 = vadd.f32 0.0, %v3286
      %v3288 = vpop.f32.mrb[0].mxu0
      %v3289 = vpop.f32.mrb[0].mxu0
      %v3290 = vadd.f32 0.0, %v3289
      %v3291 = vpop.f32.mrb[0].mxu0
      %3292 = vmatprep.mubr.bf16.mxu0 0
      %3293 = vmatmul.mubr.bf16.gmra.mrb[0].mxu0 %v3208
      %v3294 = vpop.f32.mrb[0].mxu0
      %v3295 = vadd.f32 0.0, %v3294
      %v3296 = vpop.f32.mrb[0].mxu0
      %v3297 = vpop.f32.mrb[0].mxu0
      %v3298 = vadd.f32 0.0, %v3297
      %v3299 = vpop.f32.mrb[0].mxu0
      %3300 = vmatprep.mubr.bf16.mxu0 0
      %3301 = vmatmul.mubr.bf16.gmra.mrb[0].mxu0 %v3211
      %v3302 = vpop.f32.mrb[0].mxu0
      %v3303 = vadd.f32 0.0, %v3302
      %v3304 = vpop.f32.mrb[0].mxu0
      %v3305 = vpop.f32.mrb[0].mxu0
      %v3306 = vadd.f32 0.0, %v3305
      %v3307 = vpop.f32.mrb[0].mxu0
      %3308 = vmatprep.mubr.bf16.mxu0 0
      %3309 = vmatmul.mubr.bf16.gmra.mrb[0].mxu0 %v3214
      %v3310 = vpop.f32.mrb[0].mxu0
      %v3311 = vadd.f32 0.0, %v3310
      %v3312 = vpop.f32.mrb[0].mxu0
      %v3313 = vpop.f32.mrb[0].mxu0
      %v3314 = vadd.f32 0.0, %v3313
      %v3315 = vpop.f32.mrb[0].mxu0
      %3316 = vmatprep.mubr.bf16.mxu0 0
      %3317 = vmatmul.mubr.bf16.gmra.mrb[0].mxu0 %v3217
      %v3318 = vpop.f32.mrb[0].mxu0
      %v3319 = vadd.f32 0.0, %v3318
      %v3320 = vpop.f32.mrb[0].mxu0
      %v3321 = vpop.f32.mrb[0].mxu0
      %v3322 = vadd.f32 0.0, %v3321
      %v3323 = vpop.f32.mrb[0].mxu0
      %3324 = vmatprep.mubr.bf16.mxu0 0
      %3325 = vmatmul.mubr.bf16.gmra.mrb[0].mxu0 %v3220
      %v3326 = vpop.f32.mrb[0].mxu0
      %v3327 = vadd.f32 0.0, %v3326
      %v3328 = vpop.f32.mrb[0].mxu0
      %v3329 = vpop.f32.mrb[0].mxu0
      %v3330 = vadd.f32 0.0, %v3329
      %v3331 = vpop.f32.mrb[0].mxu0
      %3332 = vmatprep.mubr.bf16.mxu0 0
      %3333 = vmatmul.mubr.bf16.gmra.mrb[0].mxu0 %v3223
      %v3334 = vpop.f32.mrb[0].mxu0
      %v3335 = vadd.f32 0.0, %v3334
      %v3336 = vpop.f32.mrb[0].mxu0
      %v3337 = vpop.f32.mrb[0].mxu0
      %v3338 = vadd.f32 0.0, %v3337
      %v3339 = vpop.f32.mrb[0].mxu0
      %3340 = vdwg.mxu0
      %v3341 = vadd.f32 %v3143, %v3263
      %v3342 = vadd.f32 %v3144, %v3266
      %v3343 = vadd.f32 %v3145, %v3271
      %v3344 = vadd.f32 %v3146, %v3274
      %v3345 = vadd.f32 %v3147, %v3279
      %v3346 = vadd.f32 %v3148, %v3282
      %v3347 = vadd.f32 %v3149, %v3287
      %v3348 = vadd.f32 %v3150, %v3290
      %v3349 = vadd.f32 %v3151, %v3295
      %v3350 = vadd.f32 %v3152, %v3298
      %v3351 = vadd.f32 %v3153, %v3303
      %v3352 = vadd.f32 %v3154, %v3306
      %v3353 = vadd.f32 %v3155, %v3311
      %v3354 = vadd.f32 %v3156, %v3314
      %v3355 = vadd.f32 %v3157, %v3319
      %v3356 = vadd.f32 %v3158, %v3322
      %v3357 = vadd.f32 %v3159, %v3327
      %v3358 = vadd.f32 %v3160, %v3330
      %v3359 = vadd.f32 %v3161, %v3335
      %v3360 = vadd.f32 %v3162, %v3338
      %v3361 = vld [vmem:[%s1787 + $0x8] sm:$0xff]
      %v3362 = vld [vmem:[%s1787 + $0x10] sm:$0xff]
      %v3363 = vld [vmem:[%s1787 + $0x28] sm:$0xff]
      %v3364 = vld [vmem:[%s1787 + $0x30] sm:$0xff]
      %v3365 = vld [vmem:[%s1787 + $0x48] sm:$0xff]
      %v3366 = vld [vmem:[%s1787 + $0x50] sm:$0xff]
      %v3367 = vld [vmem:[%s1787 + $0x68] sm:$0xff]
      %v3368 = vld [vmem:[%s1787 + $0x70] sm:$0xff]
      %v3369 = vld [vmem:[%s1787 + $0x88] sm:$0xff]
      %v3370 = vld [vmem:[%s1787 + $0x90] sm:$0xff]
      %v3371 = vld [vmem:[%s1787 + $0xa8] sm:$0xff]
      %v3372 = vld [vmem:[%s1787 + $0xb0] sm:$0xff]
      %v3373 = vld [vmem:[%s1787 + $0xc8] sm:$0xff]
      %v3374 = vld [vmem:[%s1787 + $0xd0] sm:$0xff]
      %v3375 = vld [vmem:[%s1787 + $0xe8] sm:$0xff]
      %v3376 = vld [vmem:[%s1787 + $0xf0] sm:$0xff]
      %v3377 = vld [vmem:[%s1787 + $0x108] sm:$0xff]
      %v3378 = vld [vmem:[%s1787 + $0x110] sm:$0xff]
      %v3379 = vld [vmem:[%s1787 + $0x128] sm:$0xff]
      %v3380 = vld [vmem:[%s1787 + $0x130] sm:$0xff]
      %v3381 = vpack.c.bf16 %v3362, %v3361
      %v3382 = vpack.c.bf16 %v3364, %v3363
      %v3383 = vpack.c.bf16 %v3366, %v3365
      %v3384 = vpack.c.bf16 %v3368, %v3367
      %v3385 = vpack.c.bf16 %v3370, %v3369
      %v3386 = vpack.c.bf16 %v3372, %v3371
      %v3387 = vpack.c.bf16 %v3374, %v3373
      %v3388 = vpack.c.bf16 %v3376, %v3375
      %v3389 = vpack.c.bf16 %v3378, %v3377
      %v3390 = vpack.c.bf16 %v3380, %v3379
      %s3391 = scalar_lea.vmem %s3, 32
      %v3392 = vld [vmem:[%s3391] sm:$0x7]
      %v3394 = vsel %vm1722, %v3381, 0
      %v3397 = vsel %vm1722, %v3382, 0
      %v3400 = vsel %vm1722, %v3383, 0
      %v3403 = vsel %vm1722, %v3384, 0
      %v3406 = vsel %vm1722, %v3385, 0
      %v3409 = vsel %vm1722, %v3386, 0
      %v3412 = vsel %vm1722, %v3387, 0
      %v3415 = vsel %vm1722, %v3388, 0
      %v3418 = vsel %vm1722, %v3389, 0
      %v3421 = vsel %vm1722, %v3390, 0
      %v3424 = vsel %vm1910, %v3392, 0
      %3426 = vmatprep.subr.bf16.mxu0 0
      %3427 = vmatpush1.bf16.msra.mxu0 %v3424
      %3428 = vmatprep.subr.bf16.mxu0 0
      %3429 = vmatpush1.bf16.msra.mxu0 0
      %3430 = vmatprep.subr.bf16.mxu0 0
      %3431 = vmatpush1.bf16.msra.mxu0 0
      %3432 = vmatprep.subr.bf16.mxu0 0
      %3433 = vmatpush1.bf16.msra.mxu0 0
      %3434 = vmatprep.subr.bf16.mxu0 0
      %3435 = vmatpush1.bf16.msra.mxu0 0
      %3436 = vmatprep.subr.bf16.mxu0 0
      %3437 = vmatpush1.bf16.msra.mxu0 0
      %3438 = vmatprep.subr.bf16.mxu0 0
      %3439 = vmatpush1.bf16.msra.mxu0 0
      %3440 = vmatprep.subr.bf16.mxu0 0
      %3441 = vmatpush1.bf16.msra.mxu0 0
      %3442 = vmatprep.subr.bf16.mxu0 0
      %3443 = vmatpush1.bf16.msra.mxu0 0
      %3444 = vmatprep.subr.bf16.mxu0 0
      %3445 = vmatpush1.bf16.msra.mxu0 0
      %3446 = vmatprep.subr.bf16.mxu0 0
      %3447 = vmatpush1.bf16.msra.mxu0 0
      %3448 = vmatprep.subr.bf16.mxu0 0
      %3449 = vmatpush1.bf16.msra.mxu0 0
      %3450 = vmatprep.subr.bf16.mxu0 0
      %3451 = vmatpush1.bf16.msra.mxu0 0
      %3452 = vmatprep.subr.bf16.mxu0 0
      %3453 = vmatpush1.bf16.msra.mxu0 0
      %3454 = vmatprep.subr.bf16.mxu0 0
      %3455 = vmatpush1.bf16.msra.mxu0 0
      %3456 = vmatprep.subr.bf16.mxu0 0
      %3457 = vmatpush1.bf16.msra.mxu0 0
      %3458 = vmatprep.mubr.bf16.mxu0 0
      %3459 = vmatmul.mubr.bf16.gmra.mrb[0].mxu0 %v3394
      %v3460 = vpop.f32.mrb[0].mxu0
      %v3461 = vadd.f32 0.0, %v3460
      %v3462 = vpop.f32.mrb[0].mxu0
      %v3463 = vpop.f32.mrb[0].mxu0
      %v3464 = vadd.f32 0.0, %v3463
      %v3465 = vpop.f32.mrb[0].mxu0
      %3466 = vmatprep.mubr.bf16.mxu0 0
      %3467 = vmatmul.mubr.bf16.gmra.mrb[0].mxu0 %v3397
      %v3468 = vpop.f32.mrb[0].mxu0
      %v3469 = vadd.f32 0.0, %v3468
      %v3470 = vpop.f32.mrb[0].mxu0
      %v3471 = vpop.f32.mrb[0].mxu0
      %v3472 = vadd.f32 0.0, %v3471
      %v3473 = vpop.f32.mrb[0].mxu0
      %3474 = vmatprep.mubr.bf16.mxu0 0
      %3475 = vmatmul.mubr.bf16.gmra.mrb[0].mxu0 %v3400
      %v3476 = vpop.f32.mrb[0].mxu0
      %v3477 = vadd.f32 0.0, %v3476
      %v3478 = vpop.f32.mrb[0].mxu0
      %v3479 = vpop.f32.mrb[0].mxu0
      %v3480 = vadd.f32 0.0, %v3479
      %v3481 = vpop.f32.mrb[0].mxu0
      %3482 = vmatprep.mubr.bf16.mxu0 0
      %3483 = vmatmul.mubr.bf16.gmra.mrb[0].mxu0 %v3403
      %v3484 = vpop.f32.mrb[0].mxu0
      %v3485 = vadd.f32 0.0, %v3484
      %v3486 = vpop.f32.mrb[0].mxu0
      %v3487 = vpop.f32.mrb[0].mxu0
      %v3488 = vadd.f32 0.0, %v3487
      %v3489 = vpop.f32.mrb[0].mxu0
      %3490 = vmatprep.mubr.bf16.mxu0 0
      %3491 = vmatmul.mubr.bf16.gmra.mrb[0].mxu0 %v3406
      %v3492 = vpop.f32.mrb[0].mxu0
      %v3493 = vadd.f32 0.0, %v3492
      %v3494 = vpop.f32.mrb[0].mxu0
      %v3495 = vpop.f32.mrb[0].mxu0
      %v3496 = vadd.f32 0.0, %v3495
      %v3497 = vpop.f32.mrb[0].mxu0
      %3498 = vmatprep.mubr.bf16.mxu0 0
      %3499 = vmatmul.mubr.bf16.gmra.mrb[0].mxu0 %v3409
      %v3500 = vpop.f32.mrb[0].mxu0
      %v3501 = vadd.f32 0.0, %v3500
      %v3502 = vpop.f32.mrb[0].mxu0
      %v3503 = vpop.f32.mrb[0].mxu0
      %v3504 = vadd.f32 0.0, %v3503
      %v3505 = vpop.f32.mrb[0].mxu0
      %3506 = vmatprep.mubr.bf16.mxu0 0
      %3507 = vmatmul.mubr.bf16.gmra.mrb[0].mxu0 %v3412
      %v3508 = vpop.f32.mrb[0].mxu0
      %v3509 = vadd.f32 0.0, %v3508
      %v3510 = vpop.f32.mrb[0].mxu0
      %v3511 = vpop.f32.mrb[0].mxu0
      %v3512 = vadd.f32 0.0, %v3511
      %v3513 = vpop.f32.mrb[0].mxu0
      %3514 = vmatprep.mubr.bf16.mxu0 0
      %3515 = vmatmul.mubr.bf16.gmra.mrb[0].mxu0 %v3415
      %v3516 = vpop.f32.mrb[0].mxu0
      %v3517 = vadd.f32 0.0, %v3516
      %v3518 = vpop.f32.mrb[0].mxu0
      %v3519 = vpop.f32.mrb[0].mxu0
      %v3520 = vadd.f32 0.0, %v3519
      %v3521 = vpop.f32.mrb[0].mxu0
      %3522 = vmatprep.mubr.bf16.mxu0 0
      %3523 = vmatmul.mubr.bf16.gmra.mrb[0].mxu0 %v3418
      %v3524 = vpop.f32.mrb[0].mxu0
      %v3525 = vadd.f32 0.0, %v3524
      %v3526 = vpop.f32.mrb[0].mxu0
      %v3527 = vpop.f32.mrb[0].mxu0
      %v3528 = vadd.f32 0.0, %v3527
      %v3529 = vpop.f32.mrb[0].mxu0
      %3530 = vmatprep.mubr.bf16.mxu0 0
      %3531 = vmatmul.mubr.bf16.gmra.mrb[0].mxu0 %v3421
      %v3532 = vpop.f32.mrb[0].mxu0
      %v3533 = vadd.f32 0.0, %v3532
      %v3534 = vpop.f32.mrb[0].mxu0
      %v3535 = vpop.f32.mrb[0].mxu0
      %v3536 = vadd.f32 0.0, %v3535
      %v3537 = vpop.f32.mrb[0].mxu0
      %3538 = vdwg.mxu0
      %v3539 = vadd.f32 %v3341, %v3461
      %v3540 = vadd.f32 %v3342, %v3464
      %v3541 = vadd.f32 %v3343, %v3469
      %v3542 = vadd.f32 %v3344, %v3472
      %v3543 = vadd.f32 %v3345, %v3477
      %v3544 = vadd.f32 %v3346, %v3480
      %v3545 = vadd.f32 %v3347, %v3485
      %v3546 = vadd.f32 %v3348, %v3488
      %v3547 = vadd.f32 %v3349, %v3493
      %v3548 = vadd.f32 %v3350, %v3496
      %v3549 = vadd.f32 %v3351, %v3501
      %v3550 = vadd.f32 %v3352, %v3504
      %v3551 = vadd.f32 %v3353, %v3509
      %v3552 = vadd.f32 %v3354, %v3512
      %v3553 = vadd.f32 %v3355, %v3517
      %v3554 = vadd.f32 %v3356, %v3520
      %v3555 = vadd.f32 %v3357, %v3525
      %v3556 = vadd.f32 %v3358, %v3528
      %v3557 = vadd.f32 %v3359, %v3533
      %v3558 = vadd.f32 %v3360, %v3536
      %v3559 = vld [vmem:[%s1787 + $0x9] sm:$0xff]
      %v3560 = vld [vmem:[%s1787 + $0x11] sm:$0xff]
      %v3561 = vld [vmem:[%s1787 + $0x29] sm:$0xff]
      %v3562 = vld [vmem:[%s1787 + $0x31] sm:$0xff]
      %v3563 = vld [vmem:[%s1787 + $0x49] sm:$0xff]
      %v3564 = vld [vmem:[%s1787 + $0x51] sm:$0xff]
      %v3565 = vld [vmem:[%s1787 + $0x69] sm:$0xff]
      %v3566 = vld [vmem:[%s1787 + $0x71] sm:$0xff]
      %v3567 = vld [vmem:[%s1787 + $0x89] sm:$0xff]
      %v3568 = vld [vmem:[%s1787 + $0x91] sm:$0xff]
      %v3569 = vld [vmem:[%s1787 + $0xa9] sm:$0xff]
      %v3570 = vld [vmem:[%s1787 + $0xb1] sm:$0xff]
      %v3571 = vld [vmem:[%s1787 + $0xc9] sm:$0xff]
      %v3572 = vld [vmem:[%s1787 + $0xd1] sm:$0xff]
      %v3573 = vld [vmem:[%s1787 + $0xe9] sm:$0xff]
      %v3574 = vld [vmem:[%s1787 + $0xf1] sm:$0xff]
      %v3575 = vld [vmem:[%s1787 + $0x109] sm:$0xff]
      %v3576 = vld [vmem:[%s1787 + $0x111] sm:$0xff]
      %v3577 = vld [vmem:[%s1787 + $0x129] sm:$0xff]
      %v3578 = vld [vmem:[%s1787 + $0x131] sm:$0xff]
      %v3579 = vpack.c.bf16 %v3560, %v3559
      %v3580 = vpack.c.bf16 %v3562, %v3561
      %v3581 = vpack.c.bf16 %v3564, %v3563
      %v3582 = vpack.c.bf16 %v3566, %v3565
      %v3583 = vpack.c.bf16 %v3568, %v3567
      %v3584 = vpack.c.bf16 %v3570, %v3569
      %v3585 = vpack.c.bf16 %v3572, %v3571
      %v3586 = vpack.c.bf16 %v3574, %v3573
      %v3587 = vpack.c.bf16 %v3576, %v3575
      %v3588 = vpack.c.bf16 %v3578, %v3577
      %s3589 = scalar_lea.vmem %s3, 36
      %v3590 = vld [vmem:[%s3589] sm:$0x7]
      %v3592 = vsel %vm1722, %v3579, 0
      %v3595 = vsel %vm1722, %v3580, 0
      %v3598 = vsel %vm1722, %v3581, 0
      %v3601 = vsel %vm1722, %v3582, 0
      %v3604 = vsel %vm1722, %v3583, 0
      %v3607 = vsel %vm1722, %v3584, 0
      %v3610 = vsel %vm1722, %v3585, 0
      %v3613 = vsel %vm1722, %v3586, 0
      %v3616 = vsel %vm1722, %v3587, 0
      %v3619 = vsel %vm1722, %v3588, 0
      %v3622 = vsel %vm1910, %v3590, 0
      %3624 = vmatprep.subr.bf16.mxu0 0
      %3625 = vmatpush1.bf16.msra.mxu0 %v3622
      %3626 = vmatprep.subr.bf16.mxu0 0
      %3627 = vmatpush1.bf16.msra.mxu0 0
      %3628 = vmatprep.subr.bf16.mxu0 0
      %3629 = vmatpush1.bf16.msra.mxu0 0
      %3630 = vmatprep.subr.bf16.mxu0 0
      %3631 = vmatpush1.bf16.msra.mxu0 0
      %3632 = vmatprep.subr.bf16.mxu0 0
      %3633 = vmatpush1.bf16.msra.mxu0 0
      %3634 = vmatprep.subr.bf16.mxu0 0
      %3635 = vmatpush1.bf16.msra.mxu0 0
      %3636 = vmatprep.subr.bf16.mxu0 0
      %3637 = vmatpush1.bf16.msra.mxu0 0
      %3638 = vmatprep.subr.bf16.mxu0 0
      %3639 = vmatpush1.bf16.msra.mxu0 0
      %3640 = vmatprep.subr.bf16.mxu0 0
      %3641 = vmatpush1.bf16.msra.mxu0 0
      %3642 = vmatprep.subr.bf16.mxu0 0
      %3643 = vmatpush1.bf16.msra.mxu0 0
      %3644 = vmatprep.subr.bf16.mxu0 0
      %3645 = vmatpush1.bf16.msra.mxu0 0
      %3646 = vmatprep.subr.bf16.mxu0 0
      %3647 = vmatpush1.bf16.msra.mxu0 0
      %3648 = vmatprep.subr.bf16.mxu0 0
      %3649 = vmatpush1.bf16.msra.mxu0 0
      %3650 = vmatprep.subr.bf16.mxu0 0
      %3651 = vmatpush1.bf16.msra.mxu0 0
      %3652 = vmatprep.subr.bf16.mxu0 0
      %3653 = vmatpush1.bf16.msra.mxu0 0
      %3654 = vmatprep.subr.bf16.mxu0 0
      %3655 = vmatpush1.bf16.msra.mxu0 0
      %3656 = vmatprep.mubr.bf16.mxu0 0
      %3657 = vmatmul.mubr.bf16.gmra.mrb[0].mxu0 %v3592
      %v3658 = vpop.f32.mrb[0].mxu0
      %v3659 = vadd.f32 0.0, %v3658
      %v3660 = vpop.f32.mrb[0].mxu0
      %v3661 = vpop.f32.mrb[0].mxu0
      %v3662 = vadd.f32 0.0, %v3661
      %v3663 = vpop.f32.mrb[0].mxu0
      %3664 = vmatprep.mubr.bf16.mxu0 0
      %3665 = vmatmul.mubr.bf16.gmra.mrb[0].mxu0 %v3595
      %v3666 = vpop.f32.mrb[0].mxu0
      %v3667 = vadd.f32 0.0, %v3666
      %v3668 = vpop.f32.mrb[0].mxu0
      %v3669 = vpop.f32.mrb[0].mxu0
      %v3670 = vadd.f32 0.0, %v3669
      %v3671 = vpop.f32.mrb[0].mxu0
      %3672 = vmatprep.mubr.bf16.mxu0 0
      %3673 = vmatmul.mubr.bf16.gmra.mrb[0].mxu0 %v3598
      %v3674 = vpop.f32.mrb[0].mxu0
      %v3675 = vadd.f32 0.0, %v3674
      %v3676 = vpop.f32.mrb[0].mxu0
      %v3677 = vpop.f32.mrb[0].mxu0
      %v3678 = vadd.f32 0.0, %v3677
      %v3679 = vpop.f32.mrb[0].mxu0
      %3680 = vmatprep.mubr.bf16.mxu0 0
      %3681 = vmatmul.mubr.bf16.gmra.mrb[0].mxu0 %v3601
      %v3682 = vpop.f32.mrb[0].mxu0
      %v3683 = vadd.f32 0.0, %v3682
      %v3684 = vpop.f32.mrb[0].mxu0
      %v3685 = vpop.f32.mrb[0].mxu0
      %v3686 = vadd.f32 0.0, %v3685
      %v3687 = vpop.f32.mrb[0].mxu0
      %3688 = vmatprep.mubr.bf16.mxu0 0
      %3689 = vmatmul.mubr.bf16.gmra.mrb[0].mxu0 %v3604
      %v3690 = vpop.f32.mrb[0].mxu0
      %v3691 = vadd.f32 0.0, %v3690
      %v3692 = vpop.f32.mrb[0].mxu0
      %v3693 = vpop.f32.mrb[0].mxu0
      %v3694 = vadd.f32 0.0, %v3693
      %v3695 = vpop.f32.mrb[0].mxu0
      %3696 = vmatprep.mubr.bf16.mxu0 0
      %3697 = vmatmul.mubr.bf16.gmra.mrb[0].mxu0 %v3607
      %v3698 = vpop.f32.mrb[0].mxu0
      %v3699 = vadd.f32 0.0, %v3698
      %v3700 = vpop.f32.mrb[0].mxu0
      %v3701 = vpop.f32.mrb[0].mxu0
      %v3702 = vadd.f32 0.0, %v3701
      %v3703 = vpop.f32.mrb[0].mxu0
      %3704 = vmatprep.mubr.bf16.mxu0 0
      %3705 = vmatmul.mubr.bf16.gmra.mrb[0].mxu0 %v3610
      %v3706 = vpop.f32.mrb[0].mxu0
      %v3707 = vadd.f32 0.0, %v3706
      %v3708 = vpop.f32.mrb[0].mxu0
      %v3709 = vpop.f32.mrb[0].mxu0
      %v3710 = vadd.f32 0.0, %v3709
      %v3711 = vpop.f32.mrb[0].mxu0
      %3712 = vmatprep.mubr.bf16.mxu0 0
      %3713 = vmatmul.mubr.bf16.gmra.mrb[0].mxu0 %v3613
      %v3714 = vpop.f32.mrb[0].mxu0
      %v3715 = vadd.f32 0.0, %v3714
      %v3716 = vpop.f32.mrb[0].mxu0
      %v3717 = vpop.f32.mrb[0].mxu0
      %v3718 = vadd.f32 0.0, %v3717
      %v3719 = vpop.f32.mrb[0].mxu0
      %3720 = vmatprep.mubr.bf16.mxu0 0
      %3721 = vmatmul.mubr.bf16.gmra.mrb[0].mxu0 %v3616
      %v3722 = vpop.f32.mrb[0].mxu0
      %v3723 = vadd.f32 0.0, %v3722
      %v3724 = vpop.f32.mrb[0].mxu0
      %v3725 = vpop.f32.mrb[0].mxu0
      %v3726 = vadd.f32 0.0, %v3725
      %v3727 = vpop.f32.mrb[0].mxu0
      %3728 = vmatprep.mubr.bf16.mxu0 0
      %3729 = vmatmul.mubr.bf16.gmra.mrb[0].mxu0 %v3619
      %v3730 = vpop.f32.mrb[0].mxu0
      %v3731 = vadd.f32 0.0, %v3730
      %v3732 = vpop.f32.mrb[0].mxu0
      %v3733 = vpop.f32.mrb[0].mxu0
      %v3734 = vadd.f32 0.0, %v3733
      %v3735 = vpop.f32.mrb[0].mxu0
      %3736 = vdwg.mxu0
      %v3737 = vadd.f32 %v3539, %v3659
      %v3738 = vadd.f32 %v3540, %v3662
      %v3739 = vadd.f32 %v3541, %v3667
      %v3740 = vadd.f32 %v3542, %v3670
      %v3741 = vadd.f32 %v3543, %v3675
      %v3742 = vadd.f32 %v3544, %v3678
      %v3743 = vadd.f32 %v3545, %v3683
      %v3744 = vadd.f32 %v3546, %v3686
      %v3745 = vadd.f32 %v3547, %v3691
      %v3746 = vadd.f32 %v3548, %v3694
      %v3747 = vadd.f32 %v3549, %v3699
      %v3748 = vadd.f32 %v3550, %v3702
      %v3749 = vadd.f32 %v3551, %v3707
      %v3750 = vadd.f32 %v3552, %v3710
      %v3751 = vadd.f32 %v3553, %v3715
      %v3752 = vadd.f32 %v3554, %v3718
      %v3753 = vadd.f32 %v3555, %v3723
      %v3754 = vadd.f32 %v3556, %v3726
      %v3755 = vadd.f32 %v3557, %v3731
      %v3756 = vadd.f32 %v3558, %v3734
      %v3757 = vld [vmem:[%s1787 + $0xa] sm:$0xff]
      %v3758 = vld [vmem:[%s1787 + $0x12] sm:$0xff]
      %v3759 = vld [vmem:[%s1787 + $0x2a] sm:$0xff]
      %v3760 = vld [vmem:[%s1787 + $0x32] sm:$0xff]
      %v3761 = vld [vmem:[%s1787 + $0x4a] sm:$0xff]
      %v3762 = vld [vmem:[%s1787 + $0x52] sm:$0xff]
      %v3763 = vld [vmem:[%s1787 + $0x6a] sm:$0xff]
      %v3764 = vld [vmem:[%s1787 + $0x72] sm:$0xff]
      %v3765 = vld [vmem:[%s1787 + $0x8a] sm:$0xff]
      %v3766 = vld [vmem:[%s1787 + $0x92] sm:$0xff]
      %v3767 = vld [vmem:[%s1787 + $0xaa] sm:$0xff]
      %v3768 = vld [vmem:[%s1787 + $0xb2] sm:$0xff]
      %v3769 = vld [vmem:[%s1787 + $0xca] sm:$0xff]
      %v3770 = vld [vmem:[%s1787 + $0xd2] sm:$0xff]
      %v3771 = vld [vmem:[%s1787 + $0xea] sm:$0xff]
      %v3772 = vld [vmem:[%s1787 + $0xf2] sm:$0xff]
      %v3773 = vld [vmem:[%s1787 + $0x10a] sm:$0xff]
      %v3774 = vld [vmem:[%s1787 + $0x112] sm:$0xff]
      %v3775 = vld [vmem:[%s1787 + $0x12a] sm:$0xff]
      %v3776 = vld [vmem:[%s1787 + $0x132] sm:$0xff]
      %v3777 = vpack.c.bf16 %v3758, %v3757
      %v3778 = vpack.c.bf16 %v3760, %v3759
      %v3779 = vpack.c.bf16 %v3762, %v3761
      %v3780 = vpack.c.bf16 %v3764, %v3763
      %v3781 = vpack.c.bf16 %v3766, %v3765
      %v3782 = vpack.c.bf16 %v3768, %v3767
      %v3783 = vpack.c.bf16 %v3770, %v3769
      %v3784 = vpack.c.bf16 %v3772, %v3771
      %v3785 = vpack.c.bf16 %v3774, %v3773
      %v3786 = vpack.c.bf16 %v3776, %v3775
      %s3787 = scalar_lea.vmem %s3, 40
      %v3788 = vld [vmem:[%s3787] sm:$0x7]
      %v3790 = vsel %vm1722, %v3777, 0
      %v3793 = vsel %vm1722, %v3778, 0
      %v3796 = vsel %vm1722, %v3779, 0
      %v3799 = vsel %vm1722, %v3780, 0
      %v3802 = vsel %vm1722, %v3781, 0
      %v3805 = vsel %vm1722, %v3782, 0
      %v3808 = vsel %vm1722, %v3783, 0
      %v3811 = vsel %vm1722, %v3784, 0
      %v3814 = vsel %vm1722, %v3785, 0
      %v3817 = vsel %vm1722, %v3786, 0
      %v3820 = vsel %vm1910, %v3788, 0
      %3822 = vmatprep.subr.bf16.mxu0 0
      %3823 = vmatpush1.bf16.msra.mxu0 %v3820
      %3824 = vmatprep.subr.bf16.mxu0 0
      %3825 = vmatpush1.bf16.msra.mxu0 0
      %3826 = vmatprep.subr.bf16.mxu0 0
      %3827 = vmatpush1.bf16.msra.mxu0 0
      %3828 = vmatprep.subr.bf16.mxu0 0
      %3829 = vmatpush1.bf16.msra.mxu0 0
      %3830 = vmatprep.subr.bf16.mxu0 0
      %3831 = vmatpush1.bf16.msra.mxu0 0
      %3832 = vmatprep.subr.bf16.mxu0 0
      %3833 = vmatpush1.bf16.msra.mxu0 0
      %3834 = vmatprep.subr.bf16.mxu0 0
      %3835 = vmatpush1.bf16.msra.mxu0 0
      %3836 = vmatprep.subr.bf16.mxu0 0
      %3837 = vmatpush1.bf16.msra.mxu0 0
      %3838 = vmatprep.subr.bf16.mxu0 0
      %3839 = vmatpush1.bf16.msra.mxu0 0
      %3840 = vmatprep.subr.bf16.mxu0 0
      %3841 = vmatpush1.bf16.msra.mxu0 0
      %3842 = vmatprep.subr.bf16.mxu0 0
      %3843 = vmatpush1.bf16.msra.mxu0 0
      %3844 = vmatprep.subr.bf16.mxu0 0
      %3845 = vmatpush1.bf16.msra.mxu0 0
      %3846 = vmatprep.subr.bf16.mxu0 0
      %3847 = vmatpush1.bf16.msra.mxu0 0
      %3848 = vmatprep.subr.bf16.mxu0 0
      %3849 = vmatpush1.bf16.msra.mxu0 0
      %3850 = vmatprep.subr.bf16.mxu0 0
      %3851 = vmatpush1.bf16.msra.mxu0 0
      %3852 = vmatprep.subr.bf16.mxu0 0
      %3853 = vmatpush1.bf16.msra.mxu0 0
      %3854 = vmatprep.mubr.bf16.mxu0 0
      %3855 = vmatmul.mubr.bf16.gmra.mrb[0].mxu0 %v3790
      %v3856 = vpop.f32.mrb[0].mxu0
      %v3857 = vadd.f32 0.0, %v3856
      %v3858 = vpop.f32.mrb[0].mxu0
      %v3859 = vpop.f32.mrb[0].mxu0
      %v3860 = vadd.f32 0.0, %v3859
      %v3861 = vpop.f32.mrb[0].mxu0
      %3862 = vmatprep.mubr.bf16.mxu0 0
      %3863 = vmatmul.mubr.bf16.gmra.mrb[0].mxu0 %v3793
      %v3864 = vpop.f32.mrb[0].mxu0
      %v3865 = vadd.f32 0.0, %v3864
      %v3866 = vpop.f32.mrb[0].mxu0
      %v3867 = vpop.f32.mrb[0].mxu0
      %v3868 = vadd.f32 0.0, %v3867
      %v3869 = vpop.f32.mrb[0].mxu0
      %3870 = vmatprep.mubr.bf16.mxu0 0
      %3871 = vmatmul.mubr.bf16.gmra.mrb[0].mxu0 %v3796
      %v3872 = vpop.f32.mrb[0].mxu0
      %v3873 = vadd.f32 0.0, %v3872
      %v3874 = vpop.f32.mrb[0].mxu0
      %v3875 = vpop.f32.mrb[0].mxu0
      %v3876 = vadd.f32 0.0, %v3875
      %v3877 = vpop.f32.mrb[0].mxu0
      %3878 = vmatprep.mubr.bf16.mxu0 0
      %3879 = vmatmul.mubr.bf16.gmra.mrb[0].mxu0 %v3799
      %v3880 = vpop.f32.mrb[0].mxu0
      %v3881 = vadd.f32 0.0, %v3880
      %v3882 = vpop.f32.mrb[0].mxu0
      %v3883 = vpop.f32.mrb[0].mxu0
      %v3884 = vadd.f32 0.0, %v3883
      %v3885 = vpop.f32.mrb[0].mxu0
      %3886 = vmatprep.mubr.bf16.mxu0 0
      %3887 = vmatmul.mubr.bf16.gmra.mrb[0].mxu0 %v3802
      %v3888 = vpop.f32.mrb[0].mxu0
      %v3889 = vadd.f32 0.0, %v3888
      %v3890 = vpop.f32.mrb[0].mxu0
      %v3891 = vpop.f32.mrb[0].mxu0
      %v3892 = vadd.f32 0.0, %v3891
      %v3893 = vpop.f32.mrb[0].mxu0
      %3894 = vmatprep.mubr.bf16.mxu0 0
      %3895 = vmatmul.mubr.bf16.gmra.mrb[0].mxu0 %v3805
      %v3896 = vpop.f32.mrb[0].mxu0
      %v3897 = vadd.f32 0.0, %v3896
      %v3898 = vpop.f32.mrb[0].mxu0
      %v3899 = vpop.f32.mrb[0].mxu0
      %v3900 = vadd.f32 0.0, %v3899
      %v3901 = vpop.f32.mrb[0].mxu0
      %3902 = vmatprep.mubr.bf16.mxu0 0
      %3903 = vmatmul.mubr.bf16.gmra.mrb[0].mxu0 %v3808
      %v3904 = vpop.f32.mrb[0].mxu0
      %v3905 = vadd.f32 0.0, %v3904
      %v3906 = vpop.f32.mrb[0].mxu0
      %v3907 = vpop.f32.mrb[0].mxu0
      %v3908 = vadd.f32 0.0, %v3907
      %v3909 = vpop.f32.mrb[0].mxu0
      %3910 = vmatprep.mubr.bf16.mxu0 0
      %3911 = vmatmul.mubr.bf16.gmra.mrb[0].mxu0 %v3811
      %v3912 = vpop.f32.mrb[0].mxu0
      %v3913 = vadd.f32 0.0, %v3912
      %v3914 = vpop.f32.mrb[0].mxu0
      %v3915 = vpop.f32.mrb[0].mxu0
      %v3916 = vadd.f32 0.0, %v3915
      %v3917 = vpop.f32.mrb[0].mxu0
      %3918 = vmatprep.mubr.bf16.mxu0 0
      %3919 = vmatmul.mubr.bf16.gmra.mrb[0].mxu0 %v3814
      %v3920 = vpop.f32.mrb[0].mxu0
      %v3921 = vadd.f32 0.0, %v3920
      %v3922 = vpop.f32.mrb[0].mxu0
      %v3923 = vpop.f32.mrb[0].mxu0
      %v3924 = vadd.f32 0.0, %v3923
      %v3925 = vpop.f32.mrb[0].mxu0
      %3926 = vmatprep.mubr.bf16.mxu0 0
      %3927 = vmatmul.mubr.bf16.gmra.mrb[0].mxu0 %v3817
      %v3928 = vpop.f32.mrb[0].mxu0
      %v3929 = vadd.f32 0.0, %v3928
      %v3930 = vpop.f32.mrb[0].mxu0
      %v3931 = vpop.f32.mrb[0].mxu0
      %v3932 = vadd.f32 0.0, %v3931
      %v3933 = vpop.f32.mrb[0].mxu0
      %3934 = vdwg.mxu0
      %v3935 = vadd.f32 %v3737, %v3857
      %v3936 = vadd.f32 %v3738, %v3860
      %v3937 = vadd.f32 %v3739, %v3865
      %v3938 = vadd.f32 %v3740, %v3868
      %v3939 = vadd.f32 %v3741, %v3873
      %v3940 = vadd.f32 %v3742, %v3876
      %v3941 = vadd.f32 %v3743, %v3881
      %v3942 = vadd.f32 %v3744, %v3884
      %v3943 = vadd.f32 %v3745, %v3889
      %v3944 = vadd.f32 %v3746, %v3892
      %v3945 = vadd.f32 %v3747, %v3897
      %v3946 = vadd.f32 %v3748, %v3900
      %v3947 = vadd.f32 %v3749, %v3905
      %v3948 = vadd.f32 %v3750, %v3908
      %v3949 = vadd.f32 %v3751, %v3913
      %v3950 = vadd.f32 %v3752, %v3916
      %v3951 = vadd.f32 %v3753, %v3921
      %v3952 = vadd.f32 %v3754, %v3924
      %v3953 = vadd.f32 %v3755, %v3929
      %v3954 = vadd.f32 %v3756, %v3932
      %v3955 = vld [vmem:[%s1787 + $0xb] sm:$0xff]
      %v3956 = vld [vmem:[%s1787 + $0x13] sm:$0xff]
      %v3957 = vld [vmem:[%s1787 + $0x2b] sm:$0xff]
      %v3958 = vld [vmem:[%s1787 + $0x33] sm:$0xff]
      %v3959 = vld [vmem:[%s1787 + $0x4b] sm:$0xff]
      %v3960 = vld [vmem:[%s1787 + $0x53] sm:$0xff]
      %v3961 = vld [vmem:[%s1787 + $0x6b] sm:$0xff]
      %v3962 = vld [vmem:[%s1787 + $0x73] sm:$0xff]
      %v3963 = vld [vmem:[%s1787 + $0x8b] sm:$0xff]
      %v3964 = vld [vmem:[%s1787 + $0x93] sm:$0xff]
      %v3965 = vld [vmem:[%s1787 + $0xab] sm:$0xff]
      %v3966 = vld [vmem:[%s1787 + $0xb3] sm:$0xff]
      %v3967 = vld [vmem:[%s1787 + $0xcb] sm:$0xff]
      %v3968 = vld [vmem:[%s1787 + $0xd3] sm:$0xff]
      %v3969 = vld [vmem:[%s1787 + $0xeb] sm:$0xff]
      %v3970 = vld [vmem:[%s1787 + $0xf3] sm:$0xff]
      %v3971 = vld [vmem:[%s1787 + $0x10b] sm:$0xff]
      %v3972 = vld [vmem:[%s1787 + $0x113] sm:$0xff]
      %v3973 = vld [vmem:[%s1787 + $0x12b] sm:$0xff]
      %v3974 = vld [vmem:[%s1787 + $0x133] sm:$0xff]
      %v3975 = vpack.c.bf16 %v3956, %v3955
      %v3976 = vpack.c.bf16 %v3958, %v3957
      %v3977 = vpack.c.bf16 %v3960, %v3959
      %v3978 = vpack.c.bf16 %v3962, %v3961
      %v3979 = vpack.c.bf16 %v3964, %v3963
      %v3980 = vpack.c.bf16 %v3966, %v3965
      %v3981 = vpack.c.bf16 %v3968, %v3967
      %v3982 = vpack.c.bf16 %v3970, %v3969
      %v3983 = vpack.c.bf16 %v3972, %v3971
      %v3984 = vpack.c.bf16 %v3974, %v3973
      %s3985 = scalar_lea.vmem %s3, 44
      %v3986 = vld [vmem:[%s3985] sm:$0x7]
      %v3988 = vsel %vm1722, %v3975, 0
      %v3991 = vsel %vm1722, %v3976, 0
      %v3994 = vsel %vm1722, %v3977, 0
      %v3997 = vsel %vm1722, %v3978, 0
      %v4000 = vsel %vm1722, %v3979, 0
      %v4003 = vsel %vm1722, %v3980, 0
      %v4006 = vsel %vm1722, %v3981, 0
      %v4009 = vsel %vm1722, %v3982, 0
      %v4012 = vsel %vm1722, %v3983, 0
      %v4015 = vsel %vm1722, %v3984, 0
      %v4018 = vsel %vm1910, %v3986, 0
      %4020 = vmatprep.subr.bf16.mxu0 0
      %4021 = vmatpush1.bf16.msra.mxu0 %v4018
      %4022 = vmatprep.subr.bf16.mxu0 0
      %4023 = vmatpush1.bf16.msra.mxu0 0
      %4024 = vmatprep.subr.bf16.mxu0 0
      %4025 = vmatpush1.bf16.msra.mxu0 0
      %4026 = vmatprep.subr.bf16.mxu0 0
      %4027 = vmatpush1.bf16.msra.mxu0 0
      %4028 = vmatprep.subr.bf16.mxu0 0
      %4029 = vmatpush1.bf16.msra.mxu0 0
      %4030 = vmatprep.subr.bf16.mxu0 0
      %4031 = vmatpush1.bf16.msra.mxu0 0
      %4032 = vmatprep.subr.bf16.mxu0 0
      %4033 = vmatpush1.bf16.msra.mxu0 0
      %4034 = vmatprep.subr.bf16.mxu0 0
      %4035 = vmatpush1.bf16.msra.mxu0 0
      %4036 = vmatprep.subr.bf16.mxu0 0
      %4037 = vmatpush1.bf16.msra.mxu0 0
      %4038 = vmatprep.subr.bf16.mxu0 0
      %4039 = vmatpush1.bf16.msra.mxu0 0
      %4040 = vmatprep.subr.bf16.mxu0 0
      %4041 = vmatpush1.bf16.msra.mxu0 0
      %4042 = vmatprep.subr.bf16.mxu0 0
      %4043 = vmatpush1.bf16.msra.mxu0 0
      %4044 = vmatprep.subr.bf16.mxu0 0
      %4045 = vmatpush1.bf16.msra.mxu0 0
      %4046 = vmatprep.subr.bf16.mxu0 0
      %4047 = vmatpush1.bf16.msra.mxu0 0
      %4048 = vmatprep.subr.bf16.mxu0 0
      %4049 = vmatpush1.bf16.msra.mxu0 0
      %4050 = vmatprep.subr.bf16.mxu0 0
      %4051 = vmatpush1.bf16.msra.mxu0 0
      %4052 = vmatprep.mubr.bf16.mxu0 0
      %4053 = vmatmul.mubr.bf16.gmra.mrb[0].mxu0 %v3988
      %v4054 = vpop.f32.mrb[0].mxu0
      %v4055 = vadd.f32 0.0, %v4054
      %v4056 = vpop.f32.mrb[0].mxu0
      %v4057 = vpop.f32.mrb[0].mxu0
      %v4058 = vadd.f32 0.0, %v4057
      %v4059 = vpop.f32.mrb[0].mxu0
      %4060 = vmatprep.mubr.bf16.mxu0 0
      %4061 = vmatmul.mubr.bf16.gmra.mrb[0].mxu0 %v3991
      %v4062 = vpop.f32.mrb[0].mxu0
      %v4063 = vadd.f32 0.0, %v4062
      %v4064 = vpop.f32.mrb[0].mxu0
      %v4065 = vpop.f32.mrb[0].mxu0
      %v4066 = vadd.f32 0.0, %v4065
      %v4067 = vpop.f32.mrb[0].mxu0
      %4068 = vmatprep.mubr.bf16.mxu0 0
      %4069 = vmatmul.mubr.bf16.gmra.mrb[0].mxu0 %v3994
      %v4070 = vpop.f32.mrb[0].mxu0
      %v4071 = vadd.f32 0.0, %v4070
      %v4072 = vpop.f32.mrb[0].mxu0
      %v4073 = vpop.f32.mrb[0].mxu0
      %v4074 = vadd.f32 0.0, %v4073
      %v4075 = vpop.f32.mrb[0].mxu0
      %4076 = vmatprep.mubr.bf16.mxu0 0
      %4077 = vmatmul.mubr.bf16.gmra.mrb[0].mxu0 %v3997
      %v4078 = vpop.f32.mrb[0].mxu0
      %v4079 = vadd.f32 0.0, %v4078
      %v4080 = vpop.f32.mrb[0].mxu0
      %v4081 = vpop.f32.mrb[0].mxu0
      %v4082 = vadd.f32 0.0, %v4081
      %v4083 = vpop.f32.mrb[0].mxu0
      %4084 = vmatprep.mubr.bf16.mxu0 0
      %4085 = vmatmul.mubr.bf16.gmra.mrb[0].mxu0 %v4000
      %v4086 = vpop.f32.mrb[0].mxu0
      %v4087 = vadd.f32 0.0, %v4086
      %v4088 = vpop.f32.mrb[0].mxu0
      %v4089 = vpop.f32.mrb[0].mxu0
      %v4090 = vadd.f32 0.0, %v4089
      %v4091 = vpop.f32.mrb[0].mxu0
      %4092 = vmatprep.mubr.bf16.mxu0 0
      %4093 = vmatmul.mubr.bf16.gmra.mrb[0].mxu0 %v4003
      %v4094 = vpop.f32.mrb[0].mxu0
      %v4095 = vadd.f32 0.0, %v4094
      %v4096 = vpop.f32.mrb[0].mxu0
      %v4097 = vpop.f32.mrb[0].mxu0
      %v4098 = vadd.f32 0.0, %v4097
      %v4099 = vpop.f32.mrb[0].mxu0
      %4100 = vmatprep.mubr.bf16.mxu0 0
      %4101 = vmatmul.mubr.bf16.gmra.mrb[0].mxu0 %v4006
      %v4102 = vpop.f32.mrb[0].mxu0
      %v4103 = vadd.f32 0.0, %v4102
      %v4104 = vpop.f32.mrb[0].mxu0
      %v4105 = vpop.f32.mrb[0].mxu0
      %v4106 = vadd.f32 0.0, %v4105
      %v4107 = vpop.f32.mrb[0].mxu0
      %4108 = vmatprep.mubr.bf16.mxu0 0
      %4109 = vmatmul.mubr.bf16.gmra.mrb[0].mxu0 %v4009
      %v4110 = vpop.f32.mrb[0].mxu0
      %v4111 = vadd.f32 0.0, %v4110
      %v4112 = vpop.f32.mrb[0].mxu0
      %v4113 = vpop.f32.mrb[0].mxu0
      %v4114 = vadd.f32 0.0, %v4113
      %v4115 = vpop.f32.mrb[0].mxu0
      %4116 = vmatprep.mubr.bf16.mxu0 0
      %4117 = vmatmul.mubr.bf16.gmra.mrb[0].mxu0 %v4012
      %v4118 = vpop.f32.mrb[0].mxu0
      %v4119 = vadd.f32 0.0, %v4118
      %v4120 = vpop.f32.mrb[0].mxu0
      %v4121 = vpop.f32.mrb[0].mxu0
      %v4122 = vadd.f32 0.0, %v4121
      %v4123 = vpop.f32.mrb[0].mxu0
      %4124 = vmatprep.mubr.bf16.mxu0 0
      %4125 = vmatmul.mubr.bf16.gmra.mrb[0].mxu0 %v4015
      %v4126 = vpop.f32.mrb[0].mxu0
      %v4127 = vadd.f32 0.0, %v4126
      %v4128 = vpop.f32.mrb[0].mxu0
      %v4129 = vpop.f32.mrb[0].mxu0
      %v4130 = vadd.f32 0.0, %v4129
      %v4131 = vpop.f32.mrb[0].mxu0
      %4132 = vdwg.mxu0
      %v4133 = vadd.f32 %v3935, %v4055
      %v4134 = vadd.f32 %v3936, %v4058
      %v4135 = vadd.f32 %v3937, %v4063
      %v4136 = vadd.f32 %v3938, %v4066
      %v4137 = vadd.f32 %v3939, %v4071
      %v4138 = vadd.f32 %v3940, %v4074
      %v4139 = vadd.f32 %v3941, %v4079
      %v4140 = vadd.f32 %v3942, %v4082
      %v4141 = vadd.f32 %v3943, %v4087
      %v4142 = vadd.f32 %v3944, %v4090
      %v4143 = vadd.f32 %v3945, %v4095
      %v4144 = vadd.f32 %v3946, %v4098
      %v4145 = vadd.f32 %v3947, %v4103
      %v4146 = vadd.f32 %v3948, %v4106
      %v4147 = vadd.f32 %v3949, %v4111
      %v4148 = vadd.f32 %v3950, %v4114
      %v4149 = vadd.f32 %v3951, %v4119
      %v4150 = vadd.f32 %v3952, %v4122
      %v4151 = vadd.f32 %v3953, %v4127
      %v4152 = vadd.f32 %v3954, %v4130
      %v4153 = vld [vmem:[%s1787 + $0xc] sm:$0xff]
      %v4154 = vld [vmem:[%s1787 + $0x14] sm:$0xff]
      %v4155 = vld [vmem:[%s1787 + $0x2c] sm:$0xff]
      %v4156 = vld [vmem:[%s1787 + $0x34] sm:$0xff]
      %v4157 = vld [vmem:[%s1787 + $0x4c] sm:$0xff]
      %v4158 = vld [vmem:[%s1787 + $0x54] sm:$0xff]
      %v4159 = vld [vmem:[%s1787 + $0x6c] sm:$0xff]
      %v4160 = vld [vmem:[%s1787 + $0x74] sm:$0xff]
      %v4161 = vld [vmem:[%s1787 + $0x8c] sm:$0xff]
      %v4162 = vld [vmem:[%s1787 + $0x94] sm:$0xff]
      %v4163 = vld [vmem:[%s1787 + $0xac] sm:$0xff]
      %v4164 = vld [vmem:[%s1787 + $0xb4] sm:$0xff]
      %v4165 = vld [vmem:[%s1787 + $0xcc] sm:$0xff]
      %v4166 = vld [vmem:[%s1787 + $0xd4] sm:$0xff]
      %v4167 = vld [vmem:[%s1787 + $0xec] sm:$0xff]
      %v4168 = vld [vmem:[%s1787 + $0xf4] sm:$0xff]
      %v4169 = vld [vmem:[%s1787 + $0x10c] sm:$0xff]
      %v4170 = vld [vmem:[%s1787 + $0x114] sm:$0xff]
      %v4171 = vld [vmem:[%s1787 + $0x12c] sm:$0xff]
      %v4172 = vld [vmem:[%s1787 + $0x134] sm:$0xff]
      %v4173 = vpack.c.bf16 %v4154, %v4153
      %v4174 = vpack.c.bf16 %v4156, %v4155
      %v4175 = vpack.c.bf16 %v4158, %v4157
      %v4176 = vpack.c.bf16 %v4160, %v4159
      %v4177 = vpack.c.bf16 %v4162, %v4161
      %v4178 = vpack.c.bf16 %v4164, %v4163
      %v4179 = vpack.c.bf16 %v4166, %v4165
      %v4180 = vpack.c.bf16 %v4168, %v4167
      %v4181 = vpack.c.bf16 %v4170, %v4169
      %v4182 = vpack.c.bf16 %v4172, %v4171
      %s4183 = scalar_lea.vmem %s3, 48
      %v4184 = vld [vmem:[%s4183] sm:$0x7]
      %v4186 = vsel %vm1722, %v4173, 0
      %v4189 = vsel %vm1722, %v4174, 0
      %v4192 = vsel %vm1722, %v4175, 0
      %v4195 = vsel %vm1722, %v4176, 0
      %v4198 = vsel %vm1722, %v4177, 0
      %v4201 = vsel %vm1722, %v4178, 0
      %v4204 = vsel %vm1722, %v4179, 0
      %v4207 = vsel %vm1722, %v4180, 0
      %v4210 = vsel %vm1722, %v4181, 0
      %v4213 = vsel %vm1722, %v4182, 0
      %v4216 = vsel %vm1910, %v4184, 0
      %4218 = vmatprep.subr.bf16.mxu0 0
      %4219 = vmatpush1.bf16.msra.mxu0 %v4216
      %4220 = vmatprep.subr.bf16.mxu0 0
      %4221 = vmatpush1.bf16.msra.mxu0 0
      %4222 = vmatprep.subr.bf16.mxu0 0
      %4223 = vmatpush1.bf16.msra.mxu0 0
      %4224 = vmatprep.subr.bf16.mxu0 0
      %4225 = vmatpush1.bf16.msra.mxu0 0
      %4226 = vmatprep.subr.bf16.mxu0 0
      %4227 = vmatpush1.bf16.msra.mxu0 0
      %4228 = vmatprep.subr.bf16.mxu0 0
      %4229 = vmatpush1.bf16.msra.mxu0 0
      %4230 = vmatprep.subr.bf16.mxu0 0
      %4231 = vmatpush1.bf16.msra.mxu0 0
      %4232 = vmatprep.subr.bf16.mxu0 0
      %4233 = vmatpush1.bf16.msra.mxu0 0
      %4234 = vmatprep.subr.bf16.mxu0 0
      %4235 = vmatpush1.bf16.msra.mxu0 0
      %4236 = vmatprep.subr.bf16.mxu0 0
      %4237 = vmatpush1.bf16.msra.mxu0 0
      %4238 = vmatprep.subr.bf16.mxu0 0
      %4239 = vmatpush1.bf16.msra.mxu0 0
      %4240 = vmatprep.subr.bf16.mxu0 0
      %4241 = vmatpush1.bf16.msra.mxu0 0
      %4242 = vmatprep.subr.bf16.mxu0 0
      %4243 = vmatpush1.bf16.msra.mxu0 0
      %4244 = vmatprep.subr.bf16.mxu0 0
      %4245 = vmatpush1.bf16.msra.mxu0 0
      %4246 = vmatprep.subr.bf16.mxu0 0
      %4247 = vmatpush1.bf16.msra.mxu0 0
      %4248 = vmatprep.subr.bf16.mxu0 0
      %4249 = vmatpush1.bf16.msra.mxu0 0
      %4250 = vmatprep.mubr.bf16.mxu0 0
      %4251 = vmatmul.mubr.bf16.gmra.mrb[0].mxu0 %v4186
      %v4252 = vpop.f32.mrb[0].mxu0
      %v4253 = vadd.f32 0.0, %v4252
      %v4254 = vpop.f32.mrb[0].mxu0
      %v4255 = vpop.f32.mrb[0].mxu0
      %v4256 = vadd.f32 0.0, %v4255
      %v4257 = vpop.f32.mrb[0].mxu0
      %4258 = vmatprep.mubr.bf16.mxu0 0
      %4259 = vmatmul.mubr.bf16.gmra.mrb[0].mxu0 %v4189
      %v4260 = vpop.f32.mrb[0].mxu0
      %v4261 = vadd.f32 0.0, %v4260
      %v4262 = vpop.f32.mrb[0].mxu0
      %v4263 = vpop.f32.mrb[0].mxu0
      %v4264 = vadd.f32 0.0, %v4263
      %v4265 = vpop.f32.mrb[0].mxu0
      %4266 = vmatprep.mubr.bf16.mxu0 0
      %4267 = vmatmul.mubr.bf16.gmra.mrb[0].mxu0 %v4192
      %v4268 = vpop.f32.mrb[0].mxu0
      %v4269 = vadd.f32 0.0, %v4268
      %v4270 = vpop.f32.mrb[0].mxu0
      %v4271 = vpop.f32.mrb[0].mxu0
      %v4272 = vadd.f32 0.0, %v4271
      %v4273 = vpop.f32.mrb[0].mxu0
      %4274 = vmatprep.mubr.bf16.mxu0 0
      %4275 = vmatmul.mubr.bf16.gmra.mrb[0].mxu0 %v4195
      %v4276 = vpop.f32.mrb[0].mxu0
      %v4277 = vadd.f32 0.0, %v4276
      %v4278 = vpop.f32.mrb[0].mxu0
      %v4279 = vpop.f32.mrb[0].mxu0
      %v4280 = vadd.f32 0.0, %v4279
      %v4281 = vpop.f32.mrb[0].mxu0
      %4282 = vmatprep.mubr.bf16.mxu0 0
      %4283 = vmatmul.mubr.bf16.gmra.mrb[0].mxu0 %v4198
      %v4284 = vpop.f32.mrb[0].mxu0
      %v4285 = vadd.f32 0.0, %v4284
      %v4286 = vpop.f32.mrb[0].mxu0
      %v4287 = vpop.f32.mrb[0].mxu0
      %v4288 = vadd.f32 0.0, %v4287
      %v4289 = vpop.f32.mrb[0].mxu0
      %4290 = vmatprep.mubr.bf16.mxu0 0
      %4291 = vmatmul.mubr.bf16.gmra.mrb[0].mxu0 %v4201
      %v4292 = vpop.f32.mrb[0].mxu0
      %v4293 = vadd.f32 0.0, %v4292
      %v4294 = vpop.f32.mrb[0].mxu0
      %v4295 = vpop.f32.mrb[0].mxu0
      %v4296 = vadd.f32 0.0, %v4295
      %v4297 = vpop.f32.mrb[0].mxu0
      %4298 = vmatprep.mubr.bf16.mxu0 0
      %4299 = vmatmul.mubr.bf16.gmra.mrb[0].mxu0 %v4204
      %v4300 = vpop.f32.mrb[0].mxu0
      %v4301 = vadd.f32 0.0, %v4300
      %v4302 = vpop.f32.mrb[0].mxu0
      %v4303 = vpop.f32.mrb[0].mxu0
      %v4304 = vadd.f32 0.0, %v4303
      %v4305 = vpop.f32.mrb[0].mxu0
      %4306 = vmatprep.mubr.bf16.mxu0 0
      %4307 = vmatmul.mubr.bf16.gmra.mrb[0].mxu0 %v4207
      %v4308 = vpop.f32.mrb[0].mxu0
      %v4309 = vadd.f32 0.0, %v4308
      %v4310 = vpop.f32.mrb[0].mxu0
      %v4311 = vpop.f32.mrb[0].mxu0
      %v4312 = vadd.f32 0.0, %v4311
      %v4313 = vpop.f32.mrb[0].mxu0
      %4314 = vmatprep.mubr.bf16.mxu0 0
      %4315 = vmatmul.mubr.bf16.gmra.mrb[0].mxu0 %v4210
      %v4316 = vpop.f32.mrb[0].mxu0
      %v4317 = vadd.f32 0.0, %v4316
      %v4318 = vpop.f32.mrb[0].mxu0
      %v4319 = vpop.f32.mrb[0].mxu0
      %v4320 = vadd.f32 0.0, %v4319
      %v4321 = vpop.f32.mrb[0].mxu0
      %4322 = vmatprep.mubr.bf16.mxu0 0
      %4323 = vmatmul.mubr.bf16.gmra.mrb[0].mxu0 %v4213
      %v4324 = vpop.f32.mrb[0].mxu0
      %v4325 = vadd.f32 0.0, %v4324
      %v4326 = vpop.f32.mrb[0].mxu0
      %v4327 = vpop.f32.mrb[0].mxu0
      %v4328 = vadd.f32 0.0, %v4327
      %v4329 = vpop.f32.mrb[0].mxu0
      %4330 = vdwg.mxu0
      %v4331 = vadd.f32 %v4133, %v4253
      %v4332 = vadd.f32 %v4134, %v4256
      %v4333 = vadd.f32 %v4135, %v4261
      %v4334 = vadd.f32 %v4136, %v4264
      %v4335 = vadd.f32 %v4137, %v4269
      %v4336 = vadd.f32 %v4138, %v4272
      %v4337 = vadd.f32 %v4139, %v4277
      %v4338 = vadd.f32 %v4140, %v4280
      %v4339 = vadd.f32 %v4141, %v4285
      %v4340 = vadd.f32 %v4142, %v4288
      %v4341 = vadd.f32 %v4143, %v4293
      %v4342 = vadd.f32 %v4144, %v4296
      %v4343 = vadd.f32 %v4145, %v4301
      %v4344 = vadd.f32 %v4146, %v4304
      %v4345 = vadd.f32 %v4147, %v4309
      %v4346 = vadd.f32 %v4148, %v4312
      %v4347 = vadd.f32 %v4149, %v4317
      %v4348 = vadd.f32 %v4150, %v4320
      %v4349 = vadd.f32 %v4151, %v4325
      %v4350 = vadd.f32 %v4152, %v4328
      %v4351 = vld [vmem:[%s1787 + $0xd] sm:$0xff]
      %v4352 = vld [vmem:[%s1787 + $0x15] sm:$0xff]
      %v4353 = vld [vmem:[%s1787 + $0x2d] sm:$0xff]
      %v4354 = vld [vmem:[%s1787 + $0x35] sm:$0xff]
      %v4355 = vld [vmem:[%s1787 + $0x4d] sm:$0xff]
      %v4356 = vld [vmem:[%s1787 + $0x55] sm:$0xff]
      %v4357 = vld [vmem:[%s1787 + $0x6d] sm:$0xff]
      %v4358 = vld [vmem:[%s1787 + $0x75] sm:$0xff]
      %v4359 = vld [vmem:[%s1787 + $0x8d] sm:$0xff]
      %v4360 = vld [vmem:[%s1787 + $0x95] sm:$0xff]
      %v4361 = vld [vmem:[%s1787 + $0xad] sm:$0xff]
      %v4362 = vld [vmem:[%s1787 + $0xb5] sm:$0xff]
      %v4363 = vld [vmem:[%s1787 + $0xcd] sm:$0xff]
      %v4364 = vld [vmem:[%s1787 + $0xd5] sm:$0xff]
      %v4365 = vld [vmem:[%s1787 + $0xed] sm:$0xff]
      %v4366 = vld [vmem:[%s1787 + $0xf5] sm:$0xff]
      %v4367 = vld [vmem:[%s1787 + $0x10d] sm:$0xff]
      %v4368 = vld [vmem:[%s1787 + $0x115] sm:$0xff]
      %v4369 = vld [vmem:[%s1787 + $0x12d] sm:$0xff]
      %v4370 = vld [vmem:[%s1787 + $0x135] sm:$0xff]
      %v4371 = vpack.c.bf16 %v4352, %v4351
      %v4372 = vpack.c.bf16 %v4354, %v4353
      %v4373 = vpack.c.bf16 %v4356, %v4355
      %v4374 = vpack.c.bf16 %v4358, %v4357
      %v4375 = vpack.c.bf16 %v4360, %v4359
      %v4376 = vpack.c.bf16 %v4362, %v4361
      %v4377 = vpack.c.bf16 %v4364, %v4363
      %v4378 = vpack.c.bf16 %v4366, %v4365
      %v4379 = vpack.c.bf16 %v4368, %v4367
      %v4380 = vpack.c.bf16 %v4370, %v4369
      %s4381 = scalar_lea.vmem %s3, 52
      %v4382 = vld [vmem:[%s4381] sm:$0x7]
      %v4384 = vsel %vm1722, %v4371, 0
      %v4387 = vsel %vm1722, %v4372, 0
      %v4390 = vsel %vm1722, %v4373, 0
      %v4393 = vsel %vm1722, %v4374, 0
      %v4396 = vsel %vm1722, %v4375, 0
      %v4399 = vsel %vm1722, %v4376, 0
      %v4402 = vsel %vm1722, %v4377, 0
      %v4405 = vsel %vm1722, %v4378, 0
      %v4408 = vsel %vm1722, %v4379, 0
      %v4411 = vsel %vm1722, %v4380, 0
      %v4414 = vsel %vm1910, %v4382, 0
      %4416 = vmatprep.subr.bf16.mxu0 0
      %4417 = vmatpush1.bf16.msra.mxu0 %v4414
      %4418 = vmatprep.subr.bf16.mxu0 0
      %4419 = vmatpush1.bf16.msra.mxu0 0
      %4420 = vmatprep.subr.bf16.mxu0 0
      %4421 = vmatpush1.bf16.msra.mxu0 0
      %4422 = vmatprep.subr.bf16.mxu0 0
      %4423 = vmatpush1.bf16.msra.mxu0 0
      %4424 = vmatprep.subr.bf16.mxu0 0
      %4425 = vmatpush1.bf16.msra.mxu0 0
      %4426 = vmatprep.subr.bf16.mxu0 0
      %4427 = vmatpush1.bf16.msra.mxu0 0
      %4428 = vmatprep.subr.bf16.mxu0 0
      %4429 = vmatpush1.bf16.msra.mxu0 0
      %4430 = vmatprep.subr.bf16.mxu0 0
      %4431 = vmatpush1.bf16.msra.mxu0 0
      %4432 = vmatprep.subr.bf16.mxu0 0
      %4433 = vmatpush1.bf16.msra.mxu0 0
      %4434 = vmatprep.subr.bf16.mxu0 0
      %4435 = vmatpush1.bf16.msra.mxu0 0
      %4436 = vmatprep.subr.bf16.mxu0 0
      %4437 = vmatpush1.bf16.msra.mxu0 0
      %4438 = vmatprep.subr.bf16.mxu0 0
      %4439 = vmatpush1.bf16.msra.mxu0 0
      %4440 = vmatprep.subr.bf16.mxu0 0
      %4441 = vmatpush1.bf16.msra.mxu0 0
      %4442 = vmatprep.subr.bf16.mxu0 0
      %4443 = vmatpush1.bf16.msra.mxu0 0
      %4444 = vmatprep.subr.bf16.mxu0 0
      %4445 = vmatpush1.bf16.msra.mxu0 0
      %4446 = vmatprep.subr.bf16.mxu0 0
      %4447 = vmatpush1.bf16.msra.mxu0 0
      %4448 = vmatprep.mubr.bf16.mxu0 0
      %4449 = vmatmul.mubr.bf16.gmra.mrb[0].mxu0 %v4384
      %v4450 = vpop.f32.mrb[0].mxu0
      %v4451 = vadd.f32 0.0, %v4450
      %v4452 = vpop.f32.mrb[0].mxu0
      %v4453 = vpop.f32.mrb[0].mxu0
      %v4454 = vadd.f32 0.0, %v4453
      %v4455 = vpop.f32.mrb[0].mxu0
      %4456 = vmatprep.mubr.bf16.mxu0 0
      %4457 = vmatmul.mubr.bf16.gmra.mrb[0].mxu0 %v4387
      %v4458 = vpop.f32.mrb[0].mxu0
      %v4459 = vadd.f32 0.0, %v4458
      %v4460 = vpop.f32.mrb[0].mxu0
      %v4461 = vpop.f32.mrb[0].mxu0
      %v4462 = vadd.f32 0.0, %v4461
      %v4463 = vpop.f32.mrb[0].mxu0
      %4464 = vmatprep.mubr.bf16.mxu0 0
      %4465 = vmatmul.mubr.bf16.gmra.mrb[0].mxu0 %v4390
      %v4466 = vpop.f32.mrb[0].mxu0
      %v4467 = vadd.f32 0.0, %v4466
      %v4468 = vpop.f32.mrb[0].mxu0
      %v4469 = vpop.f32.mrb[0].mxu0
      %v4470 = vadd.f32 0.0, %v4469
      %v4471 = vpop.f32.mrb[0].mxu0
      %4472 = vmatprep.mubr.bf16.mxu0 0
      %4473 = vmatmul.mubr.bf16.gmra.mrb[0].mxu0 %v4393
      %v4474 = vpop.f32.mrb[0].mxu0
      %v4475 = vadd.f32 0.0, %v4474
      %v4476 = vpop.f32.mrb[0].mxu0
      %v4477 = vpop.f32.mrb[0].mxu0
      %v4478 = vadd.f32 0.0, %v4477
      %v4479 = vpop.f32.mrb[0].mxu0
      %4480 = vmatprep.mubr.bf16.mxu0 0
      %4481 = vmatmul.mubr.bf16.gmra.mrb[0].mxu0 %v4396
      %v4482 = vpop.f32.mrb[0].mxu0
      %v4483 = vadd.f32 0.0, %v4482
      %v4484 = vpop.f32.mrb[0].mxu0
      %v4485 = vpop.f32.mrb[0].mxu0
      %v4486 = vadd.f32 0.0, %v4485
      %v4487 = vpop.f32.mrb[0].mxu0
      %4488 = vmatprep.mubr.bf16.mxu0 0
      %4489 = vmatmul.mubr.bf16.gmra.mrb[0].mxu0 %v4399
      %v4490 = vpop.f32.mrb[0].mxu0
      %v4491 = vadd.f32 0.0, %v4490
      %v4492 = vpop.f32.mrb[0].mxu0
      %v4493 = vpop.f32.mrb[0].mxu0
      %v4494 = vadd.f32 0.0, %v4493
      %v4495 = vpop.f32.mrb[0].mxu0
      %4496 = vmatprep.mubr.bf16.mxu0 0
      %4497 = vmatmul.mubr.bf16.gmra.mrb[0].mxu0 %v4402
      %v4498 = vpop.f32.mrb[0].mxu0
      %v4499 = vadd.f32 0.0, %v4498
      %v4500 = vpop.f32.mrb[0].mxu0
      %v4501 = vpop.f32.mrb[0].mxu0
      %v4502 = vadd.f32 0.0, %v4501
      %v4503 = vpop.f32.mrb[0].mxu0
      %4504 = vmatprep.mubr.bf16.mxu0 0
      %4505 = vmatmul.mubr.bf16.gmra.mrb[0].mxu0 %v4405
      %v4506 = vpop.f32.mrb[0].mxu0
      %v4507 = vadd.f32 0.0, %v4506
      %v4508 = vpop.f32.mrb[0].mxu0
      %v4509 = vpop.f32.mrb[0].mxu0
      %v4510 = vadd.f32 0.0, %v4509
      %v4511 = vpop.f32.mrb[0].mxu0
      %4512 = vmatprep.mubr.bf16.mxu0 0
      %4513 = vmatmul.mubr.bf16.gmra.mrb[0].mxu0 %v4408
      %v4514 = vpop.f32.mrb[0].mxu0
      %v4515 = vadd.f32 0.0, %v4514
      %v4516 = vpop.f32.mrb[0].mxu0
      %v4517 = vpop.f32.mrb[0].mxu0
      %v4518 = vadd.f32 0.0, %v4517
      %v4519 = vpop.f32.mrb[0].mxu0
      %4520 = vmatprep.mubr.bf16.mxu0 0
      %4521 = vmatmul.mubr.bf16.gmra.mrb[0].mxu0 %v4411
      %v4522 = vpop.f32.mrb[0].mxu0
      %v4523 = vadd.f32 0.0, %v4522
      %v4524 = vpop.f32.mrb[0].mxu0
      %v4525 = vpop.f32.mrb[0].mxu0
      %v4526 = vadd.f32 0.0, %v4525
      %v4527 = vpop.f32.mrb[0].mxu0
      %4528 = vdwg.mxu0
      %v4529 = vadd.f32 %v4331, %v4451
      %v4530 = vadd.f32 %v4332, %v4454
      %v4531 = vadd.f32 %v4333, %v4459
      %v4532 = vadd.f32 %v4334, %v4462
      %v4533 = vadd.f32 %v4335, %v4467
      %v4534 = vadd.f32 %v4336, %v4470
      %v4535 = vadd.f32 %v4337, %v4475
      %v4536 = vadd.f32 %v4338, %v4478
      %v4537 = vadd.f32 %v4339, %v4483
      %v4538 = vadd.f32 %v4340, %v4486
      %v4539 = vadd.f32 %v4341, %v4491
      %v4540 = vadd.f32 %v4342, %v4494
      %v4541 = vadd.f32 %v4343, %v4499
      %v4542 = vadd.f32 %v4344, %v4502
      %v4543 = vadd.f32 %v4345, %v4507
      %v4544 = vadd.f32 %v4346, %v4510
      %v4545 = vadd.f32 %v4347, %v4515
      %v4546 = vadd.f32 %v4348, %v4518
      %v4547 = vadd.f32 %v4349, %v4523
      %v4548 = vadd.f32 %v4350, %v4526
      %s4549 = scalar_lea.vmem [#allocation2], 64
      %v4550 = vld [vmem:[%s4549 + $0x7] sm:$0xff]
      %v4551 = vld [vmem:[%s4549 + $0xf] sm:$0xff]
      %v4552 = vld [vmem:[%s4549 + $0x27] sm:$0xff]
      %v4553 = vld [vmem:[%s4549 + $0x2f] sm:$0xff]
      %v4554 = vld [vmem:[%s4549 + $0x47] sm:$0xff]
      %v4555 = vld [vmem:[%s4549 + $0x4f] sm:$0xff]
      %v4556 = vld [vmem:[%s4549 + $0x67] sm:$0xff]
      %v4557 = vld [vmem:[%s4549 + $0x6f] sm:$0xff]
      %v4558 = vld [vmem:[%s4549 + $0x87] sm:$0xff]
      %v4559 = vld [vmem:[%s4549 + $0x8f] sm:$0xff]
      %v4560 = vld [vmem:[%s4549 + $0xa7] sm:$0xff]
      %v4561 = vld [vmem:[%s4549 + $0xaf] sm:$0xff]
      %v4562 = vld [vmem:[%s4549 + $0xc7] sm:$0xff]
      %v4563 = vld [vmem:[%s4549 + $0xcf] sm:$0xff]
      %v4564 = vld [vmem:[%s4549 + $0xe7] sm:$0xff]
      %v4565 = vld [vmem:[%s4549 + $0xef] sm:$0xff]
      %v4566 = vld [vmem:[%s4549 + $0x107] sm:$0xff]
      %v4567 = vld [vmem:[%s4549 + $0x10f] sm:$0xff]
      %v4568 = vld [vmem:[%s4549 + $0x127] sm:$0xff]
      %v4569 = vld [vmem:[%s4549 + $0x12f] sm:$0xff]
      %v4570 = vpack.c.bf16 %v4551, %v4550
      %v4571 = vpack.c.bf16 %v4553, %v4552
      %v4572 = vpack.c.bf16 %v4555, %v4554
      %v4573 = vpack.c.bf16 %v4557, %v4556
      %v4574 = vpack.c.bf16 %v4559, %v4558
      %v4575 = vpack.c.bf16 %v4561, %v4560
      %v4576 = vpack.c.bf16 %v4563, %v4562
      %v4577 = vpack.c.bf16 %v4565, %v4564
      %v4578 = vpack.c.bf16 %v4567, %v4566
      %v4579 = vpack.c.bf16 %v4569, %v4568
      %s4580 = scalar_lea.vmem %s3, 56
      %v4581 = vld [vmem:[%s4580] sm:$0x7]
      %v4583 = vsel %vm1722, %v4570, 0
      %v4586 = vsel %vm1722, %v4571, 0
      %v4589 = vsel %vm1722, %v4572, 0
      %v4592 = vsel %vm1722, %v4573, 0
      %v4595 = vsel %vm1722, %v4574, 0
      %v4598 = vsel %vm1722, %v4575, 0
      %v4601 = vsel %vm1722, %v4576, 0
      %v4604 = vsel %vm1722, %v4577, 0
      %v4607 = vsel %vm1722, %v4578, 0
      %v4610 = vsel %vm1722, %v4579, 0
      %v4613 = vsel %vm1910, %v4581, 0
      %4615 = vmatprep.subr.bf16.mxu0 0
      %4616 = vmatpush1.bf16.msra.mxu0 %v4613
      %4617 = vmatprep.subr.bf16.mxu0 0
      %4618 = vmatpush1.bf16.msra.mxu0 0
      %4619 = vmatprep.subr.bf16.mxu0 0
      %4620 = vmatpush1.bf16.msra.mxu0 0
      %4621 = vmatprep.subr.bf16.mxu0 0
      %4622 = vmatpush1.bf16.msra.mxu0 0
      %4623 = vmatprep.subr.bf16.mxu0 0
      %4624 = vmatpush1.bf16.msra.mxu0 0
      %4625 = vmatprep.subr.bf16.mxu0 0
      %4626 = vmatpush1.bf16.msra.mxu0 0
      %4627 = vmatprep.subr.bf16.mxu0 0
      %4628 = vmatpush1.bf16.msra.mxu0 0
      %4629 = vmatprep.subr.bf16.mxu0 0
      %4630 = vmatpush1.bf16.msra.mxu0 0
      %4631 = vmatprep.subr.bf16.mxu0 0
      %4632 = vmatpush1.bf16.msra.mxu0 0
      %4633 = vmatprep.subr.bf16.mxu0 0
      %4634 = vmatpush1.bf16.msra.mxu0 0
      %4635 = vmatprep.subr.bf16.mxu0 0
      %4636 = vmatpush1.bf16.msra.mxu0 0
      %4637 = vmatprep.subr.bf16.mxu0 0
      %4638 = vmatpush1.bf16.msra.mxu0 0
      %4639 = vmatprep.subr.bf16.mxu0 0
      %4640 = vmatpush1.bf16.msra.mxu0 0
      %4641 = vmatprep.subr.bf16.mxu0 0
      %4642 = vmatpush1.bf16.msra.mxu0 0
      %4643 = vmatprep.subr.bf16.mxu0 0
      %4644 = vmatpush1.bf16.msra.mxu0 0
      %4645 = vmatprep.subr.bf16.mxu0 0
      %4646 = vmatpush1.bf16.msra.mxu0 0
      %4647 = vmatprep.mubr.bf16.mxu0 0
      %4648 = vmatmul.mubr.bf16.gmra.mrb[0].mxu0 %v4583
      %v4649 = vpop.f32.mrb[0].mxu0
      %v4650 = vadd.f32 0.0, %v4649
      %v4651 = vpop.f32.mrb[0].mxu0
      %v4652 = vpop.f32.mrb[0].mxu0
      %v4653 = vadd.f32 0.0, %v4652
      %v4654 = vpop.f32.mrb[0].mxu0
      %4655 = vmatprep.mubr.bf16.mxu0 0
      %4656 = vmatmul.mubr.bf16.gmra.mrb[0].mxu0 %v4586
      %v4657 = vpop.f32.mrb[0].mxu0
      %v4658 = vadd.f32 0.0, %v4657
      %v4659 = vpop.f32.mrb[0].mxu0
      %v4660 = vpop.f32.mrb[0].mxu0
      %v4661 = vadd.f32 0.0, %v4660
      %v4662 = vpop.f32.mrb[0].mxu0
      %4663 = vmatprep.mubr.bf16.mxu0 0
      %4664 = vmatmul.mubr.bf16.gmra.mrb[0].mxu0 %v4589
      %v4665 = vpop.f32.mrb[0].mxu0
      %v4666 = vadd.f32 0.0, %v4665
      %v4667 = vpop.f32.mrb[0].mxu0
      %v4668 = vpop.f32.mrb[0].mxu0
      %v4669 = vadd.f32 0.0, %v4668
      %v4670 = vpop.f32.mrb[0].mxu0
      %4671 = vmatprep.mubr.bf16.mxu0 0
      %4672 = vmatmul.mubr.bf16.gmra.mrb[0].mxu0 %v4592
      %v4673 = vpop.f32.mrb[0].mxu0
      %v4674 = vadd.f32 0.0, %v4673
      %v4675 = vpop.f32.mrb[0].mxu0
      %v4676 = vpop.f32.mrb[0].mxu0
      %v4677 = vadd.f32 0.0, %v4676
      %v4678 = vpop.f32.mrb[0].mxu0
      %4679 = vmatprep.mubr.bf16.mxu0 0
      %4680 = vmatmul.mubr.bf16.gmra.mrb[0].mxu0 %v4595
      %v4681 = vpop.f32.mrb[0].mxu0
      %v4682 = vadd.f32 0.0, %v4681
      %v4683 = vpop.f32.mrb[0].mxu0
      %v4684 = vpop.f32.mrb[0].mxu0
      %v4685 = vadd.f32 0.0, %v4684
      %v4686 = vpop.f32.mrb[0].mxu0
      %4687 = vmatprep.mubr.bf16.mxu0 0
      %4688 = vmatmul.mubr.bf16.gmra.mrb[0].mxu0 %v4598
      %v4689 = vpop.f32.mrb[0].mxu0
      %v4690 = vadd.f32 0.0, %v4689
      %v4691 = vpop.f32.mrb[0].mxu0
      %v4692 = vpop.f32.mrb[0].mxu0
      %v4693 = vadd.f32 0.0, %v4692
      %v4694 = vpop.f32.mrb[0].mxu0
      %4695 = vmatprep.mubr.bf16.mxu0 0
      %4696 = vmatmul.mubr.bf16.gmra.mrb[0].mxu0 %v4601
      %v4697 = vpop.f32.mrb[0].mxu0
      %v4698 = vadd.f32 0.0, %v4697
      %v4699 = vpop.f32.mrb[0].mxu0
      %v4700 = vpop.f32.mrb[0].mxu0
      %v4701 = vadd.f32 0.0, %v4700
      %v4702 = vpop.f32.mrb[0].mxu0
      %4703 = vmatprep.mubr.bf16.mxu0 0
      %4704 = vmatmul.mubr.bf16.gmra.mrb[0].mxu0 %v4604
      %v4705 = vpop.f32.mrb[0].mxu0
      %v4706 = vadd.f32 0.0, %v4705
      %v4707 = vpop.f32.mrb[0].mxu0
      %v4708 = vpop.f32.mrb[0].mxu0
      %v4709 = vadd.f32 0.0, %v4708
      %v4710 = vpop.f32.mrb[0].mxu0
      %4711 = vmatprep.mubr.bf16.mxu0 0
      %4712 = vmatmul.mubr.bf16.gmra.mrb[0].mxu0 %v4607
      %v4713 = vpop.f32.mrb[0].mxu0
      %v4714 = vadd.f32 0.0, %v4713
      %v4715 = vpop.f32.mrb[0].mxu0
      %v4716 = vpop.f32.mrb[0].mxu0
      %v4717 = vadd.f32 0.0, %v4716
      %v4718 = vpop.f32.mrb[0].mxu0
      %4719 = vmatprep.mubr.bf16.mxu0 0
      %4720 = vmatmul.mubr.bf16.gmra.mrb[0].mxu0 %v4610
      %v4721 = vpop.f32.mrb[0].mxu0
      %v4722 = vadd.f32 0.0, %v4721
      %v4723 = vpop.f32.mrb[0].mxu0
      %v4724 = vpop.f32.mrb[0].mxu0
      %v4725 = vadd.f32 0.0, %v4724
      %v4726 = vpop.f32.mrb[0].mxu0
      %4727 = vdwg.mxu0
      %v4728 = vadd.f32 %v4529, %v4650
      %v4729 = vadd.f32 %v4530, %v4653
      %v4730 = vadd.f32 %v4531, %v4658
      %v4731 = vadd.f32 %v4532, %v4661
      %v4732 = vadd.f32 %v4533, %v4666
      %v4733 = vadd.f32 %v4534, %v4669
      %v4734 = vadd.f32 %v4535, %v4674
      %v4735 = vadd.f32 %v4536, %v4677
      %v4736 = vadd.f32 %v4537, %v4682
      %v4737 = vadd.f32 %v4538, %v4685
      %v4738 = vadd.f32 %v4539, %v4690
      %v4739 = vadd.f32 %v4540, %v4693
      %v4740 = vadd.f32 %v4541, %v4698
      %v4741 = vadd.f32 %v4542, %v4701
      %v4742 = vadd.f32 %v4543, %v4706
      %v4743 = vadd.f32 %v4544, %v4709
      %v4744 = vadd.f32 %v4545, %v4714
      %v4745 = vadd.f32 %v4546, %v4717
      %v4746 = vadd.f32 %v4547, %v4722
      %v4747 = vadd.f32 %v4548, %v4725
      %v4748 = vld [vmem:[%s4549 + $0x8] sm:$0xff]
      %v4749 = vld [vmem:[%s4549 + $0x10] sm:$0xff]
      %v4750 = vld [vmem:[%s4549 + $0x28] sm:$0xff]
      %v4751 = vld [vmem:[%s4549 + $0x30] sm:$0xff]
      %v4752 = vld [vmem:[%s4549 + $0x48] sm:$0xff]
      %v4753 = vld [vmem:[%s4549 + $0x50] sm:$0xff]
      %v4754 = vld [vmem:[%s4549 + $0x68] sm:$0xff]
      %v4755 = vld [vmem:[%s4549 + $0x70] sm:$0xff]
      %v4756 = vld [vmem:[%s4549 + $0x88] sm:$0xff]
      %v4757 = vld [vmem:[%s4549 + $0x90] sm:$0xff]
      %v4758 = vld [vmem:[%s4549 + $0xa8] sm:$0xff]
      %v4759 = vld [vmem:[%s4549 + $0xb0] sm:$0xff]
      %v4760 = vld [vmem:[%s4549 + $0xc8] sm:$0xff]
      %v4761 = vld [vmem:[%s4549 + $0xd0] sm:$0xff]
      %v4762 = vld [vmem:[%s4549 + $0xe8] sm:$0xff]
      %v4763 = vld [vmem:[%s4549 + $0xf0] sm:$0xff]
      %v4764 = vld [vmem:[%s4549 + $0x108] sm:$0xff]
      %v4765 = vld [vmem:[%s4549 + $0x110] sm:$0xff]
      %v4766 = vld [vmem:[%s4549 + $0x128] sm:$0xff]
      %v4767 = vld [vmem:[%s4549 + $0x130] sm:$0xff]
      %v4768 = vpack.c.bf16 %v4749, %v4748
      %v4769 = vpack.c.bf16 %v4751, %v4750
      %v4770 = vpack.c.bf16 %v4753, %v4752
      %v4771 = vpack.c.bf16 %v4755, %v4754
      %v4772 = vpack.c.bf16 %v4757, %v4756
      %v4773 = vpack.c.bf16 %v4759, %v4758
      %v4774 = vpack.c.bf16 %v4761, %v4760
      %v4775 = vpack.c.bf16 %v4763, %v4762
      %v4776 = vpack.c.bf16 %v4765, %v4764
      %v4777 = vpack.c.bf16 %v4767, %v4766
      %s4778 = scalar_lea.vmem %s3, 60
      %v4779 = vld [vmem:[%s4778] sm:$0x7]
      %v4781 = vsel %vm1722, %v4768, 0
      %v4784 = vsel %vm1722, %v4769, 0
      %v4787 = vsel %vm1722, %v4770, 0
      %v4790 = vsel %vm1722, %v4771, 0
      %v4793 = vsel %vm1722, %v4772, 0
      %v4796 = vsel %vm1722, %v4773, 0
      %v4799 = vsel %vm1722, %v4774, 0
      %v4802 = vsel %vm1722, %v4775, 0
      %v4805 = vsel %vm1722, %v4776, 0
      %v4808 = vsel %vm1722, %v4777, 0
      %v4811 = vsel %vm1910, %v4779, 0
      %4813 = vmatprep.subr.bf16.mxu0 0
      %4814 = vmatpush1.bf16.msra.mxu0 %v4811
      %4815 = vmatprep.subr.bf16.mxu0 0
      %4816 = vmatpush1.bf16.msra.mxu0 0
      %4817 = vmatprep.subr.bf16.mxu0 0
      %4818 = vmatpush1.bf16.msra.mxu0 0
      %4819 = vmatprep.subr.bf16.mxu0 0
      %4820 = vmatpush1.bf16.msra.mxu0 0
      %4821 = vmatprep.subr.bf16.mxu0 0
      %4822 = vmatpush1.bf16.msra.mxu0 0
      %4823 = vmatprep.subr.bf16.mxu0 0
      %4824 = vmatpush1.bf16.msra.mxu0 0
      %4825 = vmatprep.subr.bf16.mxu0 0
      %4826 = vmatpush1.bf16.msra.mxu0 0
      %4827 = vmatprep.subr.bf16.mxu0 0
      %4828 = vmatpush1.bf16.msra.mxu0 0
      %4829 = vmatprep.subr.bf16.mxu0 0
      %4830 = vmatpush1.bf16.msra.mxu0 0
      %4831 = vmatprep.subr.bf16.mxu0 0
      %4832 = vmatpush1.bf16.msra.mxu0 0
      %4833 = vmatprep.subr.bf16.mxu0 0
      %4834 = vmatpush1.bf16.msra.mxu0 0
      %4835 = vmatprep.subr.bf16.mxu0 0
      %4836 = vmatpush1.bf16.msra.mxu0 0
      %4837 = vmatprep.subr.bf16.mxu0 0
      %4838 = vmatpush1.bf16.msra.mxu0 0
      %4839 = vmatprep.subr.bf16.mxu0 0
      %4840 = vmatpush1.bf16.msra.mxu0 0
      %4841 = vmatprep.subr.bf16.mxu0 0
      %4842 = vmatpush1.bf16.msra.mxu0 0
      %4843 = vmatprep.subr.bf16.mxu0 0
      %4844 = vmatpush1.bf16.msra.mxu0 0
      %4845 = vmatprep.mubr.bf16.mxu0 0
      %4846 = vmatmul.mubr.bf16.gmra.mrb[0].mxu0 %v4781
      %v4847 = vpop.f32.mrb[0].mxu0
      %v4848 = vadd.f32 0.0, %v4847
      %v4849 = vpop.f32.mrb[0].mxu0
      %v4850 = vpop.f32.mrb[0].mxu0
      %v4851 = vadd.f32 0.0, %v4850
      %v4852 = vpop.f32.mrb[0].mxu0
      %4853 = vmatprep.mubr.bf16.mxu0 0
      %4854 = vmatmul.mubr.bf16.gmra.mrb[0].mxu0 %v4784
      %v4855 = vpop.f32.mrb[0].mxu0
      %v4856 = vadd.f32 0.0, %v4855
      %v4857 = vpop.f32.mrb[0].mxu0
      %v4858 = vpop.f32.mrb[0].mxu0
      %v4859 = vadd.f32 0.0, %v4858
      %v4860 = vpop.f32.mrb[0].mxu0
      %4861 = vmatprep.mubr.bf16.mxu0 0
      %4862 = vmatmul.mubr.bf16.gmra.mrb[0].mxu0 %v4787
      %v4863 = vpop.f32.mrb[0].mxu0
      %v4864 = vadd.f32 0.0, %v4863
      %v4865 = vpop.f32.mrb[0].mxu0
      %v4866 = vpop.f32.mrb[0].mxu0
      %v4867 = vadd.f32 0.0, %v4866
      %v4868 = vpop.f32.mrb[0].mxu0
      %4869 = vmatprep.mubr.bf16.mxu0 0
      %4870 = vmatmul.mubr.bf16.gmra.mrb[0].mxu0 %v4790
      %v4871 = vpop.f32.mrb[0].mxu0
      %v4872 = vadd.f32 0.0, %v4871
      %v4873 = vpop.f32.mrb[0].mxu0
      %v4874 = vpop.f32.mrb[0].mxu0
      %v4875 = vadd.f32 0.0, %v4874
      %v4876 = vpop.f32.mrb[0].mxu0
      %4877 = vmatprep.mubr.bf16.mxu0 0
      %4878 = vmatmul.mubr.bf16.gmra.mrb[0].mxu0 %v4793
      %v4879 = vpop.f32.mrb[0].mxu0
      %v4880 = vadd.f32 0.0, %v4879
      %v4881 = vpop.f32.mrb[0].mxu0
      %v4882 = vpop.f32.mrb[0].mxu0
      %v4883 = vadd.f32 0.0, %v4882
      %v4884 = vpop.f32.mrb[0].mxu0
      %4885 = vmatprep.mubr.bf16.mxu0 0
      %4886 = vmatmul.mubr.bf16.gmra.mrb[0].mxu0 %v4796
      %v4887 = vpop.f32.mrb[0].mxu0
      %v4888 = vadd.f32 0.0, %v4887
      %v4889 = vpop.f32.mrb[0].mxu0
      %v4890 = vpop.f32.mrb[0].mxu0
      %v4891 = vadd.f32 0.0, %v4890
      %v4892 = vpop.f32.mrb[0].mxu0
      %4893 = vmatprep.mubr.bf16.mxu0 0
      %4894 = vmatmul.mubr.bf16.gmra.mrb[0].mxu0 %v4799
      %v4895 = vpop.f32.mrb[0].mxu0
      %v4896 = vadd.f32 0.0, %v4895
      %v4897 = vpop.f32.mrb[0].mxu0
      %v4898 = vpop.f32.mrb[0].mxu0
      %v4899 = vadd.f32 0.0, %v4898
      %v4900 = vpop.f32.mrb[0].mxu0
      %4901 = vmatprep.mubr.bf16.mxu0 0
      %4902 = vmatmul.mubr.bf16.gmra.mrb[0].mxu0 %v4802
      %v4903 = vpop.f32.mrb[0].mxu0
      %v4904 = vadd.f32 0.0, %v4903
      %v4905 = vpop.f32.mrb[0].mxu0
      %v4906 = vpop.f32.mrb[0].mxu0
      %v4907 = vadd.f32 0.0, %v4906
      %v4908 = vpop.f32.mrb[0].mxu0
      %4909 = vmatprep.mubr.bf16.mxu0 0
      %4910 = vmatmul.mubr.bf16.gmra.mrb[0].mxu0 %v4805
      %v4911 = vpop.f32.mrb[0].mxu0
      %v4912 = vadd.f32 0.0, %v4911
      %v4913 = vpop.f32.mrb[0].mxu0
      %v4914 = vpop.f32.mrb[0].mxu0
      %v4915 = vadd.f32 0.0, %v4914
      %v4916 = vpop.f32.mrb[0].mxu0
      %4917 = vmatprep.mubr.bf16.mxu0 0
      %4918 = vmatmul.mubr.bf16.gmra.mrb[0].mxu0 %v4808
      %v4919 = vpop.f32.mrb[0].mxu0
      %v4920 = vadd.f32 0.0, %v4919
      %v4921 = vpop.f32.mrb[0].mxu0
      %v4922 = vpop.f32.mrb[0].mxu0
      %v4923 = vadd.f32 0.0, %v4922
      %v4924 = vpop.f32.mrb[0].mxu0
      %4925 = vdwg.mxu0
      %v4926 = vadd.f32 %v4728, %v4848
      %v4927 = vadd.f32 %v4729, %v4851
      %v4928 = vadd.f32 %v4730, %v4856
      %v4929 = vadd.f32 %v4731, %v4859
      %v4930 = vadd.f32 %v4732, %v4864
      %v4931 = vadd.f32 %v4733, %v4867
      %v4932 = vadd.f32 %v4734, %v4872
      %v4933 = vadd.f32 %v4735, %v4875
      %v4934 = vadd.f32 %v4736, %v4880
      %v4935 = vadd.f32 %v4737, %v4883
      %v4936 = vadd.f32 %v4738, %v4888
      %v4937 = vadd.f32 %v4739, %v4891
      %v4938 = vadd.f32 %v4740, %v4896
      %v4939 = vadd.f32 %v4741, %v4899
      %v4940 = vadd.f32 %v4742, %v4904
      %v4941 = vadd.f32 %v4743, %v4907
      %v4942 = vadd.f32 %v4744, %v4912
      %v4943 = vadd.f32 %v4745, %v4915
      %v4944 = vadd.f32 %v4746, %v4920
      %v4945 = vadd.f32 %v4747, %v4923
      %v4946 = vld [vmem:[%s4549 + $0x9] sm:$0xff]
      %v4947 = vld [vmem:[%s4549 + $0x11] sm:$0xff]
      %v4948 = vld [vmem:[%s4549 + $0x29] sm:$0xff]
      %v4949 = vld [vmem:[%s4549 + $0x31] sm:$0xff]
      %v4950 = vld [vmem:[%s4549 + $0x49] sm:$0xff]
      %v4951 = vld [vmem:[%s4549 + $0x51] sm:$0xff]
      %v4952 = vld [vmem:[%s4549 + $0x69] sm:$0xff]
      %v4953 = vld [vmem:[%s4549 + $0x71] sm:$0xff]
      %v4954 = vld [vmem:[%s4549 + $0x89] sm:$0xff]
      %v4955 = vld [vmem:[%s4549 + $0x91] sm:$0xff]
      %v4956 = vld [vmem:[%s4549 + $0xa9] sm:$0xff]
      %v4957 = vld [vmem:[%s4549 + $0xb1] sm:$0xff]
      %v4958 = vld [vmem:[%s4549 + $0xc9] sm:$0xff]
      %v4959 = vld [vmem:[%s4549 + $0xd1] sm:$0xff]
      %v4960 = vld [vmem:[%s4549 + $0xe9] sm:$0xff]
      %v4961 = vld [vmem:[%s4549 + $0xf1] sm:$0xff]
      %v4962 = vld [vmem:[%s4549 + $0x109] sm:$0xff]
      %v4963 = vld [vmem:[%s4549 + $0x111] sm:$0xff]
      %v4964 = vld [vmem:[%s4549 + $0x129] sm:$0xff]
      %v4965 = vld [vmem:[%s4549 + $0x131] sm:$0xff]
      %v4966 = vpack.c.bf16 %v4947, %v4946
      %v4967 = vpack.c.bf16 %v4949, %v4948
      %v4968 = vpack.c.bf16 %v4951, %v4950
      %v4969 = vpack.c.bf16 %v4953, %v4952
      %v4970 = vpack.c.bf16 %v4955, %v4954
      %v4971 = vpack.c.bf16 %v4957, %v4956
      %v4972 = vpack.c.bf16 %v4959, %v4958
      %v4973 = vpack.c.bf16 %v4961, %v4960
      %v4974 = vpack.c.bf16 %v4963, %v4962
      %v4975 = vpack.c.bf16 %v4965, %v4964
      %s4976 = scalar_lea.vmem %s3, 64
      %v4977 = vld [vmem:[%s4976] sm:$0x7]
      %v4979 = vsel %vm1722, %v4966, 0
      %v4982 = vsel %vm1722, %v4967, 0
      %v4985 = vsel %vm1722, %v4968, 0
      %v4988 = vsel %vm1722, %v4969, 0
      %v4991 = vsel %vm1722, %v4970, 0
      %v4994 = vsel %vm1722, %v4971, 0
      %v4997 = vsel %vm1722, %v4972, 0
      %v5000 = vsel %vm1722, %v4973, 0
      %v5003 = vsel %vm1722, %v4974, 0
      %v5006 = vsel %vm1722, %v4975, 0
      %v5009 = vsel %vm1910, %v4977, 0
      %5011 = vmatprep.subr.bf16.mxu0 0
      %5012 = vmatpush1.bf16.msra.mxu0 %v5009
      %5013 = vmatprep.subr.bf16.mxu0 0
      %5014 = vmatpush1.bf16.msra.mxu0 0
      %5015 = vmatprep.subr.bf16.mxu0 0
      %5016 = vmatpush1.bf16.msra.mxu0 0
      %5017 = vmatprep.subr.bf16.mxu0 0
      %5018 = vmatpush1.bf16.msra.mxu0 0
      %5019 = vmatprep.subr.bf16.mxu0 0
      %5020 = vmatpush1.bf16.msra.mxu0 0
      %5021 = vmatprep.subr.bf16.mxu0 0
      %5022 = vmatpush1.bf16.msra.mxu0 0
      %5023 = vmatprep.subr.bf16.mxu0 0
      %5024 = vmatpush1.bf16.msra.mxu0 0
      %5025 = vmatprep.subr.bf16.mxu0 0
      %5026 = vmatpush1.bf16.msra.mxu0 0
      %5027 = vmatprep.subr.bf16.mxu0 0
      %5028 = vmatpush1.bf16.msra.mxu0 0
      %5029 = vmatprep.subr.bf16.mxu0 0
      %5030 = vmatpush1.bf16.msra.mxu0 0
      %5031 = vmatprep.subr.bf16.mxu0 0
      %5032 = vmatpush1.bf16.msra.mxu0 0
      %5033 = vmatprep.subr.bf16.mxu0 0
      %5034 = vmatpush1.bf16.msra.mxu0 0
      %5035 = vmatprep.subr.bf16.mxu0 0
      %5036 = vmatpush1.bf16.msra.mxu0 0
      %5037 = vmatprep.subr.bf16.mxu0 0
      %5038 = vmatpush1.bf16.msra.mxu0 0
      %5039 = vmatprep.subr.bf16.mxu0 0
      %5040 = vmatpush1.bf16.msra.mxu0 0
      %5041 = vmatprep.subr.bf16.mxu0 0
      %5042 = vmatpush1.bf16.msra.mxu0 0
      %5043 = vmatprep.mubr.bf16.mxu0 0
      %5044 = vmatmul.mubr.bf16.gmra.mrb[0].mxu0 %v4979
      %v5045 = vpop.f32.mrb[0].mxu0
      %v5046 = vadd.f32 0.0, %v5045
      %v5047 = vpop.f32.mrb[0].mxu0
      %v5048 = vpop.f32.mrb[0].mxu0
      %v5049 = vadd.f32 0.0, %v5048
      %v5050 = vpop.f32.mrb[0].mxu0
      %5051 = vmatprep.mubr.bf16.mxu0 0
      %5052 = vmatmul.mubr.bf16.gmra.mrb[0].mxu0 %v4982
      %v5053 = vpop.f32.mrb[0].mxu0
      %v5054 = vadd.f32 0.0, %v5053
      %v5055 = vpop.f32.mrb[0].mxu0
      %v5056 = vpop.f32.mrb[0].mxu0
      %v5057 = vadd.f32 0.0, %v5056
      %v5058 = vpop.f32.mrb[0].mxu0
      %5059 = vmatprep.mubr.bf16.mxu0 0
      %5060 = vmatmul.mubr.bf16.gmra.mrb[0].mxu0 %v4985
      %v5061 = vpop.f32.mrb[0].mxu0
      %v5062 = vadd.f32 0.0, %v5061
      %v5063 = vpop.f32.mrb[0].mxu0
      %v5064 = vpop.f32.mrb[0].mxu0
      %v5065 = vadd.f32 0.0, %v5064
      %v5066 = vpop.f32.mrb[0].mxu0
      %5067 = vmatprep.mubr.bf16.mxu0 0
      %5068 = vmatmul.mubr.bf16.gmra.mrb[0].mxu0 %v4988
      %v5069 = vpop.f32.mrb[0].mxu0
      %v5070 = vadd.f32 0.0, %v5069
      %v5071 = vpop.f32.mrb[0].mxu0
      %v5072 = vpop.f32.mrb[0].mxu0
      %v5073 = vadd.f32 0.0, %v5072
      %v5074 = vpop.f32.mrb[0].mxu0
      %5075 = vmatprep.mubr.bf16.mxu0 0
      %5076 = vmatmul.mubr.bf16.gmra.mrb[0].mxu0 %v4991
      %v5077 = vpop.f32.mrb[0].mxu0
      %v5078 = vadd.f32 0.0, %v5077
      %v5079 = vpop.f32.mrb[0].mxu0
      %v5080 = vpop.f32.mrb[0].mxu0
      %v5081 = vadd.f32 0.0, %v5080
      %v5082 = vpop.f32.mrb[0].mxu0
      %5083 = vmatprep.mubr.bf16.mxu0 0
      %5084 = vmatmul.mubr.bf16.gmra.mrb[0].mxu0 %v4994
      %v5085 = vpop.f32.mrb[0].mxu0
      %v5086 = vadd.f32 0.0, %v5085
      %v5087 = vpop.f32.mrb[0].mxu0
      %v5088 = vpop.f32.mrb[0].mxu0
      %v5089 = vadd.f32 0.0, %v5088
      %v5090 = vpop.f32.mrb[0].mxu0
      %5091 = vmatprep.mubr.bf16.mxu0 0
      %5092 = vmatmul.mubr.bf16.gmra.mrb[0].mxu0 %v4997
      %v5093 = vpop.f32.mrb[0].mxu0
      %v5094 = vadd.f32 0.0, %v5093
      %v5095 = vpop.f32.mrb[0].mxu0
      %v5096 = vpop.f32.mrb[0].mxu0
      %v5097 = vadd.f32 0.0, %v5096
      %v5098 = vpop.f32.mrb[0].mxu0
      %5099 = vmatprep.mubr.bf16.mxu0 0
      %5100 = vmatmul.mubr.bf16.gmra.mrb[0].mxu0 %v5000
      %v5101 = vpop.f32.mrb[0].mxu0
      %v5102 = vadd.f32 0.0, %v5101
      %v5103 = vpop.f32.mrb[0].mxu0
      %v5104 = vpop.f32.mrb[0].mxu0
      %v5105 = vadd.f32 0.0, %v5104
      %v5106 = vpop.f32.mrb[0].mxu0
      %5107 = vmatprep.mubr.bf16.mxu0 0
      %5108 = vmatmul.mubr.bf16.gmra.mrb[0].mxu0 %v5003
      %v5109 = vpop.f32.mrb[0].mxu0
      %v5110 = vadd.f32 0.0, %v5109
      %v5111 = vpop.f32.mrb[0].mxu0
      %v5112 = vpop.f32.mrb[0].mxu0
      %v5113 = vadd.f32 0.0, %v5112
      %v5114 = vpop.f32.mrb[0].mxu0
      %5115 = vmatprep.mubr.bf16.mxu0 0
      %5116 = vmatmul.mubr.bf16.gmra.mrb[0].mxu0 %v5006
      %v5117 = vpop.f32.mrb[0].mxu0
      %v5118 = vadd.f32 0.0, %v5117
      %v5119 = vpop.f32.mrb[0].mxu0
      %v5120 = vpop.f32.mrb[0].mxu0
      %v5121 = vadd.f32 0.0, %v5120
      %v5122 = vpop.f32.mrb[0].mxu0
      %5123 = vdwg.mxu0
      %v5124 = vadd.f32 %v4926, %v5046
      %v5125 = vadd.f32 %v4927, %v5049
      %v5126 = vadd.f32 %v4928, %v5054
      %v5127 = vadd.f32 %v4929, %v5057
      %v5128 = vadd.f32 %v4930, %v5062
      %v5129 = vadd.f32 %v4931, %v5065
      %v5130 = vadd.f32 %v4932, %v5070
      %v5131 = vadd.f32 %v4933, %v5073
      %v5132 = vadd.f32 %v4934, %v5078
      %v5133 = vadd.f32 %v4935, %v5081
      %v5134 = vadd.f32 %v4936, %v5086
      %v5135 = vadd.f32 %v4937, %v5089
      %v5136 = vadd.f32 %v4938, %v5094
      %v5137 = vadd.f32 %v4939, %v5097
      %v5138 = vadd.f32 %v4940, %v5102
      %v5139 = vadd.f32 %v4941, %v5105
      %v5140 = vadd.f32 %v4942, %v5110
      %v5141 = vadd.f32 %v4943, %v5113
      %v5142 = vadd.f32 %v4944, %v5118
      %v5143 = vadd.f32 %v4945, %v5121
      %v5144 = vld [vmem:[%s4549 + $0xa] sm:$0xff]
      %v5145 = vld [vmem:[%s4549 + $0x12] sm:$0xff]
      %v5146 = vld [vmem:[%s4549 + $0x2a] sm:$0xff]
      %v5147 = vld [vmem:[%s4549 + $0x32] sm:$0xff]
      %v5148 = vld [vmem:[%s4549 + $0x4a] sm:$0xff]
      %v5149 = vld [vmem:[%s4549 + $0x52] sm:$0xff]
      %v5150 = vld [vmem:[%s4549 + $0x6a] sm:$0xff]
      %v5151 = vld [vmem:[%s4549 + $0x72] sm:$0xff]
      %v5152 = vld [vmem:[%s4549 + $0x8a] sm:$0xff]
      %v5153 = vld [vmem:[%s4549 + $0x92] sm:$0xff]
      %v5154 = vld [vmem:[%s4549 + $0xaa] sm:$0xff]
      %v5155 = vld [vmem:[%s4549 + $0xb2] sm:$0xff]
      %v5156 = vld [vmem:[%s4549 + $0xca] sm:$0xff]
      %v5157 = vld [vmem:[%s4549 + $0xd2] sm:$0xff]
      %v5158 = vld [vmem:[%s4549 + $0xea] sm:$0xff]
      %v5159 = vld [vmem:[%s4549 + $0xf2] sm:$0xff]
      %v5160 = vld [vmem:[%s4549 + $0x10a] sm:$0xff]
      %v5161 = vld [vmem:[%s4549 + $0x112] sm:$0xff]
      %v5162 = vld [vmem:[%s4549 + $0x12a] sm:$0xff]
      %v5163 = vld [vmem:[%s4549 + $0x132] sm:$0xff]
      %v5164 = vpack.c.bf16 %v5145, %v5144
      %v5165 = vpack.c.bf16 %v5147, %v5146
      %v5166 = vpack.c.bf16 %v5149, %v5148
      %v5167 = vpack.c.bf16 %v5151, %v5150
      %v5168 = vpack.c.bf16 %v5153, %v5152
      %v5169 = vpack.c.bf16 %v5155, %v5154
      %v5170 = vpack.c.bf16 %v5157, %v5156
      %v5171 = vpack.c.bf16 %v5159, %v5158
      %v5172 = vpack.c.bf16 %v5161, %v5160
      %v5173 = vpack.c.bf16 %v5163, %v5162
      %s5174 = scalar_lea.vmem %s3, 68
      %v5175 = vld [vmem:[%s5174] sm:$0x7]
      %v5177 = vsel %vm1722, %v5164, 0
      %v5180 = vsel %vm1722, %v5165, 0
      %v5183 = vsel %vm1722, %v5166, 0
      %v5186 = vsel %vm1722, %v5167, 0
      %v5189 = vsel %vm1722, %v5168, 0
      %v5192 = vsel %vm1722, %v5169, 0
      %v5195 = vsel %vm1722, %v5170, 0
      %v5198 = vsel %vm1722, %v5171, 0
      %v5201 = vsel %vm1722, %v5172, 0
      %v5204 = vsel %vm1722, %v5173, 0
      %v5207 = vsel %vm1910, %v5175, 0
      %5209 = vmatprep.subr.bf16.mxu0 0
      %5210 = vmatpush1.bf16.msra.mxu0 %v5207
      %5211 = vmatprep.subr.bf16.mxu0 0
      %5212 = vmatpush1.bf16.msra.mxu0 0
      %5213 = vmatprep.subr.bf16.mxu0 0
      %5214 = vmatpush1.bf16.msra.mxu0 0
      %5215 = vmatprep.subr.bf16.mxu0 0
      %5216 = vmatpush1.bf16.msra.mxu0 0
      %5217 = vmatprep.subr.bf16.mxu0 0
      %5218 = vmatpush1.bf16.msra.mxu0 0
      %5219 = vmatprep.subr.bf16.mxu0 0
      %5220 = vmatpush1.bf16.msra.mxu0 0
      %5221 = vmatprep.subr.bf16.mxu0 0
      %5222 = vmatpush1.bf16.msra.mxu0 0
      %5223 = vmatprep.subr.bf16.mxu0 0
      %5224 = vmatpush1.bf16.msra.mxu0 0
      %5225 = vmatprep.subr.bf16.mxu0 0
      %5226 = vmatpush1.bf16.msra.mxu0 0
      %5227 = vmatprep.subr.bf16.mxu0 0
      %5228 = vmatpush1.bf16.msra.mxu0 0
      %5229 = vmatprep.subr.bf16.mxu0 0
      %5230 = vmatpush1.bf16.msra.mxu0 0
      %5231 = vmatprep.subr.bf16.mxu0 0
      %5232 = vmatpush1.bf16.msra.mxu0 0
      %5233 = vmatprep.subr.bf16.mxu0 0
      %5234 = vmatpush1.bf16.msra.mxu0 0
      %5235 = vmatprep.subr.bf16.mxu0 0
      %5236 = vmatpush1.bf16.msra.mxu0 0
      %5237 = vmatprep.subr.bf16.mxu0 0
      %5238 = vmatpush1.bf16.msra.mxu0 0
      %5239 = vmatprep.subr.bf16.mxu0 0
      %5240 = vmatpush1.bf16.msra.mxu0 0
      %5241 = vmatprep.mubr.bf16.mxu0 0
      %5242 = vmatmul.mubr.bf16.gmra.mrb[0].mxu0 %v5177
      %v5243 = vpop.f32.mrb[0].mxu0
      %v5244 = vadd.f32 0.0, %v5243
      %v5245 = vpop.f32.mrb[0].mxu0
      %v5246 = vpop.f32.mrb[0].mxu0
      %v5247 = vadd.f32 0.0, %v5246
      %v5248 = vpop.f32.mrb[0].mxu0
      %5249 = vmatprep.mubr.bf16.mxu0 0
      %5250 = vmatmul.mubr.bf16.gmra.mrb[0].mxu0 %v5180
      %v5251 = vpop.f32.mrb[0].mxu0
      %v5252 = vadd.f32 0.0, %v5251
      %v5253 = vpop.f32.mrb[0].mxu0
      %v5254 = vpop.f32.mrb[0].mxu0
      %v5255 = vadd.f32 0.0, %v5254
      %v5256 = vpop.f32.mrb[0].mxu0
      %5257 = vmatprep.mubr.bf16.mxu0 0
      %5258 = vmatmul.mubr.bf16.gmra.mrb[0].mxu0 %v5183
      %v5259 = vpop.f32.mrb[0].mxu0
      %v5260 = vadd.f32 0.0, %v5259
      %v5261 = vpop.f32.mrb[0].mxu0
      %v5262 = vpop.f32.mrb[0].mxu0
      %v5263 = vadd.f32 0.0, %v5262
      %v5264 = vpop.f32.mrb[0].mxu0
      %5265 = vmatprep.mubr.bf16.mxu0 0
      %5266 = vmatmul.mubr.bf16.gmra.mrb[0].mxu0 %v5186
      %v5267 = vpop.f32.mrb[0].mxu0
      %v5268 = vadd.f32 0.0, %v5267
      %v5269 = vpop.f32.mrb[0].mxu0
      %v5270 = vpop.f32.mrb[0].mxu0
      %v5271 = vadd.f32 0.0, %v5270
      %v5272 = vpop.f32.mrb[0].mxu0
      %5273 = vmatprep.mubr.bf16.mxu0 0
      %5274 = vmatmul.mubr.bf16.gmra.mrb[0].mxu0 %v5189
      %v5275 = vpop.f32.mrb[0].mxu0
      %v5276 = vadd.f32 0.0, %v5275
      %v5277 = vpop.f32.mrb[0].mxu0
      %v5278 = vpop.f32.mrb[0].mxu0
      %v5279 = vadd.f32 0.0, %v5278
      %v5280 = vpop.f32.mrb[0].mxu0
      %5281 = vmatprep.mubr.bf16.mxu0 0
      %5282 = vmatmul.mubr.bf16.gmra.mrb[0].mxu0 %v5192
      %v5283 = vpop.f32.mrb[0].mxu0
      %v5284 = vadd.f32 0.0, %v5283
      %v5285 = vpop.f32.mrb[0].mxu0
      %v5286 = vpop.f32.mrb[0].mxu0
      %v5287 = vadd.f32 0.0, %v5286
      %v5288 = vpop.f32.mrb[0].mxu0
      %5289 = vmatprep.mubr.bf16.mxu0 0
      %5290 = vmatmul.mubr.bf16.gmra.mrb[0].mxu0 %v5195
      %v5291 = vpop.f32.mrb[0].mxu0
      %v5292 = vadd.f32 0.0, %v5291
      %v5293 = vpop.f32.mrb[0].mxu0
      %v5294 = vpop.f32.mrb[0].mxu0
      %v5295 = vadd.f32 0.0, %v5294
      %v5296 = vpop.f32.mrb[0].mxu0
      %5297 = vmatprep.mubr.bf16.mxu0 0
      %5298 = vmatmul.mubr.bf16.gmra.mrb[0].mxu0 %v5198
      %v5299 = vpop.f32.mrb[0].mxu0
      %v5300 = vadd.f32 0.0, %v5299
      %v5301 = vpop.f32.mrb[0].mxu0
      %v5302 = vpop.f32.mrb[0].mxu0
      %v5303 = vadd.f32 0.0, %v5302
      %v5304 = vpop.f32.mrb[0].mxu0
      %5305 = vmatprep.mubr.bf16.mxu0 0
      %5306 = vmatmul.mubr.bf16.gmra.mrb[0].mxu0 %v5201
      %v5307 = vpop.f32.mrb[0].mxu0
      %v5308 = vadd.f32 0.0, %v5307
      %v5309 = vpop.f32.mrb[0].mxu0
      %v5310 = vpop.f32.mrb[0].mxu0
      %v5311 = vadd.f32 0.0, %v5310
      %v5312 = vpop.f32.mrb[0].mxu0
      %5313 = vmatprep.mubr.bf16.mxu0 0
      %5314 = vmatmul.mubr.bf16.gmra.mrb[0].mxu0 %v5204
      %v5315 = vpop.f32.mrb[0].mxu0
      %v5316 = vadd.f32 0.0, %v5315
      %v5317 = vpop.f32.mrb[0].mxu0
      %v5318 = vpop.f32.mrb[0].mxu0
      %v5319 = vadd.f32 0.0, %v5318
      %v5320 = vpop.f32.mrb[0].mxu0
      %5321 = vdwg.mxu0
      %v5322 = vadd.f32 %v5124, %v5244
      %v5323 = vadd.f32 %v5125, %v5247
      %v5324 = vadd.f32 %v5126, %v5252
      %v5325 = vadd.f32 %v5127, %v5255
      %v5326 = vadd.f32 %v5128, %v5260
      %v5327 = vadd.f32 %v5129, %v5263
      %v5328 = vadd.f32 %v5130, %v5268
      %v5329 = vadd.f32 %v5131, %v5271
      %v5330 = vadd.f32 %v5132, %v5276
      %v5331 = vadd.f32 %v5133, %v5279
      %v5332 = vadd.f32 %v5134, %v5284
      %v5333 = vadd.f32 %v5135, %v5287
      %v5334 = vadd.f32 %v5136, %v5292
      %v5335 = vadd.f32 %v5137, %v5295
      %v5336 = vadd.f32 %v5138, %v5300
      %v5337 = vadd.f32 %v5139, %v5303
      %v5338 = vadd.f32 %v5140, %v5308
      %v5339 = vadd.f32 %v5141, %v5311
      %v5340 = vadd.f32 %v5142, %v5316
      %v5341 = vadd.f32 %v5143, %v5319
      %v5342 = vld [vmem:[%s4549 + $0xb] sm:$0xff]
      %v5343 = vld [vmem:[%s4549 + $0x13] sm:$0xff]
      %v5344 = vld [vmem:[%s4549 + $0x2b] sm:$0xff]
      %v5345 = vld [vmem:[%s4549 + $0x33] sm:$0xff]
      %v5346 = vld [vmem:[%s4549 + $0x4b] sm:$0xff]
      %v5347 = vld [vmem:[%s4549 + $0x53] sm:$0xff]
      %v5348 = vld [vmem:[%s4549 + $0x6b] sm:$0xff]
      %v5349 = vld [vmem:[%s4549 + $0x73] sm:$0xff]
      %v5350 = vld [vmem:[%s4549 + $0x8b] sm:$0xff]
      %v5351 = vld [vmem:[%s4549 + $0x93] sm:$0xff]
      %v5352 = vld [vmem:[%s4549 + $0xab] sm:$0xff]
      %v5353 = vld [vmem:[%s4549 + $0xb3] sm:$0xff]
      %v5354 = vld [vmem:[%s4549 + $0xcb] sm:$0xff]
      %v5355 = vld [vmem:[%s4549 + $0xd3] sm:$0xff]
      %v5356 = vld [vmem:[%s4549 + $0xeb] sm:$0xff]
      %v5357 = vld [vmem:[%s4549 + $0xf3] sm:$0xff]
      %v5358 = vld [vmem:[%s4549 + $0x10b] sm:$0xff]
      %v5359 = vld [vmem:[%s4549 + $0x113] sm:$0xff]
      %v5360 = vld [vmem:[%s4549 + $0x12b] sm:$0xff]
      %v5361 = vld [vmem:[%s4549 + $0x133] sm:$0xff]
      %v5362 = vpack.c.bf16 %v5343, %v5342
      %v5363 = vpack.c.bf16 %v5345, %v5344
      %v5364 = vpack.c.bf16 %v5347, %v5346
      %v5365 = vpack.c.bf16 %v5349, %v5348
      %v5366 = vpack.c.bf16 %v5351, %v5350
      %v5367 = vpack.c.bf16 %v5353, %v5352
      %v5368 = vpack.c.bf16 %v5355, %v5354
      %v5369 = vpack.c.bf16 %v5357, %v5356
      %v5370 = vpack.c.bf16 %v5359, %v5358
      %v5371 = vpack.c.bf16 %v5361, %v5360
      %s5372 = scalar_lea.vmem %s3, 72
      %v5373 = vld [vmem:[%s5372] sm:$0x7]
      %v5375 = vsel %vm1722, %v5362, 0
      %v5378 = vsel %vm1722, %v5363, 0
      %v5381 = vsel %vm1722, %v5364, 0
      %v5384 = vsel %vm1722, %v5365, 0
      %v5387 = vsel %vm1722, %v5366, 0
      %v5390 = vsel %vm1722, %v5367, 0
      %v5393 = vsel %vm1722, %v5368, 0
      %v5396 = vsel %vm1722, %v5369, 0
      %v5399 = vsel %vm1722, %v5370, 0
      %v5402 = vsel %vm1722, %v5371, 0
      %v5405 = vsel %vm1910, %v5373, 0
      %5407 = vmatprep.subr.bf16.mxu0 0
      %5408 = vmatpush1.bf16.msra.mxu0 %v5405
      %5409 = vmatprep.subr.bf16.mxu0 0
      %5410 = vmatpush1.bf16.msra.mxu0 0
      %5411 = vmatprep.subr.bf16.mxu0 0
      %5412 = vmatpush1.bf16.msra.mxu0 0
      %5413 = vmatprep.subr.bf16.mxu0 0
      %5414 = vmatpush1.bf16.msra.mxu0 0
      %5415 = vmatprep.subr.bf16.mxu0 0
      %5416 = vmatpush1.bf16.msra.mxu0 0
      %5417 = vmatprep.subr.bf16.mxu0 0
      %5418 = vmatpush1.bf16.msra.mxu0 0
      %5419 = vmatprep.subr.bf16.mxu0 0
      %5420 = vmatpush1.bf16.msra.mxu0 0
      %5421 = vmatprep.subr.bf16.mxu0 0
      %5422 = vmatpush1.bf16.msra.mxu0 0
      %5423 = vmatprep.subr.bf16.mxu0 0
      %5424 = vmatpush1.bf16.msra.mxu0 0
      %5425 = vmatprep.subr.bf16.mxu0 0
      %5426 = vmatpush1.bf16.msra.mxu0 0
      %5427 = vmatprep.subr.bf16.mxu0 0
      %5428 = vmatpush1.bf16.msra.mxu0 0
      %5429 = vmatprep.subr.bf16.mxu0 0
      %5430 = vmatpush1.bf16.msra.mxu0 0
      %5431 = vmatprep.subr.bf16.mxu0 0
      %5432 = vmatpush1.bf16.msra.mxu0 0
      %5433 = vmatprep.subr.bf16.mxu0 0
      %5434 = vmatpush1.bf16.msra.mxu0 0
      %5435 = vmatprep.subr.bf16.mxu0 0
      %5436 = vmatpush1.bf16.msra.mxu0 0
      %5437 = vmatprep.subr.bf16.mxu0 0
      %5438 = vmatpush1.bf16.msra.mxu0 0
      %5439 = vmatprep.mubr.bf16.mxu0 0
      %5440 = vmatmul.mubr.bf16.gmra.mrb[0].mxu0 %v5375
      %v5441 = vpop.f32.mrb[0].mxu0
      %v5442 = vadd.f32 0.0, %v5441
      %v5443 = vpop.f32.mrb[0].mxu0
      %v5444 = vpop.f32.mrb[0].mxu0
      %v5445 = vadd.f32 0.0, %v5444
      %v5446 = vpop.f32.mrb[0].mxu0
      %5447 = vmatprep.mubr.bf16.mxu0 0
      %5448 = vmatmul.mubr.bf16.gmra.mrb[0].mxu0 %v5378
      %v5449 = vpop.f32.mrb[0].mxu0
      %v5450 = vadd.f32 0.0, %v5449
      %v5451 = vpop.f32.mrb[0].mxu0
      %v5452 = vpop.f32.mrb[0].mxu0
      %v5453 = vadd.f32 0.0, %v5452
      %v5454 = vpop.f32.mrb[0].mxu0
      %5455 = vmatprep.mubr.bf16.mxu0 0
      %5456 = vmatmul.mubr.bf16.gmra.mrb[0].mxu0 %v5381
      %v5457 = vpop.f32.mrb[0].mxu0
      %v5458 = vadd.f32 0.0, %v5457
      %v5459 = vpop.f32.mrb[0].mxu0
      %v5460 = vpop.f32.mrb[0].mxu0
      %v5461 = vadd.f32 0.0, %v5460
      %v5462 = vpop.f32.mrb[0].mxu0
      %5463 = vmatprep.mubr.bf16.mxu0 0
      %5464 = vmatmul.mubr.bf16.gmra.mrb[0].mxu0 %v5384
      %v5465 = vpop.f32.mrb[0].mxu0
      %v5466 = vadd.f32 0.0, %v5465
      %v5467 = vpop.f32.mrb[0].mxu0
      %v5468 = vpop.f32.mrb[0].mxu0
      %v5469 = vadd.f32 0.0, %v5468
      %v5470 = vpop.f32.mrb[0].mxu0
      %5471 = vmatprep.mubr.bf16.mxu0 0
      %5472 = vmatmul.mubr.bf16.gmra.mrb[0].mxu0 %v5387
      %v5473 = vpop.f32.mrb[0].mxu0
      %v5474 = vadd.f32 0.0, %v5473
      %v5475 = vpop.f32.mrb[0].mxu0
      %v5476 = vpop.f32.mrb[0].mxu0
      %v5477 = vadd.f32 0.0, %v5476
      %v5478 = vpop.f32.mrb[0].mxu0
      %5479 = vmatprep.mubr.bf16.mxu0 0
      %5480 = vmatmul.mubr.bf16.gmra.mrb[0].mxu0 %v5390
      %v5481 = vpop.f32.mrb[0].mxu0
      %v5482 = vadd.f32 0.0, %v5481
      %v5483 = vpop.f32.mrb[0].mxu0
      %v5484 = vpop.f32.mrb[0].mxu0
      %v5485 = vadd.f32 0.0, %v5484
      %v5486 = vpop.f32.mrb[0].mxu0
      %5487 = vmatprep.mubr.bf16.mxu0 0
      %5488 = vmatmul.mubr.bf16.gmra.mrb[0].mxu0 %v5393
      %v5489 = vpop.f32.mrb[0].mxu0
      %v5490 = vadd.f32 0.0, %v5489
      %v5491 = vpop.f32.mrb[0].mxu0
      %v5492 = vpop.f32.mrb[0].mxu0
      %v5493 = vadd.f32 0.0, %v5492
      %v5494 = vpop.f32.mrb[0].mxu0
      %5495 = vmatprep.mubr.bf16.mxu0 0
      %5496 = vmatmul.mubr.bf16.gmra.mrb[0].mxu0 %v5396
      %v5497 = vpop.f32.mrb[0].mxu0
      %v5498 = vadd.f32 0.0, %v5497
      %v5499 = vpop.f32.mrb[0].mxu0
      %v5500 = vpop.f32.mrb[0].mxu0
      %v5501 = vadd.f32 0.0, %v5500
      %v5502 = vpop.f32.mrb[0].mxu0
      %5503 = vmatprep.mubr.bf16.mxu0 0
      %5504 = vmatmul.mubr.bf16.gmra.mrb[0].mxu0 %v5399
      %v5505 = vpop.f32.mrb[0].mxu0
      %v5506 = vadd.f32 0.0, %v5505
      %v5507 = vpop.f32.mrb[0].mxu0
      %v5508 = vpop.f32.mrb[0].mxu0
      %v5509 = vadd.f32 0.0, %v5508
      %v5510 = vpop.f32.mrb[0].mxu0
      %5511 = vmatprep.mubr.bf16.mxu0 0
      %5512 = vmatmul.mubr.bf16.gmra.mrb[0].mxu0 %v5402
      %v5513 = vpop.f32.mrb[0].mxu0
      %v5514 = vadd.f32 0.0, %v5513
      %v5515 = vpop.f32.mrb[0].mxu0
      %v5516 = vpop.f32.mrb[0].mxu0
      %v5517 = vadd.f32 0.0, %v5516
      %v5518 = vpop.f32.mrb[0].mxu0
      %5519 = vdwg.mxu0
      %v5520 = vadd.f32 %v5322, %v5442
      %v5521 = vadd.f32 %v5323, %v5445
      %v5522 = vadd.f32 %v5324, %v5450
      %v5523 = vadd.f32 %v5325, %v5453
      %v5524 = vadd.f32 %v5326, %v5458
      %v5525 = vadd.f32 %v5327, %v5461
      %v5526 = vadd.f32 %v5328, %v5466
      %v5527 = vadd.f32 %v5329, %v5469
      %v5528 = vadd.f32 %v5330, %v5474
      %v5529 = vadd.f32 %v5331, %v5477
      %v5530 = vadd.f32 %v5332, %v5482
      %v5531 = vadd.f32 %v5333, %v5485
      %v5532 = vadd.f32 %v5334, %v5490
      %v5533 = vadd.f32 %v5335, %v5493
      %v5534 = vadd.f32 %v5336, %v5498
      %v5535 = vadd.f32 %v5337, %v5501
      %v5536 = vadd.f32 %v5338, %v5506
      %v5537 = vadd.f32 %v5339, %v5509
      %v5538 = vadd.f32 %v5340, %v5514
      %v5539 = vadd.f32 %v5341, %v5517
      %v5540 = vld [vmem:[%s4549 + $0xc] sm:$0xff]
      %v5541 = vld [vmem:[%s4549 + $0x14] sm:$0xff]
      %v5542 = vld [vmem:[%s4549 + $0x2c] sm:$0xff]
      %v5543 = vld [vmem:[%s4549 + $0x34] sm:$0xff]
      %v5544 = vld [vmem:[%s4549 + $0x4c] sm:$0xff]
      %v5545 = vld [vmem:[%s4549 + $0x54] sm:$0xff]
      %v5546 = vld [vmem:[%s4549 + $0x6c] sm:$0xff]
      %v5547 = vld [vmem:[%s4549 + $0x74] sm:$0xff]
      %v5548 = vld [vmem:[%s4549 + $0x8c] sm:$0xff]
      %v5549 = vld [vmem:[%s4549 + $0x94] sm:$0xff]
      %v5550 = vld [vmem:[%s4549 + $0xac] sm:$0xff]
      %v5551 = vld [vmem:[%s4549 + $0xb4] sm:$0xff]
      %v5552 = vld [vmem:[%s4549 + $0xcc] sm:$0xff]
      %v5553 = vld [vmem:[%s4549 + $0xd4] sm:$0xff]
      %v5554 = vld [vmem:[%s4549 + $0xec] sm:$0xff]
      %v5555 = vld [vmem:[%s4549 + $0xf4] sm:$0xff]
      %v5556 = vld [vmem:[%s4549 + $0x10c] sm:$0xff]
      %v5557 = vld [vmem:[%s4549 + $0x114] sm:$0xff]
      %v5558 = vld [vmem:[%s4549 + $0x12c] sm:$0xff]
      %v5559 = vld [vmem:[%s4549 + $0x134] sm:$0xff]
      %v5560 = vpack.c.bf16 %v5541, %v5540
      %v5561 = vpack.c.bf16 %v5543, %v5542
      %v5562 = vpack.c.bf16 %v5545, %v5544
      %v5563 = vpack.c.bf16 %v5547, %v5546
      %v5564 = vpack.c.bf16 %v5549, %v5548
      %v5565 = vpack.c.bf16 %v5551, %v5550
      %v5566 = vpack.c.bf16 %v5553, %v5552
      %v5567 = vpack.c.bf16 %v5555, %v5554
      %v5568 = vpack.c.bf16 %v5557, %v5556
      %v5569 = vpack.c.bf16 %v5559, %v5558
      %s5570 = scalar_lea.vmem %s3, 76
      %v5571 = vld [vmem:[%s5570] sm:$0x7]
      %v5573 = vsel %vm1722, %v5560, 0
      %v5576 = vsel %vm1722, %v5561, 0
      %v5579 = vsel %vm1722, %v5562, 0
      %v5582 = vsel %vm1722, %v5563, 0
      %v5585 = vsel %vm1722, %v5564, 0
      %v5588 = vsel %vm1722, %v5565, 0
      %v5591 = vsel %vm1722, %v5566, 0
      %v5594 = vsel %vm1722, %v5567, 0
      %v5597 = vsel %vm1722, %v5568, 0
      %v5600 = vsel %vm1722, %v5569, 0
      %v5603 = vsel %vm1910, %v5571, 0
      %5605 = vmatprep.subr.bf16.mxu0 0
      %5606 = vmatpush1.bf16.msra.mxu0 %v5603
      %5607 = vmatprep.subr.bf16.mxu0 0
      %5608 = vmatpush1.bf16.msra.mxu0 0
      %5609 = vmatprep.subr.bf16.mxu0 0
      %5610 = vmatpush1.bf16.msra.mxu0 0
      %5611 = vmatprep.subr.bf16.mxu0 0
      %5612 = vmatpush1.bf16.msra.mxu0 0
      %5613 = vmatprep.subr.bf16.mxu0 0
      %5614 = vmatpush1.bf16.msra.mxu0 0
      %5615 = vmatprep.subr.bf16.mxu0 0
      %5616 = vmatpush1.bf16.msra.mxu0 0
      %5617 = vmatprep.subr.bf16.mxu0 0
      %5618 = vmatpush1.bf16.msra.mxu0 0
      %5619 = vmatprep.subr.bf16.mxu0 0
      %5620 = vmatpush1.bf16.msra.mxu0 0
      %5621 = vmatprep.subr.bf16.mxu0 0
      %5622 = vmatpush1.bf16.msra.mxu0 0
      %5623 = vmatprep.subr.bf16.mxu0 0
      %5624 = vmatpush1.bf16.msra.mxu0 0
      %5625 = vmatprep.subr.bf16.mxu0 0
      %5626 = vmatpush1.bf16.msra.mxu0 0
      %5627 = vmatprep.subr.bf16.mxu0 0
      %5628 = vmatpush1.bf16.msra.mxu0 0
      %5629 = vmatprep.subr.bf16.mxu0 0
      %5630 = vmatpush1.bf16.msra.mxu0 0
      %5631 = vmatprep.subr.bf16.mxu0 0
      %5632 = vmatpush1.bf16.msra.mxu0 0
      %5633 = vmatprep.subr.bf16.mxu0 0
      %5634 = vmatpush1.bf16.msra.mxu0 0
      %5635 = vmatprep.subr.bf16.mxu0 0
      %5636 = vmatpush1.bf16.msra.mxu0 0
      %5637 = vmatprep.mubr.bf16.mxu0 0
      %5638 = vmatmul.mubr.bf16.gmra.mrb[0].mxu0 %v5573
      %v5639 = vpop.f32.mrb[0].mxu0
      %v5640 = vadd.f32 0.0, %v5639
      %v5641 = vpop.f32.mrb[0].mxu0
      %v5642 = vpop.f32.mrb[0].mxu0
      %v5643 = vadd.f32 0.0, %v5642
      %v5644 = vpop.f32.mrb[0].mxu0
      %5645 = vmatprep.mubr.bf16.mxu0 0
      %5646 = vmatmul.mubr.bf16.gmra.mrb[0].mxu0 %v5576
      %v5647 = vpop.f32.mrb[0].mxu0
      %v5648 = vadd.f32 0.0, %v5647
      %v5649 = vpop.f32.mrb[0].mxu0
      %v5650 = vpop.f32.mrb[0].mxu0
      %v5651 = vadd.f32 0.0, %v5650
      %v5652 = vpop.f32.mrb[0].mxu0
      %5653 = vmatprep.mubr.bf16.mxu0 0
      %5654 = vmatmul.mubr.bf16.gmra.mrb[0].mxu0 %v5579
      %v5655 = vpop.f32.mrb[0].mxu0
      %v5656 = vadd.f32 0.0, %v5655
      %v5657 = vpop.f32.mrb[0].mxu0
      %v5658 = vpop.f32.mrb[0].mxu0
      %v5659 = vadd.f32 0.0, %v5658
      %v5660 = vpop.f32.mrb[0].mxu0
      %5661 = vmatprep.mubr.bf16.mxu0 0
      %5662 = vmatmul.mubr.bf16.gmra.mrb[0].mxu0 %v5582
      %v5663 = vpop.f32.mrb[0].mxu0
      %v5664 = vadd.f32 0.0, %v5663
      %v5665 = vpop.f32.mrb[0].mxu0
      %v5666 = vpop.f32.mrb[0].mxu0
      %v5667 = vadd.f32 0.0, %v5666
      %v5668 = vpop.f32.mrb[0].mxu0
      %5669 = vmatprep.mubr.bf16.mxu0 0
      %5670 = vmatmul.mubr.bf16.gmra.mrb[0].mxu0 %v5585
      %v5671 = vpop.f32.mrb[0].mxu0
      %v5672 = vadd.f32 0.0, %v5671
      %v5673 = vpop.f32.mrb[0].mxu0
      %v5674 = vpop.f32.mrb[0].mxu0
      %v5675 = vadd.f32 0.0, %v5674
      %v5676 = vpop.f32.mrb[0].mxu0
      %5677 = vmatprep.mubr.bf16.mxu0 0
      %5678 = vmatmul.mubr.bf16.gmra.mrb[0].mxu0 %v5588
      %v5679 = vpop.f32.mrb[0].mxu0
      %v5680 = vadd.f32 0.0, %v5679
      %v5681 = vpop.f32.mrb[0].mxu0
      %v5682 = vpop.f32.mrb[0].mxu0
      %v5683 = vadd.f32 0.0, %v5682
      %v5684 = vpop.f32.mrb[0].mxu0
      %5685 = vmatprep.mubr.bf16.mxu0 0
      %5686 = vmatmul.mubr.bf16.gmra.mrb[0].mxu0 %v5591
      %v5687 = vpop.f32.mrb[0].mxu0
      %v5688 = vadd.f32 0.0, %v5687
      %v5689 = vpop.f32.mrb[0].mxu0
      %v5690 = vpop.f32.mrb[0].mxu0
      %v5691 = vadd.f32 0.0, %v5690
      %v5692 = vpop.f32.mrb[0].mxu0
      %5693 = vmatprep.mubr.bf16.mxu0 0
      %5694 = vmatmul.mubr.bf16.gmra.mrb[0].mxu0 %v5594
      %v5695 = vpop.f32.mrb[0].mxu0
      %v5696 = vadd.f32 0.0, %v5695
      %v5697 = vpop.f32.mrb[0].mxu0
      %v5698 = vpop.f32.mrb[0].mxu0
      %v5699 = vadd.f32 0.0, %v5698
      %v5700 = vpop.f32.mrb[0].mxu0
      %5701 = vmatprep.mubr.bf16.mxu0 0
      %5702 = vmatmul.mubr.bf16.gmra.mrb[0].mxu0 %v5597
      %v5703 = vpop.f32.mrb[0].mxu0
      %v5704 = vadd.f32 0.0, %v5703
      %v5705 = vpop.f32.mrb[0].mxu0
      %v5706 = vpop.f32.mrb[0].mxu0
      %v5707 = vadd.f32 0.0, %v5706
      %v5708 = vpop.f32.mrb[0].mxu0
      %5709 = vmatprep.mubr.bf16.mxu0 0
      %5710 = vmatmul.mubr.bf16.gmra.mrb[0].mxu0 %v5600
      %v5711 = vpop.f32.mrb[0].mxu0
      %v5712 = vadd.f32 0.0, %v5711
      %v5713 = vpop.f32.mrb[0].mxu0
      %v5714 = vpop.f32.mrb[0].mxu0
      %v5715 = vadd.f32 0.0, %v5714
      %v5716 = vpop.f32.mrb[0].mxu0
      %5717 = vdwg.mxu0
      %v5718 = vadd.f32 %v5520, %v5640
      %v5719 = vadd.f32 %v5521, %v5643
      %v5720 = vadd.f32 %v5522, %v5648
      %v5721 = vadd.f32 %v5523, %v5651
      %v5722 = vadd.f32 %v5524, %v5656
      %v5723 = vadd.f32 %v5525, %v5659
      %v5724 = vadd.f32 %v5526, %v5664
      %v5725 = vadd.f32 %v5527, %v5667
      %v5726 = vadd.f32 %v5528, %v5672
      %v5727 = vadd.f32 %v5529, %v5675
      %v5728 = vadd.f32 %v5530, %v5680
      %v5729 = vadd.f32 %v5531, %v5683
      %v5730 = vadd.f32 %v5532, %v5688
      %v5731 = vadd.f32 %v5533, %v5691
      %v5732 = vadd.f32 %v5534, %v5696
      %v5733 = vadd.f32 %v5535, %v5699
      %v5734 = vadd.f32 %v5536, %v5704
      %v5735 = vadd.f32 %v5537, %v5707
      %v5736 = vadd.f32 %v5538, %v5712
      %v5737 = vadd.f32 %v5539, %v5715
      %v5738 = vld [vmem:[%s4549 + $0xd] sm:$0xff]
      %v5739 = vld [vmem:[%s4549 + $0x15] sm:$0xff]
      %v5740 = vld [vmem:[%s4549 + $0x2d] sm:$0xff]
      %v5741 = vld [vmem:[%s4549 + $0x35] sm:$0xff]
      %v5742 = vld [vmem:[%s4549 + $0x4d] sm:$0xff]
      %v5743 = vld [vmem:[%s4549 + $0x55] sm:$0xff]
      %v5744 = vld [vmem:[%s4549 + $0x6d] sm:$0xff]
      %v5745 = vld [vmem:[%s4549 + $0x75] sm:$0xff]
      %v5746 = vld [vmem:[%s4549 + $0x8d] sm:$0xff]
      %v5747 = vld [vmem:[%s4549 + $0x95] sm:$0xff]
      %v5748 = vld [vmem:[%s4549 + $0xad] sm:$0xff]
      %v5749 = vld [vmem:[%s4549 + $0xb5] sm:$0xff]
      %v5750 = vld [vmem:[%s4549 + $0xcd] sm:$0xff]
      %v5751 = vld [vmem:[%s4549 + $0xd5] sm:$0xff]
      %v5752 = vld [vmem:[%s4549 + $0xed] sm:$0xff]
      %v5753 = vld [vmem:[%s4549 + $0xf5] sm:$0xff]
      %v5754 = vld [vmem:[%s4549 + $0x10d] sm:$0xff]
      %v5755 = vld [vmem:[%s4549 + $0x115] sm:$0xff]
      %v5756 = vld [vmem:[%s4549 + $0x12d] sm:$0xff]
      %v5757 = vld [vmem:[%s4549 + $0x135] sm:$0xff]
      %v5758 = vpack.c.bf16 %v5739, %v5738
      %v5759 = vpack.c.bf16 %v5741, %v5740
      %v5760 = vpack.c.bf16 %v5743, %v5742
      %v5761 = vpack.c.bf16 %v5745, %v5744
      %v5762 = vpack.c.bf16 %v5747, %v5746
      %v5763 = vpack.c.bf16 %v5749, %v5748
      %v5764 = vpack.c.bf16 %v5751, %v5750
      %v5765 = vpack.c.bf16 %v5753, %v5752
      %v5766 = vpack.c.bf16 %v5755, %v5754
      %v5767 = vpack.c.bf16 %v5757, %v5756
      %s5768 = scalar_lea.vmem %s3, 80
      %v5769 = vld [vmem:[%s5768] sm:$0x7]
      %v5771 = vsel %vm1722, %v5758, 0
      %v5774 = vsel %vm1722, %v5759, 0
      %v5777 = vsel %vm1722, %v5760, 0
      %v5780 = vsel %vm1722, %v5761, 0
      %v5783 = vsel %vm1722, %v5762, 0
      %v5786 = vsel %vm1722, %v5763, 0
      %v5789 = vsel %vm1722, %v5764, 0
      %v5792 = vsel %vm1722, %v5765, 0
      %v5795 = vsel %vm1722, %v5766, 0
      %v5798 = vsel %vm1722, %v5767, 0
      %v5801 = vsel %vm1910, %v5769, 0
      %5803 = vmatprep.subr.bf16.mxu0 0
      %5804 = vmatpush1.bf16.msra.mxu0 %v5801
      %5805 = vmatprep.subr.bf16.mxu0 0
      %5806 = vmatpush1.bf16.msra.mxu0 0
      %5807 = vmatprep.subr.bf16.mxu0 0
      %5808 = vmatpush1.bf16.msra.mxu0 0
      %5809 = vmatprep.subr.bf16.mxu0 0
      %5810 = vmatpush1.bf16.msra.mxu0 0
      %5811 = vmatprep.subr.bf16.mxu0 0
      %5812 = vmatpush1.bf16.msra.mxu0 0
      %5813 = vmatprep.subr.bf16.mxu0 0
      %5814 = vmatpush1.bf16.msra.mxu0 0
      %5815 = vmatprep.subr.bf16.mxu0 0
      %5816 = vmatpush1.bf16.msra.mxu0 0
      %5817 = vmatprep.subr.bf16.mxu0 0
      %5818 = vmatpush1.bf16.msra.mxu0 0
      %5819 = vmatprep.subr.bf16.mxu0 0
      %5820 = vmatpush1.bf16.msra.mxu0 0
      %5821 = vmatprep.subr.bf16.mxu0 0
      %5822 = vmatpush1.bf16.msra.mxu0 0
      %5823 = vmatprep.subr.bf16.mxu0 0
      %5824 = vmatpush1.bf16.msra.mxu0 0
      %5825 = vmatprep.subr.bf16.mxu0 0
      %5826 = vmatpush1.bf16.msra.mxu0 0
      %5827 = vmatprep.subr.bf16.mxu0 0
      %5828 = vmatpush1.bf16.msra.mxu0 0
      %5829 = vmatprep.subr.bf16.mxu0 0
      %5830 = vmatpush1.bf16.msra.mxu0 0
      %5831 = vmatprep.subr.bf16.mxu0 0
      %5832 = vmatpush1.bf16.msra.mxu0 0
      %5833 = vmatprep.subr.bf16.mxu0 0
      %5834 = vmatpush1.bf16.msra.mxu0 0
      %5835 = vmatprep.mubr.bf16.mxu0 0
      %5836 = vmatmul.mubr.bf16.gmra.mrb[0].mxu0 %v5771
      %v5837 = vpop.f32.mrb[0].mxu0
      %v5838 = vadd.f32 0.0, %v5837
      %v5839 = vpop.f32.mrb[0].mxu0
      %v5840 = vpop.f32.mrb[0].mxu0
      %v5841 = vadd.f32 0.0, %v5840
      %v5842 = vpop.f32.mrb[0].mxu0
      %5843 = vmatprep.mubr.bf16.mxu0 0
      %5844 = vmatmul.mubr.bf16.gmra.mrb[0].mxu0 %v5774
      %v5845 = vpop.f32.mrb[0].mxu0
      %v5846 = vadd.f32 0.0, %v5845
      %v5847 = vpop.f32.mrb[0].mxu0
      %v5848 = vpop.f32.mrb[0].mxu0
      %v5849 = vadd.f32 0.0, %v5848
      %v5850 = vpop.f32.mrb[0].mxu0
      %5851 = vmatprep.mubr.bf16.mxu0 0
      %5852 = vmatmul.mubr.bf16.gmra.mrb[0].mxu0 %v5777
      %v5853 = vpop.f32.mrb[0].mxu0
      %v5854 = vadd.f32 0.0, %v5853
      %v5855 = vpop.f32.mrb[0].mxu0
      %v5856 = vpop.f32.mrb[0].mxu0
      %v5857 = vadd.f32 0.0, %v5856
      %v5858 = vpop.f32.mrb[0].mxu0
      %5859 = vmatprep.mubr.bf16.mxu0 0
      %5860 = vmatmul.mubr.bf16.gmra.mrb[0].mxu0 %v5780
      %v5861 = vpop.f32.mrb[0].mxu0
      %v5862 = vadd.f32 0.0, %v5861
      %v5863 = vpop.f32.mrb[0].mxu0
      %v5864 = vpop.f32.mrb[0].mxu0
      %v5865 = vadd.f32 0.0, %v5864
      %v5866 = vpop.f32.mrb[0].mxu0
      %5867 = vmatprep.mubr.bf16.mxu0 0
      %5868 = vmatmul.mubr.bf16.gmra.mrb[0].mxu0 %v5783
      %v5869 = vpop.f32.mrb[0].mxu0
      %v5870 = vadd.f32 0.0, %v5869
      %v5871 = vpop.f32.mrb[0].mxu0
      %v5872 = vpop.f32.mrb[0].mxu0
      %v5873 = vadd.f32 0.0, %v5872
      %v5874 = vpop.f32.mrb[0].mxu0
      %5875 = vmatprep.mubr.bf16.mxu0 0
      %5876 = vmatmul.mubr.bf16.gmra.mrb[0].mxu0 %v5786
      %v5877 = vpop.f32.mrb[0].mxu0
      %v5878 = vadd.f32 0.0, %v5877
      %v5879 = vpop.f32.mrb[0].mxu0
      %v5880 = vpop.f32.mrb[0].mxu0
      %v5881 = vadd.f32 0.0, %v5880
      %v5882 = vpop.f32.mrb[0].mxu0
      %5883 = vmatprep.mubr.bf16.mxu0 0
      %5884 = vmatmul.mubr.bf16.gmra.mrb[0].mxu0 %v5789
      %v5885 = vpop.f32.mrb[0].mxu0
      %v5886 = vadd.f32 0.0, %v5885
      %v5887 = vpop.f32.mrb[0].mxu0
      %v5888 = vpop.f32.mrb[0].mxu0
      %v5889 = vadd.f32 0.0, %v5888
      %v5890 = vpop.f32.mrb[0].mxu0
      %5891 = vmatprep.mubr.bf16.mxu0 0
      %5892 = vmatmul.mubr.bf16.gmra.mrb[0].mxu0 %v5792
      %v5893 = vpop.f32.mrb[0].mxu0
      %v5894 = vadd.f32 0.0, %v5893
      %v5895 = vpop.f32.mrb[0].mxu0
      %v5896 = vpop.f32.mrb[0].mxu0
      %v5897 = vadd.f32 0.0, %v5896
      %v5898 = vpop.f32.mrb[0].mxu0
      %5899 = vmatprep.mubr.bf16.mxu0 0
      %5900 = vmatmul.mubr.bf16.gmra.mrb[0].mxu0 %v5795
      %v5901 = vpop.f32.mrb[0].mxu0
      %v5902 = vadd.f32 0.0, %v5901
      %v5903 = vpop.f32.mrb[0].mxu0
      %v5904 = vpop.f32.mrb[0].mxu0
      %v5905 = vadd.f32 0.0, %v5904
      %v5906 = vpop.f32.mrb[0].mxu0
      %5907 = vmatprep.mubr.bf16.mxu0 0
      %5908 = vmatmul.mubr.bf16.gmra.mrb[0].mxu0 %v5798
      %v5909 = vpop.f32.mrb[0].mxu0
      %v5910 = vadd.f32 0.0, %v5909
      %v5911 = vpop.f32.mrb[0].mxu0
      %v5912 = vpop.f32.mrb[0].mxu0
      %v5913 = vadd.f32 0.0, %v5912
      %v5914 = vpop.f32.mrb[0].mxu0
      %5915 = vdwg.mxu0
      %v5916 = vadd.f32 %v5718, %v5838
      %v5917 = vadd.f32 %v5719, %v5841
      %v5918 = vadd.f32 %v5720, %v5846
      %v5919 = vadd.f32 %v5721, %v5849
      %v5920 = vadd.f32 %v5722, %v5854
      %v5921 = vadd.f32 %v5723, %v5857
      %v5922 = vadd.f32 %v5724, %v5862
      %v5923 = vadd.f32 %v5725, %v5865
      %v5924 = vadd.f32 %v5726, %v5870
      %v5925 = vadd.f32 %v5727, %v5873
      %v5926 = vadd.f32 %v5728, %v5878
      %v5927 = vadd.f32 %v5729, %v5881
      %v5928 = vadd.f32 %v5730, %v5886
      %v5929 = vadd.f32 %v5731, %v5889
      %v5930 = vadd.f32 %v5732, %v5894
      %v5931 = vadd.f32 %v5733, %v5897
      %v5932 = vadd.f32 %v5734, %v5902
      %v5933 = vadd.f32 %v5735, %v5905
      %v5934 = vadd.f32 %v5736, %v5910
      %v5935 = vadd.f32 %v5737, %v5913
      %s5936 = scalar_lea.vmem [#allocation2], 96
      %v5937 = vld [vmem:[%s5936 + $0x7] sm:$0xff]
      %v5938 = vld [vmem:[%s5936 + $0xf] sm:$0xff]
      %v5939 = vld [vmem:[%s5936 + $0x27] sm:$0xff]
      %v5940 = vld [vmem:[%s5936 + $0x2f] sm:$0xff]
      %v5941 = vld [vmem:[%s5936 + $0x47] sm:$0xff]
      %v5942 = vld [vmem:[%s5936 + $0x4f] sm:$0xff]
      %v5943 = vld [vmem:[%s5936 + $0x67] sm:$0xff]
      %v5944 = vld [vmem:[%s5936 + $0x6f] sm:$0xff]
      %v5945 = vld [vmem:[%s5936 + $0x87] sm:$0xff]
      %v5946 = vld [vmem:[%s5936 + $0x8f] sm:$0xff]
      %v5947 = vld [vmem:[%s5936 + $0xa7] sm:$0xff]
      %v5948 = vld [vmem:[%s5936 + $0xaf] sm:$0xff]
      %v5949 = vld [vmem:[%s5936 + $0xc7] sm:$0xff]
      %v5950 = vld [vmem:[%s5936 + $0xcf] sm:$0xff]
      %v5951 = vld [vmem:[%s5936 + $0xe7] sm:$0xff]
      %v5952 = vld [vmem:[%s5936 + $0xef] sm:$0xff]
      %v5953 = vld [vmem:[%s5936 + $0x107] sm:$0xff]
      %v5954 = vld [vmem:[%s5936 + $0x10f] sm:$0xff]
      %v5955 = vld [vmem:[%s5936 + $0x127] sm:$0xff]
      %v5956 = vld [vmem:[%s5936 + $0x12f] sm:$0xff]
      %v5957 = vpack.c.bf16 %v5938, %v5937
      %v5958 = vpack.c.bf16 %v5940, %v5939
      %v5959 = vpack.c.bf16 %v5942, %v5941
      %v5960 = vpack.c.bf16 %v5944, %v5943
      %v5961 = vpack.c.bf16 %v5946, %v5945
      %v5962 = vpack.c.bf16 %v5948, %v5947
      %v5963 = vpack.c.bf16 %v5950, %v5949
      %v5964 = vpack.c.bf16 %v5952, %v5951
      %v5965 = vpack.c.bf16 %v5954, %v5953
      %v5966 = vpack.c.bf16 %v5956, %v5955
      %s5967 = scalar_lea.vmem %s3, 84
      %v5968 = vld [vmem:[%s5967] sm:$0x7]
      %v5970 = vsel %vm1722, %v5957, 0
      %v5973 = vsel %vm1722, %v5958, 0
      %v5976 = vsel %vm1722, %v5959, 0
      %v5979 = vsel %vm1722, %v5960, 0
      %v5982 = vsel %vm1722, %v5961, 0
      %v5985 = vsel %vm1722, %v5962, 0
      %v5988 = vsel %vm1722, %v5963, 0
      %v5991 = vsel %vm1722, %v5964, 0
      %v5994 = vsel %vm1722, %v5965, 0
      %v5997 = vsel %vm1722, %v5966, 0
      %v6000 = vsel %vm1910, %v5968, 0
      %6002 = vmatprep.subr.bf16.mxu0 0
      %6003 = vmatpush1.bf16.msra.mxu0 %v6000
      %6004 = vmatprep.subr.bf16.mxu0 0
      %6005 = vmatpush1.bf16.msra.mxu0 0
      %6006 = vmatprep.subr.bf16.mxu0 0
      %6007 = vmatpush1.bf16.msra.mxu0 0
      %6008 = vmatprep.subr.bf16.mxu0 0
      %6009 = vmatpush1.bf16.msra.mxu0 0
      %6010 = vmatprep.subr.bf16.mxu0 0
      %6011 = vmatpush1.bf16.msra.mxu0 0
      %6012 = vmatprep.subr.bf16.mxu0 0
      %6013 = vmatpush1.bf16.msra.mxu0 0
      %6014 = vmatprep.subr.bf16.mxu0 0
      %6015 = vmatpush1.bf16.msra.mxu0 0
      %6016 = vmatprep.subr.bf16.mxu0 0
      %6017 = vmatpush1.bf16.msra.mxu0 0
      %6018 = vmatprep.subr.bf16.mxu0 0
      %6019 = vmatpush1.bf16.msra.mxu0 0
      %6020 = vmatprep.subr.bf16.mxu0 0
      %6021 = vmatpush1.bf16.msra.mxu0 0
      %6022 = vmatprep.subr.bf16.mxu0 0
      %6023 = vmatpush1.bf16.msra.mxu0 0
      %6024 = vmatprep.subr.bf16.mxu0 0
      %6025 = vmatpush1.bf16.msra.mxu0 0
      %6026 = vmatprep.subr.bf16.mxu0 0
      %6027 = vmatpush1.bf16.msra.mxu0 0
      %6028 = vmatprep.subr.bf16.mxu0 0
      %6029 = vmatpush1.bf16.msra.mxu0 0
      %6030 = vmatprep.subr.bf16.mxu0 0
      %6031 = vmatpush1.bf16.msra.mxu0 0
      %6032 = vmatprep.subr.bf16.mxu0 0
      %6033 = vmatpush1.bf16.msra.mxu0 0
      %6034 = vmatprep.mubr.bf16.mxu0 0
      %6035 = vmatmul.mubr.bf16.gmra.mrb[0].mxu0 %v5970
      %v6036 = vpop.f32.mrb[0].mxu0
      %v6037 = vadd.f32 0.0, %v6036
      %v6038 = vpop.f32.mrb[0].mxu0
      %v6039 = vpop.f32.mrb[0].mxu0
      %v6040 = vadd.f32 0.0, %v6039
      %v6041 = vpop.f32.mrb[0].mxu0
      %6042 = vmatprep.mubr.bf16.mxu0 0
      %6043 = vmatmul.mubr.bf16.gmra.mrb[0].mxu0 %v5973
      %v6044 = vpop.f32.mrb[0].mxu0
      %v6045 = vadd.f32 0.0, %v6044
      %v6046 = vpop.f32.mrb[0].mxu0
      %v6047 = vpop.f32.mrb[0].mxu0
      %v6048 = vadd.f32 0.0, %v6047
      %v6049 = vpop.f32.mrb[0].mxu0
      %6050 = vmatprep.mubr.bf16.mxu0 0
      %6051 = vmatmul.mubr.bf16.gmra.mrb[0].mxu0 %v5976
      %v6052 = vpop.f32.mrb[0].mxu0
      %v6053 = vadd.f32 0.0, %v6052
      %v6054 = vpop.f32.mrb[0].mxu0
      %v6055 = vpop.f32.mrb[0].mxu0
      %v6056 = vadd.f32 0.0, %v6055
      %v6057 = vpop.f32.mrb[0].mxu0
      %6058 = vmatprep.mubr.bf16.mxu0 0
      %6059 = vmatmul.mubr.bf16.gmra.mrb[0].mxu0 %v5979
      %v6060 = vpop.f32.mrb[0].mxu0
      %v6061 = vadd.f32 0.0, %v6060
      %v6062 = vpop.f32.mrb[0].mxu0
      %v6063 = vpop.f32.mrb[0].mxu0
      %v6064 = vadd.f32 0.0, %v6063
      %v6065 = vpop.f32.mrb[0].mxu0
      %6066 = vmatprep.mubr.bf16.mxu0 0
      %6067 = vmatmul.mubr.bf16.gmra.mrb[0].mxu0 %v5982
      %v6068 = vpop.f32.mrb[0].mxu0
      %v6069 = vadd.f32 0.0, %v6068
      %v6070 = vpop.f32.mrb[0].mxu0
      %v6071 = vpop.f32.mrb[0].mxu0
      %v6072 = vadd.f32 0.0, %v6071
      %v6073 = vpop.f32.mrb[0].mxu0
      %6074 = vmatprep.mubr.bf16.mxu0 0
      %6075 = vmatmul.mubr.bf16.gmra.mrb[0].mxu0 %v5985
      %v6076 = vpop.f32.mrb[0].mxu0
      %v6077 = vadd.f32 0.0, %v6076
      %v6078 = vpop.f32.mrb[0].mxu0
      %v6079 = vpop.f32.mrb[0].mxu0
      %v6080 = vadd.f32 0.0, %v6079
      %v6081 = vpop.f32.mrb[0].mxu0
      %6082 = vmatprep.mubr.bf16.mxu0 0
      %6083 = vmatmul.mubr.bf16.gmra.mrb[0].mxu0 %v5988
      %v6084 = vpop.f32.mrb[0].mxu0
      %v6085 = vadd.f32 0.0, %v6084
      %v6086 = vpop.f32.mrb[0].mxu0
      %v6087 = vpop.f32.mrb[0].mxu0
      %v6088 = vadd.f32 0.0, %v6087
      %v6089 = vpop.f32.mrb[0].mxu0
      %6090 = vmatprep.mubr.bf16.mxu0 0
      %6091 = vmatmul.mubr.bf16.gmra.mrb[0].mxu0 %v5991
      %v6092 = vpop.f32.mrb[0].mxu0
      %v6093 = vadd.f32 0.0, %v6092
      %v6094 = vpop.f32.mrb[0].mxu0
      %v6095 = vpop.f32.mrb[0].mxu0
      %v6096 = vadd.f32 0.0, %v6095
      %v6097 = vpop.f32.mrb[0].mxu0
      %6098 = vmatprep.mubr.bf16.mxu0 0
      %6099 = vmatmul.mubr.bf16.gmra.mrb[0].mxu0 %v5994
      %v6100 = vpop.f32.mrb[0].mxu0
      %v6101 = vadd.f32 0.0, %v6100
      %v6102 = vpop.f32.mrb[0].mxu0
      %v6103 = vpop.f32.mrb[0].mxu0
      %v6104 = vadd.f32 0.0, %v6103
      %v6105 = vpop.f32.mrb[0].mxu0
      %6106 = vmatprep.mubr.bf16.mxu0 0
      %6107 = vmatmul.mubr.bf16.gmra.mrb[0].mxu0 %v5997
      %v6108 = vpop.f32.mrb[0].mxu0
      %v6109 = vadd.f32 0.0, %v6108
      %v6110 = vpop.f32.mrb[0].mxu0
      %v6111 = vpop.f32.mrb[0].mxu0
      %v6112 = vadd.f32 0.0, %v6111
      %v6113 = vpop.f32.mrb[0].mxu0
      %6114 = vdwg.mxu0
      %v6115 = vadd.f32 %v5916, %v6037
      %v6116 = vadd.f32 %v5917, %v6040
      %v6117 = vadd.f32 %v5918, %v6045
      %v6118 = vadd.f32 %v5919, %v6048
      %v6119 = vadd.f32 %v5920, %v6053
      %v6120 = vadd.f32 %v5921, %v6056
      %v6121 = vadd.f32 %v5922, %v6061
      %v6122 = vadd.f32 %v5923, %v6064
      %v6123 = vadd.f32 %v5924, %v6069
      %v6124 = vadd.f32 %v5925, %v6072
      %v6125 = vadd.f32 %v5926, %v6077
      %v6126 = vadd.f32 %v5927, %v6080
      %v6127 = vadd.f32 %v5928, %v6085
      %v6128 = vadd.f32 %v5929, %v6088
      %v6129 = vadd.f32 %v5930, %v6093
      %v6130 = vadd.f32 %v5931, %v6096
      %v6131 = vadd.f32 %v5932, %v6101
      %v6132 = vadd.f32 %v5933, %v6104
      %v6133 = vadd.f32 %v5934, %v6109
      %v6134 = vadd.f32 %v5935, %v6112
      %v6135 = vld [vmem:[%s5936 + $0x8] sm:$0xff]
      %v6136 = vld [vmem:[%s5936 + $0x10] sm:$0xff]
      %v6137 = vld [vmem:[%s5936 + $0x28] sm:$0xff]
      %v6138 = vld [vmem:[%s5936 + $0x30] sm:$0xff]
      %v6139 = vld [vmem:[%s5936 + $0x48] sm:$0xff]
      %v6140 = vld [vmem:[%s5936 + $0x50] sm:$0xff]
      %v6141 = vld [vmem:[%s5936 + $0x68] sm:$0xff]
      %v6142 = vld [vmem:[%s5936 + $0x70] sm:$0xff]
      %v6143 = vld [vmem:[%s5936 + $0x88] sm:$0xff]
      %v6144 = vld [vmem:[%s5936 + $0x90] sm:$0xff]
      %v6145 = vld [vmem:[%s5936 + $0xa8] sm:$0xff]
      %v6146 = vld [vmem:[%s5936 + $0xb0] sm:$0xff]
      %v6147 = vld [vmem:[%s5936 + $0xc8] sm:$0xff]
      %v6148 = vld [vmem:[%s5936 + $0xd0] sm:$0xff]
      %v6149 = vld [vmem:[%s5936 + $0xe8] sm:$0xff]
      %v6150 = vld [vmem:[%s5936 + $0xf0] sm:$0xff]
      %v6151 = vld [vmem:[%s5936 + $0x108] sm:$0xff]
      %v6152 = vld [vmem:[%s5936 + $0x110] sm:$0xff]
      %v6153 = vld [vmem:[%s5936 + $0x128] sm:$0xff]
      %v6154 = vld [vmem:[%s5936 + $0x130] sm:$0xff]
      %v6155 = vpack.c.bf16 %v6136, %v6135
      %v6156 = vpack.c.bf16 %v6138, %v6137
      %v6157 = vpack.c.bf16 %v6140, %v6139
      %v6158 = vpack.c.bf16 %v6142, %v6141
      %v6159 = vpack.c.bf16 %v6144, %v6143
      %v6160 = vpack.c.bf16 %v6146, %v6145
      %v6161 = vpack.c.bf16 %v6148, %v6147
      %v6162 = vpack.c.bf16 %v6150, %v6149
      %v6163 = vpack.c.bf16 %v6152, %v6151
      %v6164 = vpack.c.bf16 %v6154, %v6153
      %s6165 = scalar_lea.vmem %s3, 88
      %v6166 = vld [vmem:[%s6165] sm:$0x7]
      %v6168 = vsel %vm1722, %v6155, 0
      %v6171 = vsel %vm1722, %v6156, 0
      %v6174 = vsel %vm1722, %v6157, 0
      %v6177 = vsel %vm1722, %v6158, 0
      %v6180 = vsel %vm1722, %v6159, 0
      %v6183 = vsel %vm1722, %v6160, 0
      %v6186 = vsel %vm1722, %v6161, 0
      %v6189 = vsel %vm1722, %v6162, 0
      %v6192 = vsel %vm1722, %v6163, 0
      %v6195 = vsel %vm1722, %v6164, 0
      %v6198 = vsel %vm1910, %v6166, 0
      %6200 = vmatprep.subr.bf16.mxu0 0
      %6201 = vmatpush1.bf16.msra.mxu0 %v6198
      %6202 = vmatprep.subr.bf16.mxu0 0
      %6203 = vmatpush1.bf16.msra.mxu0 0
      %6204 = vmatprep.subr.bf16.mxu0 0
      %6205 = vmatpush1.bf16.msra.mxu0 0
      %6206 = vmatprep.subr.bf16.mxu0 0
      %6207 = vmatpush1.bf16.msra.mxu0 0
      %6208 = vmatprep.subr.bf16.mxu0 0
      %6209 = vmatpush1.bf16.msra.mxu0 0
      %6210 = vmatprep.subr.bf16.mxu0 0
      %6211 = vmatpush1.bf16.msra.mxu0 0
      %6212 = vmatprep.subr.bf16.mxu0 0
      %6213 = vmatpush1.bf16.msra.mxu0 0
      %6214 = vmatprep.subr.bf16.mxu0 0
      %6215 = vmatpush1.bf16.msra.mxu0 0
      %6216 = vmatprep.subr.bf16.mxu0 0
      %6217 = vmatpush1.bf16.msra.mxu0 0
      %6218 = vmatprep.subr.bf16.mxu0 0
      %6219 = vmatpush1.bf16.msra.mxu0 0
      %6220 = vmatprep.subr.bf16.mxu0 0
      %6221 = vmatpush1.bf16.msra.mxu0 0
      %6222 = vmatprep.subr.bf16.mxu0 0
      %6223 = vmatpush1.bf16.msra.mxu0 0
      %6224 = vmatprep.subr.bf16.mxu0 0
      %6225 = vmatpush1.bf16.msra.mxu0 0
      %6226 = vmatprep.subr.bf16.mxu0 0
      %6227 = vmatpush1.bf16.msra.mxu0 0
      %6228 = vmatprep.subr.bf16.mxu0 0
      %6229 = vmatpush1.bf16.msra.mxu0 0
      %6230 = vmatprep.subr.bf16.mxu0 0
      %6231 = vmatpush1.bf16.msra.mxu0 0
      %6232 = vmatprep.mubr.bf16.mxu0 0
      %6233 = vmatmul.mubr.bf16.gmra.mrb[0].mxu0 %v6168
      %v6234 = vpop.f32.mrb[0].mxu0
      %v6235 = vadd.f32 0.0, %v6234
      %v6236 = vpop.f32.mrb[0].mxu0
      %v6237 = vpop.f32.mrb[0].mxu0
      %v6238 = vadd.f32 0.0, %v6237
      %v6239 = vpop.f32.mrb[0].mxu0
      %6240 = vmatprep.mubr.bf16.mxu0 0
      %6241 = vmatmul.mubr.bf16.gmra.mrb[0].mxu0 %v6171
      %v6242 = vpop.f32.mrb[0].mxu0
      %v6243 = vadd.f32 0.0, %v6242
      %v6244 = vpop.f32.mrb[0].mxu0
      %v6245 = vpop.f32.mrb[0].mxu0
      %v6246 = vadd.f32 0.0, %v6245
      %v6247 = vpop.f32.mrb[0].mxu0
      %6248 = vmatprep.mubr.bf16.mxu0 0
      %6249 = vmatmul.mubr.bf16.gmra.mrb[0].mxu0 %v6174
      %v6250 = vpop.f32.mrb[0].mxu0
      %v6251 = vadd.f32 0.0, %v6250
      %v6252 = vpop.f32.mrb[0].mxu0
      %v6253 = vpop.f32.mrb[0].mxu0
      %v6254 = vadd.f32 0.0, %v6253
      %v6255 = vpop.f32.mrb[0].mxu0
      %6256 = vmatprep.mubr.bf16.mxu0 0
      %6257 = vmatmul.mubr.bf16.gmra.mrb[0].mxu0 %v6177
      %v6258 = vpop.f32.mrb[0].mxu0
      %v6259 = vadd.f32 0.0, %v6258
      %v6260 = vpop.f32.mrb[0].mxu0
      %v6261 = vpop.f32.mrb[0].mxu0
      %v6262 = vadd.f32 0.0, %v6261
      %v6263 = vpop.f32.mrb[0].mxu0
      %6264 = vmatprep.mubr.bf16.mxu0 0
      %6265 = vmatmul.mubr.bf16.gmra.mrb[0].mxu0 %v6180
      %v6266 = vpop.f32.mrb[0].mxu0
      %v6267 = vadd.f32 0.0, %v6266
      %v6268 = vpop.f32.mrb[0].mxu0
      %v6269 = vpop.f32.mrb[0].mxu0
      %v6270 = vadd.f32 0.0, %v6269
      %v6271 = vpop.f32.mrb[0].mxu0
      %6272 = vmatprep.mubr.bf16.mxu0 0
      %6273 = vmatmul.mubr.bf16.gmra.mrb[0].mxu0 %v6183
      %v6274 = vpop.f32.mrb[0].mxu0
      %v6275 = vadd.f32 0.0, %v6274
      %v6276 = vpop.f32.mrb[0].mxu0
      %v6277 = vpop.f32.mrb[0].mxu0
      %v6278 = vadd.f32 0.0, %v6277
      %v6279 = vpop.f32.mrb[0].mxu0
      %6280 = vmatprep.mubr.bf16.mxu0 0
      %6281 = vmatmul.mubr.bf16.gmra.mrb[0].mxu0 %v6186
      %v6282 = vpop.f32.mrb[0].mxu0
      %v6283 = vadd.f32 0.0, %v6282
      %v6284 = vpop.f32.mrb[0].mxu0
      %v6285 = vpop.f32.mrb[0].mxu0
      %v6286 = vadd.f32 0.0, %v6285
      %v6287 = vpop.f32.mrb[0].mxu0
      %6288 = vmatprep.mubr.bf16.mxu0 0
      %6289 = vmatmul.mubr.bf16.gmra.mrb[0].mxu0 %v6189
      %v6290 = vpop.f32.mrb[0].mxu0
      %v6291 = vadd.f32 0.0, %v6290
      %v6292 = vpop.f32.mrb[0].mxu0
      %v6293 = vpop.f32.mrb[0].mxu0
      %v6294 = vadd.f32 0.0, %v6293
      %v6295 = vpop.f32.mrb[0].mxu0
      %6296 = vmatprep.mubr.bf16.mxu0 0
      %6297 = vmatmul.mubr.bf16.gmra.mrb[0].mxu0 %v6192
      %v6298 = vpop.f32.mrb[0].mxu0
      %v6299 = vadd.f32 0.0, %v6298
      %v6300 = vpop.f32.mrb[0].mxu0
      %v6301 = vpop.f32.mrb[0].mxu0
      %v6302 = vadd.f32 0.0, %v6301
      %v6303 = vpop.f32.mrb[0].mxu0
      %6304 = vmatprep.mubr.bf16.mxu0 0
      %6305 = vmatmul.mubr.bf16.gmra.mrb[0].mxu0 %v6195
      %v6306 = vpop.f32.mrb[0].mxu0
      %v6307 = vadd.f32 0.0, %v6306
      %v6308 = vpop.f32.mrb[0].mxu0
      %v6309 = vpop.f32.mrb[0].mxu0
      %v6310 = vadd.f32 0.0, %v6309
      %v6311 = vpop.f32.mrb[0].mxu0
      %6312 = vdwg.mxu0
      %v6313 = vadd.f32 %v6115, %v6235
      %v6314 = vadd.f32 %v6116, %v6238
      %v6315 = vadd.f32 %v6117, %v6243
      %v6316 = vadd.f32 %v6118, %v6246
      %v6317 = vadd.f32 %v6119, %v6251
      %v6318 = vadd.f32 %v6120, %v6254
      %v6319 = vadd.f32 %v6121, %v6259
      %v6320 = vadd.f32 %v6122, %v6262
      %v6321 = vadd.f32 %v6123, %v6267
      %v6322 = vadd.f32 %v6124, %v6270
      %v6323 = vadd.f32 %v6125, %v6275
      %v6324 = vadd.f32 %v6126, %v6278
      %v6325 = vadd.f32 %v6127, %v6283
      %v6326 = vadd.f32 %v6128, %v6286
      %v6327 = vadd.f32 %v6129, %v6291
      %v6328 = vadd.f32 %v6130, %v6294
      %v6329 = vadd.f32 %v6131, %v6299
      %v6330 = vadd.f32 %v6132, %v6302
      %v6331 = vadd.f32 %v6133, %v6307
      %v6332 = vadd.f32 %v6134, %v6310
      %v6333 = vld [vmem:[%s5936 + $0x9] sm:$0xff]
      %v6334 = vld [vmem:[%s5936 + $0x11] sm:$0xff]
      %v6335 = vld [vmem:[%s5936 + $0x29] sm:$0xff]
      %v6336 = vld [vmem:[%s5936 + $0x31] sm:$0xff]
      %v6337 = vld [vmem:[%s5936 + $0x49] sm:$0xff]
      %v6338 = vld [vmem:[%s5936 + $0x51] sm:$0xff]
      %v6339 = vld [vmem:[%s5936 + $0x69] sm:$0xff]
      %v6340 = vld [vmem:[%s5936 + $0x71] sm:$0xff]
      %v6341 = vld [vmem:[%s5936 + $0x89] sm:$0xff]
      %v6342 = vld [vmem:[%s5936 + $0x91] sm:$0xff]
      %v6343 = vld [vmem:[%s5936 + $0xa9] sm:$0xff]
      %v6344 = vld [vmem:[%s5936 + $0xb1] sm:$0xff]
      %v6345 = vld [vmem:[%s5936 + $0xc9] sm:$0xff]
      %v6346 = vld [vmem:[%s5936 + $0xd1] sm:$0xff]
      %v6347 = vld [vmem:[%s5936 + $0xe9] sm:$0xff]
      %v6348 = vld [vmem:[%s5936 + $0xf1] sm:$0xff]
      %v6349 = vld [vmem:[%s5936 + $0x109] sm:$0xff]
      %v6350 = vld [vmem:[%s5936 + $0x111] sm:$0xff]
      %v6351 = vld [vmem:[%s5936 + $0x129] sm:$0xff]
      %v6352 = vld [vmem:[%s5936 + $0x131] sm:$0xff]
      %v6353 = vpack.c.bf16 %v6334, %v6333
      %v6354 = vpack.c.bf16 %v6336, %v6335
      %v6355 = vpack.c.bf16 %v6338, %v6337
      %v6356 = vpack.c.bf16 %v6340, %v6339
      %v6357 = vpack.c.bf16 %v6342, %v6341
      %v6358 = vpack.c.bf16 %v6344, %v6343
      %v6359 = vpack.c.bf16 %v6346, %v6345
      %v6360 = vpack.c.bf16 %v6348, %v6347
      %v6361 = vpack.c.bf16 %v6350, %v6349
      %v6362 = vpack.c.bf16 %v6352, %v6351
      %s6363 = scalar_lea.vmem %s3, 92
      %v6364 = vld [vmem:[%s6363] sm:$0x7]
      %v6366 = vsel %vm1722, %v6353, 0
      %v6369 = vsel %vm1722, %v6354, 0
      %v6372 = vsel %vm1722, %v6355, 0
      %v6375 = vsel %vm1722, %v6356, 0
      %v6378 = vsel %vm1722, %v6357, 0
      %v6381 = vsel %vm1722, %v6358, 0
      %v6384 = vsel %vm1722, %v6359, 0
      %v6387 = vsel %vm1722, %v6360, 0
      %v6390 = vsel %vm1722, %v6361, 0
      %v6393 = vsel %vm1722, %v6362, 0
      %v6396 = vsel %vm1910, %v6364, 0
      %6398 = vmatprep.subr.bf16.mxu0 0
      %6399 = vmatpush1.bf16.msra.mxu0 %v6396
      %6400 = vmatprep.subr.bf16.mxu0 0
      %6401 = vmatpush1.bf16.msra.mxu0 0
      %6402 = vmatprep.subr.bf16.mxu0 0
      %6403 = vmatpush1.bf16.msra.mxu0 0
      %6404 = vmatprep.subr.bf16.mxu0 0
      %6405 = vmatpush1.bf16.msra.mxu0 0
      %6406 = vmatprep.subr.bf16.mxu0 0
      %6407 = vmatpush1.bf16.msra.mxu0 0
      %6408 = vmatprep.subr.bf16.mxu0 0
      %6409 = vmatpush1.bf16.msra.mxu0 0
      %6410 = vmatprep.subr.bf16.mxu0 0
      %6411 = vmatpush1.bf16.msra.mxu0 0
      %6412 = vmatprep.subr.bf16.mxu0 0
      %6413 = vmatpush1.bf16.msra.mxu0 0
      %6414 = vmatprep.subr.bf16.mxu0 0
      %6415 = vmatpush1.bf16.msra.mxu0 0
      %6416 = vmatprep.subr.bf16.mxu0 0
      %6417 = vmatpush1.bf16.msra.mxu0 0
      %6418 = vmatprep.subr.bf16.mxu0 0
      %6419 = vmatpush1.bf16.msra.mxu0 0
      %6420 = vmatprep.subr.bf16.mxu0 0
      %6421 = vmatpush1.bf16.msra.mxu0 0
      %6422 = vmatprep.subr.bf16.mxu0 0
      %6423 = vmatpush1.bf16.msra.mxu0 0
      %6424 = vmatprep.subr.bf16.mxu0 0
      %6425 = vmatpush1.bf16.msra.mxu0 0
      %6426 = vmatprep.subr.bf16.mxu0 0
      %6427 = vmatpush1.bf16.msra.mxu0 0
      %6428 = vmatprep.subr.bf16.mxu0 0
      %6429 = vmatpush1.bf16.msra.mxu0 0
      %6430 = vmatprep.mubr.bf16.mxu0 0
      %6431 = vmatmul.mubr.bf16.gmra.mrb[0].mxu0 %v6366
      %v6432 = vpop.f32.mrb[0].mxu0
      %v6433 = vadd.f32 0.0, %v6432
      %v6434 = vpop.f32.mrb[0].mxu0
      %v6435 = vpop.f32.mrb[0].mxu0
      %v6436 = vadd.f32 0.0, %v6435
      %v6437 = vpop.f32.mrb[0].mxu0
      %6438 = vmatprep.mubr.bf16.mxu0 0
      %6439 = vmatmul.mubr.bf16.gmra.mrb[0].mxu0 %v6369
      %v6440 = vpop.f32.mrb[0].mxu0
      %v6441 = vadd.f32 0.0, %v6440
      %v6442 = vpop.f32.mrb[0].mxu0
      %v6443 = vpop.f32.mrb[0].mxu0
      %v6444 = vadd.f32 0.0, %v6443
      %v6445 = vpop.f32.mrb[0].mxu0
      %6446 = vmatprep.mubr.bf16.mxu0 0
      %6447 = vmatmul.mubr.bf16.gmra.mrb[0].mxu0 %v6372
      %v6448 = vpop.f32.mrb[0].mxu0
      %v6449 = vadd.f32 0.0, %v6448
      %v6450 = vpop.f32.mrb[0].mxu0
      %v6451 = vpop.f32.mrb[0].mxu0
      %v6452 = vadd.f32 0.0, %v6451
      %v6453 = vpop.f32.mrb[0].mxu0
      %6454 = vmatprep.mubr.bf16.mxu0 0
      %6455 = vmatmul.mubr.bf16.gmra.mrb[0].mxu0 %v6375
      %v6456 = vpop.f32.mrb[0].mxu0
      %v6457 = vadd.f32 0.0, %v6456
      %v6458 = vpop.f32.mrb[0].mxu0
      %v6459 = vpop.f32.mrb[0].mxu0
      %v6460 = vadd.f32 0.0, %v6459
      %v6461 = vpop.f32.mrb[0].mxu0
      %6462 = vmatprep.mubr.bf16.mxu0 0
      %6463 = vmatmul.mubr.bf16.gmra.mrb[0].mxu0 %v6378
      %v6464 = vpop.f32.mrb[0].mxu0
      %v6465 = vadd.f32 0.0, %v6464
      %v6466 = vpop.f32.mrb[0].mxu0
      %v6467 = vpop.f32.mrb[0].mxu0
      %v6468 = vadd.f32 0.0, %v6467
      %v6469 = vpop.f32.mrb[0].mxu0
      %6470 = vmatprep.mubr.bf16.mxu0 0
      %6471 = vmatmul.mubr.bf16.gmra.mrb[0].mxu0 %v6381
      %v6472 = vpop.f32.mrb[0].mxu0
      %v6473 = vadd.f32 0.0, %v6472
      %v6474 = vpop.f32.mrb[0].mxu0
      %v6475 = vpop.f32.mrb[0].mxu0
      %v6476 = vadd.f32 0.0, %v6475
      %v6477 = vpop.f32.mrb[0].mxu0
      %6478 = vmatprep.mubr.bf16.mxu0 0
      %6479 = vmatmul.mubr.bf16.gmra.mrb[0].mxu0 %v6384
      %v6480 = vpop.f32.mrb[0].mxu0
      %v6481 = vadd.f32 0.0, %v6480
      %v6482 = vpop.f32.mrb[0].mxu0
      %v6483 = vpop.f32.mrb[0].mxu0
      %v6484 = vadd.f32 0.0, %v6483
      %v6485 = vpop.f32.mrb[0].mxu0
      %6486 = vmatprep.mubr.bf16.mxu0 0
      %6487 = vmatmul.mubr.bf16.gmra.mrb[0].mxu0 %v6387
      %v6488 = vpop.f32.mrb[0].mxu0
      %v6489 = vadd.f32 0.0, %v6488
      %v6490 = vpop.f32.mrb[0].mxu0
      %v6491 = vpop.f32.mrb[0].mxu0
      %v6492 = vadd.f32 0.0, %v6491
      %v6493 = vpop.f32.mrb[0].mxu0
      %6494 = vmatprep.mubr.bf16.mxu0 0
      %6495 = vmatmul.mubr.bf16.gmra.mrb[0].mxu0 %v6390
      %v6496 = vpop.f32.mrb[0].mxu0
      %v6497 = vadd.f32 0.0, %v6496
      %v6498 = vpop.f32.mrb[0].mxu0
      %v6499 = vpop.f32.mrb[0].mxu0
      %v6500 = vadd.f32 0.0, %v6499
      %v6501 = vpop.f32.mrb[0].mxu0
      %6502 = vmatprep.mubr.bf16.mxu0 0
      %6503 = vmatmul.mubr.bf16.gmra.mrb[0].mxu0 %v6393
      %v6504 = vpop.f32.mrb[0].mxu0
      %v6505 = vadd.f32 0.0, %v6504
      %v6506 = vpop.f32.mrb[0].mxu0
      %v6507 = vpop.f32.mrb[0].mxu0
      %v6508 = vadd.f32 0.0, %v6507
      %v6509 = vpop.f32.mrb[0].mxu0
      %6510 = vdwg.mxu0
      %v6511 = vadd.f32 %v6313, %v6433
      %v6512 = vadd.f32 %v6314, %v6436
      %v6513 = vadd.f32 %v6315, %v6441
      %v6514 = vadd.f32 %v6316, %v6444
      %v6515 = vadd.f32 %v6317, %v6449
      %v6516 = vadd.f32 %v6318, %v6452
      %v6517 = vadd.f32 %v6319, %v6457
      %v6518 = vadd.f32 %v6320, %v6460
      %v6519 = vadd.f32 %v6321, %v6465
      %v6520 = vadd.f32 %v6322, %v6468
      %v6521 = vadd.f32 %v6323, %v6473
      %v6522 = vadd.f32 %v6324, %v6476
      %v6523 = vadd.f32 %v6325, %v6481
      %v6524 = vadd.f32 %v6326, %v6484
      %v6525 = vadd.f32 %v6327, %v6489
      %v6526 = vadd.f32 %v6328, %v6492
      %v6527 = vadd.f32 %v6329, %v6497
      %v6528 = vadd.f32 %v6330, %v6500
      %v6529 = vadd.f32 %v6331, %v6505
      %v6530 = vadd.f32 %v6332, %v6508
      %v6531 = vld [vmem:[%s5936 + $0xa] sm:$0xff]
      %v6532 = vld [vmem:[%s5936 + $0x12] sm:$0xff]
      %v6533 = vld [vmem:[%s5936 + $0x2a] sm:$0xff]
      %v6534 = vld [vmem:[%s5936 + $0x32] sm:$0xff]
      %v6535 = vld [vmem:[%s5936 + $0x4a] sm:$0xff]
      %v6536 = vld [vmem:[%s5936 + $0x52] sm:$0xff]
      %v6537 = vld [vmem:[%s5936 + $0x6a] sm:$0xff]
      %v6538 = vld [vmem:[%s5936 + $0x72] sm:$0xff]
      %v6539 = vld [vmem:[%s5936 + $0x8a] sm:$0xff]
      %v6540 = vld [vmem:[%s5936 + $0x92] sm:$0xff]
      %v6541 = vld [vmem:[%s5936 + $0xaa] sm:$0xff]
      %v6542 = vld [vmem:[%s5936 + $0xb2] sm:$0xff]
      %v6543 = vld [vmem:[%s5936 + $0xca] sm:$0xff]
      %v6544 = vld [vmem:[%s5936 + $0xd2] sm:$0xff]
      %v6545 = vld [vmem:[%s5936 + $0xea] sm:$0xff]
      %v6546 = vld [vmem:[%s5936 + $0xf2] sm:$0xff]
      %v6547 = vld [vmem:[%s5936 + $0x10a] sm:$0xff]
      %v6548 = vld [vmem:[%s5936 + $0x112] sm:$0xff]
      %v6549 = vld [vmem:[%s5936 + $0x12a] sm:$0xff]
      %v6550 = vld [vmem:[%s5936 + $0x132] sm:$0xff]
      %v6551 = vpack.c.bf16 %v6532, %v6531
      %v6552 = vpack.c.bf16 %v6534, %v6533
      %v6553 = vpack.c.bf16 %v6536, %v6535
      %v6554 = vpack.c.bf16 %v6538, %v6537
      %v6555 = vpack.c.bf16 %v6540, %v6539
      %v6556 = vpack.c.bf16 %v6542, %v6541
      %v6557 = vpack.c.bf16 %v6544, %v6543
      %v6558 = vpack.c.bf16 %v6546, %v6545
      %v6559 = vpack.c.bf16 %v6548, %v6547
      %v6560 = vpack.c.bf16 %v6550, %v6549
      %s6561 = scalar_lea.vmem %s3, 96
      %v6562 = vld [vmem:[%s6561] sm:$0x7]
      %v6564 = vsel %vm1722, %v6551, 0
      %v6567 = vsel %vm1722, %v6552, 0
      %v6570 = vsel %vm1722, %v6553, 0
      %v6573 = vsel %vm1722, %v6554, 0
      %v6576 = vsel %vm1722, %v6555, 0
      %v6579 = vsel %vm1722, %v6556, 0
      %v6582 = vsel %vm1722, %v6557, 0
      %v6585 = vsel %vm1722, %v6558, 0
      %v6588 = vsel %vm1722, %v6559, 0
      %v6591 = vsel %vm1722, %v6560, 0
      %v6594 = vsel %vm1910, %v6562, 0
      %6596 = vmatprep.subr.bf16.mxu0 0
      %6597 = vmatpush1.bf16.msra.mxu0 %v6594
      %6598 = vmatprep.subr.bf16.mxu0 0
      %6599 = vmatpush1.bf16.msra.mxu0 0
      %6600 = vmatprep.subr.bf16.mxu0 0
      %6601 = vmatpush1.bf16.msra.mxu0 0
      %6602 = vmatprep.subr.bf16.mxu0 0
      %6603 = vmatpush1.bf16.msra.mxu0 0
      %6604 = vmatprep.subr.bf16.mxu0 0
      %6605 = vmatpush1.bf16.msra.mxu0 0
      %6606 = vmatprep.subr.bf16.mxu0 0
      %6607 = vmatpush1.bf16.msra.mxu0 0
      %6608 = vmatprep.subr.bf16.mxu0 0
      %6609 = vmatpush1.bf16.msra.mxu0 0
      %6610 = vmatprep.subr.bf16.mxu0 0
      %6611 = vmatpush1.bf16.msra.mxu0 0
      %6612 = vmatprep.subr.bf16.mxu0 0
      %6613 = vmatpush1.bf16.msra.mxu0 0
      %6614 = vmatprep.subr.bf16.mxu0 0
      %6615 = vmatpush1.bf16.msra.mxu0 0
      %6616 = vmatprep.subr.bf16.mxu0 0
      %6617 = vmatpush1.bf16.msra.mxu0 0
      %6618 = vmatprep.subr.bf16.mxu0 0
      %6619 = vmatpush1.bf16.msra.mxu0 0
      %6620 = vmatprep.subr.bf16.mxu0 0
      %6621 = vmatpush1.bf16.msra.mxu0 0
      %6622 = vmatprep.subr.bf16.mxu0 0
      %6623 = vmatpush1.bf16.msra.mxu0 0
      %6624 = vmatprep.subr.bf16.mxu0 0
      %6625 = vmatpush1.bf16.msra.mxu0 0
      %6626 = vmatprep.subr.bf16.mxu0 0
      %6627 = vmatpush1.bf16.msra.mxu0 0
      %6628 = vmatprep.mubr.bf16.mxu0 0
      %6629 = vmatmul.mubr.bf16.gmra.mrb[0].mxu0 %v6564
      %v6630 = vpop.f32.mrb[0].mxu0
      %v6631 = vadd.f32 0.0, %v6630
      %v6632 = vpop.f32.mrb[0].mxu0
      %v6633 = vpop.f32.mrb[0].mxu0
      %v6634 = vadd.f32 0.0, %v6633
      %v6635 = vpop.f32.mrb[0].mxu0
      %6636 = vmatprep.mubr.bf16.mxu0 0
      %6637 = vmatmul.mubr.bf16.gmra.mrb[0].mxu0 %v6567
      %v6638 = vpop.f32.mrb[0].mxu0
      %v6639 = vadd.f32 0.0, %v6638
      %v6640 = vpop.f32.mrb[0].mxu0
      %v6641 = vpop.f32.mrb[0].mxu0
      %v6642 = vadd.f32 0.0, %v6641
      %v6643 = vpop.f32.mrb[0].mxu0
      %6644 = vmatprep.mubr.bf16.mxu0 0
      %6645 = vmatmul.mubr.bf16.gmra.mrb[0].mxu0 %v6570
      %v6646 = vpop.f32.mrb[0].mxu0
      %v6647 = vadd.f32 0.0, %v6646
      %v6648 = vpop.f32.mrb[0].mxu0
      %v6649 = vpop.f32.mrb[0].mxu0
      %v6650 = vadd.f32 0.0, %v6649
      %v6651 = vpop.f32.mrb[0].mxu0
      %6652 = vmatprep.mubr.bf16.mxu0 0
      %6653 = vmatmul.mubr.bf16.gmra.mrb[0].mxu0 %v6573
      %v6654 = vpop.f32.mrb[0].mxu0
      %v6655 = vadd.f32 0.0, %v6654
      %v6656 = vpop.f32.mrb[0].mxu0
      %v6657 = vpop.f32.mrb[0].mxu0
      %v6658 = vadd.f32 0.0, %v6657
      %v6659 = vpop.f32.mrb[0].mxu0
      %6660 = vmatprep.mubr.bf16.mxu0 0
      %6661 = vmatmul.mubr.bf16.gmra.mrb[0].mxu0 %v6576
      %v6662 = vpop.f32.mrb[0].mxu0
      %v6663 = vadd.f32 0.0, %v6662
      %v6664 = vpop.f32.mrb[0].mxu0
      %v6665 = vpop.f32.mrb[0].mxu0
      %v6666 = vadd.f32 0.0, %v6665
      %v6667 = vpop.f32.mrb[0].mxu0
      %6668 = vmatprep.mubr.bf16.mxu0 0
      %6669 = vmatmul.mubr.bf16.gmra.mrb[0].mxu0 %v6579
      %v6670 = vpop.f32.mrb[0].mxu0
      %v6671 = vadd.f32 0.0, %v6670
      %v6672 = vpop.f32.mrb[0].mxu0
      %v6673 = vpop.f32.mrb[0].mxu0
      %v6674 = vadd.f32 0.0, %v6673
      %v6675 = vpop.f32.mrb[0].mxu0
      %6676 = vmatprep.mubr.bf16.mxu0 0
      %6677 = vmatmul.mubr.bf16.gmra.mrb[0].mxu0 %v6582
      %v6678 = vpop.f32.mrb[0].mxu0
      %v6679 = vadd.f32 0.0, %v6678
      %v6680 = vpop.f32.mrb[0].mxu0
      %v6681 = vpop.f32.mrb[0].mxu0
      %v6682 = vadd.f32 0.0, %v6681
      %v6683 = vpop.f32.mrb[0].mxu0
      %6684 = vmatprep.mubr.bf16.mxu0 0
      %6685 = vmatmul.mubr.bf16.gmra.mrb[0].mxu0 %v6585
      %v6686 = vpop.f32.mrb[0].mxu0
      %v6687 = vadd.f32 0.0, %v6686
      %v6688 = vpop.f32.mrb[0].mxu0
      %v6689 = vpop.f32.mrb[0].mxu0
      %v6690 = vadd.f32 0.0, %v6689
      %v6691 = vpop.f32.mrb[0].mxu0
      %6692 = vmatprep.mubr.bf16.mxu0 0
      %6693 = vmatmul.mubr.bf16.gmra.mrb[0].mxu0 %v6588
      %v6694 = vpop.f32.mrb[0].mxu0
      %v6695 = vadd.f32 0.0, %v6694
      %v6696 = vpop.f32.mrb[0].mxu0
      %v6697 = vpop.f32.mrb[0].mxu0
      %v6698 = vadd.f32 0.0, %v6697
      %v6699 = vpop.f32.mrb[0].mxu0
      %6700 = vmatprep.mubr.bf16.mxu0 0
      %6701 = vmatmul.mubr.bf16.gmra.mrb[0].mxu0 %v6591
      %v6702 = vpop.f32.mrb[0].mxu0
      %v6703 = vadd.f32 0.0, %v6702
      %v6704 = vpop.f32.mrb[0].mxu0
      %v6705 = vpop.f32.mrb[0].mxu0
      %v6706 = vadd.f32 0.0, %v6705
      %v6707 = vpop.f32.mrb[0].mxu0
      %6708 = vdwg.mxu0
      %v6709 = vadd.f32 %v6511, %v6631
      %v6710 = vadd.f32 %v6512, %v6634
      %v6711 = vadd.f32 %v6513, %v6639
      %v6712 = vadd.f32 %v6514, %v6642
      %v6713 = vadd.f32 %v6515, %v6647
      %v6714 = vadd.f32 %v6516, %v6650
      %v6715 = vadd.f32 %v6517, %v6655
      %v6716 = vadd.f32 %v6518, %v6658
      %v6717 = vadd.f32 %v6519, %v6663
      %v6718 = vadd.f32 %v6520, %v6666
      %v6719 = vadd.f32 %v6521, %v6671
      %v6720 = vadd.f32 %v6522, %v6674
      %v6721 = vadd.f32 %v6523, %v6679
      %v6722 = vadd.f32 %v6524, %v6682
      %v6723 = vadd.f32 %v6525, %v6687
      %v6724 = vadd.f32 %v6526, %v6690
      %v6725 = vadd.f32 %v6527, %v6695
      %v6726 = vadd.f32 %v6528, %v6698
      %v6727 = vadd.f32 %v6529, %v6703
      %v6728 = vadd.f32 %v6530, %v6706
      %v6729 = vld [vmem:[%s5936 + $0xb] sm:$0xff]
      %v6730 = vld [vmem:[%s5936 + $0x13] sm:$0xff]
      %v6731 = vld [vmem:[%s5936 + $0x2b] sm:$0xff]
      %v6732 = vld [vmem:[%s5936 + $0x33] sm:$0xff]
      %v6733 = vld [vmem:[%s5936 + $0x4b] sm:$0xff]
      %v6734 = vld [vmem:[%s5936 + $0x53] sm:$0xff]
      %v6735 = vld [vmem:[%s5936 + $0x6b] sm:$0xff]
      %v6736 = vld [vmem:[%s5936 + $0x73] sm:$0xff]
      %v6737 = vld [vmem:[%s5936 + $0x8b] sm:$0xff]
      %v6738 = vld [vmem:[%s5936 + $0x93] sm:$0xff]
      %v6739 = vld [vmem:[%s5936 + $0xab] sm:$0xff]
      %v6740 = vld [vmem:[%s5936 + $0xb3] sm:$0xff]
      %v6741 = vld [vmem:[%s5936 + $0xcb] sm:$0xff]
      %v6742 = vld [vmem:[%s5936 + $0xd3] sm:$0xff]
      %v6743 = vld [vmem:[%s5936 + $0xeb] sm:$0xff]
      %v6744 = vld [vmem:[%s5936 + $0xf3] sm:$0xff]
      %v6745 = vld [vmem:[%s5936 + $0x10b] sm:$0xff]
      %v6746 = vld [vmem:[%s5936 + $0x113] sm:$0xff]
      %v6747 = vld [vmem:[%s5936 + $0x12b] sm:$0xff]
      %v6748 = vld [vmem:[%s5936 + $0x133] sm:$0xff]
      %v6749 = vpack.c.bf16 %v6730, %v6729
      %v6750 = vpack.c.bf16 %v6732, %v6731
      %v6751 = vpack.c.bf16 %v6734, %v6733
      %v6752 = vpack.c.bf16 %v6736, %v6735
      %v6753 = vpack.c.bf16 %v6738, %v6737
      %v6754 = vpack.c.bf16 %v6740, %v6739
      %v6755 = vpack.c.bf16 %v6742, %v6741
      %v6756 = vpack.c.bf16 %v6744, %v6743
      %v6757 = vpack.c.bf16 %v6746, %v6745
      %v6758 = vpack.c.bf16 %v6748, %v6747
      %s6759 = scalar_lea.vmem %s3, 100
      %v6760 = vld [vmem:[%s6759] sm:$0x7]
      %v6762 = vsel %vm1722, %v6749, 0
      %v6765 = vsel %vm1722, %v6750, 0
      %v6768 = vsel %vm1722, %v6751, 0
      %v6771 = vsel %vm1722, %v6752, 0
      %v6774 = vsel %vm1722, %v6753, 0
      %v6777 = vsel %vm1722, %v6754, 0
      %v6780 = vsel %vm1722, %v6755, 0
      %v6783 = vsel %vm1722, %v6756, 0
      %v6786 = vsel %vm1722, %v6757, 0
      %v6789 = vsel %vm1722, %v6758, 0
      %v6792 = vsel %vm1910, %v6760, 0
      %6794 = vmatprep.subr.bf16.mxu0 0
      %6795 = vmatpush1.bf16.msra.mxu0 %v6792
      %6796 = vmatprep.subr.bf16.mxu0 0
      %6797 = vmatpush1.bf16.msra.mxu0 0
      %6798 = vmatprep.subr.bf16.mxu0 0
      %6799 = vmatpush1.bf16.msra.mxu0 0
      %6800 = vmatprep.subr.bf16.mxu0 0
      %6801 = vmatpush1.bf16.msra.mxu0 0
      %6802 = vmatprep.subr.bf16.mxu0 0
      %6803 = vmatpush1.bf16.msra.mxu0 0
      %6804 = vmatprep.subr.bf16.mxu0 0
      %6805 = vmatpush1.bf16.msra.mxu0 0
      %6806 = vmatprep.subr.bf16.mxu0 0
      %6807 = vmatpush1.bf16.msra.mxu0 0
      %6808 = vmatprep.subr.bf16.mxu0 0
      %6809 = vmatpush1.bf16.msra.mxu0 0
      %6810 = vmatprep.subr.bf16.mxu0 0
      %6811 = vmatpush1.bf16.msra.mxu0 0
      %6812 = vmatprep.subr.bf16.mxu0 0
      %6813 = vmatpush1.bf16.msra.mxu0 0
      %6814 = vmatprep.subr.bf16.mxu0 0
      %6815 = vmatpush1.bf16.msra.mxu0 0
      %6816 = vmatprep.subr.bf16.mxu0 0
      %6817 = vmatpush1.bf16.msra.mxu0 0
      %6818 = vmatprep.subr.bf16.mxu0 0
      %6819 = vmatpush1.bf16.msra.mxu0 0
      %6820 = vmatprep.subr.bf16.mxu0 0
      %6821 = vmatpush1.bf16.msra.mxu0 0
      %6822 = vmatprep.subr.bf16.mxu0 0
      %6823 = vmatpush1.bf16.msra.mxu0 0
      %6824 = vmatprep.subr.bf16.mxu0 0
      %6825 = vmatpush1.bf16.msra.mxu0 0
      %6826 = vmatprep.mubr.bf16.mxu0 0
      %6827 = vmatmul.mubr.bf16.gmra.mrb[0].mxu0 %v6762
      %v6828 = vpop.f32.mrb[0].mxu0
      %v6829 = vadd.f32 0.0, %v6828
      %v6830 = vpop.f32.mrb[0].mxu0
      %v6831 = vpop.f32.mrb[0].mxu0
      %v6832 = vadd.f32 0.0, %v6831
      %v6833 = vpop.f32.mrb[0].mxu0
      %6834 = vmatprep.mubr.bf16.mxu0 0
      %6835 = vmatmul.mubr.bf16.gmra.mrb[0].mxu0 %v6765
      %v6836 = vpop.f32.mrb[0].mxu0
      %v6837 = vadd.f32 0.0, %v6836
      %v6838 = vpop.f32.mrb[0].mxu0
      %v6839 = vpop.f32.mrb[0].mxu0
      %v6840 = vadd.f32 0.0, %v6839
      %v6841 = vpop.f32.mrb[0].mxu0
      %6842 = vmatprep.mubr.bf16.mxu0 0
      %6843 = vmatmul.mubr.bf16.gmra.mrb[0].mxu0 %v6768
      %v6844 = vpop.f32.mrb[0].mxu0
      %v6845 = vadd.f32 0.0, %v6844
      %v6846 = vpop.f32.mrb[0].mxu0
      %v6847 = vpop.f32.mrb[0].mxu0
      %v6848 = vadd.f32 0.0, %v6847
      %v6849 = vpop.f32.mrb[0].mxu0
      %6850 = vmatprep.mubr.bf16.mxu0 0
      %6851 = vmatmul.mubr.bf16.gmra.mrb[0].mxu0 %v6771
      %v6852 = vpop.f32.mrb[0].mxu0
      %v6853 = vadd.f32 0.0, %v6852
      %v6854 = vpop.f32.mrb[0].mxu0
      %v6855 = vpop.f32.mrb[0].mxu0
      %v6856 = vadd.f32 0.0, %v6855
      %v6857 = vpop.f32.mrb[0].mxu0
      %6858 = vmatprep.mubr.bf16.mxu0 0
      %6859 = vmatmul.mubr.bf16.gmra.mrb[0].mxu0 %v6774
      %v6860 = vpop.f32.mrb[0].mxu0
      %v6861 = vadd.f32 0.0, %v6860
      %v6862 = vpop.f32.mrb[0].mxu0
      %v6863 = vpop.f32.mrb[0].mxu0
      %v6864 = vadd.f32 0.0, %v6863
      %v6865 = vpop.f32.mrb[0].mxu0
      %6866 = vmatprep.mubr.bf16.mxu0 0
      %6867 = vmatmul.mubr.bf16.gmra.mrb[0].mxu0 %v6777
      %v6868 = vpop.f32.mrb[0].mxu0
      %v6869 = vadd.f32 0.0, %v6868
      %v6870 = vpop.f32.mrb[0].mxu0
      %v6871 = vpop.f32.mrb[0].mxu0
      %v6872 = vadd.f32 0.0, %v6871
      %v6873 = vpop.f32.mrb[0].mxu0
      %6874 = vmatprep.mubr.bf16.mxu0 0
      %6875 = vmatmul.mubr.bf16.gmra.mrb[0].mxu0 %v6780
      %v6876 = vpop.f32.mrb[0].mxu0
      %v6877 = vadd.f32 0.0, %v6876
      %v6878 = vpop.f32.mrb[0].mxu0
      %v6879 = vpop.f32.mrb[0].mxu0
      %v6880 = vadd.f32 0.0, %v6879
      %v6881 = vpop.f32.mrb[0].mxu0
      %6882 = vmatprep.mubr.bf16.mxu0 0
      %6883 = vmatmul.mubr.bf16.gmra.mrb[0].mxu0 %v6783
      %v6884 = vpop.f32.mrb[0].mxu0
      %v6885 = vadd.f32 0.0, %v6884
      %v6886 = vpop.f32.mrb[0].mxu0
      %v6887 = vpop.f32.mrb[0].mxu0
      %v6888 = vadd.f32 0.0, %v6887
      %v6889 = vpop.f32.mrb[0].mxu0
      %6890 = vmatprep.mubr.bf16.mxu0 0
      %6891 = vmatmul.mubr.bf16.gmra.mrb[0].mxu0 %v6786
      %v6892 = vpop.f32.mrb[0].mxu0
      %v6893 = vadd.f32 0.0, %v6892
      %v6894 = vpop.f32.mrb[0].mxu0
      %v6895 = vpop.f32.mrb[0].mxu0
      %v6896 = vadd.f32 0.0, %v6895
      %v6897 = vpop.f32.mrb[0].mxu0
      %6898 = vmatprep.mubr.bf16.mxu0 0
      %6899 = vmatmul.mubr.bf16.gmra.mrb[0].mxu0 %v6789
      %v6900 = vpop.f32.mrb[0].mxu0
      %v6901 = vadd.f32 0.0, %v6900
      %v6902 = vpop.f32.mrb[0].mxu0
      %v6903 = vpop.f32.mrb[0].mxu0
      %v6904 = vadd.f32 0.0, %v6903
      %v6905 = vpop.f32.mrb[0].mxu0
      %6906 = vdwg.mxu0
      %v6907 = vadd.f32 %v6709, %v6829
      %v6908 = vadd.f32 %v6710, %v6832
      %v6909 = vadd.f32 %v6711, %v6837
      %v6910 = vadd.f32 %v6712, %v6840
      %v6911 = vadd.f32 %v6713, %v6845
      %v6912 = vadd.f32 %v6714, %v6848
      %v6913 = vadd.f32 %v6715, %v6853
      %v6914 = vadd.f32 %v6716, %v6856
      %v6915 = vadd.f32 %v6717, %v6861
      %v6916 = vadd.f32 %v6718, %v6864
      %v6917 = vadd.f32 %v6719, %v6869
      %v6918 = vadd.f32 %v6720, %v6872
      %v6919 = vadd.f32 %v6721, %v6877
      %v6920 = vadd.f32 %v6722, %v6880
      %v6921 = vadd.f32 %v6723, %v6885
      %v6922 = vadd.f32 %v6724, %v6888
      %v6923 = vadd.f32 %v6725, %v6893
      %v6924 = vadd.f32 %v6726, %v6896
      %v6925 = vadd.f32 %v6727, %v6901
      %v6926 = vadd.f32 %v6728, %v6904
      %v6927 = vld [vmem:[%s5936 + $0xc] sm:$0xff]
      %v6928 = vld [vmem:[%s5936 + $0x14] sm:$0xff]
      %v6929 = vld [vmem:[%s5936 + $0x2c] sm:$0xff]
      %v6930 = vld [vmem:[%s5936 + $0x34] sm:$0xff]
      %v6931 = vld [vmem:[%s5936 + $0x4c] sm:$0xff]
      %v6932 = vld [vmem:[%s5936 + $0x54] sm:$0xff]
      %v6933 = vld [vmem:[%s5936 + $0x6c] sm:$0xff]
      %v6934 = vld [vmem:[%s5936 + $0x74] sm:$0xff]
      %v6935 = vld [vmem:[%s5936 + $0x8c] sm:$0xff]
      %v6936 = vld [vmem:[%s5936 + $0x94] sm:$0xff]
      %v6937 = vld [vmem:[%s5936 + $0xac] sm:$0xff]
      %v6938 = vld [vmem:[%s5936 + $0xb4] sm:$0xff]
      %v6939 = vld [vmem:[%s5936 + $0xcc] sm:$0xff]
      %v6940 = vld [vmem:[%s5936 + $0xd4] sm:$0xff]
      %v6941 = vld [vmem:[%s5936 + $0xec] sm:$0xff]
      %v6942 = vld [vmem:[%s5936 + $0xf4] sm:$0xff]
      %v6943 = vld [vmem:[%s5936 + $0x10c] sm:$0xff]
      %v6944 = vld [vmem:[%s5936 + $0x114] sm:$0xff]
      %v6945 = vld [vmem:[%s5936 + $0x12c] sm:$0xff]
      %v6946 = vld [vmem:[%s5936 + $0x134] sm:$0xff]
      %v6947 = vpack.c.bf16 %v6928, %v6927
      %v6948 = vpack.c.bf16 %v6930, %v6929
      %v6949 = vpack.c.bf16 %v6932, %v6931
      %v6950 = vpack.c.bf16 %v6934, %v6933
      %v6951 = vpack.c.bf16 %v6936, %v6935
      %v6952 = vpack.c.bf16 %v6938, %v6937
      %v6953 = vpack.c.bf16 %v6940, %v6939
      %v6954 = vpack.c.bf16 %v6942, %v6941
      %v6955 = vpack.c.bf16 %v6944, %v6943
      %v6956 = vpack.c.bf16 %v6946, %v6945
      %s6957 = scalar_lea.vmem %s3, 104
      %v6958 = vld [vmem:[%s6957] sm:$0x7]
      %v6960 = vsel %vm1722, %v6947, 0
      %v6963 = vsel %vm1722, %v6948, 0
      %v6966 = vsel %vm1722, %v6949, 0
      %v6969 = vsel %vm1722, %v6950, 0
      %v6972 = vsel %vm1722, %v6951, 0
      %v6975 = vsel %vm1722, %v6952, 0
      %v6978 = vsel %vm1722, %v6953, 0
      %v6981 = vsel %vm1722, %v6954, 0
      %v6984 = vsel %vm1722, %v6955, 0
      %v6987 = vsel %vm1722, %v6956, 0
      %v6990 = vsel %vm1910, %v6958, 0
      %6992 = vmatprep.subr.bf16.mxu0 0
      %6993 = vmatpush1.bf16.msra.mxu0 %v6990
      %6994 = vmatprep.subr.bf16.mxu0 0
      %6995 = vmatpush1.bf16.msra.mxu0 0
      %6996 = vmatprep.subr.bf16.mxu0 0
      %6997 = vmatpush1.bf16.msra.mxu0 0
      %6998 = vmatprep.subr.bf16.mxu0 0
      %6999 = vmatpush1.bf16.msra.mxu0 0
      %7000 = vmatprep.subr.bf16.mxu0 0
      %7001 = vmatpush1.bf16.msra.mxu0 0
      %7002 = vmatprep.subr.bf16.mxu0 0
      %7003 = vmatpush1.bf16.msra.mxu0 0
      %7004 = vmatprep.subr.bf16.mxu0 0
      %7005 = vmatpush1.bf16.msra.mxu0 0
      %7006 = vmatprep.subr.bf16.mxu0 0
      %7007 = vmatpush1.bf16.msra.mxu0 0
      %7008 = vmatprep.subr.bf16.mxu0 0
      %7009 = vmatpush1.bf16.msra.mxu0 0
      %7010 = vmatprep.subr.bf16.mxu0 0
      %7011 = vmatpush1.bf16.msra.mxu0 0
      %7012 = vmatprep.subr.bf16.mxu0 0
      %7013 = vmatpush1.bf16.msra.mxu0 0
      %7014 = vmatprep.subr.bf16.mxu0 0
      %7015 = vmatpush1.bf16.msra.mxu0 0
      %7016 = vmatprep.subr.bf16.mxu0 0
      %7017 = vmatpush1.bf16.msra.mxu0 0
      %7018 = vmatprep.subr.bf16.mxu0 0
      %7019 = vmatpush1.bf16.msra.mxu0 0
      %7020 = vmatprep.subr.bf16.mxu0 0
      %7021 = vmatpush1.bf16.msra.mxu0 0
      %7022 = vmatprep.subr.bf16.mxu0 0
      %7023 = vmatpush1.bf16.msra.mxu0 0
      %7024 = vmatprep.mubr.bf16.mxu0 0
      %7025 = vmatmul.mubr.bf16.gmra.mrb[0].mxu0 %v6960
      %v7026 = vpop.f32.mrb[0].mxu0
      %v7027 = vadd.f32 0.0, %v7026
      %v7028 = vpop.f32.mrb[0].mxu0
      %v7029 = vpop.f32.mrb[0].mxu0
      %v7030 = vadd.f32 0.0, %v7029
      %v7031 = vpop.f32.mrb[0].mxu0
      %7032 = vmatprep.mubr.bf16.mxu0 0
      %7033 = vmatmul.mubr.bf16.gmra.mrb[0].mxu0 %v6963
      %v7034 = vpop.f32.mrb[0].mxu0
      %v7035 = vadd.f32 0.0, %v7034
      %v7036 = vpop.f32.mrb[0].mxu0
      %v7037 = vpop.f32.mrb[0].mxu0
      %v7038 = vadd.f32 0.0, %v7037
      %v7039 = vpop.f32.mrb[0].mxu0
      %7040 = vmatprep.mubr.bf16.mxu0 0
      %7041 = vmatmul.mubr.bf16.gmra.mrb[0].mxu0 %v6966
      %v7042 = vpop.f32.mrb[0].mxu0
      %v7043 = vadd.f32 0.0, %v7042
      %v7044 = vpop.f32.mrb[0].mxu0
      %v7045 = vpop.f32.mrb[0].mxu0
      %v7046 = vadd.f32 0.0, %v7045
      %v7047 = vpop.f32.mrb[0].mxu0
      %7048 = vmatprep.mubr.bf16.mxu0 0
      %7049 = vmatmul.mubr.bf16.gmra.mrb[0].mxu0 %v6969
      %v7050 = vpop.f32.mrb[0].mxu0
      %v7051 = vadd.f32 0.0, %v7050
      %v7052 = vpop.f32.mrb[0].mxu0
      %v7053 = vpop.f32.mrb[0].mxu0
      %v7054 = vadd.f32 0.0, %v7053
      %v7055 = vpop.f32.mrb[0].mxu0
      %7056 = vmatprep.mubr.bf16.mxu0 0
      %7057 = vmatmul.mubr.bf16.gmra.mrb[0].mxu0 %v6972
      %v7058 = vpop.f32.mrb[0].mxu0
      %v7059 = vadd.f32 0.0, %v7058
      %v7060 = vpop.f32.mrb[0].mxu0
      %v7061 = vpop.f32.mrb[0].mxu0
      %v7062 = vadd.f32 0.0, %v7061
      %v7063 = vpop.f32.mrb[0].mxu0
      %7064 = vmatprep.mubr.bf16.mxu0 0
      %7065 = vmatmul.mubr.bf16.gmra.mrb[0].mxu0 %v6975
      %v7066 = vpop.f32.mrb[0].mxu0
      %v7067 = vadd.f32 0.0, %v7066
      %v7068 = vpop.f32.mrb[0].mxu0
      %v7069 = vpop.f32.mrb[0].mxu0
      %v7070 = vadd.f32 0.0, %v7069
      %v7071 = vpop.f32.mrb[0].mxu0
      %7072 = vmatprep.mubr.bf16.mxu0 0
      %7073 = vmatmul.mubr.bf16.gmra.mrb[0].mxu0 %v6978
      %v7074 = vpop.f32.mrb[0].mxu0
      %v7075 = vadd.f32 0.0, %v7074
      %v7076 = vpop.f32.mrb[0].mxu0
      %v7077 = vpop.f32.mrb[0].mxu0
      %v7078 = vadd.f32 0.0, %v7077
      %v7079 = vpop.f32.mrb[0].mxu0
      %7080 = vmatprep.mubr.bf16.mxu0 0
      %7081 = vmatmul.mubr.bf16.gmra.mrb[0].mxu0 %v6981
      %v7082 = vpop.f32.mrb[0].mxu0
      %v7083 = vadd.f32 0.0, %v7082
      %v7084 = vpop.f32.mrb[0].mxu0
      %v7085 = vpop.f32.mrb[0].mxu0
      %v7086 = vadd.f32 0.0, %v7085
      %v7087 = vpop.f32.mrb[0].mxu0
      %7088 = vmatprep.mubr.bf16.mxu0 0
      %7089 = vmatmul.mubr.bf16.gmra.mrb[0].mxu0 %v6984
      %v7090 = vpop.f32.mrb[0].mxu0
      %v7091 = vadd.f32 0.0, %v7090
      %v7092 = vpop.f32.mrb[0].mxu0
      %v7093 = vpop.f32.mrb[0].mxu0
      %v7094 = vadd.f32 0.0, %v7093
      %v7095 = vpop.f32.mrb[0].mxu0
      %7096 = vmatprep.mubr.bf16.mxu0 0
      %7097 = vmatmul.mubr.bf16.gmra.mrb[0].mxu0 %v6987
      %v7098 = vpop.f32.mrb[0].mxu0
      %v7099 = vadd.f32 0.0, %v7098
      %v7100 = vpop.f32.mrb[0].mxu0
      %v7101 = vpop.f32.mrb[0].mxu0
      %v7102 = vadd.f32 0.0, %v7101
      %v7103 = vpop.f32.mrb[0].mxu0
      %7104 = vdwg.mxu0
      %v7105 = vadd.f32 %v6907, %v7027
      %v7106 = vadd.f32 %v6908, %v7030
      %v7107 = vadd.f32 %v6909, %v7035
      %v7108 = vadd.f32 %v6910, %v7038
      %v7109 = vadd.f32 %v6911, %v7043
      %v7110 = vadd.f32 %v6912, %v7046
      %v7111 = vadd.f32 %v6913, %v7051
      %v7112 = vadd.f32 %v6914, %v7054
      %v7113 = vadd.f32 %v6915, %v7059
      %v7114 = vadd.f32 %v6916, %v7062
      %v7115 = vadd.f32 %v6917, %v7067
      %v7116 = vadd.f32 %v6918, %v7070
      %v7117 = vadd.f32 %v6919, %v7075
      %v7118 = vadd.f32 %v6920, %v7078
      %v7119 = vadd.f32 %v6921, %v7083
      %v7120 = vadd.f32 %v6922, %v7086
      %v7121 = vadd.f32 %v6923, %v7091
      %v7122 = vadd.f32 %v6924, %v7094
      %v7123 = vadd.f32 %v6925, %v7099
      %v7124 = vadd.f32 %v6926, %v7102
      %v7125 = vld [vmem:[%s5936 + $0xd] sm:$0xff]
      %v7126 = vld [vmem:[%s5936 + $0x15] sm:$0xff]
      %v7127 = vld [vmem:[%s5936 + $0x2d] sm:$0xff]
      %v7128 = vld [vmem:[%s5936 + $0x35] sm:$0xff]
      %v7129 = vld [vmem:[%s5936 + $0x4d] sm:$0xff]
      %v7130 = vld [vmem:[%s5936 + $0x55] sm:$0xff]
      %v7131 = vld [vmem:[%s5936 + $0x6d] sm:$0xff]
      %v7132 = vld [vmem:[%s5936 + $0x75] sm:$0xff]
      %v7133 = vld [vmem:[%s5936 + $0x8d] sm:$0xff]
      %v7134 = vld [vmem:[%s5936 + $0x95] sm:$0xff]
      %v7135 = vld [vmem:[%s5936 + $0xad] sm:$0xff]
      %v7136 = vld [vmem:[%s5936 + $0xb5] sm:$0xff]
      %v7137 = vld [vmem:[%s5936 + $0xcd] sm:$0xff]
      %v7138 = vld [vmem:[%s5936 + $0xd5] sm:$0xff]
      %v7139 = vld [vmem:[%s5936 + $0xed] sm:$0xff]
      %v7140 = vld [vmem:[%s5936 + $0xf5] sm:$0xff]
      %v7141 = vld [vmem:[%s5936 + $0x10d] sm:$0xff]
      %v7142 = vld [vmem:[%s5936 + $0x115] sm:$0xff]
      %v7143 = vld [vmem:[%s5936 + $0x12d] sm:$0xff]
      %v7144 = vld [vmem:[%s5936 + $0x135] sm:$0xff]
      %v7145 = vpack.c.bf16 %v7126, %v7125
      %v7146 = vpack.c.bf16 %v7128, %v7127
      %v7147 = vpack.c.bf16 %v7130, %v7129
      %v7148 = vpack.c.bf16 %v7132, %v7131
      %v7149 = vpack.c.bf16 %v7134, %v7133
      %v7150 = vpack.c.bf16 %v7136, %v7135
      %v7151 = vpack.c.bf16 %v7138, %v7137
      %v7152 = vpack.c.bf16 %v7140, %v7139
      %v7153 = vpack.c.bf16 %v7142, %v7141
      %v7154 = vpack.c.bf16 %v7144, %v7143
      %s7155 = scalar_lea.vmem %s3, 108
      %v7156 = vld [vmem:[%s7155] sm:$0x7]
      %v7158 = vsel %vm1722, %v7145, 0
      %v7161 = vsel %vm1722, %v7146, 0
      %v7164 = vsel %vm1722, %v7147, 0
      %v7167 = vsel %vm1722, %v7148, 0
      %v7170 = vsel %vm1722, %v7149, 0
      %v7173 = vsel %vm1722, %v7150, 0
      %v7176 = vsel %vm1722, %v7151, 0
      %v7179 = vsel %vm1722, %v7152, 0
      %v7182 = vsel %vm1722, %v7153, 0
      %v7185 = vsel %vm1722, %v7154, 0
      %v7188 = vsel %vm1910, %v7156, 0
      %7190 = vmatprep.subr.bf16.mxu0 0
      %7191 = vmatpush1.bf16.msra.mxu0 %v7188
      %7192 = vmatprep.subr.bf16.mxu0 0
      %7193 = vmatpush1.bf16.msra.mxu0 0
      %7194 = vmatprep.subr.bf16.mxu0 0
      %7195 = vmatpush1.bf16.msra.mxu0 0
      %7196 = vmatprep.subr.bf16.mxu0 0
      %7197 = vmatpush1.bf16.msra.mxu0 0
      %7198 = vmatprep.subr.bf16.mxu0 0
      %7199 = vmatpush1.bf16.msra.mxu0 0
      %7200 = vmatprep.subr.bf16.mxu0 0
      %7201 = vmatpush1.bf16.msra.mxu0 0
      %7202 = vmatprep.subr.bf16.mxu0 0
      %7203 = vmatpush1.bf16.msra.mxu0 0
      %7204 = vmatprep.subr.bf16.mxu0 0
      %7205 = vmatpush1.bf16.msra.mxu0 0
      %7206 = vmatprep.subr.bf16.mxu0 0
      %7207 = vmatpush1.bf16.msra.mxu0 0
      %7208 = vmatprep.subr.bf16.mxu0 0
      %7209 = vmatpush1.bf16.msra.mxu0 0
      %7210 = vmatprep.subr.bf16.mxu0 0
      %7211 = vmatpush1.bf16.msra.mxu0 0
      %7212 = vmatprep.subr.bf16.mxu0 0
      %7213 = vmatpush1.bf16.msra.mxu0 0
      %7214 = vmatprep.subr.bf16.mxu0 0
      %7215 = vmatpush1.bf16.msra.mxu0 0
      %7216 = vmatprep.subr.bf16.mxu0 0
      %7217 = vmatpush1.bf16.msra.mxu0 0
      %7218 = vmatprep.subr.bf16.mxu0 0
      %7219 = vmatpush1.bf16.msra.mxu0 0
      %7220 = vmatprep.subr.bf16.mxu0 0
      %7221 = vmatpush1.bf16.msra.mxu0 0
      %7222 = vmatprep.mubr.bf16.mxu0 0
      %7223 = vmatmul.mubr.bf16.gmra.mrb[0].mxu0 %v7158
      %v7224 = vpop.f32.mrb[0].mxu0
      %v7225 = vadd.f32 0.0, %v7224
      %v7226 = vpop.f32.mrb[0].mxu0
      %v7227 = vpop.f32.mrb[0].mxu0
      %v7228 = vadd.f32 0.0, %v7227
      %v7229 = vpop.f32.mrb[0].mxu0
      %7230 = vmatprep.mubr.bf16.mxu0 0
      %7231 = vmatmul.mubr.bf16.gmra.mrb[0].mxu0 %v7161
      %v7232 = vpop.f32.mrb[0].mxu0
      %v7233 = vadd.f32 0.0, %v7232
      %v7234 = vpop.f32.mrb[0].mxu0
      %v7235 = vpop.f32.mrb[0].mxu0
      %v7236 = vadd.f32 0.0, %v7235
      %v7237 = vpop.f32.mrb[0].mxu0
      %7238 = vmatprep.mubr.bf16.mxu0 0
      %7239 = vmatmul.mubr.bf16.gmra.mrb[0].mxu0 %v7164
      %v7240 = vpop.f32.mrb[0].mxu0
      %v7241 = vadd.f32 0.0, %v7240
      %v7242 = vpop.f32.mrb[0].mxu0
      %v7243 = vpop.f32.mrb[0].mxu0
      %v7244 = vadd.f32 0.0, %v7243
      %v7245 = vpop.f32.mrb[0].mxu0
      %7246 = vmatprep.mubr.bf16.mxu0 0
      %7247 = vmatmul.mubr.bf16.gmra.mrb[0].mxu0 %v7167
      %v7248 = vpop.f32.mrb[0].mxu0
      %v7249 = vadd.f32 0.0, %v7248
      %v7250 = vpop.f32.mrb[0].mxu0
      %v7251 = vpop.f32.mrb[0].mxu0
      %v7252 = vadd.f32 0.0, %v7251
      %v7253 = vpop.f32.mrb[0].mxu0
      %7254 = vmatprep.mubr.bf16.mxu0 0
      %7255 = vmatmul.mubr.bf16.gmra.mrb[0].mxu0 %v7170
      %v7256 = vpop.f32.mrb[0].mxu0
      %v7257 = vadd.f32 0.0, %v7256
      %v7258 = vpop.f32.mrb[0].mxu0
      %v7259 = vpop.f32.mrb[0].mxu0
      %v7260 = vadd.f32 0.0, %v7259
      %v7261 = vpop.f32.mrb[0].mxu0
      %7262 = vmatprep.mubr.bf16.mxu0 0
      %7263 = vmatmul.mubr.bf16.gmra.mrb[0].mxu0 %v7173
      %v7264 = vpop.f32.mrb[0].mxu0
      %v7265 = vadd.f32 0.0, %v7264
      %v7266 = vpop.f32.mrb[0].mxu0
      %v7267 = vpop.f32.mrb[0].mxu0
      %v7268 = vadd.f32 0.0, %v7267
      %v7269 = vpop.f32.mrb[0].mxu0
      %7270 = vmatprep.mubr.bf16.mxu0 0
      %7271 = vmatmul.mubr.bf16.gmra.mrb[0].mxu0 %v7176
      %v7272 = vpop.f32.mrb[0].mxu0
      %v7273 = vadd.f32 0.0, %v7272
      %v7274 = vpop.f32.mrb[0].mxu0
      %v7275 = vpop.f32.mrb[0].mxu0
      %v7276 = vadd.f32 0.0, %v7275
      %v7277 = vpop.f32.mrb[0].mxu0
      %7278 = vmatprep.mubr.bf16.mxu0 0
      %7279 = vmatmul.mubr.bf16.gmra.mrb[0].mxu0 %v7179
      %v7280 = vpop.f32.mrb[0].mxu0
      %v7281 = vadd.f32 0.0, %v7280
      %v7282 = vpop.f32.mrb[0].mxu0
      %v7283 = vpop.f32.mrb[0].mxu0
      %v7284 = vadd.f32 0.0, %v7283
      %v7285 = vpop.f32.mrb[0].mxu0
      %7286 = vmatprep.mubr.bf16.mxu0 0
      %7287 = vmatmul.mubr.bf16.gmra.mrb[0].mxu0 %v7182
      %v7288 = vpop.f32.mrb[0].mxu0
      %v7289 = vadd.f32 0.0, %v7288
      %v7290 = vpop.f32.mrb[0].mxu0
      %v7291 = vpop.f32.mrb[0].mxu0
      %v7292 = vadd.f32 0.0, %v7291
      %v7293 = vpop.f32.mrb[0].mxu0
      %7294 = vmatprep.mubr.bf16.mxu0 0
      %7295 = vmatmul.mubr.bf16.gmra.mrb[0].mxu0 %v7185
      %v7296 = vpop.f32.mrb[0].mxu0
      %v7297 = vadd.f32 0.0, %v7296
      %v7298 = vpop.f32.mrb[0].mxu0
      %v7299 = vpop.f32.mrb[0].mxu0
      %v7300 = vadd.f32 0.0, %v7299
      %v7301 = vpop.f32.mrb[0].mxu0
      %7302 = vdwg.mxu0
      %v7303 = vadd.f32 %v7105, %v7225
      %v7304 = vadd.f32 %v7106, %v7228
      %v7305 = vadd.f32 %v7107, %v7233
      %v7306 = vadd.f32 %v7108, %v7236
      %v7307 = vadd.f32 %v7109, %v7241
      %v7308 = vadd.f32 %v7110, %v7244
      %v7309 = vadd.f32 %v7111, %v7249
      %v7310 = vadd.f32 %v7112, %v7252
      %v7311 = vadd.f32 %v7113, %v7257
      %v7312 = vadd.f32 %v7114, %v7260
      %v7313 = vadd.f32 %v7115, %v7265
      %v7314 = vadd.f32 %v7116, %v7268
      %v7315 = vadd.f32 %v7117, %v7273
      %v7316 = vadd.f32 %v7118, %v7276
      %v7317 = vadd.f32 %v7119, %v7281
      %v7318 = vadd.f32 %v7120, %v7284
      %v7319 = vadd.f32 %v7121, %v7289
      %v7320 = vadd.f32 %v7122, %v7292
      %v7321 = vadd.f32 %v7123, %v7297
      %v7322 = vadd.f32 %v7124, %v7300
      %s7323 = scalar_lea.vmem [#allocation2], 128
      %v7324 = vld [vmem:[%s7323 + $0x7] sm:$0xff]
      %v7325 = vld [vmem:[%s7323 + $0xf] sm:$0xff]
      %v7326 = vld [vmem:[%s7323 + $0x27] sm:$0xff]
      %v7327 = vld [vmem:[%s7323 + $0x2f] sm:$0xff]
      %v7328 = vld [vmem:[%s7323 + $0x47] sm:$0xff]
      %v7329 = vld [vmem:[%s7323 + $0x4f] sm:$0xff]
      %v7330 = vld [vmem:[%s7323 + $0x67] sm:$0xff]
      %v7331 = vld [vmem:[%s7323 + $0x6f] sm:$0xff]
      %v7332 = vld [vmem:[%s7323 + $0x87] sm:$0xff]
      %v7333 = vld [vmem:[%s7323 + $0x8f] sm:$0xff]
      %v7334 = vld [vmem:[%s7323 + $0xa7] sm:$0xff]
      %v7335 = vld [vmem:[%s7323 + $0xaf] sm:$0xff]
      %v7336 = vld [vmem:[%s7323 + $0xc7] sm:$0xff]
      %v7337 = vld [vmem:[%s7323 + $0xcf] sm:$0xff]
      %v7338 = vld [vmem:[%s7323 + $0xe7] sm:$0xff]
      %v7339 = vld [vmem:[%s7323 + $0xef] sm:$0xff]
      %v7340 = vld [vmem:[%s7323 + $0x107] sm:$0xff]
      %v7341 = vld [vmem:[%s7323 + $0x10f] sm:$0xff]
      %v7342 = vld [vmem:[%s7323 + $0x127] sm:$0xff]
      %v7343 = vld [vmem:[%s7323 + $0x12f] sm:$0xff]
      %v7344 = vpack.c.bf16 %v7325, %v7324
      %v7345 = vpack.c.bf16 %v7327, %v7326
      %v7346 = vpack.c.bf16 %v7329, %v7328
      %v7347 = vpack.c.bf16 %v7331, %v7330
      %v7348 = vpack.c.bf16 %v7333, %v7332
      %v7349 = vpack.c.bf16 %v7335, %v7334
      %v7350 = vpack.c.bf16 %v7337, %v7336
      %v7351 = vpack.c.bf16 %v7339, %v7338
      %v7352 = vpack.c.bf16 %v7341, %v7340
      %v7353 = vpack.c.bf16 %v7343, %v7342
      %s7354 = scalar_lea.vmem %s3, 112
      %v7355 = vld [vmem:[%s7354] sm:$0x7]
      %v7357 = vsel %vm1722, %v7344, 0
      %v7360 = vsel %vm1722, %v7345, 0
      %v7363 = vsel %vm1722, %v7346, 0
      %v7366 = vsel %vm1722, %v7347, 0
      %v7369 = vsel %vm1722, %v7348, 0
      %v7372 = vsel %vm1722, %v7349, 0
      %v7375 = vsel %vm1722, %v7350, 0
      %v7378 = vsel %vm1722, %v7351, 0
      %v7381 = vsel %vm1722, %v7352, 0
      %v7384 = vsel %vm1722, %v7353, 0
      %v7387 = vsel %vm1910, %v7355, 0
      %7389 = vmatprep.subr.bf16.mxu0 0
      %7390 = vmatpush1.bf16.msra.mxu0 %v7387
      %7391 = vmatprep.subr.bf16.mxu0 0
      %7392 = vmatpush1.bf16.msra.mxu0 0
      %7393 = vmatprep.subr.bf16.mxu0 0
      %7394 = vmatpush1.bf16.msra.mxu0 0
      %7395 = vmatprep.subr.bf16.mxu0 0
      %7396 = vmatpush1.bf16.msra.mxu0 0
      %7397 = vmatprep.subr.bf16.mxu0 0
      %7398 = vmatpush1.bf16.msra.mxu0 0
      %7399 = vmatprep.subr.bf16.mxu0 0
      %7400 = vmatpush1.bf16.msra.mxu0 0
      %7401 = vmatprep.subr.bf16.mxu0 0
      %7402 = vmatpush1.bf16.msra.mxu0 0
      %7403 = vmatprep.subr.bf16.mxu0 0
      %7404 = vmatpush1.bf16.msra.mxu0 0
      %7405 = vmatprep.subr.bf16.mxu0 0
      %7406 = vmatpush1.bf16.msra.mxu0 0
      %7407 = vmatprep.subr.bf16.mxu0 0
      %7408 = vmatpush1.bf16.msra.mxu0 0
      %7409 = vmatprep.subr.bf16.mxu0 0
      %7410 = vmatpush1.bf16.msra.mxu0 0
      %7411 = vmatprep.subr.bf16.mxu0 0
      %7412 = vmatpush1.bf16.msra.mxu0 0
      %7413 = vmatprep.subr.bf16.mxu0 0
      %7414 = vmatpush1.bf16.msra.mxu0 0
      %7415 = vmatprep.subr.bf16.mxu0 0
      %7416 = vmatpush1.bf16.msra.mxu0 0
      %7417 = vmatprep.subr.bf16.mxu0 0
      %7418 = vmatpush1.bf16.msra.mxu0 0
      %7419 = vmatprep.subr.bf16.mxu0 0
      %7420 = vmatpush1.bf16.msra.mxu0 0
      %7421 = vmatprep.mubr.bf16.mxu0 0
      %7422 = vmatmul.mubr.bf16.gmra.mrb[0].mxu0 %v7357
      %v7423 = vpop.f32.mrb[0].mxu0
      %v7424 = vadd.f32 0.0, %v7423
      %v7425 = vpop.f32.mrb[0].mxu0
      %v7426 = vpop.f32.mrb[0].mxu0
      %v7427 = vadd.f32 0.0, %v7426
      %v7428 = vpop.f32.mrb[0].mxu0
      %7429 = vmatprep.mubr.bf16.mxu0 0
      %7430 = vmatmul.mubr.bf16.gmra.mrb[0].mxu0 %v7360
      %v7431 = vpop.f32.mrb[0].mxu0
      %v7432 = vadd.f32 0.0, %v7431
      %v7433 = vpop.f32.mrb[0].mxu0
      %v7434 = vpop.f32.mrb[0].mxu0
      %v7435 = vadd.f32 0.0, %v7434
      %v7436 = vpop.f32.mrb[0].mxu0
      %7437 = vmatprep.mubr.bf16.mxu0 0
      %7438 = vmatmul.mubr.bf16.gmra.mrb[0].mxu0 %v7363
      %v7439 = vpop.f32.mrb[0].mxu0
      %v7440 = vadd.f32 0.0, %v7439
      %v7441 = vpop.f32.mrb[0].mxu0
      %v7442 = vpop.f32.mrb[0].mxu0
      %v7443 = vadd.f32 0.0, %v7442
      %v7444 = vpop.f32.mrb[0].mxu0
      %7445 = vmatprep.mubr.bf16.mxu0 0
      %7446 = vmatmul.mubr.bf16.gmra.mrb[0].mxu0 %v7366
      %v7447 = vpop.f32.mrb[0].mxu0
      %v7448 = vadd.f32 0.0, %v7447
      %v7449 = vpop.f32.mrb[0].mxu0
      %v7450 = vpop.f32.mrb[0].mxu0
      %v7451 = vadd.f32 0.0, %v7450
      %v7452 = vpop.f32.mrb[0].mxu0
      %7453 = vmatprep.mubr.bf16.mxu0 0
      %7454 = vmatmul.mubr.bf16.gmra.mrb[0].mxu0 %v7369
      %v7455 = vpop.f32.mrb[0].mxu0
      %v7456 = vadd.f32 0.0, %v7455
      %v7457 = vpop.f32.mrb[0].mxu0
      %v7458 = vpop.f32.mrb[0].mxu0
      %v7459 = vadd.f32 0.0, %v7458
      %v7460 = vpop.f32.mrb[0].mxu0
      %7461 = vmatprep.mubr.bf16.mxu0 0
      %7462 = vmatmul.mubr.bf16.gmra.mrb[0].mxu0 %v7372
      %v7463 = vpop.f32.mrb[0].mxu0
      %v7464 = vadd.f32 0.0, %v7463
      %v7465 = vpop.f32.mrb[0].mxu0
      %v7466 = vpop.f32.mrb[0].mxu0
      %v7467 = vadd.f32 0.0, %v7466
      %v7468 = vpop.f32.mrb[0].mxu0
      %7469 = vmatprep.mubr.bf16.mxu0 0
      %7470 = vmatmul.mubr.bf16.gmra.mrb[0].mxu0 %v7375
      %v7471 = vpop.f32.mrb[0].mxu0
      %v7472 = vadd.f32 0.0, %v7471
      %v7473 = vpop.f32.mrb[0].mxu0
      %v7474 = vpop.f32.mrb[0].mxu0
      %v7475 = vadd.f32 0.0, %v7474
      %v7476 = vpop.f32.mrb[0].mxu0
      %7477 = vmatprep.mubr.bf16.mxu0 0
      %7478 = vmatmul.mubr.bf16.gmra.mrb[0].mxu0 %v7378
      %v7479 = vpop.f32.mrb[0].mxu0
      %v7480 = vadd.f32 0.0, %v7479
      %v7481 = vpop.f32.mrb[0].mxu0
      %v7482 = vpop.f32.mrb[0].mxu0
      %v7483 = vadd.f32 0.0, %v7482
      %v7484 = vpop.f32.mrb[0].mxu0
      %7485 = vmatprep.mubr.bf16.mxu0 0
      %7486 = vmatmul.mubr.bf16.gmra.mrb[0].mxu0 %v7381
      %v7487 = vpop.f32.mrb[0].mxu0
      %v7488 = vadd.f32 0.0, %v7487
      %v7489 = vpop.f32.mrb[0].mxu0
      %v7490 = vpop.f32.mrb[0].mxu0
      %v7491 = vadd.f32 0.0, %v7490
      %v7492 = vpop.f32.mrb[0].mxu0
      %7493 = vmatprep.mubr.bf16.mxu0 0
      %7494 = vmatmul.mubr.bf16.gmra.mrb[0].mxu0 %v7384
      %v7495 = vpop.f32.mrb[0].mxu0
      %v7496 = vadd.f32 0.0, %v7495
      %v7497 = vpop.f32.mrb[0].mxu0
      %v7498 = vpop.f32.mrb[0].mxu0
      %v7499 = vadd.f32 0.0, %v7498
      %v7500 = vpop.f32.mrb[0].mxu0
      %7501 = vdwg.mxu0
      %v7502 = vadd.f32 %v7303, %v7424
      %v7503 = vadd.f32 %v7304, %v7427
      %v7504 = vadd.f32 %v7305, %v7432
      %v7505 = vadd.f32 %v7306, %v7435
      %v7506 = vadd.f32 %v7307, %v7440
      %v7507 = vadd.f32 %v7308, %v7443
      %v7508 = vadd.f32 %v7309, %v7448
      %v7509 = vadd.f32 %v7310, %v7451
      %v7510 = vadd.f32 %v7311, %v7456
      %v7511 = vadd.f32 %v7312, %v7459
      %v7512 = vadd.f32 %v7313, %v7464
      %v7513 = vadd.f32 %v7314, %v7467
      %v7514 = vadd.f32 %v7315, %v7472
      %v7515 = vadd.f32 %v7316, %v7475
      %v7516 = vadd.f32 %v7317, %v7480
      %v7517 = vadd.f32 %v7318, %v7483
      %v7518 = vadd.f32 %v7319, %v7488
      %v7519 = vadd.f32 %v7320, %v7491
      %v7520 = vadd.f32 %v7321, %v7496
      %v7521 = vadd.f32 %v7322, %v7499
      %v7522 = vld [vmem:[%s7323 + $0x8] sm:$0xff]
      %v7523 = vld [vmem:[%s7323 + $0x10] sm:$0xff]
      %v7524 = vld [vmem:[%s7323 + $0x28] sm:$0xff]
      %v7525 = vld [vmem:[%s7323 + $0x30] sm:$0xff]
      %v7526 = vld [vmem:[%s7323 + $0x48] sm:$0xff]
      %v7527 = vld [vmem:[%s7323 + $0x50] sm:$0xff]
      %v7528 = vld [vmem:[%s7323 + $0x68] sm:$0xff]
      %v7529 = vld [vmem:[%s7323 + $0x70] sm:$0xff]
      %v7530 = vld [vmem:[%s7323 + $0x88] sm:$0xff]
      %v7531 = vld [vmem:[%s7323 + $0x90] sm:$0xff]
      %v7532 = vld [vmem:[%s7323 + $0xa8] sm:$0xff]
      %v7533 = vld [vmem:[%s7323 + $0xb0] sm:$0xff]
      %v7534 = vld [vmem:[%s7323 + $0xc8] sm:$0xff]
      %v7535 = vld [vmem:[%s7323 + $0xd0] sm:$0xff]
      %v7536 = vld [vmem:[%s7323 + $0xe8] sm:$0xff]
      %v7537 = vld [vmem:[%s7323 + $0xf0] sm:$0xff]
      %v7538 = vld [vmem:[%s7323 + $0x108] sm:$0xff]
      %v7539 = vld [vmem:[%s7323 + $0x110] sm:$0xff]
      %v7540 = vld [vmem:[%s7323 + $0x128] sm:$0xff]
      %v7541 = vld [vmem:[%s7323 + $0x130] sm:$0xff]
      %v7542 = vpack.c.bf16 %v7523, %v7522
      %v7543 = vpack.c.bf16 %v7525, %v7524
      %v7544 = vpack.c.bf16 %v7527, %v7526
      %v7545 = vpack.c.bf16 %v7529, %v7528
      %v7546 = vpack.c.bf16 %v7531, %v7530
      %v7547 = vpack.c.bf16 %v7533, %v7532
      %v7548 = vpack.c.bf16 %v7535, %v7534
      %v7549 = vpack.c.bf16 %v7537, %v7536
      %v7550 = vpack.c.bf16 %v7539, %v7538
      %v7551 = vpack.c.bf16 %v7541, %v7540
      %s7552 = scalar_lea.vmem %s3, 116
      %v7553 = vld [vmem:[%s7552] sm:$0x7]
      %v7555 = vsel %vm1722, %v7542, 0
      %v7558 = vsel %vm1722, %v7543, 0
      %v7561 = vsel %vm1722, %v7544, 0
      %v7564 = vsel %vm1722, %v7545, 0
      %v7567 = vsel %vm1722, %v7546, 0
      %v7570 = vsel %vm1722, %v7547, 0
      %v7573 = vsel %vm1722, %v7548, 0
      %v7576 = vsel %vm1722, %v7549, 0
      %v7579 = vsel %vm1722, %v7550, 0
      %v7582 = vsel %vm1722, %v7551, 0
      %v7585 = vsel %vm1910, %v7553, 0
      %7587 = vmatprep.subr.bf16.mxu0 0
      %7588 = vmatpush1.bf16.msra.mxu0 %v7585
      %7589 = vmatprep.subr.bf16.mxu0 0
      %7590 = vmatpush1.bf16.msra.mxu0 0
      %7591 = vmatprep.subr.bf16.mxu0 0
      %7592 = vmatpush1.bf16.msra.mxu0 0
      %7593 = vmatprep.subr.bf16.mxu0 0
      %7594 = vmatpush1.bf16.msra.mxu0 0
      %7595 = vmatprep.subr.bf16.mxu0 0
      %7596 = vmatpush1.bf16.msra.mxu0 0
      %7597 = vmatprep.subr.bf16.mxu0 0
      %7598 = vmatpush1.bf16.msra.mxu0 0
      %7599 = vmatprep.subr.bf16.mxu0 0
      %7600 = vmatpush1.bf16.msra.mxu0 0
      %7601 = vmatprep.subr.bf16.mxu0 0
      %7602 = vmatpush1.bf16.msra.mxu0 0
      %7603 = vmatprep.subr.bf16.mxu0 0
      %7604 = vmatpush1.bf16.msra.mxu0 0
      %7605 = vmatprep.subr.bf16.mxu0 0
      %7606 = vmatpush1.bf16.msra.mxu0 0
      %7607 = vmatprep.subr.bf16.mxu0 0
      %7608 = vmatpush1.bf16.msra.mxu0 0
      %7609 = vmatprep.subr.bf16.mxu0 0
      %7610 = vmatpush1.bf16.msra.mxu0 0
      %7611 = vmatprep.subr.bf16.mxu0 0
      %7612 = vmatpush1.bf16.msra.mxu0 0
      %7613 = vmatprep.subr.bf16.mxu0 0
      %7614 = vmatpush1.bf16.msra.mxu0 0
      %7615 = vmatprep.subr.bf16.mxu0 0
      %7616 = vmatpush1.bf16.msra.mxu0 0
      %7617 = vmatprep.subr.bf16.mxu0 0
      %7618 = vmatpush1.bf16.msra.mxu0 0
      %7619 = vmatprep.mubr.bf16.mxu0 0
      %7620 = vmatmul.mubr.bf16.gmra.mrb[0].mxu0 %v7555
      %v7621 = vpop.f32.mrb[0].mxu0
      %v7622 = vadd.f32 0.0, %v7621
      %v7623 = vpop.f32.mrb[0].mxu0
      %v7624 = vpop.f32.mrb[0].mxu0
      %v7625 = vadd.f32 0.0, %v7624
      %v7626 = vpop.f32.mrb[0].mxu0
      %7627 = vmatprep.mubr.bf16.mxu0 0
      %7628 = vmatmul.mubr.bf16.gmra.mrb[0].mxu0 %v7558
      %v7629 = vpop.f32.mrb[0].mxu0
      %v7630 = vadd.f32 0.0, %v7629
      %v7631 = vpop.f32.mrb[0].mxu0
      %v7632 = vpop.f32.mrb[0].mxu0
      %v7633 = vadd.f32 0.0, %v7632
      %v7634 = vpop.f32.mrb[0].mxu0
      %7635 = vmatprep.mubr.bf16.mxu0 0
      %7636 = vmatmul.mubr.bf16.gmra.mrb[0].mxu0 %v7561
      %v7637 = vpop.f32.mrb[0].mxu0
      %v7638 = vadd.f32 0.0, %v7637
      %v7639 = vpop.f32.mrb[0].mxu0
      %v7640 = vpop.f32.mrb[0].mxu0
      %v7641 = vadd.f32 0.0, %v7640
      %v7642 = vpop.f32.mrb[0].mxu0
      %7643 = vmatprep.mubr.bf16.mxu0 0
      %7644 = vmatmul.mubr.bf16.gmra.mrb[0].mxu0 %v7564
      %v7645 = vpop.f32.mrb[0].mxu0
      %v7646 = vadd.f32 0.0, %v7645
      %v7647 = vpop.f32.mrb[0].mxu0
      %v7648 = vpop.f32.mrb[0].mxu0
      %v7649 = vadd.f32 0.0, %v7648
      %v7650 = vpop.f32.mrb[0].mxu0
      %7651 = vmatprep.mubr.bf16.mxu0 0
      %7652 = vmatmul.mubr.bf16.gmra.mrb[0].mxu0 %v7567
      %v7653 = vpop.f32.mrb[0].mxu0
      %v7654 = vadd.f32 0.0, %v7653
      %v7655 = vpop.f32.mrb[0].mxu0
      %v7656 = vpop.f32.mrb[0].mxu0
      %v7657 = vadd.f32 0.0, %v7656
      %v7658 = vpop.f32.mrb[0].mxu0
      %7659 = vmatprep.mubr.bf16.mxu0 0
      %7660 = vmatmul.mubr.bf16.gmra.mrb[0].mxu0 %v7570
      %v7661 = vpop.f32.mrb[0].mxu0
      %v7662 = vadd.f32 0.0, %v7661
      %v7663 = vpop.f32.mrb[0].mxu0
      %v7664 = vpop.f32.mrb[0].mxu0
      %v7665 = vadd.f32 0.0, %v7664
      %v7666 = vpop.f32.mrb[0].mxu0
      %7667 = vmatprep.mubr.bf16.mxu0 0
      %7668 = vmatmul.mubr.bf16.gmra.mrb[0].mxu0 %v7573
      %v7669 = vpop.f32.mrb[0].mxu0
      %v7670 = vadd.f32 0.0, %v7669
      %v7671 = vpop.f32.mrb[0].mxu0
      %v7672 = vpop.f32.mrb[0].mxu0
      %v7673 = vadd.f32 0.0, %v7672
      %v7674 = vpop.f32.mrb[0].mxu0
      %7675 = vmatprep.mubr.bf16.mxu0 0
      %7676 = vmatmul.mubr.bf16.gmra.mrb[0].mxu0 %v7576
      %v7677 = vpop.f32.mrb[0].mxu0
      %v7678 = vadd.f32 0.0, %v7677
      %v7679 = vpop.f32.mrb[0].mxu0
      %v7680 = vpop.f32.mrb[0].mxu0
      %v7681 = vadd.f32 0.0, %v7680
      %v7682 = vpop.f32.mrb[0].mxu0
      %7683 = vmatprep.mubr.bf16.mxu0 0
      %7684 = vmatmul.mubr.bf16.gmra.mrb[0].mxu0 %v7579
      %v7685 = vpop.f32.mrb[0].mxu0
      %v7686 = vadd.f32 0.0, %v7685
      %v7687 = vpop.f32.mrb[0].mxu0
      %v7688 = vpop.f32.mrb[0].mxu0
      %v7689 = vadd.f32 0.0, %v7688
      %v7690 = vpop.f32.mrb[0].mxu0
      %7691 = vmatprep.mubr.bf16.mxu0 0
      %7692 = vmatmul.mubr.bf16.gmra.mrb[0].mxu0 %v7582
      %v7693 = vpop.f32.mrb[0].mxu0
      %v7694 = vadd.f32 0.0, %v7693
      %v7695 = vpop.f32.mrb[0].mxu0
      %v7696 = vpop.f32.mrb[0].mxu0
      %v7697 = vadd.f32 0.0, %v7696
      %v7698 = vpop.f32.mrb[0].mxu0
      %7699 = vdwg.mxu0
      %v7700 = vadd.f32 %v7502, %v7622
      %v7701 = vadd.f32 %v7503, %v7625
      %v7702 = vadd.f32 %v7504, %v7630
      %v7703 = vadd.f32 %v7505, %v7633
      %v7704 = vadd.f32 %v7506, %v7638
      %v7705 = vadd.f32 %v7507, %v7641
      %v7706 = vadd.f32 %v7508, %v7646
      %v7707 = vadd.f32 %v7509, %v7649
      %v7708 = vadd.f32 %v7510, %v7654
      %v7709 = vadd.f32 %v7511, %v7657
      %v7710 = vadd.f32 %v7512, %v7662
      %v7711 = vadd.f32 %v7513, %v7665
      %v7712 = vadd.f32 %v7514, %v7670
      %v7713 = vadd.f32 %v7515, %v7673
      %v7714 = vadd.f32 %v7516, %v7678
      %v7715 = vadd.f32 %v7517, %v7681
      %v7716 = vadd.f32 %v7518, %v7686
      %v7717 = vadd.f32 %v7519, %v7689
      %v7718 = vadd.f32 %v7520, %v7694
      %v7719 = vadd.f32 %v7521, %v7697
      %v7720 = vld [vmem:[%s7323 + $0x9] sm:$0xff]
      %v7721 = vld [vmem:[%s7323 + $0x11] sm:$0xff]
      %v7722 = vld [vmem:[%s7323 + $0x29] sm:$0xff]
      %v7723 = vld [vmem:[%s7323 + $0x31] sm:$0xff]
      %v7724 = vld [vmem:[%s7323 + $0x49] sm:$0xff]
      %v7725 = vld [vmem:[%s7323 + $0x51] sm:$0xff]
      %v7726 = vld [vmem:[%s7323 + $0x69] sm:$0xff]
      %v7727 = vld [vmem:[%s7323 + $0x71] sm:$0xff]
      %v7728 = vld [vmem:[%s7323 + $0x89] sm:$0xff]
      %v7729 = vld [vmem:[%s7323 + $0x91] sm:$0xff]
      %v7730 = vld [vmem:[%s7323 + $0xa9] sm:$0xff]
      %v7731 = vld [vmem:[%s7323 + $0xb1] sm:$0xff]
      %v7732 = vld [vmem:[%s7323 + $0xc9] sm:$0xff]
      %v7733 = vld [vmem:[%s7323 + $0xd1] sm:$0xff]
      %v7734 = vld [vmem:[%s7323 + $0xe9] sm:$0xff]
      %v7735 = vld [vmem:[%s7323 + $0xf1] sm:$0xff]
      %v7736 = vld [vmem:[%s7323 + $0x109] sm:$0xff]
      %v7737 = vld [vmem:[%s7323 + $0x111] sm:$0xff]
      %v7738 = vld [vmem:[%s7323 + $0x129] sm:$0xff]
      %v7739 = vld [vmem:[%s7323 + $0x131] sm:$0xff]
      %v7740 = vpack.c.bf16 %v7721, %v7720
      %v7741 = vpack.c.bf16 %v7723, %v7722
      %v7742 = vpack.c.bf16 %v7725, %v7724
      %v7743 = vpack.c.bf16 %v7727, %v7726
      %v7744 = vpack.c.bf16 %v7729, %v7728
      %v7745 = vpack.c.bf16 %v7731, %v7730
      %v7746 = vpack.c.bf16 %v7733, %v7732
      %v7747 = vpack.c.bf16 %v7735, %v7734
      %v7748 = vpack.c.bf16 %v7737, %v7736
      %v7749 = vpack.c.bf16 %v7739, %v7738
      %s7750 = scalar_lea.vmem %s3, 120
      %v7751 = vld [vmem:[%s7750] sm:$0x7]
      %v7753 = vsel %vm1722, %v7740, 0
      %v7756 = vsel %vm1722, %v7741, 0
      %v7759 = vsel %vm1722, %v7742, 0
      %v7762 = vsel %vm1722, %v7743, 0
      %v7765 = vsel %vm1722, %v7744, 0
      %v7768 = vsel %vm1722, %v7745, 0
      %v7771 = vsel %vm1722, %v7746, 0
      %v7774 = vsel %vm1722, %v7747, 0
      %v7777 = vsel %vm1722, %v7748, 0
      %v7780 = vsel %vm1722, %v7749, 0
      %v7783 = vsel %vm1910, %v7751, 0
      %7785 = vmatprep.subr.bf16.mxu0 0
      %7786 = vmatpush1.bf16.msra.mxu0 %v7783
      %7787 = vmatprep.subr.bf16.mxu0 0
      %7788 = vmatpush1.bf16.msra.mxu0 0
      %7789 = vmatprep.subr.bf16.mxu0 0
      %7790 = vmatpush1.bf16.msra.mxu0 0
      %7791 = vmatprep.subr.bf16.mxu0 0
      %7792 = vmatpush1.bf16.msra.mxu0 0
      %7793 = vmatprep.subr.bf16.mxu0 0
      %7794 = vmatpush1.bf16.msra.mxu0 0
      %7795 = vmatprep.subr.bf16.mxu0 0
      %7796 = vmatpush1.bf16.msra.mxu0 0
      %7797 = vmatprep.subr.bf16.mxu0 0
      %7798 = vmatpush1.bf16.msra.mxu0 0
      %7799 = vmatprep.subr.bf16.mxu0 0
      %7800 = vmatpush1.bf16.msra.mxu0 0
      %7801 = vmatprep.subr.bf16.mxu0 0
      %7802 = vmatpush1.bf16.msra.mxu0 0
      %7803 = vmatprep.subr.bf16.mxu0 0
      %7804 = vmatpush1.bf16.msra.mxu0 0
      %7805 = vmatprep.subr.bf16.mxu0 0
      %7806 = vmatpush1.bf16.msra.mxu0 0
      %7807 = vmatprep.subr.bf16.mxu0 0
      %7808 = vmatpush1.bf16.msra.mxu0 0
      %7809 = vmatprep.subr.bf16.mxu0 0
      %7810 = vmatpush1.bf16.msra.mxu0 0
      %7811 = vmatprep.subr.bf16.mxu0 0
      %7812 = vmatpush1.bf16.msra.mxu0 0
      %7813 = vmatprep.subr.bf16.mxu0 0
      %7814 = vmatpush1.bf16.msra.mxu0 0
      %7815 = vmatprep.subr.bf16.mxu0 0
      %7816 = vmatpush1.bf16.msra.mxu0 0
      %7817 = vmatprep.mubr.bf16.mxu0 0
      %7818 = vmatmul.mubr.bf16.gmra.mrb[0].mxu0 %v7753
      %v7819 = vpop.f32.mrb[0].mxu0
      %v7820 = vadd.f32 0.0, %v7819
      %v7821 = vpop.f32.mrb[0].mxu0
      %v7822 = vpop.f32.mrb[0].mxu0
      %v7823 = vadd.f32 0.0, %v7822
      %v7824 = vpop.f32.mrb[0].mxu0
      %7825 = vmatprep.mubr.bf16.mxu0 0
      %7826 = vmatmul.mubr.bf16.gmra.mrb[0].mxu0 %v7756
      %v7827 = vpop.f32.mrb[0].mxu0
      %v7828 = vadd.f32 0.0, %v7827
      %v7829 = vpop.f32.mrb[0].mxu0
      %v7830 = vpop.f32.mrb[0].mxu0
      %v7831 = vadd.f32 0.0, %v7830
      %v7832 = vpop.f32.mrb[0].mxu0
      %7833 = vmatprep.mubr.bf16.mxu0 0
      %7834 = vmatmul.mubr.bf16.gmra.mrb[0].mxu0 %v7759
      %v7835 = vpop.f32.mrb[0].mxu0
      %v7836 = vadd.f32 0.0, %v7835
      %v7837 = vpop.f32.mrb[0].mxu0
      %v7838 = vpop.f32.mrb[0].mxu0
      %v7839 = vadd.f32 0.0, %v7838
      %v7840 = vpop.f32.mrb[0].mxu0
      %7841 = vmatprep.mubr.bf16.mxu0 0
      %7842 = vmatmul.mubr.bf16.gmra.mrb[0].mxu0 %v7762
      %v7843 = vpop.f32.mrb[0].mxu0
      %v7844 = vadd.f32 0.0, %v7843
      %v7845 = vpop.f32.mrb[0].mxu0
      %v7846 = vpop.f32.mrb[0].mxu0
      %v7847 = vadd.f32 0.0, %v7846
      %v7848 = vpop.f32.mrb[0].mxu0
      %7849 = vmatprep.mubr.bf16.mxu0 0
      %7850 = vmatmul.mubr.bf16.gmra.mrb[0].mxu0 %v7765
      %v7851 = vpop.f32.mrb[0].mxu0
      %v7852 = vadd.f32 0.0, %v7851
      %v7853 = vpop.f32.mrb[0].mxu0
      %v7854 = vpop.f32.mrb[0].mxu0
      %v7855 = vadd.f32 0.0, %v7854
      %v7856 = vpop.f32.mrb[0].mxu0
      %7857 = vmatprep.mubr.bf16.mxu0 0
      %7858 = vmatmul.mubr.bf16.gmra.mrb[0].mxu0 %v7768
      %v7859 = vpop.f32.mrb[0].mxu0
      %v7860 = vadd.f32 0.0, %v7859
      %v7861 = vpop.f32.mrb[0].mxu0
      %v7862 = vpop.f32.mrb[0].mxu0
      %v7863 = vadd.f32 0.0, %v7862
      %v7864 = vpop.f32.mrb[0].mxu0
      %7865 = vmatprep.mubr.bf16.mxu0 0
      %7866 = vmatmul.mubr.bf16.gmra.mrb[0].mxu0 %v7771
      %v7867 = vpop.f32.mrb[0].mxu0
      %v7868 = vadd.f32 0.0, %v7867
      %v7869 = vpop.f32.mrb[0].mxu0
      %v7870 = vpop.f32.mrb[0].mxu0
      %v7871 = vadd.f32 0.0, %v7870
      %v7872 = vpop.f32.mrb[0].mxu0
      %7873 = vmatprep.mubr.bf16.mxu0 0
      %7874 = vmatmul.mubr.bf16.gmra.mrb[0].mxu0 %v7774
      %v7875 = vpop.f32.mrb[0].mxu0
      %v7876 = vadd.f32 0.0, %v7875
      %v7877 = vpop.f32.mrb[0].mxu0
      %v7878 = vpop.f32.mrb[0].mxu0
      %v7879 = vadd.f32 0.0, %v7878
      %v7880 = vpop.f32.mrb[0].mxu0
      %7881 = vmatprep.mubr.bf16.mxu0 0
      %7882 = vmatmul.mubr.bf16.gmra.mrb[0].mxu0 %v7777
      %v7883 = vpop.f32.mrb[0].mxu0
      %v7884 = vadd.f32 0.0, %v7883
      %v7885 = vpop.f32.mrb[0].mxu0
      %v7886 = vpop.f32.mrb[0].mxu0
      %v7887 = vadd.f32 0.0, %v7886
      %v7888 = vpop.f32.mrb[0].mxu0
      %7889 = vmatprep.mubr.bf16.mxu0 0
      %7890 = vmatmul.mubr.bf16.gmra.mrb[0].mxu0 %v7780
      %v7891 = vpop.f32.mrb[0].mxu0
      %v7892 = vadd.f32 0.0, %v7891
      %v7893 = vpop.f32.mrb[0].mxu0
      %v7894 = vpop.f32.mrb[0].mxu0
      %v7895 = vadd.f32 0.0, %v7894
      %v7896 = vpop.f32.mrb[0].mxu0
      %7897 = vdwg.mxu0
      %v7898 = vadd.f32 %v7700, %v7820
      %v7899 = vadd.f32 %v7701, %v7823
      %v7900 = vadd.f32 %v7702, %v7828
      %v7901 = vadd.f32 %v7703, %v7831
      %v7902 = vadd.f32 %v7704, %v7836
      %v7903 = vadd.f32 %v7705, %v7839
      %v7904 = vadd.f32 %v7706, %v7844
      %v7905 = vadd.f32 %v7707, %v7847
      %v7906 = vadd.f32 %v7708, %v7852
      %v7907 = vadd.f32 %v7709, %v7855
      %v7908 = vadd.f32 %v7710, %v7860
      %v7909 = vadd.f32 %v7711, %v7863
      %v7910 = vadd.f32 %v7712, %v7868
      %v7911 = vadd.f32 %v7713, %v7871
      %v7912 = vadd.f32 %v7714, %v7876
      %v7913 = vadd.f32 %v7715, %v7879
      %v7914 = vadd.f32 %v7716, %v7884
      %v7915 = vadd.f32 %v7717, %v7887
      %v7916 = vadd.f32 %v7718, %v7892
      %v7917 = vadd.f32 %v7719, %v7895
      %v7918 = vld [vmem:[%s7323 + $0xa] sm:$0xff]
      %v7919 = vld [vmem:[%s7323 + $0x12] sm:$0xff]
      %v7920 = vld [vmem:[%s7323 + $0x2a] sm:$0xff]
      %v7921 = vld [vmem:[%s7323 + $0x32] sm:$0xff]
      %v7922 = vld [vmem:[%s7323 + $0x4a] sm:$0xff]
      %v7923 = vld [vmem:[%s7323 + $0x52] sm:$0xff]
      %v7924 = vld [vmem:[%s7323 + $0x6a] sm:$0xff]
      %v7925 = vld [vmem:[%s7323 + $0x72] sm:$0xff]
      %v7926 = vld [vmem:[%s7323 + $0x8a] sm:$0xff]
      %v7927 = vld [vmem:[%s7323 + $0x92] sm:$0xff]
      %v7928 = vld [vmem:[%s7323 + $0xaa] sm:$0xff]
      %v7929 = vld [vmem:[%s7323 + $0xb2] sm:$0xff]
      %v7930 = vld [vmem:[%s7323 + $0xca] sm:$0xff]
      %v7931 = vld [vmem:[%s7323 + $0xd2] sm:$0xff]
      %v7932 = vld [vmem:[%s7323 + $0xea] sm:$0xff]
      %v7933 = vld [vmem:[%s7323 + $0xf2] sm:$0xff]
      %v7934 = vld [vmem:[%s7323 + $0x10a] sm:$0xff]
      %v7935 = vld [vmem:[%s7323 + $0x112] sm:$0xff]
      %v7936 = vld [vmem:[%s7323 + $0x12a] sm:$0xff]
      %v7937 = vld [vmem:[%s7323 + $0x132] sm:$0xff]
      %v7938 = vpack.c.bf16 %v7919, %v7918
      %v7939 = vpack.c.bf16 %v7921, %v7920
      %v7940 = vpack.c.bf16 %v7923, %v7922
      %v7941 = vpack.c.bf16 %v7925, %v7924
      %v7942 = vpack.c.bf16 %v7927, %v7926
      %v7943 = vpack.c.bf16 %v7929, %v7928
      %v7944 = vpack.c.bf16 %v7931, %v7930
      %v7945 = vpack.c.bf16 %v7933, %v7932
      %v7946 = vpack.c.bf16 %v7935, %v7934
      %v7947 = vpack.c.bf16 %v7937, %v7936
      %s7948 = scalar_lea.vmem %s3, 124
      %v7949 = vld [vmem:[%s7948] sm:$0x7]
      %v7951 = vsel %vm1722, %v7938, 0
      %v7954 = vsel %vm1722, %v7939, 0
      %v7957 = vsel %vm1722, %v7940, 0
      %v7960 = vsel %vm1722, %v7941, 0
      %v7963 = vsel %vm1722, %v7942, 0
      %v7966 = vsel %vm1722, %v7943, 0
      %v7969 = vsel %vm1722, %v7944, 0
      %v7972 = vsel %vm1722, %v7945, 0
      %v7975 = vsel %vm1722, %v7946, 0
      %v7978 = vsel %vm1722, %v7947, 0
      %v7981 = vsel %vm1910, %v7949, 0
      %7983 = vmatprep.subr.bf16.mxu0 0
      %7984 = vmatpush1.bf16.msra.mxu0 %v7981
      %7985 = vmatprep.subr.bf16.mxu0 0
      %7986 = vmatpush1.bf16.msra.mxu0 0
      %7987 = vmatprep.subr.bf16.mxu0 0
      %7988 = vmatpush1.bf16.msra.mxu0 0
      %7989 = vmatprep.subr.bf16.mxu0 0
      %7990 = vmatpush1.bf16.msra.mxu0 0
      %7991 = vmatprep.subr.bf16.mxu0 0
      %7992 = vmatpush1.bf16.msra.mxu0 0
      %7993 = vmatprep.subr.bf16.mxu0 0
      %7994 = vmatpush1.bf16.msra.mxu0 0
      %7995 = vmatprep.subr.bf16.mxu0 0
      %7996 = vmatpush1.bf16.msra.mxu0 0
      %7997 = vmatprep.subr.bf16.mxu0 0
      %7998 = vmatpush1.bf16.msra.mxu0 0
      %7999 = vmatprep.subr.bf16.mxu0 0
      %8000 = vmatpush1.bf16.msra.mxu0 0
      %8001 = vmatprep.subr.bf16.mxu0 0
      %8002 = vmatpush1.bf16.msra.mxu0 0
      %8003 = vmatprep.subr.bf16.mxu0 0
      %8004 = vmatpush1.bf16.msra.mxu0 0
      %8005 = vmatprep.subr.bf16.mxu0 0
      %8006 = vmatpush1.bf16.msra.mxu0 0
      %8007 = vmatprep.subr.bf16.mxu0 0
      %8008 = vmatpush1.bf16.msra.mxu0 0
      %8009 = vmatprep.subr.bf16.mxu0 0
      %8010 = vmatpush1.bf16.msra.mxu0 0
      %8011 = vmatprep.subr.bf16.mxu0 0
      %8012 = vmatpush1.bf16.msra.mxu0 0
      %8013 = vmatprep.subr.bf16.mxu0 0
      %8014 = vmatpush1.bf16.msra.mxu0 0
      %8015 = vmatprep.mubr.bf16.mxu0 0
      %8016 = vmatmul.mubr.bf16.gmra.mrb[0].mxu0 %v7951
      %v8017 = vpop.f32.mrb[0].mxu0
      %v8018 = vadd.f32 0.0, %v8017
      %v8019 = vpop.f32.mrb[0].mxu0
      %v8020 = vpop.f32.mrb[0].mxu0
      %v8021 = vadd.f32 0.0, %v8020
      %v8022 = vpop.f32.mrb[0].mxu0
      %8023 = vmatprep.mubr.bf16.mxu0 0
      %8024 = vmatmul.mubr.bf16.gmra.mrb[0].mxu0 %v7954
      %v8025 = vpop.f32.mrb[0].mxu0
      %v8026 = vadd.f32 0.0, %v8025
      %v8027 = vpop.f32.mrb[0].mxu0
      %v8028 = vpop.f32.mrb[0].mxu0
      %v8029 = vadd.f32 0.0, %v8028
      %v8030 = vpop.f32.mrb[0].mxu0
      %8031 = vmatprep.mubr.bf16.mxu0 0
      %8032 = vmatmul.mubr.bf16.gmra.mrb[0].mxu0 %v7957
      %v8033 = vpop.f32.mrb[0].mxu0
      %v8034 = vadd.f32 0.0, %v8033
      %v8035 = vpop.f32.mrb[0].mxu0
      %v8036 = vpop.f32.mrb[0].mxu0
      %v8037 = vadd.f32 0.0, %v8036
      %v8038 = vpop.f32.mrb[0].mxu0
      %8039 = vmatprep.mubr.bf16.mxu0 0
      %8040 = vmatmul.mubr.bf16.gmra.mrb[0].mxu0 %v7960
      %v8041 = vpop.f32.mrb[0].mxu0
      %v8042 = vadd.f32 0.0, %v8041
      %v8043 = vpop.f32.mrb[0].mxu0
      %v8044 = vpop.f32.mrb[0].mxu0
      %v8045 = vadd.f32 0.0, %v8044
      %v8046 = vpop.f32.mrb[0].mxu0
      %8047 = vmatprep.mubr.bf16.mxu0 0
      %8048 = vmatmul.mubr.bf16.gmra.mrb[0].mxu0 %v7963
      %v8049 = vpop.f32.mrb[0].mxu0
      %v8050 = vadd.f32 0.0, %v8049
      %v8051 = vpop.f32.mrb[0].mxu0
      %v8052 = vpop.f32.mrb[0].mxu0
      %v8053 = vadd.f32 0.0, %v8052
      %v8054 = vpop.f32.mrb[0].mxu0
      %8055 = vmatprep.mubr.bf16.mxu0 0
      %8056 = vmatmul.mubr.bf16.gmra.mrb[0].mxu0 %v7966
      %v8057 = vpop.f32.mrb[0].mxu0
      %v8058 = vadd.f32 0.0, %v8057
      %v8059 = vpop.f32.mrb[0].mxu0
      %v8060 = vpop.f32.mrb[0].mxu0
      %v8061 = vadd.f32 0.0, %v8060
      %v8062 = vpop.f32.mrb[0].mxu0
      %8063 = vmatprep.mubr.bf16.mxu0 0
      %8064 = vmatmul.mubr.bf16.gmra.mrb[0].mxu0 %v7969
      %v8065 = vpop.f32.mrb[0].mxu0
      %v8066 = vadd.f32 0.0, %v8065
      %v8067 = vpop.f32.mrb[0].mxu0
      %v8068 = vpop.f32.mrb[0].mxu0
      %v8069 = vadd.f32 0.0, %v8068
      %v8070 = vpop.f32.mrb[0].mxu0
      %8071 = vmatprep.mubr.bf16.mxu0 0
      %8072 = vmatmul.mubr.bf16.gmra.mrb[0].mxu0 %v7972
      %v8073 = vpop.f32.mrb[0].mxu0
      %v8074 = vadd.f32 0.0, %v8073
      %v8075 = vpop.f32.mrb[0].mxu0
      %v8076 = vpop.f32.mrb[0].mxu0
      %v8077 = vadd.f32 0.0, %v8076
      %v8078 = vpop.f32.mrb[0].mxu0
      %8079 = vmatprep.mubr.bf16.mxu0 0
      %8080 = vmatmul.mubr.bf16.gmra.mrb[0].mxu0 %v7975
      %v8081 = vpop.f32.mrb[0].mxu0
      %v8082 = vadd.f32 0.0, %v8081
      %v8083 = vpop.f32.mrb[0].mxu0
      %v8084 = vpop.f32.mrb[0].mxu0
      %v8085 = vadd.f32 0.0, %v8084
      %v8086 = vpop.f32.mrb[0].mxu0
      %8087 = vmatprep.mubr.bf16.mxu0 0
      %8088 = vmatmul.mubr.bf16.gmra.mrb[0].mxu0 %v7978
      %v8089 = vpop.f32.mrb[0].mxu0
      %v8090 = vadd.f32 0.0, %v8089
      %v8091 = vpop.f32.mrb[0].mxu0
      %v8092 = vpop.f32.mrb[0].mxu0
      %v8093 = vadd.f32 0.0, %v8092
      %v8094 = vpop.f32.mrb[0].mxu0
      %8095 = vdwg.mxu0
      %v8096 = vadd.f32 %v7898, %v8018
      %v8097 = vadd.f32 %v7899, %v8021
      %v8098 = vadd.f32 %v7900, %v8026
      %v8099 = vadd.f32 %v7901, %v8029
      %v8100 = vadd.f32 %v7902, %v8034
      %v8101 = vadd.f32 %v7903, %v8037
      %v8102 = vadd.f32 %v7904, %v8042
      %v8103 = vadd.f32 %v7905, %v8045
      %v8104 = vadd.f32 %v7906, %v8050
      %v8105 = vadd.f32 %v7907, %v8053
      %v8106 = vadd.f32 %v7908, %v8058
      %v8107 = vadd.f32 %v7909, %v8061
      %v8108 = vadd.f32 %v7910, %v8066
      %v8109 = vadd.f32 %v7911, %v8069
      %v8110 = vadd.f32 %v7912, %v8074
      %v8111 = vadd.f32 %v7913, %v8077
      %v8112 = vadd.f32 %v7914, %v8082
      %v8113 = vadd.f32 %v7915, %v8085
      %v8114 = vadd.f32 %v7916, %v8090
      %v8115 = vadd.f32 %v7917, %v8093
      %v8116 = vld [vmem:[%s7323 + $0xb] sm:$0xff]
      %v8117 = vld [vmem:[%s7323 + $0x13] sm:$0xff]
      %v8118 = vld [vmem:[%s7323 + $0x2b] sm:$0xff]
      %v8119 = vld [vmem:[%s7323 + $0x33] sm:$0xff]
      %v8120 = vld [vmem:[%s7323 + $0x4b] sm:$0xff]
      %v8121 = vld [vmem:[%s7323 + $0x53] sm:$0xff]
      %v8122 = vld [vmem:[%s7323 + $0x6b] sm:$0xff]
      %v8123 = vld [vmem:[%s7323 + $0x73] sm:$0xff]
      %v8124 = vld [vmem:[%s7323 + $0x8b] sm:$0xff]
      %v8125 = vld [vmem:[%s7323 + $0x93] sm:$0xff]
      %v8126 = vld [vmem:[%s7323 + $0xab] sm:$0xff]
      %v8127 = vld [vmem:[%s7323 + $0xb3] sm:$0xff]
      %v8128 = vld [vmem:[%s7323 + $0xcb] sm:$0xff]
      %v8129 = vld [vmem:[%s7323 + $0xd3] sm:$0xff]
      %v8130 = vld [vmem:[%s7323 + $0xeb] sm:$0xff]
      %v8131 = vld [vmem:[%s7323 + $0xf3] sm:$0xff]
      %v8132 = vld [vmem:[%s7323 + $0x10b] sm:$0xff]
      %v8133 = vld [vmem:[%s7323 + $0x113] sm:$0xff]
      %v8134 = vld [vmem:[%s7323 + $0x12b] sm:$0xff]
      %v8135 = vld [vmem:[%s7323 + $0x133] sm:$0xff]
      %v8136 = vpack.c.bf16 %v8117, %v8116
      %v8137 = vpack.c.bf16 %v8119, %v8118
      %v8138 = vpack.c.bf16 %v8121, %v8120
      %v8139 = vpack.c.bf16 %v8123, %v8122
      %v8140 = vpack.c.bf16 %v8125, %v8124
      %v8141 = vpack.c.bf16 %v8127, %v8126
      %v8142 = vpack.c.bf16 %v8129, %v8128
      %v8143 = vpack.c.bf16 %v8131, %v8130
      %v8144 = vpack.c.bf16 %v8133, %v8132
      %v8145 = vpack.c.bf16 %v8135, %v8134
      %s8146 = scalar_lea.vmem %s3, 128
      %v8147 = vld [vmem:[%s8146] sm:$0x7]
      %v8149 = vsel %vm1722, %v8136, 0
      %v8152 = vsel %vm1722, %v8137, 0
      %v8155 = vsel %vm1722, %v8138, 0
      %v8158 = vsel %vm1722, %v8139, 0
      %v8161 = vsel %vm1722, %v8140, 0
      %v8164 = vsel %vm1722, %v8141, 0
      %v8167 = vsel %vm1722, %v8142, 0
      %v8170 = vsel %vm1722, %v8143, 0
      %v8173 = vsel %vm1722, %v8144, 0
      %v8176 = vsel %vm1722, %v8145, 0
      %v8179 = vsel %vm1910, %v8147, 0
      %8181 = vmatprep.subr.bf16.mxu0 0
      %8182 = vmatpush1.bf16.msra.mxu0 %v8179
      %8183 = vmatprep.subr.bf16.mxu0 0
      %8184 = vmatpush1.bf16.msra.mxu0 0
      %8185 = vmatprep.subr.bf16.mxu0 0
      %8186 = vmatpush1.bf16.msra.mxu0 0
      %8187 = vmatprep.subr.bf16.mxu0 0
      %8188 = vmatpush1.bf16.msra.mxu0 0
      %8189 = vmatprep.subr.bf16.mxu0 0
      %8190 = vmatpush1.bf16.msra.mxu0 0
      %8191 = vmatprep.subr.bf16.mxu0 0
      %8192 = vmatpush1.bf16.msra.mxu0 0
      %8193 = vmatprep.subr.bf16.mxu0 0
      %8194 = vmatpush1.bf16.msra.mxu0 0
      %8195 = vmatprep.subr.bf16.mxu0 0
      %8196 = vmatpush1.bf16.msra.mxu0 0
      %8197 = vmatprep.subr.bf16.mxu0 0
      %8198 = vmatpush1.bf16.msra.mxu0 0
      %8199 = vmatprep.subr.bf16.mxu0 0
      %8200 = vmatpush1.bf16.msra.mxu0 0
      %8201 = vmatprep.subr.bf16.mxu0 0
      %8202 = vmatpush1.bf16.msra.mxu0 0
      %8203 = vmatprep.subr.bf16.mxu0 0
      %8204 = vmatpush1.bf16.msra.mxu0 0
      %8205 = vmatprep.subr.bf16.mxu0 0
      %8206 = vmatpush1.bf16.msra.mxu0 0
      %8207 = vmatprep.subr.bf16.mxu0 0
      %8208 = vmatpush1.bf16.msra.mxu0 0
      %8209 = vmatprep.subr.bf16.mxu0 0
      %8210 = vmatpush1.bf16.msra.mxu0 0
      %8211 = vmatprep.subr.bf16.mxu0 0
      %8212 = vmatpush1.bf16.msra.mxu0 0
      %8213 = vmatprep.mubr.bf16.mxu0 0
      %8214 = vmatmul.mubr.bf16.gmra.mrb[0].mxu0 %v8149
      %v8215 = vpop.f32.mrb[0].mxu0
      %v8216 = vadd.f32 0.0, %v8215
      %v8217 = vpop.f32.mrb[0].mxu0
      %v8218 = vpop.f32.mrb[0].mxu0
      %v8219 = vadd.f32 0.0, %v8218
      %v8220 = vpop.f32.mrb[0].mxu0
      %8221 = vmatprep.mubr.bf16.mxu0 0
      %8222 = vmatmul.mubr.bf16.gmra.mrb[0].mxu0 %v8152
      %v8223 = vpop.f32.mrb[0].mxu0
      %v8224 = vadd.f32 0.0, %v8223
      %v8225 = vpop.f32.mrb[0].mxu0
      %v8226 = vpop.f32.mrb[0].mxu0
      %v8227 = vadd.f32 0.0, %v8226
      %v8228 = vpop.f32.mrb[0].mxu0
      %8229 = vmatprep.mubr.bf16.mxu0 0
      %8230 = vmatmul.mubr.bf16.gmra.mrb[0].mxu0 %v8155
      %v8231 = vpop.f32.mrb[0].mxu0
      %v8232 = vadd.f32 0.0, %v8231
      %v8233 = vpop.f32.mrb[0].mxu0
      %v8234 = vpop.f32.mrb[0].mxu0
      %v8235 = vadd.f32 0.0, %v8234
      %v8236 = vpop.f32.mrb[0].mxu0
      %8237 = vmatprep.mubr.bf16.mxu0 0
      %8238 = vmatmul.mubr.bf16.gmra.mrb[0].mxu0 %v8158
      %v8239 = vpop.f32.mrb[0].mxu0
      %v8240 = vadd.f32 0.0, %v8239
      %v8241 = vpop.f32.mrb[0].mxu0
      %v8242 = vpop.f32.mrb[0].mxu0
      %v8243 = vadd.f32 0.0, %v8242
      %v8244 = vpop.f32.mrb[0].mxu0
      %8245 = vmatprep.mubr.bf16.mxu0 0
      %8246 = vmatmul.mubr.bf16.gmra.mrb[0].mxu0 %v8161
      %v8247 = vpop.f32.mrb[0].mxu0
      %v8248 = vadd.f32 0.0, %v8247
      %v8249 = vpop.f32.mrb[0].mxu0
      %v8250 = vpop.f32.mrb[0].mxu0
      %v8251 = vadd.f32 0.0, %v8250
      %v8252 = vpop.f32.mrb[0].mxu0
      %8253 = vmatprep.mubr.bf16.mxu0 0
      %8254 = vmatmul.mubr.bf16.gmra.mrb[0].mxu0 %v8164
      %v8255 = vpop.f32.mrb[0].mxu0
      %v8256 = vadd.f32 0.0, %v8255
      %v8257 = vpop.f32.mrb[0].mxu0
      %v8258 = vpop.f32.mrb[0].mxu0
      %v8259 = vadd.f32 0.0, %v8258
      %v8260 = vpop.f32.mrb[0].mxu0
      %8261 = vmatprep.mubr.bf16.mxu0 0
      %8262 = vmatmul.mubr.bf16.gmra.mrb[0].mxu0 %v8167
      %v8263 = vpop.f32.mrb[0].mxu0
      %v8264 = vadd.f32 0.0, %v8263
      %v8265 = vpop.f32.mrb[0].mxu0
      %v8266 = vpop.f32.mrb[0].mxu0
      %v8267 = vadd.f32 0.0, %v8266
      %v8268 = vpop.f32.mrb[0].mxu0
      %8269 = vmatprep.mubr.bf16.mxu0 0
      %8270 = vmatmul.mubr.bf16.gmra.mrb[0].mxu0 %v8170
      %v8271 = vpop.f32.mrb[0].mxu0
      %v8272 = vadd.f32 0.0, %v8271
      %v8273 = vpop.f32.mrb[0].mxu0
      %v8274 = vpop.f32.mrb[0].mxu0
      %v8275 = vadd.f32 0.0, %v8274
      %v8276 = vpop.f32.mrb[0].mxu0
      %8277 = vmatprep.mubr.bf16.mxu0 0
      %8278 = vmatmul.mubr.bf16.gmra.mrb[0].mxu0 %v8173
      %v8279 = vpop.f32.mrb[0].mxu0
      %v8280 = vadd.f32 0.0, %v8279
      %v8281 = vpop.f32.mrb[0].mxu0
      %v8282 = vpop.f32.mrb[0].mxu0
      %v8283 = vadd.f32 0.0, %v8282
      %v8284 = vpop.f32.mrb[0].mxu0
      %8285 = vmatprep.mubr.bf16.mxu0 0
      %8286 = vmatmul.mubr.bf16.gmra.mrb[0].mxu0 %v8176
      %v8287 = vpop.f32.mrb[0].mxu0
      %v8288 = vadd.f32 0.0, %v8287
      %v8289 = vpop.f32.mrb[0].mxu0
      %v8290 = vpop.f32.mrb[0].mxu0
      %v8291 = vadd.f32 0.0, %v8290
      %v8292 = vpop.f32.mrb[0].mxu0
      %8293 = vdwg.mxu0
      %v8294 = vadd.f32 %v8096, %v8216
      %v8295 = vadd.f32 %v8097, %v8219
      %v8296 = vadd.f32 %v8098, %v8224
      %v8297 = vadd.f32 %v8099, %v8227
      %v8298 = vadd.f32 %v8100, %v8232
      %v8299 = vadd.f32 %v8101, %v8235
      %v8300 = vadd.f32 %v8102, %v8240
      %v8301 = vadd.f32 %v8103, %v8243
      %v8302 = vadd.f32 %v8104, %v8248
      %v8303 = vadd.f32 %v8105, %v8251
      %v8304 = vadd.f32 %v8106, %v8256
      %v8305 = vadd.f32 %v8107, %v8259
      %v8306 = vadd.f32 %v8108, %v8264
      %v8307 = vadd.f32 %v8109, %v8267
      %v8308 = vadd.f32 %v8110, %v8272
      %v8309 = vadd.f32 %v8111, %v8275
      %v8310 = vadd.f32 %v8112, %v8280
      %v8311 = vadd.f32 %v8113, %v8283
      %v8312 = vadd.f32 %v8114, %v8288
      %v8313 = vadd.f32 %v8115, %v8291
      %v8314 = vld [vmem:[%s7323 + $0xc] sm:$0xff]
      %v8315 = vld [vmem:[%s7323 + $0x14] sm:$0xff]
      %v8316 = vld [vmem:[%s7323 + $0x2c] sm:$0xff]
      %v8317 = vld [vmem:[%s7323 + $0x34] sm:$0xff]
      %v8318 = vld [vmem:[%s7323 + $0x4c] sm:$0xff]
      %v8319 = vld [vmem:[%s7323 + $0x54] sm:$0xff]
      %v8320 = vld [vmem:[%s7323 + $0x6c] sm:$0xff]
      %v8321 = vld [vmem:[%s7323 + $0x74] sm:$0xff]
      %v8322 = vld [vmem:[%s7323 + $0x8c] sm:$0xff]
      %v8323 = vld [vmem:[%s7323 + $0x94] sm:$0xff]
      %v8324 = vld [vmem:[%s7323 + $0xac] sm:$0xff]
      %v8325 = vld [vmem:[%s7323 + $0xb4] sm:$0xff]
      %v8326 = vld [vmem:[%s7323 + $0xcc] sm:$0xff]
      %v8327 = vld [vmem:[%s7323 + $0xd4] sm:$0xff]
      %v8328 = vld [vmem:[%s7323 + $0xec] sm:$0xff]
      %v8329 = vld [vmem:[%s7323 + $0xf4] sm:$0xff]
      %v8330 = vld [vmem:[%s7323 + $0x10c] sm:$0xff]
      %v8331 = vld [vmem:[%s7323 + $0x114] sm:$0xff]
      %v8332 = vld [vmem:[%s7323 + $0x12c] sm:$0xff]
      %v8333 = vld [vmem:[%s7323 + $0x134] sm:$0xff]
      %v8334 = vpack.c.bf16 %v8315, %v8314
      %v8335 = vpack.c.bf16 %v8317, %v8316
      %v8336 = vpack.c.bf16 %v8319, %v8318
      %v8337 = vpack.c.bf16 %v8321, %v8320
      %v8338 = vpack.c.bf16 %v8323, %v8322
      %v8339 = vpack.c.bf16 %v8325, %v8324
      %v8340 = vpack.c.bf16 %v8327, %v8326
      %v8341 = vpack.c.bf16 %v8329, %v8328
      %v8342 = vpack.c.bf16 %v8331, %v8330
      %v8343 = vpack.c.bf16 %v8333, %v8332
      %s8344 = scalar_lea.vmem %s3, 132
      %v8345 = vld [vmem:[%s8344] sm:$0x7]
      %v8347 = vsel %vm1722, %v8334, 0
      %v8350 = vsel %vm1722, %v8335, 0
      %v8353 = vsel %vm1722, %v8336, 0
      %v8356 = vsel %vm1722, %v8337, 0
      %v8359 = vsel %vm1722, %v8338, 0
      %v8362 = vsel %vm1722, %v8339, 0
      %v8365 = vsel %vm1722, %v8340, 0
      %v8368 = vsel %vm1722, %v8341, 0
      %v8371 = vsel %vm1722, %v8342, 0
      %v8374 = vsel %vm1722, %v8343, 0
      %v8377 = vsel %vm1910, %v8345, 0
      %8379 = vmatprep.subr.bf16.mxu0 0
      %8380 = vmatpush1.bf16.msra.mxu0 %v8377
      %8381 = vmatprep.subr.bf16.mxu0 0
      %8382 = vmatpush1.bf16.msra.mxu0 0
      %8383 = vmatprep.subr.bf16.mxu0 0
      %8384 = vmatpush1.bf16.msra.mxu0 0
      %8385 = vmatprep.subr.bf16.mxu0 0
      %8386 = vmatpush1.bf16.msra.mxu0 0
      %8387 = vmatprep.subr.bf16.mxu0 0
      %8388 = vmatpush1.bf16.msra.mxu0 0
      %8389 = vmatprep.subr.bf16.mxu0 0
      %8390 = vmatpush1.bf16.msra.mxu0 0
      %8391 = vmatprep.subr.bf16.mxu0 0
      %8392 = vmatpush1.bf16.msra.mxu0 0
      %8393 = vmatprep.subr.bf16.mxu0 0
      %8394 = vmatpush1.bf16.msra.mxu0 0
      %8395 = vmatprep.subr.bf16.mxu0 0
      %8396 = vmatpush1.bf16.msra.mxu0 0
      %8397 = vmatprep.subr.bf16.mxu0 0
      %8398 = vmatpush1.bf16.msra.mxu0 0
      %8399 = vmatprep.subr.bf16.mxu0 0
      %8400 = vmatpush1.bf16.msra.mxu0 0
      %8401 = vmatprep.subr.bf16.mxu0 0
      %8402 = vmatpush1.bf16.msra.mxu0 0
      %8403 = vmatprep.subr.bf16.mxu0 0
      %8404 = vmatpush1.bf16.msra.mxu0 0
      %8405 = vmatprep.subr.bf16.mxu0 0
      %8406 = vmatpush1.bf16.msra.mxu0 0
      %8407 = vmatprep.subr.bf16.mxu0 0
      %8408 = vmatpush1.bf16.msra.mxu0 0
      %8409 = vmatprep.subr.bf16.mxu0 0
      %8410 = vmatpush1.bf16.msra.mxu0 0
      %8411 = vmatprep.mubr.bf16.mxu0 0
      %8412 = vmatmul.mubr.bf16.gmra.mrb[0].mxu0 %v8347
      %v8413 = vpop.f32.mrb[0].mxu0
      %v8414 = vadd.f32 0.0, %v8413
      %v8415 = vpop.f32.mrb[0].mxu0
      %v8416 = vpop.f32.mrb[0].mxu0
      %v8417 = vadd.f32 0.0, %v8416
      %v8418 = vpop.f32.mrb[0].mxu0
      %8419 = vmatprep.mubr.bf16.mxu0 0
      %8420 = vmatmul.mubr.bf16.gmra.mrb[0].mxu0 %v8350
      %v8421 = vpop.f32.mrb[0].mxu0
      %v8422 = vadd.f32 0.0, %v8421
      %v8423 = vpop.f32.mrb[0].mxu0
      %v8424 = vpop.f32.mrb[0].mxu0
      %v8425 = vadd.f32 0.0, %v8424
      %v8426 = vpop.f32.mrb[0].mxu0
      %8427 = vmatprep.mubr.bf16.mxu0 0
      %8428 = vmatmul.mubr.bf16.gmra.mrb[0].mxu0 %v8353
      %v8429 = vpop.f32.mrb[0].mxu0
      %v8430 = vadd.f32 0.0, %v8429
      %v8431 = vpop.f32.mrb[0].mxu0
      %v8432 = vpop.f32.mrb[0].mxu0
      %v8433 = vadd.f32 0.0, %v8432
      %v8434 = vpop.f32.mrb[0].mxu0
      %8435 = vmatprep.mubr.bf16.mxu0 0
      %8436 = vmatmul.mubr.bf16.gmra.mrb[0].mxu0 %v8356
      %v8437 = vpop.f32.mrb[0].mxu0
      %v8438 = vadd.f32 0.0, %v8437
      %v8439 = vpop.f32.mrb[0].mxu0
      %v8440 = vpop.f32.mrb[0].mxu0
      %v8441 = vadd.f32 0.0, %v8440
      %v8442 = vpop.f32.mrb[0].mxu0
      %8443 = vmatprep.mubr.bf16.mxu0 0
      %8444 = vmatmul.mubr.bf16.gmra.mrb[0].mxu0 %v8359
      %v8445 = vpop.f32.mrb[0].mxu0
      %v8446 = vadd.f32 0.0, %v8445
      %v8447 = vpop.f32.mrb[0].mxu0
      %v8448 = vpop.f32.mrb[0].mxu0
      %v8449 = vadd.f32 0.0, %v8448
      %v8450 = vpop.f32.mrb[0].mxu0
      %8451 = vmatprep.mubr.bf16.mxu0 0
      %8452 = vmatmul.mubr.bf16.gmra.mrb[0].mxu0 %v8362
      %v8453 = vpop.f32.mrb[0].mxu0
      %v8454 = vadd.f32 0.0, %v8453
      %v8455 = vpop.f32.mrb[0].mxu0
      %v8456 = vpop.f32.mrb[0].mxu0
      %v8457 = vadd.f32 0.0, %v8456
      %v8458 = vpop.f32.mrb[0].mxu0
      %8459 = vmatprep.mubr.bf16.mxu0 0
      %8460 = vmatmul.mubr.bf16.gmra.mrb[0].mxu0 %v8365
      %v8461 = vpop.f32.mrb[0].mxu0
      %v8462 = vadd.f32 0.0, %v8461
      %v8463 = vpop.f32.mrb[0].mxu0
      %v8464 = vpop.f32.mrb[0].mxu0
      %v8465 = vadd.f32 0.0, %v8464
      %v8466 = vpop.f32.mrb[0].mxu0
      %8467 = vmatprep.mubr.bf16.mxu0 0
      %8468 = vmatmul.mubr.bf16.gmra.mrb[0].mxu0 %v8368
      %v8469 = vpop.f32.mrb[0].mxu0
      %v8470 = vadd.f32 0.0, %v8469
      %v8471 = vpop.f32.mrb[0].mxu0
      %v8472 = vpop.f32.mrb[0].mxu0
      %v8473 = vadd.f32 0.0, %v8472
      %v8474 = vpop.f32.mrb[0].mxu0
      %8475 = vmatprep.mubr.bf16.mxu0 0
      %8476 = vmatmul.mubr.bf16.gmra.mrb[0].mxu0 %v8371
      %v8477 = vpop.f32.mrb[0].mxu0
      %v8478 = vadd.f32 0.0, %v8477
      %v8479 = vpop.f32.mrb[0].mxu0
      %v8480 = vpop.f32.mrb[0].mxu0
      %v8481 = vadd.f32 0.0, %v8480
      %v8482 = vpop.f32.mrb[0].mxu0
      %8483 = vmatprep.mubr.bf16.mxu0 0
      %8484 = vmatmul.mubr.bf16.gmra.mrb[0].mxu0 %v8374
      %v8485 = vpop.f32.mrb[0].mxu0
      %v8486 = vadd.f32 0.0, %v8485
      %v8487 = vpop.f32.mrb[0].mxu0
      %v8488 = vpop.f32.mrb[0].mxu0
      %v8489 = vadd.f32 0.0, %v8488
      %v8490 = vpop.f32.mrb[0].mxu0
      %8491 = vdwg.mxu0
      %v8492 = vadd.f32 %v8294, %v8414
      %v8493 = vadd.f32 %v8295, %v8417
      %v8494 = vadd.f32 %v8296, %v8422
      %v8495 = vadd.f32 %v8297, %v8425
      %v8496 = vadd.f32 %v8298, %v8430
      %v8497 = vadd.f32 %v8299, %v8433
      %v8498 = vadd.f32 %v8300, %v8438
      %v8499 = vadd.f32 %v8301, %v8441
      %v8500 = vadd.f32 %v8302, %v8446
      %v8501 = vadd.f32 %v8303, %v8449
      %v8502 = vadd.f32 %v8304, %v8454
      %v8503 = vadd.f32 %v8305, %v8457
      %v8504 = vadd.f32 %v8306, %v8462
      %v8505 = vadd.f32 %v8307, %v8465
      %v8506 = vadd.f32 %v8308, %v8470
      %v8507 = vadd.f32 %v8309, %v8473
      %v8508 = vadd.f32 %v8310, %v8478
      %v8509 = vadd.f32 %v8311, %v8481
      %v8510 = vadd.f32 %v8312, %v8486
      %v8511 = vadd.f32 %v8313, %v8489
      %v8512 = vld [vmem:[%s7323 + $0xd] sm:$0xff]
      %v8513 = vld [vmem:[%s7323 + $0x15] sm:$0xff]
      %v8514 = vld [vmem:[%s7323 + $0x2d] sm:$0xff]
      %v8515 = vld [vmem:[%s7323 + $0x35] sm:$0xff]
      %v8516 = vld [vmem:[%s7323 + $0x4d] sm:$0xff]
      %v8517 = vld [vmem:[%s7323 + $0x55] sm:$0xff]
      %v8518 = vld [vmem:[%s7323 + $0x6d] sm:$0xff]
      %v8519 = vld [vmem:[%s7323 + $0x75] sm:$0xff]
      %v8520 = vld [vmem:[%s7323 + $0x8d] sm:$0xff]
      %v8521 = vld [vmem:[%s7323 + $0x95] sm:$0xff]
      %v8522 = vld [vmem:[%s7323 + $0xad] sm:$0xff]
      %v8523 = vld [vmem:[%s7323 + $0xb5] sm:$0xff]
      %v8524 = vld [vmem:[%s7323 + $0xcd] sm:$0xff]
      %v8525 = vld [vmem:[%s7323 + $0xd5] sm:$0xff]
      %v8526 = vld [vmem:[%s7323 + $0xed] sm:$0xff]
      %v8527 = vld [vmem:[%s7323 + $0xf5] sm:$0xff]
      %v8528 = vld [vmem:[%s7323 + $0x10d] sm:$0xff]
      %v8529 = vld [vmem:[%s7323 + $0x115] sm:$0xff]
      %v8530 = vld [vmem:[%s7323 + $0x12d] sm:$0xff]
      %v8531 = vld [vmem:[%s7323 + $0x135] sm:$0xff]
      %v8532 = vpack.c.bf16 %v8513, %v8512
      %v8533 = vpack.c.bf16 %v8515, %v8514
      %v8534 = vpack.c.bf16 %v8517, %v8516
      %v8535 = vpack.c.bf16 %v8519, %v8518
      %v8536 = vpack.c.bf16 %v8521, %v8520
      %v8537 = vpack.c.bf16 %v8523, %v8522
      %v8538 = vpack.c.bf16 %v8525, %v8524
      %v8539 = vpack.c.bf16 %v8527, %v8526
      %v8540 = vpack.c.bf16 %v8529, %v8528
      %v8541 = vpack.c.bf16 %v8531, %v8530
      %s8542 = scalar_lea.vmem %s3, 136
      %v8543 = vld [vmem:[%s8542] sm:$0x7]
      %v8545 = vsel %vm1722, %v8532, 0
      %v8548 = vsel %vm1722, %v8533, 0
      %v8551 = vsel %vm1722, %v8534, 0
      %v8554 = vsel %vm1722, %v8535, 0
      %v8557 = vsel %vm1722, %v8536, 0
      %v8560 = vsel %vm1722, %v8537, 0
      %v8563 = vsel %vm1722, %v8538, 0
      %v8566 = vsel %vm1722, %v8539, 0
      %v8569 = vsel %vm1722, %v8540, 0
      %v8572 = vsel %vm1722, %v8541, 0
      %v8575 = vsel %vm1910, %v8543, 0
      %8577 = vmatprep.subr.bf16.mxu0 0
      %8578 = vmatpush1.bf16.msra.mxu0 %v8575
      %8579 = vmatprep.subr.bf16.mxu0 0
      %8580 = vmatpush1.bf16.msra.mxu0 0
      %8581 = vmatprep.subr.bf16.mxu0 0
      %8582 = vmatpush1.bf16.msra.mxu0 0
      %8583 = vmatprep.subr.bf16.mxu0 0
      %8584 = vmatpush1.bf16.msra.mxu0 0
      %8585 = vmatprep.subr.bf16.mxu0 0
      %8586 = vmatpush1.bf16.msra.mxu0 0
      %8587 = vmatprep.subr.bf16.mxu0 0
      %8588 = vmatpush1.bf16.msra.mxu0 0
      %8589 = vmatprep.subr.bf16.mxu0 0
      %8590 = vmatpush1.bf16.msra.mxu0 0
      %8591 = vmatprep.subr.bf16.mxu0 0
      %8592 = vmatpush1.bf16.msra.mxu0 0
      %8593 = vmatprep.subr.bf16.mxu0 0
      %8594 = vmatpush1.bf16.msra.mxu0 0
      %8595 = vmatprep.subr.bf16.mxu0 0
      %8596 = vmatpush1.bf16.msra.mxu0 0
      %8597 = vmatprep.subr.bf16.mxu0 0
      %8598 = vmatpush1.bf16.msra.mxu0 0
      %8599 = vmatprep.subr.bf16.mxu0 0
      %8600 = vmatpush1.bf16.msra.mxu0 0
      %8601 = vmatprep.subr.bf16.mxu0 0
      %8602 = vmatpush1.bf16.msra.mxu0 0
      %8603 = vmatprep.subr.bf16.mxu0 0
      %8604 = vmatpush1.bf16.msra.mxu0 0
      %8605 = vmatprep.subr.bf16.mxu0 0
      %8606 = vmatpush1.bf16.msra.mxu0 0
      %8607 = vmatprep.subr.bf16.mxu0 0
      %8608 = vmatpush1.bf16.msra.mxu0 0
      %8609 = vmatprep.mubr.bf16.mxu0 0
      %8610 = vmatmul.mubr.bf16.gmra.mrb[0].mxu0 %v8545
      %v8611 = vpop.f32.mrb[0].mxu0
      %v8612 = vadd.f32 0.0, %v8611
      %v8613 = vpop.f32.mrb[0].mxu0
      %v8614 = vpop.f32.mrb[0].mxu0
      %v8615 = vadd.f32 0.0, %v8614
      %v8616 = vpop.f32.mrb[0].mxu0
      %8617 = vmatprep.mubr.bf16.mxu0 0
      %8618 = vmatmul.mubr.bf16.gmra.mrb[0].mxu0 %v8548
      %v8619 = vpop.f32.mrb[0].mxu0
      %v8620 = vadd.f32 0.0, %v8619
      %v8621 = vpop.f32.mrb[0].mxu0
      %v8622 = vpop.f32.mrb[0].mxu0
      %v8623 = vadd.f32 0.0, %v8622
      %v8624 = vpop.f32.mrb[0].mxu0
      %8625 = vmatprep.mubr.bf16.mxu0 0
      %8626 = vmatmul.mubr.bf16.gmra.mrb[0].mxu0 %v8551
      %v8627 = vpop.f32.mrb[0].mxu0
      %v8628 = vadd.f32 0.0, %v8627
      %v8629 = vpop.f32.mrb[0].mxu0
      %v8630 = vpop.f32.mrb[0].mxu0
      %v8631 = vadd.f32 0.0, %v8630
      %v8632 = vpop.f32.mrb[0].mxu0
      %8633 = vmatprep.mubr.bf16.mxu0 0
      %8634 = vmatmul.mubr.bf16.gmra.mrb[0].mxu0 %v8554
      %v8635 = vpop.f32.mrb[0].mxu0
      %v8636 = vadd.f32 0.0, %v8635
      %v8637 = vpop.f32.mrb[0].mxu0
      %v8638 = vpop.f32.mrb[0].mxu0
      %v8639 = vadd.f32 0.0, %v8638
      %v8640 = vpop.f32.mrb[0].mxu0
      %8641 = vmatprep.mubr.bf16.mxu0 0
      %8642 = vmatmul.mubr.bf16.gmra.mrb[0].mxu0 %v8557
      %v8643 = vpop.f32.mrb[0].mxu0
      %v8644 = vadd.f32 0.0, %v8643
      %v8645 = vpop.f32.mrb[0].mxu0
      %v8646 = vpop.f32.mrb[0].mxu0
      %v8647 = vadd.f32 0.0, %v8646
      %v8648 = vpop.f32.mrb[0].mxu0
      %8649 = vmatprep.mubr.bf16.mxu0 0
      %8650 = vmatmul.mubr.bf16.gmra.mrb[0].mxu0 %v8560
      %v8651 = vpop.f32.mrb[0].mxu0
      %v8652 = vadd.f32 0.0, %v8651
      %v8653 = vpop.f32.mrb[0].mxu0
      %v8654 = vpop.f32.mrb[0].mxu0
      %v8655 = vadd.f32 0.0, %v8654
      %v8656 = vpop.f32.mrb[0].mxu0
      %8657 = vmatprep.mubr.bf16.mxu0 0
      %8658 = vmatmul.mubr.bf16.gmra.mrb[0].mxu0 %v8563
      %v8659 = vpop.f32.mrb[0].mxu0
      %v8660 = vadd.f32 0.0, %v8659
      %v8661 = vpop.f32.mrb[0].mxu0
      %v8662 = vpop.f32.mrb[0].mxu0
      %v8663 = vadd.f32 0.0, %v8662
      %v8664 = vpop.f32.mrb[0].mxu0
      %8665 = vmatprep.mubr.bf16.mxu0 0
      %8666 = vmatmul.mubr.bf16.gmra.mrb[0].mxu0 %v8566
      %v8667 = vpop.f32.mrb[0].mxu0
      %v8668 = vadd.f32 0.0, %v8667
      %v8669 = vpop.f32.mrb[0].mxu0
      %v8670 = vpop.f32.mrb[0].mxu0
      %v8671 = vadd.f32 0.0, %v8670
      %v8672 = vpop.f32.mrb[0].mxu0
      %8673 = vmatprep.mubr.bf16.mxu0 0
      %8674 = vmatmul.mubr.bf16.gmra.mrb[0].mxu0 %v8569
      %v8675 = vpop.f32.mrb[0].mxu0
      %v8676 = vadd.f32 0.0, %v8675
      %v8677 = vpop.f32.mrb[0].mxu0
      %v8678 = vpop.f32.mrb[0].mxu0
      %v8679 = vadd.f32 0.0, %v8678
      %v8680 = vpop.f32.mrb[0].mxu0
      %8681 = vmatprep.mubr.bf16.mxu0 0
      %8682 = vmatmul.mubr.bf16.gmra.mrb[0].mxu0 %v8572
      %v8683 = vpop.f32.mrb[0].mxu0
      %v8684 = vadd.f32 0.0, %v8683
      %v8685 = vpop.f32.mrb[0].mxu0
      %v8686 = vpop.f32.mrb[0].mxu0
      %v8687 = vadd.f32 0.0, %v8686
      %v8688 = vpop.f32.mrb[0].mxu0
      %8689 = vdwg.mxu0
      %v8690 = vadd.f32 %v8492, %v8612
      %v8691 = vadd.f32 %v8493, %v8615
      %v8692 = vadd.f32 %v8494, %v8620
      %v8693 = vadd.f32 %v8495, %v8623
      %v8694 = vadd.f32 %v8496, %v8628
      %v8695 = vadd.f32 %v8497, %v8631
      %v8696 = vadd.f32 %v8498, %v8636
      %v8697 = vadd.f32 %v8499, %v8639
      %v8698 = vadd.f32 %v8500, %v8644
      %v8699 = vadd.f32 %v8501, %v8647
      %v8700 = vadd.f32 %v8502, %v8652
      %v8701 = vadd.f32 %v8503, %v8655
      %v8702 = vadd.f32 %v8504, %v8660
      %v8703 = vadd.f32 %v8505, %v8663
      %v8704 = vadd.f32 %v8506, %v8668
      %v8705 = vadd.f32 %v8507, %v8671
      %v8706 = vadd.f32 %v8508, %v8676
      %v8707 = vadd.f32 %v8509, %v8679
      %v8708 = vadd.f32 %v8510, %v8684
      %v8709 = vadd.f32 %v8511, %v8687
      %s8710 = scalar_lea.vmem [#allocation2], 160
      %v8711 = vld [vmem:[%s8710 + $0x7] sm:$0xff]
      %v8712 = vld [vmem:[%s8710 + $0xf] sm:$0xff]
      %v8713 = vld [vmem:[%s8710 + $0x27] sm:$0xff]
      %v8714 = vld [vmem:[%s8710 + $0x2f] sm:$0xff]
      %v8715 = vld [vmem:[%s8710 + $0x47] sm:$0xff]
      %v8716 = vld [vmem:[%s8710 + $0x4f] sm:$0xff]
      %v8717 = vld [vmem:[%s8710 + $0x67] sm:$0xff]
      %v8718 = vld [vmem:[%s8710 + $0x6f] sm:$0xff]
      %v8719 = vld [vmem:[%s8710 + $0x87] sm:$0xff]
      %v8720 = vld [vmem:[%s8710 + $0x8f] sm:$0xff]
      %v8721 = vld [vmem:[%s8710 + $0xa7] sm:$0xff]
      %v8722 = vld [vmem:[%s8710 + $0xaf] sm:$0xff]
      %v8723 = vld [vmem:[%s8710 + $0xc7] sm:$0xff]
      %v8724 = vld [vmem:[%s8710 + $0xcf] sm:$0xff]
      %v8725 = vld [vmem:[%s8710 + $0xe7] sm:$0xff]
      %v8726 = vld [vmem:[%s8710 + $0xef] sm:$0xff]
      %v8727 = vld [vmem:[%s8710 + $0x107] sm:$0xff]
      %v8728 = vld [vmem:[%s8710 + $0x10f] sm:$0xff]
      %v8729 = vld [vmem:[%s8710 + $0x127] sm:$0xff]
      %v8730 = vld [vmem:[%s8710 + $0x12f] sm:$0xff]
      %v8731 = vpack.c.bf16 %v8712, %v8711
      %v8732 = vpack.c.bf16 %v8714, %v8713
      %v8733 = vpack.c.bf16 %v8716, %v8715
      %v8734 = vpack.c.bf16 %v8718, %v8717
      %v8735 = vpack.c.bf16 %v8720, %v8719
      %v8736 = vpack.c.bf16 %v8722, %v8721
      %v8737 = vpack.c.bf16 %v8724, %v8723
      %v8738 = vpack.c.bf16 %v8726, %v8725
      %v8739 = vpack.c.bf16 %v8728, %v8727
      %v8740 = vpack.c.bf16 %v8730, %v8729
      %s8741 = scalar_lea.vmem %s3, 140
      %v8742 = vld [vmem:[%s8741] sm:$0x7]
      %v8744 = vsel %vm1722, %v8731, 0
      %v8747 = vsel %vm1722, %v8732, 0
      %v8750 = vsel %vm1722, %v8733, 0
      %v8753 = vsel %vm1722, %v8734, 0
      %v8756 = vsel %vm1722, %v8735, 0
      %v8759 = vsel %vm1722, %v8736, 0
      %v8762 = vsel %vm1722, %v8737, 0
      %v8765 = vsel %vm1722, %v8738, 0
      %v8768 = vsel %vm1722, %v8739, 0
      %v8771 = vsel %vm1722, %v8740, 0
      %v8774 = vsel %vm1910, %v8742, 0
      %8776 = vmatprep.subr.bf16.mxu0 0
      %8777 = vmatpush1.bf16.msra.mxu0 %v8774
      %8778 = vmatprep.subr.bf16.mxu0 0
      %8779 = vmatpush1.bf16.msra.mxu0 0
      %8780 = vmatprep.subr.bf16.mxu0 0
      %8781 = vmatpush1.bf16.msra.mxu0 0
      %8782 = vmatprep.subr.bf16.mxu0 0
      %8783 = vmatpush1.bf16.msra.mxu0 0
      %8784 = vmatprep.subr.bf16.mxu0 0
      %8785 = vmatpush1.bf16.msra.mxu0 0
      %8786 = vmatprep.subr.bf16.mxu0 0
      %8787 = vmatpush1.bf16.msra.mxu0 0
      %8788 = vmatprep.subr.bf16.mxu0 0
      %8789 = vmatpush1.bf16.msra.mxu0 0
      %8790 = vmatprep.subr.bf16.mxu0 0
      %8791 = vmatpush1.bf16.msra.mxu0 0
      %8792 = vmatprep.subr.bf16.mxu0 0
      %8793 = vmatpush1.bf16.msra.mxu0 0
      %8794 = vmatprep.subr.bf16.mxu0 0
      %8795 = vmatpush1.bf16.msra.mxu0 0
      %8796 = vmatprep.subr.bf16.mxu0 0
      %8797 = vmatpush1.bf16.msra.mxu0 0
      %8798 = vmatprep.subr.bf16.mxu0 0
      %8799 = vmatpush1.bf16.msra.mxu0 0
      %8800 = vmatprep.subr.bf16.mxu0 0
      %8801 = vmatpush1.bf16.msra.mxu0 0
      %8802 = vmatprep.subr.bf16.mxu0 0
      %8803 = vmatpush1.bf16.msra.mxu0 0
      %8804 = vmatprep.subr.bf16.mxu0 0
      %8805 = vmatpush1.bf16.msra.mxu0 0
      %8806 = vmatprep.subr.bf16.mxu0 0
      %8807 = vmatpush1.bf16.msra.mxu0 0
      %8808 = vmatprep.mubr.bf16.mxu0 0
      %8809 = vmatmul.mubr.bf16.gmra.mrb[0].mxu0 %v8744
      %v8810 = vpop.f32.mrb[0].mxu0
      %v8811 = vadd.f32 0.0, %v8810
      %v8812 = vpop.f32.mrb[0].mxu0
      %v8813 = vpop.f32.mrb[0].mxu0
      %v8814 = vadd.f32 0.0, %v8813
      %v8815 = vpop.f32.mrb[0].mxu0
      %8816 = vmatprep.mubr.bf16.mxu0 0
      %8817 = vmatmul.mubr.bf16.gmra.mrb[0].mxu0 %v8747
      %v8818 = vpop.f32.mrb[0].mxu0
      %v8819 = vadd.f32 0.0, %v8818
      %v8820 = vpop.f32.mrb[0].mxu0
      %v8821 = vpop.f32.mrb[0].mxu0
      %v8822 = vadd.f32 0.0, %v8821
      %v8823 = vpop.f32.mrb[0].mxu0
      %8824 = vmatprep.mubr.bf16.mxu0 0
      %8825 = vmatmul.mubr.bf16.gmra.mrb[0].mxu0 %v8750
      %v8826 = vpop.f32.mrb[0].mxu0
      %v8827 = vadd.f32 0.0, %v8826
      %v8828 = vpop.f32.mrb[0].mxu0
      %v8829 = vpop.f32.mrb[0].mxu0
      %v8830 = vadd.f32 0.0, %v8829
      %v8831 = vpop.f32.mrb[0].mxu0
      %8832 = vmatprep.mubr.bf16.mxu0 0
      %8833 = vmatmul.mubr.bf16.gmra.mrb[0].mxu0 %v8753
      %v8834 = vpop.f32.mrb[0].mxu0
      %v8835 = vadd.f32 0.0, %v8834
      %v8836 = vpop.f32.mrb[0].mxu0
      %v8837 = vpop.f32.mrb[0].mxu0
      %v8838 = vadd.f32 0.0, %v8837
      %v8839 = vpop.f32.mrb[0].mxu0
      %8840 = vmatprep.mubr.bf16.mxu0 0
      %8841 = vmatmul.mubr.bf16.gmra.mrb[0].mxu0 %v8756
      %v8842 = vpop.f32.mrb[0].mxu0
      %v8843 = vadd.f32 0.0, %v8842
      %v8844 = vpop.f32.mrb[0].mxu0
      %v8845 = vpop.f32.mrb[0].mxu0
      %v8846 = vadd.f32 0.0, %v8845
      %v8847 = vpop.f32.mrb[0].mxu0
      %8848 = vmatprep.mubr.bf16.mxu0 0
      %8849 = vmatmul.mubr.bf16.gmra.mrb[0].mxu0 %v8759
      %v8850 = vpop.f32.mrb[0].mxu0
      %v8851 = vadd.f32 0.0, %v8850
      %v8852 = vpop.f32.mrb[0].mxu0
      %v8853 = vpop.f32.mrb[0].mxu0
      %v8854 = vadd.f32 0.0, %v8853
      %v8855 = vpop.f32.mrb[0].mxu0
      %8856 = vmatprep.mubr.bf16.mxu0 0
      %8857 = vmatmul.mubr.bf16.gmra.mrb[0].mxu0 %v8762
      %v8858 = vpop.f32.mrb[0].mxu0
      %v8859 = vadd.f32 0.0, %v8858
      %v8860 = vpop.f32.mrb[0].mxu0
      %v8861 = vpop.f32.mrb[0].mxu0
      %v8862 = vadd.f32 0.0, %v8861
      %v8863 = vpop.f32.mrb[0].mxu0
      %8864 = vmatprep.mubr.bf16.mxu0 0
      %8865 = vmatmul.mubr.bf16.gmra.mrb[0].mxu0 %v8765
      %v8866 = vpop.f32.mrb[0].mxu0
      %v8867 = vadd.f32 0.0, %v8866
      %v8868 = vpop.f32.mrb[0].mxu0
      %v8869 = vpop.f32.mrb[0].mxu0
      %v8870 = vadd.f32 0.0, %v8869
      %v8871 = vpop.f32.mrb[0].mxu0
      %8872 = vmatprep.mubr.bf16.mxu0 0
      %8873 = vmatmul.mubr.bf16.gmra.mrb[0].mxu0 %v8768
      %v8874 = vpop.f32.mrb[0].mxu0
      %v8875 = vadd.f32 0.0, %v8874
      %v8876 = vpop.f32.mrb[0].mxu0
      %v8877 = vpop.f32.mrb[0].mxu0
      %v8878 = vadd.f32 0.0, %v8877
      %v8879 = vpop.f32.mrb[0].mxu0
      %8880 = vmatprep.mubr.bf16.mxu0 0
      %8881 = vmatmul.mubr.bf16.gmra.mrb[0].mxu0 %v8771
      %v8882 = vpop.f32.mrb[0].mxu0
      %v8883 = vadd.f32 0.0, %v8882
      %v8884 = vpop.f32.mrb[0].mxu0
      %v8885 = vpop.f32.mrb[0].mxu0
      %v8886 = vadd.f32 0.0, %v8885
      %v8887 = vpop.f32.mrb[0].mxu0
      %8888 = vdwg.mxu0
      %v8889 = vadd.f32 %v8690, %v8811
      %v8890 = vadd.f32 %v8691, %v8814
      %v8891 = vadd.f32 %v8692, %v8819
      %v8892 = vadd.f32 %v8693, %v8822
      %v8893 = vadd.f32 %v8694, %v8827
      %v8894 = vadd.f32 %v8695, %v8830
      %v8895 = vadd.f32 %v8696, %v8835
      %v8896 = vadd.f32 %v8697, %v8838
      %v8897 = vadd.f32 %v8698, %v8843
      %v8898 = vadd.f32 %v8699, %v8846
      %v8899 = vadd.f32 %v8700, %v8851
      %v8900 = vadd.f32 %v8701, %v8854
      %v8901 = vadd.f32 %v8702, %v8859
      %v8902 = vadd.f32 %v8703, %v8862
      %v8903 = vadd.f32 %v8704, %v8867
      %v8904 = vadd.f32 %v8705, %v8870
      %v8905 = vadd.f32 %v8706, %v8875
      %v8906 = vadd.f32 %v8707, %v8878
      %v8907 = vadd.f32 %v8708, %v8883
      %v8908 = vadd.f32 %v8709, %v8886
      %v8909 = vld [vmem:[%s8710 + $0x8] sm:$0xff]
      %v8910 = vld [vmem:[%s8710 + $0x10] sm:$0xff]
      %v8911 = vld [vmem:[%s8710 + $0x28] sm:$0xff]
      %v8912 = vld [vmem:[%s8710 + $0x30] sm:$0xff]
      %v8913 = vld [vmem:[%s8710 + $0x48] sm:$0xff]
      %v8914 = vld [vmem:[%s8710 + $0x50] sm:$0xff]
      %v8915 = vld [vmem:[%s8710 + $0x68] sm:$0xff]
      %v8916 = vld [vmem:[%s8710 + $0x70] sm:$0xff]
      %v8917 = vld [vmem:[%s8710 + $0x88] sm:$0xff]
      %v8918 = vld [vmem:[%s8710 + $0x90] sm:$0xff]
      %v8919 = vld [vmem:[%s8710 + $0xa8] sm:$0xff]
      %v8920 = vld [vmem:[%s8710 + $0xb0] sm:$0xff]
      %v8921 = vld [vmem:[%s8710 + $0xc8] sm:$0xff]
      %v8922 = vld [vmem:[%s8710 + $0xd0] sm:$0xff]
      %v8923 = vld [vmem:[%s8710 + $0xe8] sm:$0xff]
      %v8924 = vld [vmem:[%s8710 + $0xf0] sm:$0xff]
      %v8925 = vld [vmem:[%s8710 + $0x108] sm:$0xff]
      %v8926 = vld [vmem:[%s8710 + $0x110] sm:$0xff]
      %v8927 = vld [vmem:[%s8710 + $0x128] sm:$0xff]
      %v8928 = vld [vmem:[%s8710 + $0x130] sm:$0xff]
      %v8929 = vpack.c.bf16 %v8910, %v8909
      %v8930 = vpack.c.bf16 %v8912, %v8911
      %v8931 = vpack.c.bf16 %v8914, %v8913
      %v8932 = vpack.c.bf16 %v8916, %v8915
      %v8933 = vpack.c.bf16 %v8918, %v8917
      %v8934 = vpack.c.bf16 %v8920, %v8919
      %v8935 = vpack.c.bf16 %v8922, %v8921
      %v8936 = vpack.c.bf16 %v8924, %v8923
      %v8937 = vpack.c.bf16 %v8926, %v8925
      %v8938 = vpack.c.bf16 %v8928, %v8927
      %s8939 = scalar_lea.vmem %s3, 144
      %v8940 = vld [vmem:[%s8939] sm:$0x7]
      %v8942 = vsel %vm1722, %v8929, 0
      %v8945 = vsel %vm1722, %v8930, 0
      %v8948 = vsel %vm1722, %v8931, 0
      %v8951 = vsel %vm1722, %v8932, 0
      %v8954 = vsel %vm1722, %v8933, 0
      %v8957 = vsel %vm1722, %v8934, 0
      %v8960 = vsel %vm1722, %v8935, 0
      %v8963 = vsel %vm1722, %v8936, 0
      %v8966 = vsel %vm1722, %v8937, 0
      %v8969 = vsel %vm1722, %v8938, 0
      %v8972 = vsel %vm1910, %v8940, 0
      %8974 = vmatprep.subr.bf16.mxu0 0
      %8975 = vmatpush1.bf16.msra.mxu0 %v8972
      %8976 = vmatprep.subr.bf16.mxu0 0
      %8977 = vmatpush1.bf16.msra.mxu0 0
      %8978 = vmatprep.subr.bf16.mxu0 0
      %8979 = vmatpush1.bf16.msra.mxu0 0
      %8980 = vmatprep.subr.bf16.mxu0 0
      %8981 = vmatpush1.bf16.msra.mxu0 0
      %8982 = vmatprep.subr.bf16.mxu0 0
      %8983 = vmatpush1.bf16.msra.mxu0 0
      %8984 = vmatprep.subr.bf16.mxu0 0
      %8985 = vmatpush1.bf16.msra.mxu0 0
      %8986 = vmatprep.subr.bf16.mxu0 0
      %8987 = vmatpush1.bf16.msra.mxu0 0
      %8988 = vmatprep.subr.bf16.mxu0 0
      %8989 = vmatpush1.bf16.msra.mxu0 0
      %8990 = vmatprep.subr.bf16.mxu0 0
      %8991 = vmatpush1.bf16.msra.mxu0 0
      %8992 = vmatprep.subr.bf16.mxu0 0
      %8993 = vmatpush1.bf16.msra.mxu0 0
      %8994 = vmatprep.subr.bf16.mxu0 0
      %8995 = vmatpush1.bf16.msra.mxu0 0
      %8996 = vmatprep.subr.bf16.mxu0 0
      %8997 = vmatpush1.bf16.msra.mxu0 0
      %8998 = vmatprep.subr.bf16.mxu0 0
      %8999 = vmatpush1.bf16.msra.mxu0 0
      %9000 = vmatprep.subr.bf16.mxu0 0
      %9001 = vmatpush1.bf16.msra.mxu0 0
      %9002 = vmatprep.subr.bf16.mxu0 0
      %9003 = vmatpush1.bf16.msra.mxu0 0
      %9004 = vmatprep.subr.bf16.mxu0 0
      %9005 = vmatpush1.bf16.msra.mxu0 0
      %9006 = vmatprep.mubr.bf16.mxu0 0
      %9007 = vmatmul.mubr.bf16.gmra.mrb[0].mxu0 %v8942
      %v9008 = vpop.f32.mrb[0].mxu0
      %v9009 = vadd.f32 0.0, %v9008
      %v9010 = vpop.f32.mrb[0].mxu0
      %v9011 = vpop.f32.mrb[0].mxu0
      %v9012 = vadd.f32 0.0, %v9011
      %v9013 = vpop.f32.mrb[0].mxu0
      %9014 = vmatprep.mubr.bf16.mxu0 0
      %9015 = vmatmul.mubr.bf16.gmra.mrb[0].mxu0 %v8945
      %v9016 = vpop.f32.mrb[0].mxu0
      %v9017 = vadd.f32 0.0, %v9016
      %v9018 = vpop.f32.mrb[0].mxu0
      %v9019 = vpop.f32.mrb[0].mxu0
      %v9020 = vadd.f32 0.0, %v9019
      %v9021 = vpop.f32.mrb[0].mxu0
      %9022 = vmatprep.mubr.bf16.mxu0 0
      %9023 = vmatmul.mubr.bf16.gmra.mrb[0].mxu0 %v8948
      %v9024 = vpop.f32.mrb[0].mxu0
      %v9025 = vadd.f32 0.0, %v9024
      %v9026 = vpop.f32.mrb[0].mxu0
      %v9027 = vpop.f32.mrb[0].mxu0
      %v9028 = vadd.f32 0.0, %v9027
      %v9029 = vpop.f32.mrb[0].mxu0
      %9030 = vmatprep.mubr.bf16.mxu0 0
      %9031 = vmatmul.mubr.bf16.gmra.mrb[0].mxu0 %v8951
      %v9032 = vpop.f32.mrb[0].mxu0
      %v9033 = vadd.f32 0.0, %v9032
      %v9034 = vpop.f32.mrb[0].mxu0
      %v9035 = vpop.f32.mrb[0].mxu0
      %v9036 = vadd.f32 0.0, %v9035
      %v9037 = vpop.f32.mrb[0].mxu0
      %9038 = vmatprep.mubr.bf16.mxu0 0
      %9039 = vmatmul.mubr.bf16.gmra.mrb[0].mxu0 %v8954
      %v9040 = vpop.f32.mrb[0].mxu0
      %v9041 = vadd.f32 0.0, %v9040
      %v9042 = vpop.f32.mrb[0].mxu0
      %v9043 = vpop.f32.mrb[0].mxu0
      %v9044 = vadd.f32 0.0, %v9043
      %v9045 = vpop.f32.mrb[0].mxu0
      %9046 = vmatprep.mubr.bf16.mxu0 0
      %9047 = vmatmul.mubr.bf16.gmra.mrb[0].mxu0 %v8957
      %v9048 = vpop.f32.mrb[0].mxu0
      %v9049 = vadd.f32 0.0, %v9048
      %v9050 = vpop.f32.mrb[0].mxu0
      %v9051 = vpop.f32.mrb[0].mxu0
      %v9052 = vadd.f32 0.0, %v9051
      %v9053 = vpop.f32.mrb[0].mxu0
      %9054 = vmatprep.mubr.bf16.mxu0 0
      %9055 = vmatmul.mubr.bf16.gmra.mrb[0].mxu0 %v8960
      %v9056 = vpop.f32.mrb[0].mxu0
      %v9057 = vadd.f32 0.0, %v9056
      %v9058 = vpop.f32.mrb[0].mxu0
      %v9059 = vpop.f32.mrb[0].mxu0
      %v9060 = vadd.f32 0.0, %v9059
      %v9061 = vpop.f32.mrb[0].mxu0
      %9062 = vmatprep.mubr.bf16.mxu0 0
      %9063 = vmatmul.mubr.bf16.gmra.mrb[0].mxu0 %v8963
      %v9064 = vpop.f32.mrb[0].mxu0
      %v9065 = vadd.f32 0.0, %v9064
      %v9066 = vpop.f32.mrb[0].mxu0
      %v9067 = vpop.f32.mrb[0].mxu0
      %v9068 = vadd.f32 0.0, %v9067
      %v9069 = vpop.f32.mrb[0].mxu0
      %9070 = vmatprep.mubr.bf16.mxu0 0
      %9071 = vmatmul.mubr.bf16.gmra.mrb[0].mxu0 %v8966
      %v9072 = vpop.f32.mrb[0].mxu0
      %v9073 = vadd.f32 0.0, %v9072
      %v9074 = vpop.f32.mrb[0].mxu0
      %v9075 = vpop.f32.mrb[0].mxu0
      %v9076 = vadd.f32 0.0, %v9075
      %v9077 = vpop.f32.mrb[0].mxu0
      %9078 = vmatprep.mubr.bf16.mxu0 0
      %9079 = vmatmul.mubr.bf16.gmra.mrb[0].mxu0 %v8969
      %v9080 = vpop.f32.mrb[0].mxu0
      %v9081 = vadd.f32 0.0, %v9080
      %v9082 = vpop.f32.mrb[0].mxu0
      %v9083 = vpop.f32.mrb[0].mxu0
      %v9084 = vadd.f32 0.0, %v9083
      %v9085 = vpop.f32.mrb[0].mxu0
      %9086 = vdwg.mxu0
      %v9087 = vadd.f32 %v8889, %v9009
      %v9088 = vadd.f32 %v8890, %v9012
      %v9089 = vadd.f32 %v8891, %v9017
      %v9090 = vadd.f32 %v8892, %v9020
      %v9091 = vadd.f32 %v8893, %v9025
      %v9092 = vadd.f32 %v8894, %v9028
      %v9093 = vadd.f32 %v8895, %v9033
      %v9094 = vadd.f32 %v8896, %v9036
      %v9095 = vadd.f32 %v8897, %v9041
      %v9096 = vadd.f32 %v8898, %v9044
      %v9097 = vadd.f32 %v8899, %v9049
      %v9098 = vadd.f32 %v8900, %v9052
      %v9099 = vadd.f32 %v8901, %v9057
      %v9100 = vadd.f32 %v8902, %v9060
      %v9101 = vadd.f32 %v8903, %v9065
      %v9102 = vadd.f32 %v8904, %v9068
      %v9103 = vadd.f32 %v8905, %v9073
      %v9104 = vadd.f32 %v8906, %v9076
      %v9105 = vadd.f32 %v8907, %v9081
      %v9106 = vadd.f32 %v8908, %v9084
      %v9107 = vld [vmem:[%s8710 + $0x9] sm:$0xff]
      %v9108 = vld [vmem:[%s8710 + $0x11] sm:$0xff]
      %v9109 = vld [vmem:[%s8710 + $0x29] sm:$0xff]
      %v9110 = vld [vmem:[%s8710 + $0x31] sm:$0xff]
      %v9111 = vld [vmem:[%s8710 + $0x49] sm:$0xff]
      %v9112 = vld [vmem:[%s8710 + $0x51] sm:$0xff]
      %v9113 = vld [vmem:[%s8710 + $0x69] sm:$0xff]
      %v9114 = vld [vmem:[%s8710 + $0x71] sm:$0xff]
      %v9115 = vld [vmem:[%s8710 + $0x89] sm:$0xff]
      %v9116 = vld [vmem:[%s8710 + $0x91] sm:$0xff]
      %v9117 = vld [vmem:[%s8710 + $0xa9] sm:$0xff]
      %v9118 = vld [vmem:[%s8710 + $0xb1] sm:$0xff]
      %v9119 = vld [vmem:[%s8710 + $0xc9] sm:$0xff]
      %v9120 = vld [vmem:[%s8710 + $0xd1] sm:$0xff]
      %v9121 = vld [vmem:[%s8710 + $0xe9] sm:$0xff]
      %v9122 = vld [vmem:[%s8710 + $0xf1] sm:$0xff]
      %v9123 = vld [vmem:[%s8710 + $0x109] sm:$0xff]
      %v9124 = vld [vmem:[%s8710 + $0x111] sm:$0xff]
      %v9125 = vld [vmem:[%s8710 + $0x129] sm:$0xff]
      %v9126 = vld [vmem:[%s8710 + $0x131] sm:$0xff]
      %v9127 = vpack.c.bf16 %v9108, %v9107
      %v9128 = vpack.c.bf16 %v9110, %v9109
      %v9129 = vpack.c.bf16 %v9112, %v9111
      %v9130 = vpack.c.bf16 %v9114, %v9113
      %v9131 = vpack.c.bf16 %v9116, %v9115
      %v9132 = vpack.c.bf16 %v9118, %v9117
      %v9133 = vpack.c.bf16 %v9120, %v9119
      %v9134 = vpack.c.bf16 %v9122, %v9121
      %v9135 = vpack.c.bf16 %v9124, %v9123
      %v9136 = vpack.c.bf16 %v9126, %v9125
      %s9137 = scalar_lea.vmem %s3, 148
      %v9138 = vld [vmem:[%s9137] sm:$0x7]
      %v9140 = vsel %vm1722, %v9127, 0
      %v9143 = vsel %vm1722, %v9128, 0
      %v9146 = vsel %vm1722, %v9129, 0
      %v9149 = vsel %vm1722, %v9130, 0
      %v9152 = vsel %vm1722, %v9131, 0
      %v9155 = vsel %vm1722, %v9132, 0
      %v9158 = vsel %vm1722, %v9133, 0
      %v9161 = vsel %vm1722, %v9134, 0
      %v9164 = vsel %vm1722, %v9135, 0
      %v9167 = vsel %vm1722, %v9136, 0
      %v9170 = vsel %vm1910, %v9138, 0
      %9172 = vmatprep.subr.bf16.mxu0 0
      %9173 = vmatpush1.bf16.msra.mxu0 %v9170
      %9174 = vmatprep.subr.bf16.mxu0 0
      %9175 = vmatpush1.bf16.msra.mxu0 0
      %9176 = vmatprep.subr.bf16.mxu0 0
      %9177 = vmatpush1.bf16.msra.mxu0 0
      %9178 = vmatprep.subr.bf16.mxu0 0
      %9179 = vmatpush1.bf16.msra.mxu0 0
      %9180 = vmatprep.subr.bf16.mxu0 0
      %9181 = vmatpush1.bf16.msra.mxu0 0
      %9182 = vmatprep.subr.bf16.mxu0 0
      %9183 = vmatpush1.bf16.msra.mxu0 0
      %9184 = vmatprep.subr.bf16.mxu0 0
      %9185 = vmatpush1.bf16.msra.mxu0 0
      %9186 = vmatprep.subr.bf16.mxu0 0
      %9187 = vmatpush1.bf16.msra.mxu0 0
      %9188 = vmatprep.subr.bf16.mxu0 0
      %9189 = vmatpush1.bf16.msra.mxu0 0
      %9190 = vmatprep.subr.bf16.mxu0 0
      %9191 = vmatpush1.bf16.msra.mxu0 0
      %9192 = vmatprep.subr.bf16.mxu0 0
      %9193 = vmatpush1.bf16.msra.mxu0 0
      %9194 = vmatprep.subr.bf16.mxu0 0
      %9195 = vmatpush1.bf16.msra.mxu0 0
      %9196 = vmatprep.subr.bf16.mxu0 0
      %9197 = vmatpush1.bf16.msra.mxu0 0
      %9198 = vmatprep.subr.bf16.mxu0 0
      %9199 = vmatpush1.bf16.msra.mxu0 0
      %9200 = vmatprep.subr.bf16.mxu0 0
      %9201 = vmatpush1.bf16.msra.mxu0 0
      %9202 = vmatprep.subr.bf16.mxu0 0
      %9203 = vmatpush1.bf16.msra.mxu0 0
      %9204 = vmatprep.mubr.bf16.mxu0 0
      %9205 = vmatmul.mubr.bf16.gmra.mrb[0].mxu0 %v9140
      %v9206 = vpop.f32.mrb[0].mxu0
      %v9207 = vadd.f32 0.0, %v9206
      %v9208 = vpop.f32.mrb[0].mxu0
      %v9209 = vpop.f32.mrb[0].mxu0
      %v9210 = vadd.f32 0.0, %v9209
      %v9211 = vpop.f32.mrb[0].mxu0
      %9212 = vmatprep.mubr.bf16.mxu0 0
      %9213 = vmatmul.mubr.bf16.gmra.mrb[0].mxu0 %v9143
      %v9214 = vpop.f32.mrb[0].mxu0
      %v9215 = vadd.f32 0.0, %v9214
      %v9216 = vpop.f32.mrb[0].mxu0
      %v9217 = vpop.f32.mrb[0].mxu0
      %v9218 = vadd.f32 0.0, %v9217
      %v9219 = vpop.f32.mrb[0].mxu0
      %9220 = vmatprep.mubr.bf16.mxu0 0
      %9221 = vmatmul.mubr.bf16.gmra.mrb[0].mxu0 %v9146
      %v9222 = vpop.f32.mrb[0].mxu0
      %v9223 = vadd.f32 0.0, %v9222
      %v9224 = vpop.f32.mrb[0].mxu0
      %v9225 = vpop.f32.mrb[0].mxu0
      %v9226 = vadd.f32 0.0, %v9225
      %v9227 = vpop.f32.mrb[0].mxu0
      %9228 = vmatprep.mubr.bf16.mxu0 0
      %9229 = vmatmul.mubr.bf16.gmra.mrb[0].mxu0 %v9149
      %v9230 = vpop.f32.mrb[0].mxu0
      %v9231 = vadd.f32 0.0, %v9230
      %v9232 = vpop.f32.mrb[0].mxu0
      %v9233 = vpop.f32.mrb[0].mxu0
      %v9234 = vadd.f32 0.0, %v9233
      %v9235 = vpop.f32.mrb[0].mxu0
      %9236 = vmatprep.mubr.bf16.mxu0 0
      %9237 = vmatmul.mubr.bf16.gmra.mrb[0].mxu0 %v9152
      %v9238 = vpop.f32.mrb[0].mxu0
      %v9239 = vadd.f32 0.0, %v9238
      %v9240 = vpop.f32.mrb[0].mxu0
      %v9241 = vpop.f32.mrb[0].mxu0
      %v9242 = vadd.f32 0.0, %v9241
      %v9243 = vpop.f32.mrb[0].mxu0
      %9244 = vmatprep.mubr.bf16.mxu0 0
      %9245 = vmatmul.mubr.bf16.gmra.mrb[0].mxu0 %v9155
      %v9246 = vpop.f32.mrb[0].mxu0
      %v9247 = vadd.f32 0.0, %v9246
      %v9248 = vpop.f32.mrb[0].mxu0
      %v9249 = vpop.f32.mrb[0].mxu0
      %v9250 = vadd.f32 0.0, %v9249
      %v9251 = vpop.f32.mrb[0].mxu0
      %9252 = vmatprep.mubr.bf16.mxu0 0
      %9253 = vmatmul.mubr.bf16.gmra.mrb[0].mxu0 %v9158
      %v9254 = vpop.f32.mrb[0].mxu0
      %v9255 = vadd.f32 0.0, %v9254
      %v9256 = vpop.f32.mrb[0].mxu0
      %v9257 = vpop.f32.mrb[0].mxu0
      %v9258 = vadd.f32 0.0, %v9257
      %v9259 = vpop.f32.mrb[0].mxu0
      %9260 = vmatprep.mubr.bf16.mxu0 0
      %9261 = vmatmul.mubr.bf16.gmra.mrb[0].mxu0 %v9161
      %v9262 = vpop.f32.mrb[0].mxu0
      %v9263 = vadd.f32 0.0, %v9262
      %v9264 = vpop.f32.mrb[0].mxu0
      %v9265 = vpop.f32.mrb[0].mxu0
      %v9266 = vadd.f32 0.0, %v9265
      %v9267 = vpop.f32.mrb[0].mxu0
      %9268 = vmatprep.mubr.bf16.mxu0 0
      %9269 = vmatmul.mubr.bf16.gmra.mrb[0].mxu0 %v9164
      %v9270 = vpop.f32.mrb[0].mxu0
      %v9271 = vadd.f32 0.0, %v9270
      %v9272 = vpop.f32.mrb[0].mxu0
      %v9273 = vpop.f32.mrb[0].mxu0
      %v9274 = vadd.f32 0.0, %v9273
      %v9275 = vpop.f32.mrb[0].mxu0
      %9276 = vmatprep.mubr.bf16.mxu0 0
      %9277 = vmatmul.mubr.bf16.gmra.mrb[0].mxu0 %v9167
      %v9278 = vpop.f32.mrb[0].mxu0
      %v9279 = vadd.f32 0.0, %v9278
      %v9280 = vpop.f32.mrb[0].mxu0
      %v9281 = vpop.f32.mrb[0].mxu0
      %v9282 = vadd.f32 0.0, %v9281
      %v9283 = vpop.f32.mrb[0].mxu0
      %9284 = vdwg.mxu0
      %v9285 = vadd.f32 %v9087, %v9207
      %v9286 = vadd.f32 %v9088, %v9210
      %v9287 = vadd.f32 %v9089, %v9215
      %v9288 = vadd.f32 %v9090, %v9218
      %v9289 = vadd.f32 %v9091, %v9223
      %v9290 = vadd.f32 %v9092, %v9226
      %v9291 = vadd.f32 %v9093, %v9231
      %v9292 = vadd.f32 %v9094, %v9234
      %v9293 = vadd.f32 %v9095, %v9239
      %v9294 = vadd.f32 %v9096, %v9242
      %v9295 = vadd.f32 %v9097, %v9247
      %v9296 = vadd.f32 %v9098, %v9250
      %v9297 = vadd.f32 %v9099, %v9255
      %v9298 = vadd.f32 %v9100, %v9258
      %v9299 = vadd.f32 %v9101, %v9263
      %v9300 = vadd.f32 %v9102, %v9266
      %v9301 = vadd.f32 %v9103, %v9271
      %v9302 = vadd.f32 %v9104, %v9274
      %v9303 = vadd.f32 %v9105, %v9279
      %v9304 = vadd.f32 %v9106, %v9282
      %v9305 = vld [vmem:[%s8710 + $0xa] sm:$0xff]
      %v9306 = vld [vmem:[%s8710 + $0x12] sm:$0xff]
      %v9307 = vld [vmem:[%s8710 + $0x2a] sm:$0xff]
      %v9308 = vld [vmem:[%s8710 + $0x32] sm:$0xff]
      %v9309 = vld [vmem:[%s8710 + $0x4a] sm:$0xff]
      %v9310 = vld [vmem:[%s8710 + $0x52] sm:$0xff]
      %v9311 = vld [vmem:[%s8710 + $0x6a] sm:$0xff]
      %v9312 = vld [vmem:[%s8710 + $0x72] sm:$0xff]
      %v9313 = vld [vmem:[%s8710 + $0x8a] sm:$0xff]
      %v9314 = vld [vmem:[%s8710 + $0x92] sm:$0xff]
      %v9315 = vld [vmem:[%s8710 + $0xaa] sm:$0xff]
      %v9316 = vld [vmem:[%s8710 + $0xb2] sm:$0xff]
      %v9317 = vld [vmem:[%s8710 + $0xca] sm:$0xff]
      %v9318 = vld [vmem:[%s8710 + $0xd2] sm:$0xff]
      %v9319 = vld [vmem:[%s8710 + $0xea] sm:$0xff]
      %v9320 = vld [vmem:[%s8710 + $0xf2] sm:$0xff]
      %v9321 = vld [vmem:[%s8710 + $0x10a] sm:$0xff]
      %v9322 = vld [vmem:[%s8710 + $0x112] sm:$0xff]
      %v9323 = vld [vmem:[%s8710 + $0x12a] sm:$0xff]
      %v9324 = vld [vmem:[%s8710 + $0x132] sm:$0xff]
      %v9325 = vpack.c.bf16 %v9306, %v9305
      %v9326 = vpack.c.bf16 %v9308, %v9307
      %v9327 = vpack.c.bf16 %v9310, %v9309
      %v9328 = vpack.c.bf16 %v9312, %v9311
      %v9329 = vpack.c.bf16 %v9314, %v9313
      %v9330 = vpack.c.bf16 %v9316, %v9315
      %v9331 = vpack.c.bf16 %v9318, %v9317
      %v9332 = vpack.c.bf16 %v9320, %v9319
      %v9333 = vpack.c.bf16 %v9322, %v9321
      %v9334 = vpack.c.bf16 %v9324, %v9323
      %s9335 = scalar_lea.vmem %s3, 152
      %v9336 = vld [vmem:[%s9335] sm:$0x7]
      %v9338 = vsel %vm1722, %v9325, 0
      %v9341 = vsel %vm1722, %v9326, 0
      %v9344 = vsel %vm1722, %v9327, 0
      %v9347 = vsel %vm1722, %v9328, 0
      %v9350 = vsel %vm1722, %v9329, 0
      %v9353 = vsel %vm1722, %v9330, 0
      %v9356 = vsel %vm1722, %v9331, 0
      %v9359 = vsel %vm1722, %v9332, 0
      %v9362 = vsel %vm1722, %v9333, 0
      %v9365 = vsel %vm1722, %v9334, 0
      %v9368 = vsel %vm1910, %v9336, 0
      %9370 = vmatprep.subr.bf16.mxu0 0
      %9371 = vmatpush1.bf16.msra.mxu0 %v9368
      %9372 = vmatprep.subr.bf16.mxu0 0
      %9373 = vmatpush1.bf16.msra.mxu0 0
      %9374 = vmatprep.subr.bf16.mxu0 0
      %9375 = vmatpush1.bf16.msra.mxu0 0
      %9376 = vmatprep.subr.bf16.mxu0 0
      %9377 = vmatpush1.bf16.msra.mxu0 0
      %9378 = vmatprep.subr.bf16.mxu0 0
      %9379 = vmatpush1.bf16.msra.mxu0 0
      %9380 = vmatprep.subr.bf16.mxu0 0
      %9381 = vmatpush1.bf16.msra.mxu0 0
      %9382 = vmatprep.subr.bf16.mxu0 0
      %9383 = vmatpush1.bf16.msra.mxu0 0
      %9384 = vmatprep.subr.bf16.mxu0 0
      %9385 = vmatpush1.bf16.msra.mxu0 0
      %9386 = vmatprep.subr.bf16.mxu0 0
      %9387 = vmatpush1.bf16.msra.mxu0 0
      %9388 = vmatprep.subr.bf16.mxu0 0
      %9389 = vmatpush1.bf16.msra.mxu0 0
      %9390 = vmatprep.subr.bf16.mxu0 0
      %9391 = vmatpush1.bf16.msra.mxu0 0
      %9392 = vmatprep.subr.bf16.mxu0 0
      %9393 = vmatpush1.bf16.msra.mxu0 0
      %9394 = vmatprep.subr.bf16.mxu0 0
      %9395 = vmatpush1.bf16.msra.mxu0 0
      %9396 = vmatprep.subr.bf16.mxu0 0
      %9397 = vmatpush1.bf16.msra.mxu0 0
      %9398 = vmatprep.subr.bf16.mxu0 0
      %9399 = vmatpush1.bf16.msra.mxu0 0
      %9400 = vmatprep.subr.bf16.mxu0 0
      %9401 = vmatpush1.bf16.msra.mxu0 0
      %9402 = vmatprep.mubr.bf16.mxu0 0
      %9403 = vmatmul.mubr.bf16.gmra.mrb[0].mxu0 %v9338
      %v9404 = vpop.f32.mrb[0].mxu0
      %v9405 = vadd.f32 0.0, %v9404
      %v9406 = vpop.f32.mrb[0].mxu0
      %v9407 = vpop.f32.mrb[0].mxu0
      %v9408 = vadd.f32 0.0, %v9407
      %v9409 = vpop.f32.mrb[0].mxu0
      %9410 = vmatprep.mubr.bf16.mxu0 0
      %9411 = vmatmul.mubr.bf16.gmra.mrb[0].mxu0 %v9341
      %v9412 = vpop.f32.mrb[0].mxu0
      %v9413 = vadd.f32 0.0, %v9412
      %v9414 = vpop.f32.mrb[0].mxu0
      %v9415 = vpop.f32.mrb[0].mxu0
      %v9416 = vadd.f32 0.0, %v9415
      %v9417 = vpop.f32.mrb[0].mxu0
      %9418 = vmatprep.mubr.bf16.mxu0 0
      %9419 = vmatmul.mubr.bf16.gmra.mrb[0].mxu0 %v9344
      %v9420 = vpop.f32.mrb[0].mxu0
      %v9421 = vadd.f32 0.0, %v9420
      %v9422 = vpop.f32.mrb[0].mxu0
      %v9423 = vpop.f32.mrb[0].mxu0
      %v9424 = vadd.f32 0.0, %v9423
      %v9425 = vpop.f32.mrb[0].mxu0
      %9426 = vmatprep.mubr.bf16.mxu0 0
      %9427 = vmatmul.mubr.bf16.gmra.mrb[0].mxu0 %v9347
      %v9428 = vpop.f32.mrb[0].mxu0
      %v9429 = vadd.f32 0.0, %v9428
      %v9430 = vpop.f32.mrb[0].mxu0
      %v9431 = vpop.f32.mrb[0].mxu0
      %v9432 = vadd.f32 0.0, %v9431
      %v9433 = vpop.f32.mrb[0].mxu0
      %9434 = vmatprep.mubr.bf16.mxu0 0
      %9435 = vmatmul.mubr.bf16.gmra.mrb[0].mxu0 %v9350
      %v9436 = vpop.f32.mrb[0].mxu0
      %v9437 = vadd.f32 0.0, %v9436
      %v9438 = vpop.f32.mrb[0].mxu0
      %v9439 = vpop.f32.mrb[0].mxu0
      %v9440 = vadd.f32 0.0, %v9439
      %v9441 = vpop.f32.mrb[0].mxu0
      %9442 = vmatprep.mubr.bf16.mxu0 0
      %9443 = vmatmul.mubr.bf16.gmra.mrb[0].mxu0 %v9353
      %v9444 = vpop.f32.mrb[0].mxu0
      %v9445 = vadd.f32 0.0, %v9444
      %v9446 = vpop.f32.mrb[0].mxu0
      %v9447 = vpop.f32.mrb[0].mxu0
      %v9448 = vadd.f32 0.0, %v9447
      %v9449 = vpop.f32.mrb[0].mxu0
      %9450 = vmatprep.mubr.bf16.mxu0 0
      %9451 = vmatmul.mubr.bf16.gmra.mrb[0].mxu0 %v9356
      %v9452 = vpop.f32.mrb[0].mxu0
      %v9453 = vadd.f32 0.0, %v9452
      %v9454 = vpop.f32.mrb[0].mxu0
      %v9455 = vpop.f32.mrb[0].mxu0
      %v9456 = vadd.f32 0.0, %v9455
      %v9457 = vpop.f32.mrb[0].mxu0
      %9458 = vmatprep.mubr.bf16.mxu0 0
      %9459 = vmatmul.mubr.bf16.gmra.mrb[0].mxu0 %v9359
      %v9460 = vpop.f32.mrb[0].mxu0
      %v9461 = vadd.f32 0.0, %v9460
      %v9462 = vpop.f32.mrb[0].mxu0
      %v9463 = vpop.f32.mrb[0].mxu0
      %v9464 = vadd.f32 0.0, %v9463
      %v9465 = vpop.f32.mrb[0].mxu0
      %9466 = vmatprep.mubr.bf16.mxu0 0
      %9467 = vmatmul.mubr.bf16.gmra.mrb[0].mxu0 %v9362
      %v9468 = vpop.f32.mrb[0].mxu0
      %v9469 = vadd.f32 0.0, %v9468
      %v9470 = vpop.f32.mrb[0].mxu0
      %v9471 = vpop.f32.mrb[0].mxu0
      %v9472 = vadd.f32 0.0, %v9471
      %v9473 = vpop.f32.mrb[0].mxu0
      %9474 = vmatprep.mubr.bf16.mxu0 0
      %9475 = vmatmul.mubr.bf16.gmra.mrb[0].mxu0 %v9365
      %v9476 = vpop.f32.mrb[0].mxu0
      %v9477 = vadd.f32 0.0, %v9476
      %v9478 = vpop.f32.mrb[0].mxu0
      %v9479 = vpop.f32.mrb[0].mxu0
      %v9480 = vadd.f32 0.0, %v9479
      %v9481 = vpop.f32.mrb[0].mxu0
      %9482 = vdwg.mxu0
      %v9483 = vadd.f32 %v9285, %v9405
      %v9484 = vadd.f32 %v9286, %v9408
      %v9485 = vadd.f32 %v9287, %v9413
      %v9486 = vadd.f32 %v9288, %v9416
      %v9487 = vadd.f32 %v9289, %v9421
      %v9488 = vadd.f32 %v9290, %v9424
      %v9489 = vadd.f32 %v9291, %v9429
      %v9490 = vadd.f32 %v9292, %v9432
      %v9491 = vadd.f32 %v9293, %v9437
      %v9492 = vadd.f32 %v9294, %v9440
      %v9493 = vadd.f32 %v9295, %v9445
      %v9494 = vadd.f32 %v9296, %v9448
      %v9495 = vadd.f32 %v9297, %v9453
      %v9496 = vadd.f32 %v9298, %v9456
      %v9497 = vadd.f32 %v9299, %v9461
      %v9498 = vadd.f32 %v9300, %v9464
      %v9499 = vadd.f32 %v9301, %v9469
      %v9500 = vadd.f32 %v9302, %v9472
      %v9501 = vadd.f32 %v9303, %v9477
      %v9502 = vadd.f32 %v9304, %v9480
      %v9503 = vld [vmem:[%s8710 + $0xb] sm:$0xff]
      %v9504 = vld [vmem:[%s8710 + $0x13] sm:$0xff]
      %v9505 = vld [vmem:[%s8710 + $0x2b] sm:$0xff]
      %v9506 = vld [vmem:[%s8710 + $0x33] sm:$0xff]
      %v9507 = vld [vmem:[%s8710 + $0x4b] sm:$0xff]
      %v9508 = vld [vmem:[%s8710 + $0x53] sm:$0xff]
      %v9509 = vld [vmem:[%s8710 + $0x6b] sm:$0xff]
      %v9510 = vld [vmem:[%s8710 + $0x73] sm:$0xff]
      %v9511 = vld [vmem:[%s8710 + $0x8b] sm:$0xff]
      %v9512 = vld [vmem:[%s8710 + $0x93] sm:$0xff]
      %v9513 = vld [vmem:[%s8710 + $0xab] sm:$0xff]
      %v9514 = vld [vmem:[%s8710 + $0xb3] sm:$0xff]
      %v9515 = vld [vmem:[%s8710 + $0xcb] sm:$0xff]
      %v9516 = vld [vmem:[%s8710 + $0xd3] sm:$0xff]
      %v9517 = vld [vmem:[%s8710 + $0xeb] sm:$0xff]
      %v9518 = vld [vmem:[%s8710 + $0xf3] sm:$0xff]
      %v9519 = vld [vmem:[%s8710 + $0x10b] sm:$0xff]
      %v9520 = vld [vmem:[%s8710 + $0x113] sm:$0xff]
      %v9521 = vld [vmem:[%s8710 + $0x12b] sm:$0xff]
      %v9522 = vld [vmem:[%s8710 + $0x133] sm:$0xff]
      %v9523 = vpack.c.bf16 %v9504, %v9503
      %v9524 = vpack.c.bf16 %v9506, %v9505
      %v9525 = vpack.c.bf16 %v9508, %v9507
      %v9526 = vpack.c.bf16 %v9510, %v9509
      %v9527 = vpack.c.bf16 %v9512, %v9511
      %v9528 = vpack.c.bf16 %v9514, %v9513
      %v9529 = vpack.c.bf16 %v9516, %v9515
      %v9530 = vpack.c.bf16 %v9518, %v9517
      %v9531 = vpack.c.bf16 %v9520, %v9519
      %v9532 = vpack.c.bf16 %v9522, %v9521
      %s9533 = scalar_lea.vmem %s3, 156
      %v9534 = vld [vmem:[%s9533] sm:$0x7]
      %v9536 = vsel %vm1722, %v9523, 0
      %v9539 = vsel %vm1722, %v9524, 0
      %v9542 = vsel %vm1722, %v9525, 0
      %v9545 = vsel %vm1722, %v9526, 0
      %v9548 = vsel %vm1722, %v9527, 0
      %v9551 = vsel %vm1722, %v9528, 0
      %v9554 = vsel %vm1722, %v9529, 0
      %v9557 = vsel %vm1722, %v9530, 0
      %v9560 = vsel %vm1722, %v9531, 0
      %v9563 = vsel %vm1722, %v9532, 0
      %v9566 = vsel %vm1910, %v9534, 0
      %9568 = vmatprep.subr.bf16.mxu0 0
      %9569 = vmatpush1.bf16.msra.mxu0 %v9566
      %9570 = vmatprep.subr.bf16.mxu0 0
      %9571 = vmatpush1.bf16.msra.mxu0 0
      %9572 = vmatprep.subr.bf16.mxu0 0
      %9573 = vmatpush1.bf16.msra.mxu0 0
      %9574 = vmatprep.subr.bf16.mxu0 0
      %9575 = vmatpush1.bf16.msra.mxu0 0
      %9576 = vmatprep.subr.bf16.mxu0 0
      %9577 = vmatpush1.bf16.msra.mxu0 0
      %9578 = vmatprep.subr.bf16.mxu0 0
      %9579 = vmatpush1.bf16.msra.mxu0 0
      %9580 = vmatprep.subr.bf16.mxu0 0
      %9581 = vmatpush1.bf16.msra.mxu0 0
      %9582 = vmatprep.subr.bf16.mxu0 0
      %9583 = vmatpush1.bf16.msra.mxu0 0
      %9584 = vmatprep.subr.bf16.mxu0 0
      %9585 = vmatpush1.bf16.msra.mxu0 0
      %9586 = vmatprep.subr.bf16.mxu0 0
      %9587 = vmatpush1.bf16.msra.mxu0 0
      %9588 = vmatprep.subr.bf16.mxu0 0
      %9589 = vmatpush1.bf16.msra.mxu0 0
      %9590 = vmatprep.subr.bf16.mxu0 0
      %9591 = vmatpush1.bf16.msra.mxu0 0
      %9592 = vmatprep.subr.bf16.mxu0 0
      %9593 = vmatpush1.bf16.msra.mxu0 0
      %9594 = vmatprep.subr.bf16.mxu0 0
      %9595 = vmatpush1.bf16.msra.mxu0 0
      %9596 = vmatprep.subr.bf16.mxu0 0
      %9597 = vmatpush1.bf16.msra.mxu0 0
      %9598 = vmatprep.subr.bf16.mxu0 0
      %9599 = vmatpush1.bf16.msra.mxu0 0
      %9600 = vmatprep.mubr.bf16.mxu0 0
      %9601 = vmatmul.mubr.bf16.gmra.mrb[0].mxu0 %v9536
      %v9602 = vpop.f32.mrb[0].mxu0
      %v9603 = vadd.f32 0.0, %v9602
      %v9604 = vpop.f32.mrb[0].mxu0
      %v9605 = vpop.f32.mrb[0].mxu0
      %v9606 = vadd.f32 0.0, %v9605
      %v9607 = vpop.f32.mrb[0].mxu0
      %9608 = vmatprep.mubr.bf16.mxu0 0
      %9609 = vmatmul.mubr.bf16.gmra.mrb[0].mxu0 %v9539
      %v9610 = vpop.f32.mrb[0].mxu0
      %v9611 = vadd.f32 0.0, %v9610
      %v9612 = vpop.f32.mrb[0].mxu0
      %v9613 = vpop.f32.mrb[0].mxu0
      %v9614 = vadd.f32 0.0, %v9613
      %v9615 = vpop.f32.mrb[0].mxu0
      %9616 = vmatprep.mubr.bf16.mxu0 0
      %9617 = vmatmul.mubr.bf16.gmra.mrb[0].mxu0 %v9542
      %v9618 = vpop.f32.mrb[0].mxu0
      %v9619 = vadd.f32 0.0, %v9618
      %v9620 = vpop.f32.mrb[0].mxu0
      %v9621 = vpop.f32.mrb[0].mxu0
      %v9622 = vadd.f32 0.0, %v9621
      %v9623 = vpop.f32.mrb[0].mxu0
      %9624 = vmatprep.mubr.bf16.mxu0 0
      %9625 = vmatmul.mubr.bf16.gmra.mrb[0].mxu0 %v9545
      %v9626 = vpop.f32.mrb[0].mxu0
      %v9627 = vadd.f32 0.0, %v9626
      %v9628 = vpop.f32.mrb[0].mxu0
      %v9629 = vpop.f32.mrb[0].mxu0
      %v9630 = vadd.f32 0.0, %v9629
      %v9631 = vpop.f32.mrb[0].mxu0
      %9632 = vmatprep.mubr.bf16.mxu0 0
      %9633 = vmatmul.mubr.bf16.gmra.mrb[0].mxu0 %v9548
      %v9634 = vpop.f32.mrb[0].mxu0
      %v9635 = vadd.f32 0.0, %v9634
      %v9636 = vpop.f32.mrb[0].mxu0
      %v9637 = vpop.f32.mrb[0].mxu0
      %v9638 = vadd.f32 0.0, %v9637
      %v9639 = vpop.f32.mrb[0].mxu0
      %9640 = vmatprep.mubr.bf16.mxu0 0
      %9641 = vmatmul.mubr.bf16.gmra.mrb[0].mxu0 %v9551
      %v9642 = vpop.f32.mrb[0].mxu0
      %v9643 = vadd.f32 0.0, %v9642
      %v9644 = vpop.f32.mrb[0].mxu0
      %v9645 = vpop.f32.mrb[0].mxu0
      %v9646 = vadd.f32 0.0, %v9645
      %v9647 = vpop.f32.mrb[0].mxu0
      %9648 = vmatprep.mubr.bf16.mxu0 0
      %9649 = vmatmul.mubr.bf16.gmra.mrb[0].mxu0 %v9554
      %v9650 = vpop.f32.mrb[0].mxu0
      %v9651 = vadd.f32 0.0, %v9650
      %v9652 = vpop.f32.mrb[0].mxu0
      %v9653 = vpop.f32.mrb[0].mxu0
      %v9654 = vadd.f32 0.0, %v9653
      %v9655 = vpop.f32.mrb[0].mxu0
      %9656 = vmatprep.mubr.bf16.mxu0 0
      %9657 = vmatmul.mubr.bf16.gmra.mrb[0].mxu0 %v9557
      %v9658 = vpop.f32.mrb[0].mxu0
      %v9659 = vadd.f32 0.0, %v9658
      %v9660 = vpop.f32.mrb[0].mxu0
      %v9661 = vpop.f32.mrb[0].mxu0
      %v9662 = vadd.f32 0.0, %v9661
      %v9663 = vpop.f32.mrb[0].mxu0
      %9664 = vmatprep.mubr.bf16.mxu0 0
      %9665 = vmatmul.mubr.bf16.gmra.mrb[0].mxu0 %v9560
      %v9666 = vpop.f32.mrb[0].mxu0
      %v9667 = vadd.f32 0.0, %v9666
      %v9668 = vpop.f32.mrb[0].mxu0
      %v9669 = vpop.f32.mrb[0].mxu0
      %v9670 = vadd.f32 0.0, %v9669
      %v9671 = vpop.f32.mrb[0].mxu0
      %9672 = vmatprep.mubr.bf16.mxu0 0
      %9673 = vmatmul.mubr.bf16.gmra.mrb[0].mxu0 %v9563
      %v9674 = vpop.f32.mrb[0].mxu0
      %v9675 = vadd.f32 0.0, %v9674
      %v9676 = vpop.f32.mrb[0].mxu0
      %v9677 = vpop.f32.mrb[0].mxu0
      %v9678 = vadd.f32 0.0, %v9677
      %v9679 = vpop.f32.mrb[0].mxu0
      %9680 = vdwg.mxu0
      %v9681 = vadd.f32 %v9483, %v9603
      %v9682 = vadd.f32 %v9484, %v9606
      %v9683 = vadd.f32 %v9485, %v9611
      %v9684 = vadd.f32 %v9486, %v9614
      %v9685 = vadd.f32 %v9487, %v9619
      %v9686 = vadd.f32 %v9488, %v9622
      %v9687 = vadd.f32 %v9489, %v9627
      %v9688 = vadd.f32 %v9490, %v9630
      %v9689 = vadd.f32 %v9491, %v9635
      %v9690 = vadd.f32 %v9492, %v9638
      %v9691 = vadd.f32 %v9493, %v9643
      %v9692 = vadd.f32 %v9494, %v9646
      %v9693 = vadd.f32 %v9495, %v9651
      %v9694 = vadd.f32 %v9496, %v9654
      %v9695 = vadd.f32 %v9497, %v9659
      %v9696 = vadd.f32 %v9498, %v9662
      %v9697 = vadd.f32 %v9499, %v9667
      %v9698 = vadd.f32 %v9500, %v9670
      %v9699 = vadd.f32 %v9501, %v9675
      %v9700 = vadd.f32 %v9502, %v9678
      %v9701 = vld [vmem:[%s8710 + $0xc] sm:$0xff]
      %v9702 = vld [vmem:[%s8710 + $0x14] sm:$0xff]
      %v9703 = vld [vmem:[%s8710 + $0x2c] sm:$0xff]
      %v9704 = vld [vmem:[%s8710 + $0x34] sm:$0xff]
      %v9705 = vld [vmem:[%s8710 + $0x4c] sm:$0xff]
      %v9706 = vld [vmem:[%s8710 + $0x54] sm:$0xff]
      %v9707 = vld [vmem:[%s8710 + $0x6c] sm:$0xff]
      %v9708 = vld [vmem:[%s8710 + $0x74] sm:$0xff]
      %v9709 = vld [vmem:[%s8710 + $0x8c] sm:$0xff]
      %v9710 = vld [vmem:[%s8710 + $0x94] sm:$0xff]
      %v9711 = vld [vmem:[%s8710 + $0xac] sm:$0xff]
      %v9712 = vld [vmem:[%s8710 + $0xb4] sm:$0xff]
      %v9713 = vld [vmem:[%s8710 + $0xcc] sm:$0xff]
      %v9714 = vld [vmem:[%s8710 + $0xd4] sm:$0xff]
      %v9715 = vld [vmem:[%s8710 + $0xec] sm:$0xff]
      %v9716 = vld [vmem:[%s8710 + $0xf4] sm:$0xff]
      %v9717 = vld [vmem:[%s8710 + $0x10c] sm:$0xff]
      %v9718 = vld [vmem:[%s8710 + $0x114] sm:$0xff]
      %v9719 = vld [vmem:[%s8710 + $0x12c] sm:$0xff]
      %v9720 = vld [vmem:[%s8710 + $0x134] sm:$0xff]
      %v9721 = vpack.c.bf16 %v9702, %v9701
      %v9722 = vpack.c.bf16 %v9704, %v9703
      %v9723 = vpack.c.bf16 %v9706, %v9705
      %v9724 = vpack.c.bf16 %v9708, %v9707
      %v9725 = vpack.c.bf16 %v9710, %v9709
      %v9726 = vpack.c.bf16 %v9712, %v9711
      %v9727 = vpack.c.bf16 %v9714, %v9713
      %v9728 = vpack.c.bf16 %v9716, %v9715
      %v9729 = vpack.c.bf16 %v9718, %v9717
      %v9730 = vpack.c.bf16 %v9720, %v9719
      %s9731 = scalar_lea.vmem %s3, 160
      %v9732 = vld [vmem:[%s9731] sm:$0x7]
      %v9734 = vsel %vm1722, %v9721, 0
      %v9737 = vsel %vm1722, %v9722, 0
      %v9740 = vsel %vm1722, %v9723, 0
      %v9743 = vsel %vm1722, %v9724, 0
      %v9746 = vsel %vm1722, %v9725, 0
      %v9749 = vsel %vm1722, %v9726, 0
      %v9752 = vsel %vm1722, %v9727, 0
      %v9755 = vsel %vm1722, %v9728, 0
      %v9758 = vsel %vm1722, %v9729, 0
      %v9761 = vsel %vm1722, %v9730, 0
      %v9764 = vsel %vm1910, %v9732, 0
      %9766 = vmatprep.subr.bf16.mxu0 0
      %9767 = vmatpush1.bf16.msra.mxu0 %v9764
      %9768 = vmatprep.subr.bf16.mxu0 0
      %9769 = vmatpush1.bf16.msra.mxu0 0
      %9770 = vmatprep.subr.bf16.mxu0 0
      %9771 = vmatpush1.bf16.msra.mxu0 0
      %9772 = vmatprep.subr.bf16.mxu0 0
      %9773 = vmatpush1.bf16.msra.mxu0 0
      %9774 = vmatprep.subr.bf16.mxu0 0
      %9775 = vmatpush1.bf16.msra.mxu0 0
      %9776 = vmatprep.subr.bf16.mxu0 0
      %9777 = vmatpush1.bf16.msra.mxu0 0
      %9778 = vmatprep.subr.bf16.mxu0 0
      %9779 = vmatpush1.bf16.msra.mxu0 0
      %9780 = vmatprep.subr.bf16.mxu0 0
      %9781 = vmatpush1.bf16.msra.mxu0 0
      %9782 = vmatprep.subr.bf16.mxu0 0
      %9783 = vmatpush1.bf16.msra.mxu0 0
      %9784 = vmatprep.subr.bf16.mxu0 0
      %9785 = vmatpush1.bf16.msra.mxu0 0
      %9786 = vmatprep.subr.bf16.mxu0 0
      %9787 = vmatpush1.bf16.msra.mxu0 0
      %9788 = vmatprep.subr.bf16.mxu0 0
      %9789 = vmatpush1.bf16.msra.mxu0 0
      %9790 = vmatprep.subr.bf16.mxu0 0
      %9791 = vmatpush1.bf16.msra.mxu0 0
      %9792 = vmatprep.subr.bf16.mxu0 0
      %9793 = vmatpush1.bf16.msra.mxu0 0
      %9794 = vmatprep.subr.bf16.mxu0 0
      %9795 = vmatpush1.bf16.msra.mxu0 0
      %9796 = vmatprep.subr.bf16.mxu0 0
      %9797 = vmatpush1.bf16.msra.mxu0 0
      %9798 = vmatprep.mubr.bf16.mxu0 0
      %9799 = vmatmul.mubr.bf16.gmra.mrb[0].mxu0 %v9734
      %v9800 = vpop.f32.mrb[0].mxu0
      %v9801 = vadd.f32 0.0, %v9800
      %v9802 = vpop.f32.mrb[0].mxu0
      %v9803 = vpop.f32.mrb[0].mxu0
      %v9804 = vadd.f32 0.0, %v9803
      %v9805 = vpop.f32.mrb[0].mxu0
      %9806 = vmatprep.mubr.bf16.mxu0 0
      %9807 = vmatmul.mubr.bf16.gmra.mrb[0].mxu0 %v9737
      %v9808 = vpop.f32.mrb[0].mxu0
      %v9809 = vadd.f32 0.0, %v9808
      %v9810 = vpop.f32.mrb[0].mxu0
      %v9811 = vpop.f32.mrb[0].mxu0
      %v9812 = vadd.f32 0.0, %v9811
      %v9813 = vpop.f32.mrb[0].mxu0
      %9814 = vmatprep.mubr.bf16.mxu0 0
      %9815 = vmatmul.mubr.bf16.gmra.mrb[0].mxu0 %v9740
      %v9816 = vpop.f32.mrb[0].mxu0
      %v9817 = vadd.f32 0.0, %v9816
      %v9818 = vpop.f32.mrb[0].mxu0
      %v9819 = vpop.f32.mrb[0].mxu0
      %v9820 = vadd.f32 0.0, %v9819
      %v9821 = vpop.f32.mrb[0].mxu0
      %9822 = vmatprep.mubr.bf16.mxu0 0
      %9823 = vmatmul.mubr.bf16.gmra.mrb[0].mxu0 %v9743
      %v9824 = vpop.f32.mrb[0].mxu0
      %v9825 = vadd.f32 0.0, %v9824
      %v9826 = vpop.f32.mrb[0].mxu0
      %v9827 = vpop.f32.mrb[0].mxu0
      %v9828 = vadd.f32 0.0, %v9827
      %v9829 = vpop.f32.mrb[0].mxu0
      %9830 = vmatprep.mubr.bf16.mxu0 0
      %9831 = vmatmul.mubr.bf16.gmra.mrb[0].mxu0 %v9746
      %v9832 = vpop.f32.mrb[0].mxu0
      %v9833 = vadd.f32 0.0, %v9832
      %v9834 = vpop.f32.mrb[0].mxu0
      %v9835 = vpop.f32.mrb[0].mxu0
      %v9836 = vadd.f32 0.0, %v9835
      %v9837 = vpop.f32.mrb[0].mxu0
      %9838 = vmatprep.mubr.bf16.mxu0 0
      %9839 = vmatmul.mubr.bf16.gmra.mrb[0].mxu0 %v9749
      %v9840 = vpop.f32.mrb[0].mxu0
      %v9841 = vadd.f32 0.0, %v9840
      %v9842 = vpop.f32.mrb[0].mxu0
      %v9843 = vpop.f32.mrb[0].mxu0
      %v9844 = vadd.f32 0.0, %v9843
      %v9845 = vpop.f32.mrb[0].mxu0
      %9846 = vmatprep.mubr.bf16.mxu0 0
      %9847 = vmatmul.mubr.bf16.gmra.mrb[0].mxu0 %v9752
      %v9848 = vpop.f32.mrb[0].mxu0
      %v9849 = vadd.f32 0.0, %v9848
      %v9850 = vpop.f32.mrb[0].mxu0
      %v9851 = vpop.f32.mrb[0].mxu0
      %v9852 = vadd.f32 0.0, %v9851
      %v9853 = vpop.f32.mrb[0].mxu0
      %9854 = vmatprep.mubr.bf16.mxu0 0
      %9855 = vmatmul.mubr.bf16.gmra.mrb[0].mxu0 %v9755
      %v9856 = vpop.f32.mrb[0].mxu0
      %v9857 = vadd.f32 0.0, %v9856
      %v9858 = vpop.f32.mrb[0].mxu0
      %v9859 = vpop.f32.mrb[0].mxu0
      %v9860 = vadd.f32 0.0, %v9859
      %v9861 = vpop.f32.mrb[0].mxu0
      %9862 = vmatprep.mubr.bf16.mxu0 0
      %9863 = vmatmul.mubr.bf16.gmra.mrb[0].mxu0 %v9758
      %v9864 = vpop.f32.mrb[0].mxu0
      %v9865 = vadd.f32 0.0, %v9864
      %v9866 = vpop.f32.mrb[0].mxu0
      %v9867 = vpop.f32.mrb[0].mxu0
      %v9868 = vadd.f32 0.0, %v9867
      %v9869 = vpop.f32.mrb[0].mxu0
      %9870 = vmatprep.mubr.bf16.mxu0 0
      %9871 = vmatmul.mubr.bf16.gmra.mrb[0].mxu0 %v9761
      %v9872 = vpop.f32.mrb[0].mxu0
      %v9873 = vadd.f32 0.0, %v9872
      %v9874 = vpop.f32.mrb[0].mxu0
      %v9875 = vpop.f32.mrb[0].mxu0
      %v9876 = vadd.f32 0.0, %v9875
      %v9877 = vpop.f32.mrb[0].mxu0
      %9878 = vdwg.mxu0
      %v9879 = vadd.f32 %v9681, %v9801
      %v9880 = vadd.f32 %v9682, %v9804
      %v9881 = vadd.f32 %v9683, %v9809
      %v9882 = vadd.f32 %v9684, %v9812
      %v9883 = vadd.f32 %v9685, %v9817
      %v9884 = vadd.f32 %v9686, %v9820
      %v9885 = vadd.f32 %v9687, %v9825
      %v9886 = vadd.f32 %v9688, %v9828
      %v9887 = vadd.f32 %v9689, %v9833
      %v9888 = vadd.f32 %v9690, %v9836
      %v9889 = vadd.f32 %v9691, %v9841
      %v9890 = vadd.f32 %v9692, %v9844
      %v9891 = vadd.f32 %v9693, %v9849
      %v9892 = vadd.f32 %v9694, %v9852
      %v9893 = vadd.f32 %v9695, %v9857
      %v9894 = vadd.f32 %v9696, %v9860
      %v9895 = vadd.f32 %v9697, %v9865
      %v9896 = vadd.f32 %v9698, %v9868
      %v9897 = vadd.f32 %v9699, %v9873
      %v9898 = vadd.f32 %v9700, %v9876
      %v9899 = vld [vmem:[%s8710 + $0xd] sm:$0xff]
      %v9900 = vld [vmem:[%s8710 + $0x15] sm:$0xff]
      %v9901 = vld [vmem:[%s8710 + $0x2d] sm:$0xff]
      %v9902 = vld [vmem:[%s8710 + $0x35] sm:$0xff]
      %v9903 = vld [vmem:[%s8710 + $0x4d] sm:$0xff]
      %v9904 = vld [vmem:[%s8710 + $0x55] sm:$0xff]
      %v9905 = vld [vmem:[%s8710 + $0x6d] sm:$0xff]
      %v9906 = vld [vmem:[%s8710 + $0x75] sm:$0xff]
      %v9907 = vld [vmem:[%s8710 + $0x8d] sm:$0xff]
      %v9908 = vld [vmem:[%s8710 + $0x95] sm:$0xff]
      %v9909 = vld [vmem:[%s8710 + $0xad] sm:$0xff]
      %v9910 = vld [vmem:[%s8710 + $0xb5] sm:$0xff]
      %v9911 = vld [vmem:[%s8710 + $0xcd] sm:$0xff]
      %v9912 = vld [vmem:[%s8710 + $0xd5] sm:$0xff]
      %v9913 = vld [vmem:[%s8710 + $0xed] sm:$0xff]
      %v9914 = vld [vmem:[%s8710 + $0xf5] sm:$0xff]
      %v9915 = vld [vmem:[%s8710 + $0x10d] sm:$0xff]
      %v9916 = vld [vmem:[%s8710 + $0x115] sm:$0xff]
      %v9917 = vld [vmem:[%s8710 + $0x12d] sm:$0xff]
      %v9918 = vld [vmem:[%s8710 + $0x135] sm:$0xff]
      %v9919 = vpack.c.bf16 %v9900, %v9899
      %v9920 = vpack.c.bf16 %v9902, %v9901
      %v9921 = vpack.c.bf16 %v9904, %v9903
      %v9922 = vpack.c.bf16 %v9906, %v9905
      %v9923 = vpack.c.bf16 %v9908, %v9907
      %v9924 = vpack.c.bf16 %v9910, %v9909
      %v9925 = vpack.c.bf16 %v9912, %v9911
      %v9926 = vpack.c.bf16 %v9914, %v9913
      %v9927 = vpack.c.bf16 %v9916, %v9915
      %v9928 = vpack.c.bf16 %v9918, %v9917
      %s9929 = scalar_lea.vmem %s3, 164
      %v9930 = vld [vmem:[%s9929] sm:$0x7]
      %v9932 = vsel %vm1722, %v9919, 0
      %v9935 = vsel %vm1722, %v9920, 0
      %v9938 = vsel %vm1722, %v9921, 0
      %v9941 = vsel %vm1722, %v9922, 0
      %v9944 = vsel %vm1722, %v9923, 0
      %v9947 = vsel %vm1722, %v9924, 0
      %v9950 = vsel %vm1722, %v9925, 0
      %v9953 = vsel %vm1722, %v9926, 0
      %v9956 = vsel %vm1722, %v9927, 0
      %v9959 = vsel %vm1722, %v9928, 0
      %v9962 = vsel %vm1910, %v9930, 0
      %9964 = vmatprep.subr.bf16.mxu0 0
      %9965 = vmatpush1.bf16.msra.mxu0 %v9962
      %9966 = vmatprep.subr.bf16.mxu0 0
      %9967 = vmatpush1.bf16.msra.mxu0 0
      %9968 = vmatprep.subr.bf16.mxu0 0
      %9969 = vmatpush1.bf16.msra.mxu0 0
      %9970 = vmatprep.subr.bf16.mxu0 0
      %9971 = vmatpush1.bf16.msra.mxu0 0
      %9972 = vmatprep.subr.bf16.mxu0 0
      %9973 = vmatpush1.bf16.msra.mxu0 0
      %9974 = vmatprep.subr.bf16.mxu0 0
      %9975 = vmatpush1.bf16.msra.mxu0 0
      %9976 = vmatprep.subr.bf16.mxu0 0
      %9977 = vmatpush1.bf16.msra.mxu0 0
      %9978 = vmatprep.subr.bf16.mxu0 0
      %9979 = vmatpush1.bf16.msra.mxu0 0
      %9980 = vmatprep.subr.bf16.mxu0 0
      %9981 = vmatpush1.bf16.msra.mxu0 0
      %9982 = vmatprep.subr.bf16.mxu0 0
      %9983 = vmatpush1.bf16.msra.mxu0 0
      %9984 = vmatprep.subr.bf16.mxu0 0
      %9985 = vmatpush1.bf16.msra.mxu0 0
      %9986 = vmatprep.subr.bf16.mxu0 0
      %9987 = vmatpush1.bf16.msra.mxu0 0
      %9988 = vmatprep.subr.bf16.mxu0 0
      %9989 = vmatpush1.bf16.msra.mxu0 0
      %9990 = vmatprep.subr.bf16.mxu0 0
      %9991 = vmatpush1.bf16.msra.mxu0 0
      %9992 = vmatprep.subr.bf16.mxu0 0
      %9993 = vmatpush1.bf16.msra.mxu0 0
      %9994 = vmatprep.subr.bf16.mxu0 0
      %9995 = vmatpush1.bf16.msra.mxu0 0
      %9996 = vmatprep.mubr.bf16.mxu0 0
      %9997 = vmatmul.mubr.bf16.gmra.mrb[0].mxu0 %v9932
      %v9998 = vpop.f32.mrb[0].mxu0
      %v9999 = vadd.f32 0.0, %v9998
      %v10000 = vpop.f32.mrb[0].mxu0
      %v10001 = vpop.f32.mrb[0].mxu0
      %v10002 = vadd.f32 0.0, %v10001
      %v10003 = vpop.f32.mrb[0].mxu0
      %10004 = vmatprep.mubr.bf16.mxu0 0
      %10005 = vmatmul.mubr.bf16.gmra.mrb[0].mxu0 %v9935
      %v10006 = vpop.f32.mrb[0].mxu0
      %v10007 = vadd.f32 0.0, %v10006
      %v10008 = vpop.f32.mrb[0].mxu0
      %v10009 = vpop.f32.mrb[0].mxu0
      %v10010 = vadd.f32 0.0, %v10009
      %v10011 = vpop.f32.mrb[0].mxu0
      %10012 = vmatprep.mubr.bf16.mxu0 0
      %10013 = vmatmul.mubr.bf16.gmra.mrb[0].mxu0 %v9938
      %v10014 = vpop.f32.mrb[0].mxu0
      %v10015 = vadd.f32 0.0, %v10014
      %v10016 = vpop.f32.mrb[0].mxu0
      %v10017 = vpop.f32.mrb[0].mxu0
      %v10018 = vadd.f32 0.0, %v10017
      %v10019 = vpop.f32.mrb[0].mxu0
      %10020 = vmatprep.mubr.bf16.mxu0 0
      %10021 = vmatmul.mubr.bf16.gmra.mrb[0].mxu0 %v9941
      %v10022 = vpop.f32.mrb[0].mxu0
      %v10023 = vadd.f32 0.0, %v10022
      %v10024 = vpop.f32.mrb[0].mxu0
      %v10025 = vpop.f32.mrb[0].mxu0
      %v10026 = vadd.f32 0.0, %v10025
      %v10027 = vpop.f32.mrb[0].mxu0
      %10028 = vmatprep.mubr.bf16.mxu0 0
      %10029 = vmatmul.mubr.bf16.gmra.mrb[0].mxu0 %v9944
      %v10030 = vpop.f32.mrb[0].mxu0
      %v10031 = vadd.f32 0.0, %v10030
      %v10032 = vpop.f32.mrb[0].mxu0
      %v10033 = vpop.f32.mrb[0].mxu0
      %v10034 = vadd.f32 0.0, %v10033
      %v10035 = vpop.f32.mrb[0].mxu0
      %10036 = vmatprep.mubr.bf16.mxu0 0
      %10037 = vmatmul.mubr.bf16.gmra.mrb[0].mxu0 %v9947
      %v10038 = vpop.f32.mrb[0].mxu0
      %v10039 = vadd.f32 0.0, %v10038
      %v10040 = vpop.f32.mrb[0].mxu0
      %v10041 = vpop.f32.mrb[0].mxu0
      %v10042 = vadd.f32 0.0, %v10041
      %v10043 = vpop.f32.mrb[0].mxu0
      %10044 = vmatprep.mubr.bf16.mxu0 0
      %10045 = vmatmul.mubr.bf16.gmra.mrb[0].mxu0 %v9950
      %v10046 = vpop.f32.mrb[0].mxu0
      %v10047 = vadd.f32 0.0, %v10046
      %v10048 = vpop.f32.mrb[0].mxu0
      %v10049 = vpop.f32.mrb[0].mxu0
      %v10050 = vadd.f32 0.0, %v10049
      %v10051 = vpop.f32.mrb[0].mxu0
      %10052 = vmatprep.mubr.bf16.mxu0 0
      %10053 = vmatmul.mubr.bf16.gmra.mrb[0].mxu0 %v9953
      %v10054 = vpop.f32.mrb[0].mxu0
      %v10055 = vadd.f32 0.0, %v10054
      %v10056 = vpop.f32.mrb[0].mxu0
      %v10057 = vpop.f32.mrb[0].mxu0
      %v10058 = vadd.f32 0.0, %v10057
      %v10059 = vpop.f32.mrb[0].mxu0
      %10060 = vmatprep.mubr.bf16.mxu0 0
      %10061 = vmatmul.mubr.bf16.gmra.mrb[0].mxu0 %v9956
      %v10062 = vpop.f32.mrb[0].mxu0
      %v10063 = vadd.f32 0.0, %v10062
      %v10064 = vpop.f32.mrb[0].mxu0
      %v10065 = vpop.f32.mrb[0].mxu0
      %v10066 = vadd.f32 0.0, %v10065
      %v10067 = vpop.f32.mrb[0].mxu0
      %10068 = vmatprep.mubr.bf16.mxu0 0
      %10069 = vmatmul.mubr.bf16.gmra.mrb[0].mxu0 %v9959
      %v10070 = vpop.f32.mrb[0].mxu0
      %v10071 = vadd.f32 0.0, %v10070
      %v10072 = vpop.f32.mrb[0].mxu0
      %v10073 = vpop.f32.mrb[0].mxu0
      %v10074 = vadd.f32 0.0, %v10073
      %v10075 = vpop.f32.mrb[0].mxu0
      %10076 = vdwg.mxu0
      %v10077 = vadd.f32 %v9879, %v9999
      %v10078 = vadd.f32 %v9880, %v10002
      %v10079 = vadd.f32 %v9881, %v10007
      %v10080 = vadd.f32 %v9882, %v10010
      %v10081 = vadd.f32 %v9883, %v10015
      %v10082 = vadd.f32 %v9884, %v10018
      %v10083 = vadd.f32 %v9885, %v10023
      %v10084 = vadd.f32 %v9886, %v10026
      %v10085 = vadd.f32 %v9887, %v10031
      %v10086 = vadd.f32 %v9888, %v10034
      %v10087 = vadd.f32 %v9889, %v10039
      %v10088 = vadd.f32 %v9890, %v10042
      %v10089 = vadd.f32 %v9891, %v10047
      %v10090 = vadd.f32 %v9892, %v10050
      %v10091 = vadd.f32 %v9893, %v10055
      %v10092 = vadd.f32 %v9894, %v10058
      %v10093 = vadd.f32 %v9895, %v10063
      %v10094 = vadd.f32 %v9896, %v10066
      %v10095 = vadd.f32 %v9897, %v10071
      %v10096 = vadd.f32 %v9898, %v10074
      %s10097 = scalar_lea.vmem [#allocation2], 192
      %v10098 = vld [vmem:[%s10097 + $0x7] sm:$0xff]
      %v10099 = vld [vmem:[%s10097 + $0xf] sm:$0xff]
      %v10100 = vld [vmem:[%s10097 + $0x27] sm:$0xff]
      %v10101 = vld [vmem:[%s10097 + $0x2f] sm:$0xff]
      %v10102 = vld [vmem:[%s10097 + $0x47] sm:$0xff]
      %v10103 = vld [vmem:[%s10097 + $0x4f] sm:$0xff]
      %v10104 = vld [vmem:[%s10097 + $0x67] sm:$0xff]
      %v10105 = vld [vmem:[%s10097 + $0x6f] sm:$0xff]
      %v10106 = vld [vmem:[%s10097 + $0x87] sm:$0xff]
      %v10107 = vld [vmem:[%s10097 + $0x8f] sm:$0xff]
      %v10108 = vld [vmem:[%s10097 + $0xa7] sm:$0xff]
      %v10109 = vld [vmem:[%s10097 + $0xaf] sm:$0xff]
      %v10110 = vld [vmem:[%s10097 + $0xc7] sm:$0xff]
      %v10111 = vld [vmem:[%s10097 + $0xcf] sm:$0xff]
      %v10112 = vld [vmem:[%s10097 + $0xe7] sm:$0xff]
      %v10113 = vld [vmem:[%s10097 + $0xef] sm:$0xff]
      %v10114 = vld [vmem:[%s10097 + $0x107] sm:$0xff]
      %v10115 = vld [vmem:[%s10097 + $0x10f] sm:$0xff]
      %v10116 = vld [vmem:[%s10097 + $0x127] sm:$0xff]
      %v10117 = vld [vmem:[%s10097 + $0x12f] sm:$0xff]
      %v10118 = vpack.c.bf16 %v10099, %v10098
      %v10119 = vpack.c.bf16 %v10101, %v10100
      %v10120 = vpack.c.bf16 %v10103, %v10102
      %v10121 = vpack.c.bf16 %v10105, %v10104
      %v10122 = vpack.c.bf16 %v10107, %v10106
      %v10123 = vpack.c.bf16 %v10109, %v10108
      %v10124 = vpack.c.bf16 %v10111, %v10110
      %v10125 = vpack.c.bf16 %v10113, %v10112
      %v10126 = vpack.c.bf16 %v10115, %v10114
      %v10127 = vpack.c.bf16 %v10117, %v10116
      %s10128 = scalar_lea.vmem %s3, 168
      %v10129 = vld [vmem:[%s10128] sm:$0x7]
      %v10131 = vsel %vm1722, %v10118, 0
      %v10134 = vsel %vm1722, %v10119, 0
      %v10137 = vsel %vm1722, %v10120, 0
      %v10140 = vsel %vm1722, %v10121, 0
      %v10143 = vsel %vm1722, %v10122, 0
      %v10146 = vsel %vm1722, %v10123, 0
      %v10149 = vsel %vm1722, %v10124, 0
      %v10152 = vsel %vm1722, %v10125, 0
      %v10155 = vsel %vm1722, %v10126, 0
      %v10158 = vsel %vm1722, %v10127, 0
      %v10161 = vsel %vm1910, %v10129, 0
      %10163 = vmatprep.subr.bf16.mxu0 0
      %10164 = vmatpush1.bf16.msra.mxu0 %v10161
      %10165 = vmatprep.subr.bf16.mxu0 0
      %10166 = vmatpush1.bf16.msra.mxu0 0
      %10167 = vmatprep.subr.bf16.mxu0 0
      %10168 = vmatpush1.bf16.msra.mxu0 0
      %10169 = vmatprep.subr.bf16.mxu0 0
      %10170 = vmatpush1.bf16.msra.mxu0 0
      %10171 = vmatprep.subr.bf16.mxu0 0
      %10172 = vmatpush1.bf16.msra.mxu0 0
      %10173 = vmatprep.subr.bf16.mxu0 0
      %10174 = vmatpush1.bf16.msra.mxu0 0
      %10175 = vmatprep.subr.bf16.mxu0 0
      %10176 = vmatpush1.bf16.msra.mxu0 0
      %10177 = vmatprep.subr.bf16.mxu0 0
      %10178 = vmatpush1.bf16.msra.mxu0 0
      %10179 = vmatprep.subr.bf16.mxu0 0
      %10180 = vmatpush1.bf16.msra.mxu0 0
      %10181 = vmatprep.subr.bf16.mxu0 0
      %10182 = vmatpush1.bf16.msra.mxu0 0
      %10183 = vmatprep.subr.bf16.mxu0 0
      %10184 = vmatpush1.bf16.msra.mxu0 0
      %10185 = vmatprep.subr.bf16.mxu0 0
      %10186 = vmatpush1.bf16.msra.mxu0 0
      %10187 = vmatprep.subr.bf16.mxu0 0
      %10188 = vmatpush1.bf16.msra.mxu0 0
      %10189 = vmatprep.subr.bf16.mxu0 0
      %10190 = vmatpush1.bf16.msra.mxu0 0
      %10191 = vmatprep.subr.bf16.mxu0 0
      %10192 = vmatpush1.bf16.msra.mxu0 0
      %10193 = vmatprep.subr.bf16.mxu0 0
      %10194 = vmatpush1.bf16.msra.mxu0 0
      %10195 = vmatprep.mubr.bf16.mxu0 0
      %10196 = vmatmul.mubr.bf16.gmra.mrb[0].mxu0 %v10131
      %v10197 = vpop.f32.mrb[0].mxu0
      %v10198 = vadd.f32 0.0, %v10197
      %v10199 = vpop.f32.mrb[0].mxu0
      %v10200 = vpop.f32.mrb[0].mxu0
      %v10201 = vadd.f32 0.0, %v10200
      %v10202 = vpop.f32.mrb[0].mxu0
      %10203 = vmatprep.mubr.bf16.mxu0 0
      %10204 = vmatmul.mubr.bf16.gmra.mrb[0].mxu0 %v10134
      %v10205 = vpop.f32.mrb[0].mxu0
      %v10206 = vadd.f32 0.0, %v10205
      %v10207 = vpop.f32.mrb[0].mxu0
      %v10208 = vpop.f32.mrb[0].mxu0
      %v10209 = vadd.f32 0.0, %v10208
      %v10210 = vpop.f32.mrb[0].mxu0
      %10211 = vmatprep.mubr.bf16.mxu0 0
      %10212 = vmatmul.mubr.bf16.gmra.mrb[0].mxu0 %v10137
      %v10213 = vpop.f32.mrb[0].mxu0
      %v10214 = vadd.f32 0.0, %v10213
      %v10215 = vpop.f32.mrb[0].mxu0
      %v10216 = vpop.f32.mrb[0].mxu0
      %v10217 = vadd.f32 0.0, %v10216
      %v10218 = vpop.f32.mrb[0].mxu0
      %10219 = vmatprep.mubr.bf16.mxu0 0
      %10220 = vmatmul.mubr.bf16.gmra.mrb[0].mxu0 %v10140
      %v10221 = vpop.f32.mrb[0].mxu0
      %v10222 = vadd.f32 0.0, %v10221
      %v10223 = vpop.f32.mrb[0].mxu0
      %v10224 = vpop.f32.mrb[0].mxu0
      %v10225 = vadd.f32 0.0, %v10224
      %v10226 = vpop.f32.mrb[0].mxu0
      %10227 = vmatprep.mubr.bf16.mxu0 0
      %10228 = vmatmul.mubr.bf16.gmra.mrb[0].mxu0 %v10143
      %v10229 = vpop.f32.mrb[0].mxu0
      %v10230 = vadd.f32 0.0, %v10229
      %v10231 = vpop.f32.mrb[0].mxu0
      %v10232 = vpop.f32.mrb[0].mxu0
      %v10233 = vadd.f32 0.0, %v10232
      %v10234 = vpop.f32.mrb[0].mxu0
      %10235 = vmatprep.mubr.bf16.mxu0 0
      %10236 = vmatmul.mubr.bf16.gmra.mrb[0].mxu0 %v10146
      %v10237 = vpop.f32.mrb[0].mxu0
      %v10238 = vadd.f32 0.0, %v10237
      %v10239 = vpop.f32.mrb[0].mxu0
      %v10240 = vpop.f32.mrb[0].mxu0
      %v10241 = vadd.f32 0.0, %v10240
      %v10242 = vpop.f32.mrb[0].mxu0
      %10243 = vmatprep.mubr.bf16.mxu0 0
      %10244 = vmatmul.mubr.bf16.gmra.mrb[0].mxu0 %v10149
      %v10245 = vpop.f32.mrb[0].mxu0
      %v10246 = vadd.f32 0.0, %v10245
      %v10247 = vpop.f32.mrb[0].mxu0
      %v10248 = vpop.f32.mrb[0].mxu0
      %v10249 = vadd.f32 0.0, %v10248
      %v10250 = vpop.f32.mrb[0].mxu0
      %10251 = vmatprep.mubr.bf16.mxu0 0
      %10252 = vmatmul.mubr.bf16.gmra.mrb[0].mxu0 %v10152
      %v10253 = vpop.f32.mrb[0].mxu0
      %v10254 = vadd.f32 0.0, %v10253
      %v10255 = vpop.f32.mrb[0].mxu0
      %v10256 = vpop.f32.mrb[0].mxu0
      %v10257 = vadd.f32 0.0, %v10256
      %v10258 = vpop.f32.mrb[0].mxu0
      %10259 = vmatprep.mubr.bf16.mxu0 0
      %10260 = vmatmul.mubr.bf16.gmra.mrb[0].mxu0 %v10155
      %v10261 = vpop.f32.mrb[0].mxu0
      %v10262 = vadd.f32 0.0, %v10261
      %v10263 = vpop.f32.mrb[0].mxu0
      %v10264 = vpop.f32.mrb[0].mxu0
      %v10265 = vadd.f32 0.0, %v10264
      %v10266 = vpop.f32.mrb[0].mxu0
      %10267 = vmatprep.mubr.bf16.mxu0 0
      %10268 = vmatmul.mubr.bf16.gmra.mrb[0].mxu0 %v10158
      %v10269 = vpop.f32.mrb[0].mxu0
      %v10270 = vadd.f32 0.0, %v10269
      %v10271 = vpop.f32.mrb[0].mxu0
      %v10272 = vpop.f32.mrb[0].mxu0
      %v10273 = vadd.f32 0.0, %v10272
      %v10274 = vpop.f32.mrb[0].mxu0
      %10275 = vdwg.mxu0
      %v10276 = vadd.f32 %v10077, %v10198
      %v10277 = vadd.f32 %v10078, %v10201
      %v10278 = vadd.f32 %v10079, %v10206
      %v10279 = vadd.f32 %v10080, %v10209
      %v10280 = vadd.f32 %v10081, %v10214
      %v10281 = vadd.f32 %v10082, %v10217
      %v10282 = vadd.f32 %v10083, %v10222
      %v10283 = vadd.f32 %v10084, %v10225
      %v10284 = vadd.f32 %v10085, %v10230
      %v10285 = vadd.f32 %v10086, %v10233
      %v10286 = vadd.f32 %v10087, %v10238
      %v10287 = vadd.f32 %v10088, %v10241
      %v10288 = vadd.f32 %v10089, %v10246
      %v10289 = vadd.f32 %v10090, %v10249
      %v10290 = vadd.f32 %v10091, %v10254
      %v10291 = vadd.f32 %v10092, %v10257
      %v10292 = vadd.f32 %v10093, %v10262
      %v10293 = vadd.f32 %v10094, %v10265
      %v10294 = vadd.f32 %v10095, %v10270
      %v10295 = vadd.f32 %v10096, %v10273
      %v10296 = vld [vmem:[%s10097 + $0x8] sm:$0xff]
      %v10297 = vld [vmem:[%s10097 + $0x10] sm:$0xff]
      %v10298 = vld [vmem:[%s10097 + $0x28] sm:$0xff]
      %v10299 = vld [vmem:[%s10097 + $0x30] sm:$0xff]
      %v10300 = vld [vmem:[%s10097 + $0x48] sm:$0xff]
      %v10301 = vld [vmem:[%s10097 + $0x50] sm:$0xff]
      %v10302 = vld [vmem:[%s10097 + $0x68] sm:$0xff]
      %v10303 = vld [vmem:[%s10097 + $0x70] sm:$0xff]
      %v10304 = vld [vmem:[%s10097 + $0x88] sm:$0xff]
      %v10305 = vld [vmem:[%s10097 + $0x90] sm:$0xff]
      %v10306 = vld [vmem:[%s10097 + $0xa8] sm:$0xff]
      %v10307 = vld [vmem:[%s10097 + $0xb0] sm:$0xff]
      %v10308 = vld [vmem:[%s10097 + $0xc8] sm:$0xff]
      %v10309 = vld [vmem:[%s10097 + $0xd0] sm:$0xff]
      %v10310 = vld [vmem:[%s10097 + $0xe8] sm:$0xff]
      %v10311 = vld [vmem:[%s10097 + $0xf0] sm:$0xff]
      %v10312 = vld [vmem:[%s10097 + $0x108] sm:$0xff]
      %v10313 = vld [vmem:[%s10097 + $0x110] sm:$0xff]
      %v10314 = vld [vmem:[%s10097 + $0x128] sm:$0xff]
      %v10315 = vld [vmem:[%s10097 + $0x130] sm:$0xff]
      %v10316 = vpack.c.bf16 %v10297, %v10296
      %v10317 = vpack.c.bf16 %v10299, %v10298
      %v10318 = vpack.c.bf16 %v10301, %v10300
      %v10319 = vpack.c.bf16 %v10303, %v10302
      %v10320 = vpack.c.bf16 %v10305, %v10304
      %v10321 = vpack.c.bf16 %v10307, %v10306
      %v10322 = vpack.c.bf16 %v10309, %v10308
      %v10323 = vpack.c.bf16 %v10311, %v10310
      %v10324 = vpack.c.bf16 %v10313, %v10312
      %v10325 = vpack.c.bf16 %v10315, %v10314
      %s10326 = scalar_lea.vmem %s3, 172
      %v10327 = vld [vmem:[%s10326] sm:$0x7]
      %v10329 = vsel %vm1722, %v10316, 0
      %v10332 = vsel %vm1722, %v10317, 0
      %v10335 = vsel %vm1722, %v10318, 0
      %v10338 = vsel %vm1722, %v10319, 0
      %v10341 = vsel %vm1722, %v10320, 0
      %v10344 = vsel %vm1722, %v10321, 0
      %v10347 = vsel %vm1722, %v10322, 0
      %v10350 = vsel %vm1722, %v10323, 0
      %v10353 = vsel %vm1722, %v10324, 0
      %v10356 = vsel %vm1722, %v10325, 0
      %v10359 = vsel %vm1910, %v10327, 0
      %10361 = vmatprep.subr.bf16.mxu0 0
      %10362 = vmatpush1.bf16.msra.mxu0 %v10359
      %10363 = vmatprep.subr.bf16.mxu0 0
      %10364 = vmatpush1.bf16.msra.mxu0 0
      %10365 = vmatprep.subr.bf16.mxu0 0
      %10366 = vmatpush1.bf16.msra.mxu0 0
      %10367 = vmatprep.subr.bf16.mxu0 0
      %10368 = vmatpush1.bf16.msra.mxu0 0
      %10369 = vmatprep.subr.bf16.mxu0 0
      %10370 = vmatpush1.bf16.msra.mxu0 0
      %10371 = vmatprep.subr.bf16.mxu0 0
      %10372 = vmatpush1.bf16.msra.mxu0 0
      %10373 = vmatprep.subr.bf16.mxu0 0
      %10374 = vmatpush1.bf16.msra.mxu0 0
      %10375 = vmatprep.subr.bf16.mxu0 0
      %10376 = vmatpush1.bf16.msra.mxu0 0
      %10377 = vmatprep.subr.bf16.mxu0 0
      %10378 = vmatpush1.bf16.msra.mxu0 0
      %10379 = vmatprep.subr.bf16.mxu0 0
      %10380 = vmatpush1.bf16.msra.mxu0 0
      %10381 = vmatprep.subr.bf16.mxu0 0
      %10382 = vmatpush1.bf16.msra.mxu0 0
      %10383 = vmatprep.subr.bf16.mxu0 0
      %10384 = vmatpush1.bf16.msra.mxu0 0
      %10385 = vmatprep.subr.bf16.mxu0 0
      %10386 = vmatpush1.bf16.msra.mxu0 0
      %10387 = vmatprep.subr.bf16.mxu0 0
      %10388 = vmatpush1.bf16.msra.mxu0 0
      %10389 = vmatprep.subr.bf16.mxu0 0
      %10390 = vmatpush1.bf16.msra.mxu0 0
      %10391 = vmatprep.subr.bf16.mxu0 0
      %10392 = vmatpush1.bf16.msra.mxu0 0
      %10393 = vmatprep.mubr.bf16.mxu0 0
      %10394 = vmatmul.mubr.bf16.gmra.mrb[0].mxu0 %v10329
      %v10395 = vpop.f32.mrb[0].mxu0
      %v10396 = vadd.f32 0.0, %v10395
      %v10397 = vpop.f32.mrb[0].mxu0
      %v10398 = vpop.f32.mrb[0].mxu0
      %v10399 = vadd.f32 0.0, %v10398
      %v10400 = vpop.f32.mrb[0].mxu0
      %10401 = vmatprep.mubr.bf16.mxu0 0
      %10402 = vmatmul.mubr.bf16.gmra.mrb[0].mxu0 %v10332
      %v10403 = vpop.f32.mrb[0].mxu0
      %v10404 = vadd.f32 0.0, %v10403
      %v10405 = vpop.f32.mrb[0].mxu0
      %v10406 = vpop.f32.mrb[0].mxu0
      %v10407 = vadd.f32 0.0, %v10406
      %v10408 = vpop.f32.mrb[0].mxu0
      %10409 = vmatprep.mubr.bf16.mxu0 0
      %10410 = vmatmul.mubr.bf16.gmra.mrb[0].mxu0 %v10335
      %v10411 = vpop.f32.mrb[0].mxu0
      %v10412 = vadd.f32 0.0, %v10411
      %v10413 = vpop.f32.mrb[0].mxu0
      %v10414 = vpop.f32.mrb[0].mxu0
      %v10415 = vadd.f32 0.0, %v10414
      %v10416 = vpop.f32.mrb[0].mxu0
      %10417 = vmatprep.mubr.bf16.mxu0 0
      %10418 = vmatmul.mubr.bf16.gmra.mrb[0].mxu0 %v10338
      %v10419 = vpop.f32.mrb[0].mxu0
      %v10420 = vadd.f32 0.0, %v10419
      %v10421 = vpop.f32.mrb[0].mxu0
      %v10422 = vpop.f32.mrb[0].mxu0
      %v10423 = vadd.f32 0.0, %v10422
      %v10424 = vpop.f32.mrb[0].mxu0
      %10425 = vmatprep.mubr.bf16.mxu0 0
      %10426 = vmatmul.mubr.bf16.gmra.mrb[0].mxu0 %v10341
      %v10427 = vpop.f32.mrb[0].mxu0
      %v10428 = vadd.f32 0.0, %v10427
      %v10429 = vpop.f32.mrb[0].mxu0
      %v10430 = vpop.f32.mrb[0].mxu0
      %v10431 = vadd.f32 0.0, %v10430
      %v10432 = vpop.f32.mrb[0].mxu0
      %10433 = vmatprep.mubr.bf16.mxu0 0
      %10434 = vmatmul.mubr.bf16.gmra.mrb[0].mxu0 %v10344
      %v10435 = vpop.f32.mrb[0].mxu0
      %v10436 = vadd.f32 0.0, %v10435
      %v10437 = vpop.f32.mrb[0].mxu0
      %v10438 = vpop.f32.mrb[0].mxu0
      %v10439 = vadd.f32 0.0, %v10438
      %v10440 = vpop.f32.mrb[0].mxu0
      %10441 = vmatprep.mubr.bf16.mxu0 0
      %10442 = vmatmul.mubr.bf16.gmra.mrb[0].mxu0 %v10347
      %v10443 = vpop.f32.mrb[0].mxu0
      %v10444 = vadd.f32 0.0, %v10443
      %v10445 = vpop.f32.mrb[0].mxu0
      %v10446 = vpop.f32.mrb[0].mxu0
      %v10447 = vadd.f32 0.0, %v10446
      %v10448 = vpop.f32.mrb[0].mxu0
      %10449 = vmatprep.mubr.bf16.mxu0 0
      %10450 = vmatmul.mubr.bf16.gmra.mrb[0].mxu0 %v10350
      %v10451 = vpop.f32.mrb[0].mxu0
      %v10452 = vadd.f32 0.0, %v10451
      %v10453 = vpop.f32.mrb[0].mxu0
      %v10454 = vpop.f32.mrb[0].mxu0
      %v10455 = vadd.f32 0.0, %v10454
      %v10456 = vpop.f32.mrb[0].mxu0
      %10457 = vmatprep.mubr.bf16.mxu0 0
      %10458 = vmatmul.mubr.bf16.gmra.mrb[0].mxu0 %v10353
      %v10459 = vpop.f32.mrb[0].mxu0
      %v10460 = vadd.f32 0.0, %v10459
      %v10461 = vpop.f32.mrb[0].mxu0
      %v10462 = vpop.f32.mrb[0].mxu0
      %v10463 = vadd.f32 0.0, %v10462
      %v10464 = vpop.f32.mrb[0].mxu0
      %10465 = vmatprep.mubr.bf16.mxu0 0
      %10466 = vmatmul.mubr.bf16.gmra.mrb[0].mxu0 %v10356
      %v10467 = vpop.f32.mrb[0].mxu0
      %v10468 = vadd.f32 0.0, %v10467
      %v10469 = vpop.f32.mrb[0].mxu0
      %v10470 = vpop.f32.mrb[0].mxu0
      %v10471 = vadd.f32 0.0, %v10470
      %v10472 = vpop.f32.mrb[0].mxu0
      %10473 = vdwg.mxu0
      %v10474 = vadd.f32 %v10276, %v10396
      %v10475 = vadd.f32 %v10277, %v10399
      %v10476 = vadd.f32 %v10278, %v10404
      %v10477 = vadd.f32 %v10279, %v10407
      %v10478 = vadd.f32 %v10280, %v10412
      %v10479 = vadd.f32 %v10281, %v10415
      %v10480 = vadd.f32 %v10282, %v10420
      %v10481 = vadd.f32 %v10283, %v10423
      %v10482 = vadd.f32 %v10284, %v10428
      %v10483 = vadd.f32 %v10285, %v10431
      %v10484 = vadd.f32 %v10286, %v10436
      %v10485 = vadd.f32 %v10287, %v10439
      %v10486 = vadd.f32 %v10288, %v10444
      %v10487 = vadd.f32 %v10289, %v10447
      %v10488 = vadd.f32 %v10290, %v10452
      %v10489 = vadd.f32 %v10291, %v10455
      %v10490 = vadd.f32 %v10292, %v10460
      %v10491 = vadd.f32 %v10293, %v10463
      %v10492 = vadd.f32 %v10294, %v10468
      %v10493 = vadd.f32 %v10295, %v10471
      %v10494 = vld [vmem:[%s10097 + $0x9] sm:$0xff]
      %v10495 = vld [vmem:[%s10097 + $0x11] sm:$0xff]
      %v10496 = vld [vmem:[%s10097 + $0x29] sm:$0xff]
      %v10497 = vld [vmem:[%s10097 + $0x31] sm:$0xff]
      %v10498 = vld [vmem:[%s10097 + $0x49] sm:$0xff]
      %v10499 = vld [vmem:[%s10097 + $0x51] sm:$0xff]
      %v10500 = vld [vmem:[%s10097 + $0x69] sm:$0xff]
      %v10501 = vld [vmem:[%s10097 + $0x71] sm:$0xff]
      %v10502 = vld [vmem:[%s10097 + $0x89] sm:$0xff]
      %v10503 = vld [vmem:[%s10097 + $0x91] sm:$0xff]
      %v10504 = vld [vmem:[%s10097 + $0xa9] sm:$0xff]
      %v10505 = vld [vmem:[%s10097 + $0xb1] sm:$0xff]
      %v10506 = vld [vmem:[%s10097 + $0xc9] sm:$0xff]
      %v10507 = vld [vmem:[%s10097 + $0xd1] sm:$0xff]
      %v10508 = vld [vmem:[%s10097 + $0xe9] sm:$0xff]
      %v10509 = vld [vmem:[%s10097 + $0xf1] sm:$0xff]
      %v10510 = vld [vmem:[%s10097 + $0x109] sm:$0xff]
      %v10511 = vld [vmem:[%s10097 + $0x111] sm:$0xff]
      %v10512 = vld [vmem:[%s10097 + $0x129] sm:$0xff]
      %v10513 = vld [vmem:[%s10097 + $0x131] sm:$0xff]
      %v10514 = vpack.c.bf16 %v10495, %v10494
      %v10515 = vpack.c.bf16 %v10497, %v10496
      %v10516 = vpack.c.bf16 %v10499, %v10498
      %v10517 = vpack.c.bf16 %v10501, %v10500
      %v10518 = vpack.c.bf16 %v10503, %v10502
      %v10519 = vpack.c.bf16 %v10505, %v10504
      %v10520 = vpack.c.bf16 %v10507, %v10506
      %v10521 = vpack.c.bf16 %v10509, %v10508
      %v10522 = vpack.c.bf16 %v10511, %v10510
      %v10523 = vpack.c.bf16 %v10513, %v10512
      %s10524 = scalar_lea.vmem %s3, 176
      %v10525 = vld [vmem:[%s10524] sm:$0x7]
      %v10527 = vsel %vm1722, %v10514, 0
      %v10530 = vsel %vm1722, %v10515, 0
      %v10533 = vsel %vm1722, %v10516, 0
      %v10536 = vsel %vm1722, %v10517, 0
      %v10539 = vsel %vm1722, %v10518, 0
      %v10542 = vsel %vm1722, %v10519, 0
      %v10545 = vsel %vm1722, %v10520, 0
      %v10548 = vsel %vm1722, %v10521, 0
      %v10551 = vsel %vm1722, %v10522, 0
      %v10554 = vsel %vm1722, %v10523, 0
      %v10557 = vsel %vm1910, %v10525, 0
      %10559 = vmatprep.subr.bf16.mxu0 0
      %10560 = vmatpush1.bf16.msra.mxu0 %v10557
      %10561 = vmatprep.subr.bf16.mxu0 0
      %10562 = vmatpush1.bf16.msra.mxu0 0
      %10563 = vmatprep.subr.bf16.mxu0 0
      %10564 = vmatpush1.bf16.msra.mxu0 0
      %10565 = vmatprep.subr.bf16.mxu0 0
      %10566 = vmatpush1.bf16.msra.mxu0 0
      %10567 = vmatprep.subr.bf16.mxu0 0
      %10568 = vmatpush1.bf16.msra.mxu0 0
      %10569 = vmatprep.subr.bf16.mxu0 0
      %10570 = vmatpush1.bf16.msra.mxu0 0
      %10571 = vmatprep.subr.bf16.mxu0 0
      %10572 = vmatpush1.bf16.msra.mxu0 0
      %10573 = vmatprep.subr.bf16.mxu0 0
      %10574 = vmatpush1.bf16.msra.mxu0 0
      %10575 = vmatprep.subr.bf16.mxu0 0
      %10576 = vmatpush1.bf16.msra.mxu0 0
      %10577 = vmatprep.subr.bf16.mxu0 0
      %10578 = vmatpush1.bf16.msra.mxu0 0
      %10579 = vmatprep.subr.bf16.mxu0 0
      %10580 = vmatpush1.bf16.msra.mxu0 0
      %10581 = vmatprep.subr.bf16.mxu0 0
      %10582 = vmatpush1.bf16.msra.mxu0 0
      %10583 = vmatprep.subr.bf16.mxu0 0
      %10584 = vmatpush1.bf16.msra.mxu0 0
      %10585 = vmatprep.subr.bf16.mxu0 0
      %10586 = vmatpush1.bf16.msra.mxu0 0
      %10587 = vmatprep.subr.bf16.mxu0 0
      %10588 = vmatpush1.bf16.msra.mxu0 0
      %10589 = vmatprep.subr.bf16.mxu0 0
      %10590 = vmatpush1.bf16.msra.mxu0 0
      %10591 = vmatprep.mubr.bf16.mxu0 0
      %10592 = vmatmul.mubr.bf16.gmra.mrb[0].mxu0 %v10527
      %v10593 = vpop.f32.mrb[0].mxu0
      %v10594 = vadd.f32 0.0, %v10593
      %v10595 = vpop.f32.mrb[0].mxu0
      %v10596 = vpop.f32.mrb[0].mxu0
      %v10597 = vadd.f32 0.0, %v10596
      %v10598 = vpop.f32.mrb[0].mxu0
      %10599 = vmatprep.mubr.bf16.mxu0 0
      %10600 = vmatmul.mubr.bf16.gmra.mrb[0].mxu0 %v10530
      %v10601 = vpop.f32.mrb[0].mxu0
      %v10602 = vadd.f32 0.0, %v10601
      %v10603 = vpop.f32.mrb[0].mxu0
      %v10604 = vpop.f32.mrb[0].mxu0
      %v10605 = vadd.f32 0.0, %v10604
      %v10606 = vpop.f32.mrb[0].mxu0
      %10607 = vmatprep.mubr.bf16.mxu0 0
      %10608 = vmatmul.mubr.bf16.gmra.mrb[0].mxu0 %v10533
      %v10609 = vpop.f32.mrb[0].mxu0
      %v10610 = vadd.f32 0.0, %v10609
      %v10611 = vpop.f32.mrb[0].mxu0
      %v10612 = vpop.f32.mrb[0].mxu0
      %v10613 = vadd.f32 0.0, %v10612
      %v10614 = vpop.f32.mrb[0].mxu0
      %10615 = vmatprep.mubr.bf16.mxu0 0
      %10616 = vmatmul.mubr.bf16.gmra.mrb[0].mxu0 %v10536
      %v10617 = vpop.f32.mrb[0].mxu0
      %v10618 = vadd.f32 0.0, %v10617
      %v10619 = vpop.f32.mrb[0].mxu0
      %v10620 = vpop.f32.mrb[0].mxu0
      %v10621 = vadd.f32 0.0, %v10620
      %v10622 = vpop.f32.mrb[0].mxu0
      %10623 = vmatprep.mubr.bf16.mxu0 0
      %10624 = vmatmul.mubr.bf16.gmra.mrb[0].mxu0 %v10539
      %v10625 = vpop.f32.mrb[0].mxu0
      %v10626 = vadd.f32 0.0, %v10625
      %v10627 = vpop.f32.mrb[0].mxu0
      %v10628 = vpop.f32.mrb[0].mxu0
      %v10629 = vadd.f32 0.0, %v10628
      %v10630 = vpop.f32.mrb[0].mxu0
      %10631 = vmatprep.mubr.bf16.mxu0 0
      %10632 = vmatmul.mubr.bf16.gmra.mrb[0].mxu0 %v10542
      %v10633 = vpop.f32.mrb[0].mxu0
      %v10634 = vadd.f32 0.0, %v10633
      %v10635 = vpop.f32.mrb[0].mxu0
      %v10636 = vpop.f32.mrb[0].mxu0
      %v10637 = vadd.f32 0.0, %v10636
      %v10638 = vpop.f32.mrb[0].mxu0
      %10639 = vmatprep.mubr.bf16.mxu0 0
      %10640 = vmatmul.mubr.bf16.gmra.mrb[0].mxu0 %v10545
      %v10641 = vpop.f32.mrb[0].mxu0
      %v10642 = vadd.f32 0.0, %v10641
      %v10643 = vpop.f32.mrb[0].mxu0
      %v10644 = vpop.f32.mrb[0].mxu0
      %v10645 = vadd.f32 0.0, %v10644
      %v10646 = vpop.f32.mrb[0].mxu0
      %10647 = vmatprep.mubr.bf16.mxu0 0
      %10648 = vmatmul.mubr.bf16.gmra.mrb[0].mxu0 %v10548
      %v10649 = vpop.f32.mrb[0].mxu0
      %v10650 = vadd.f32 0.0, %v10649
      %v10651 = vpop.f32.mrb[0].mxu0
      %v10652 = vpop.f32.mrb[0].mxu0
      %v10653 = vadd.f32 0.0, %v10652
      %v10654 = vpop.f32.mrb[0].mxu0
      %10655 = vmatprep.mubr.bf16.mxu0 0
      %10656 = vmatmul.mubr.bf16.gmra.mrb[0].mxu0 %v10551
      %v10657 = vpop.f32.mrb[0].mxu0
      %v10658 = vadd.f32 0.0, %v10657
      %v10659 = vpop.f32.mrb[0].mxu0
      %v10660 = vpop.f32.mrb[0].mxu0
      %v10661 = vadd.f32 0.0, %v10660
      %v10662 = vpop.f32.mrb[0].mxu0
      %10663 = vmatprep.mubr.bf16.mxu0 0
      %10664 = vmatmul.mubr.bf16.gmra.mrb[0].mxu0 %v10554
      %v10665 = vpop.f32.mrb[0].mxu0
      %v10666 = vadd.f32 0.0, %v10665
      %v10667 = vpop.f32.mrb[0].mxu0
      %v10668 = vpop.f32.mrb[0].mxu0
      %v10669 = vadd.f32 0.0, %v10668
      %v10670 = vpop.f32.mrb[0].mxu0
      %10671 = vdwg.mxu0
      %v10672 = vadd.f32 %v10474, %v10594
      %v10673 = vadd.f32 %v10475, %v10597
      %v10674 = vadd.f32 %v10476, %v10602
      %v10675 = vadd.f32 %v10477, %v10605
      %v10676 = vadd.f32 %v10478, %v10610
      %v10677 = vadd.f32 %v10479, %v10613
      %v10678 = vadd.f32 %v10480, %v10618
      %v10679 = vadd.f32 %v10481, %v10621
      %v10680 = vadd.f32 %v10482, %v10626
      %v10681 = vadd.f32 %v10483, %v10629
      %v10682 = vadd.f32 %v10484, %v10634
      %v10683 = vadd.f32 %v10485, %v10637
      %v10684 = vadd.f32 %v10486, %v10642
      %v10685 = vadd.f32 %v10487, %v10645
      %v10686 = vadd.f32 %v10488, %v10650
      %v10687 = vadd.f32 %v10489, %v10653
      %v10688 = vadd.f32 %v10490, %v10658
      %v10689 = vadd.f32 %v10491, %v10661
      %v10690 = vadd.f32 %v10492, %v10666
      %v10691 = vadd.f32 %v10493, %v10669
      %v10692 = vld [vmem:[%s10097 + $0xa] sm:$0xff]
      %v10693 = vld [vmem:[%s10097 + $0x12] sm:$0xff]
      %v10694 = vld [vmem:[%s10097 + $0x2a] sm:$0xff]
      %v10695 = vld [vmem:[%s10097 + $0x32] sm:$0xff]
      %v10696 = vld [vmem:[%s10097 + $0x4a] sm:$0xff]
      %v10697 = vld [vmem:[%s10097 + $0x52] sm:$0xff]
      %v10698 = vld [vmem:[%s10097 + $0x6a] sm:$0xff]
      %v10699 = vld [vmem:[%s10097 + $0x72] sm:$0xff]
      %v10700 = vld [vmem:[%s10097 + $0x8a] sm:$0xff]
      %v10701 = vld [vmem:[%s10097 + $0x92] sm:$0xff]
      %v10702 = vld [vmem:[%s10097 + $0xaa] sm:$0xff]
      %v10703 = vld [vmem:[%s10097 + $0xb2] sm:$0xff]
      %v10704 = vld [vmem:[%s10097 + $0xca] sm:$0xff]
      %v10705 = vld [vmem:[%s10097 + $0xd2] sm:$0xff]
      %v10706 = vld [vmem:[%s10097 + $0xea] sm:$0xff]
      %v10707 = vld [vmem:[%s10097 + $0xf2] sm:$0xff]
      %v10708 = vld [vmem:[%s10097 + $0x10a] sm:$0xff]
      %v10709 = vld [vmem:[%s10097 + $0x112] sm:$0xff]
      %v10710 = vld [vmem:[%s10097 + $0x12a] sm:$0xff]
      %v10711 = vld [vmem:[%s10097 + $0x132] sm:$0xff]
      %v10712 = vpack.c.bf16 %v10693, %v10692
      %v10713 = vpack.c.bf16 %v10695, %v10694
      %v10714 = vpack.c.bf16 %v10697, %v10696
      %v10715 = vpack.c.bf16 %v10699, %v10698
      %v10716 = vpack.c.bf16 %v10701, %v10700
      %v10717 = vpack.c.bf16 %v10703, %v10702
      %v10718 = vpack.c.bf16 %v10705, %v10704
      %v10719 = vpack.c.bf16 %v10707, %v10706
      %v10720 = vpack.c.bf16 %v10709, %v10708
      %v10721 = vpack.c.bf16 %v10711, %v10710
      %s10722 = scalar_lea.vmem %s3, 180
      %v10723 = vld [vmem:[%s10722] sm:$0x7]
      %v10725 = vsel %vm1722, %v10712, 0
      %v10728 = vsel %vm1722, %v10713, 0
      %v10731 = vsel %vm1722, %v10714, 0
      %v10734 = vsel %vm1722, %v10715, 0
      %v10737 = vsel %vm1722, %v10716, 0
      %v10740 = vsel %vm1722, %v10717, 0
      %v10743 = vsel %vm1722, %v10718, 0
      %v10746 = vsel %vm1722, %v10719, 0
      %v10749 = vsel %vm1722, %v10720, 0
      %v10752 = vsel %vm1722, %v10721, 0
      %v10755 = vsel %vm1910, %v10723, 0
      %10757 = vmatprep.subr.bf16.mxu0 0
      %10758 = vmatpush1.bf16.msra.mxu0 %v10755
      %10759 = vmatprep.subr.bf16.mxu0 0
      %10760 = vmatpush1.bf16.msra.mxu0 0
      %10761 = vmatprep.subr.bf16.mxu0 0
      %10762 = vmatpush1.bf16.msra.mxu0 0
      %10763 = vmatprep.subr.bf16.mxu0 0
      %10764 = vmatpush1.bf16.msra.mxu0 0
      %10765 = vmatprep.subr.bf16.mxu0 0
      %10766 = vmatpush1.bf16.msra.mxu0 0
      %10767 = vmatprep.subr.bf16.mxu0 0
      %10768 = vmatpush1.bf16.msra.mxu0 0
      %10769 = vmatprep.subr.bf16.mxu0 0
      %10770 = vmatpush1.bf16.msra.mxu0 0
      %10771 = vmatprep.subr.bf16.mxu0 0
      %10772 = vmatpush1.bf16.msra.mxu0 0
      %10773 = vmatprep.subr.bf16.mxu0 0
      %10774 = vmatpush1.bf16.msra.mxu0 0
      %10775 = vmatprep.subr.bf16.mxu0 0
      %10776 = vmatpush1.bf16.msra.mxu0 0
      %10777 = vmatprep.subr.bf16.mxu0 0
      %10778 = vmatpush1.bf16.msra.mxu0 0
      %10779 = vmatprep.subr.bf16.mxu0 0
      %10780 = vmatpush1.bf16.msra.mxu0 0
      %10781 = vmatprep.subr.bf16.mxu0 0
      %10782 = vmatpush1.bf16.msra.mxu0 0
      %10783 = vmatprep.subr.bf16.mxu0 0
      %10784 = vmatpush1.bf16.msra.mxu0 0
      %10785 = vmatprep.subr.bf16.mxu0 0
      %10786 = vmatpush1.bf16.msra.mxu0 0
      %10787 = vmatprep.subr.bf16.mxu0 0
      %10788 = vmatpush1.bf16.msra.mxu0 0
      %10789 = vmatprep.mubr.bf16.mxu0 0
      %10790 = vmatmul.mubr.bf16.gmra.mrb[0].mxu0 %v10725
      %v10791 = vpop.f32.mrb[0].mxu0
      %v10792 = vadd.f32 0.0, %v10791
      %v10793 = vpop.f32.mrb[0].mxu0
      %v10794 = vpop.f32.mrb[0].mxu0
      %v10795 = vadd.f32 0.0, %v10794
      %v10796 = vpop.f32.mrb[0].mxu0
      %10797 = vmatprep.mubr.bf16.mxu0 0
      %10798 = vmatmul.mubr.bf16.gmra.mrb[0].mxu0 %v10728
      %v10799 = vpop.f32.mrb[0].mxu0
      %v10800 = vadd.f32 0.0, %v10799
      %v10801 = vpop.f32.mrb[0].mxu0
      %v10802 = vpop.f32.mrb[0].mxu0
      %v10803 = vadd.f32 0.0, %v10802
      %v10804 = vpop.f32.mrb[0].mxu0
      %10805 = vmatprep.mubr.bf16.mxu0 0
      %10806 = vmatmul.mubr.bf16.gmra.mrb[0].mxu0 %v10731
      %v10807 = vpop.f32.mrb[0].mxu0
      %v10808 = vadd.f32 0.0, %v10807
      %v10809 = vpop.f32.mrb[0].mxu0
      %v10810 = vpop.f32.mrb[0].mxu0
      %v10811 = vadd.f32 0.0, %v10810
      %v10812 = vpop.f32.mrb[0].mxu0
      %10813 = vmatprep.mubr.bf16.mxu0 0
      %10814 = vmatmul.mubr.bf16.gmra.mrb[0].mxu0 %v10734
      %v10815 = vpop.f32.mrb[0].mxu0
      %v10816 = vadd.f32 0.0, %v10815
      %v10817 = vpop.f32.mrb[0].mxu0
      %v10818 = vpop.f32.mrb[0].mxu0
      %v10819 = vadd.f32 0.0, %v10818
      %v10820 = vpop.f32.mrb[0].mxu0
      %10821 = vmatprep.mubr.bf16.mxu0 0
      %10822 = vmatmul.mubr.bf16.gmra.mrb[0].mxu0 %v10737
      %v10823 = vpop.f32.mrb[0].mxu0
      %v10824 = vadd.f32 0.0, %v10823
      %v10825 = vpop.f32.mrb[0].mxu0
      %v10826 = vpop.f32.mrb[0].mxu0
      %v10827 = vadd.f32 0.0, %v10826
      %v10828 = vpop.f32.mrb[0].mxu0
      %10829 = vmatprep.mubr.bf16.mxu0 0
      %10830 = vmatmul.mubr.bf16.gmra.mrb[0].mxu0 %v10740
      %v10831 = vpop.f32.mrb[0].mxu0
      %v10832 = vadd.f32 0.0, %v10831
      %v10833 = vpop.f32.mrb[0].mxu0
      %v10834 = vpop.f32.mrb[0].mxu0
      %v10835 = vadd.f32 0.0, %v10834
      %v10836 = vpop.f32.mrb[0].mxu0
      %10837 = vmatprep.mubr.bf16.mxu0 0
      %10838 = vmatmul.mubr.bf16.gmra.mrb[0].mxu0 %v10743
      %v10839 = vpop.f32.mrb[0].mxu0
      %v10840 = vadd.f32 0.0, %v10839
      %v10841 = vpop.f32.mrb[0].mxu0
      %v10842 = vpop.f32.mrb[0].mxu0
      %v10843 = vadd.f32 0.0, %v10842
      %v10844 = vpop.f32.mrb[0].mxu0
      %10845 = vmatprep.mubr.bf16.mxu0 0
      %10846 = vmatmul.mubr.bf16.gmra.mrb[0].mxu0 %v10746
      %v10847 = vpop.f32.mrb[0].mxu0
      %v10848 = vadd.f32 0.0, %v10847
      %v10849 = vpop.f32.mrb[0].mxu0
      %v10850 = vpop.f32.mrb[0].mxu0
      %v10851 = vadd.f32 0.0, %v10850
      %v10852 = vpop.f32.mrb[0].mxu0
      %10853 = vmatprep.mubr.bf16.mxu0 0
      %10854 = vmatmul.mubr.bf16.gmra.mrb[0].mxu0 %v10749
      %v10855 = vpop.f32.mrb[0].mxu0
      %v10856 = vadd.f32 0.0, %v10855
      %v10857 = vpop.f32.mrb[0].mxu0
      %v10858 = vpop.f32.mrb[0].mxu0
      %v10859 = vadd.f32 0.0, %v10858
      %v10860 = vpop.f32.mrb[0].mxu0
      %10861 = vmatprep.mubr.bf16.mxu0 0
      %10862 = vmatmul.mubr.bf16.gmra.mrb[0].mxu0 %v10752
      %v10863 = vpop.f32.mrb[0].mxu0
      %v10864 = vadd.f32 0.0, %v10863
      %v10865 = vpop.f32.mrb[0].mxu0
      %v10866 = vpop.f32.mrb[0].mxu0
      %v10867 = vadd.f32 0.0, %v10866
      %v10868 = vpop.f32.mrb[0].mxu0
      %10869 = vdwg.mxu0
      %v10870 = vadd.f32 %v10672, %v10792
      %v10871 = vadd.f32 %v10673, %v10795
      %v10872 = vadd.f32 %v10674, %v10800
      %v10873 = vadd.f32 %v10675, %v10803
      %v10874 = vadd.f32 %v10676, %v10808
      %v10875 = vadd.f32 %v10677, %v10811
      %v10876 = vadd.f32 %v10678, %v10816
      %v10877 = vadd.f32 %v10679, %v10819
      %v10878 = vadd.f32 %v10680, %v10824
      %v10879 = vadd.f32 %v10681, %v10827
      %v10880 = vadd.f32 %v10682, %v10832
      %v10881 = vadd.f32 %v10683, %v10835
      %v10882 = vadd.f32 %v10684, %v10840
      %v10883 = vadd.f32 %v10685, %v10843
      %v10884 = vadd.f32 %v10686, %v10848
      %v10885 = vadd.f32 %v10687, %v10851
      %v10886 = vadd.f32 %v10688, %v10856
      %v10887 = vadd.f32 %v10689, %v10859
      %v10888 = vadd.f32 %v10690, %v10864
      %v10889 = vadd.f32 %v10691, %v10867
      %v10890 = vld [vmem:[%s10097 + $0xb] sm:$0xff]
      %v10891 = vld [vmem:[%s10097 + $0x13] sm:$0xff]
      %v10892 = vld [vmem:[%s10097 + $0x2b] sm:$0xff]
      %v10893 = vld [vmem:[%s10097 + $0x33] sm:$0xff]
      %v10894 = vld [vmem:[%s10097 + $0x4b] sm:$0xff]
      %v10895 = vld [vmem:[%s10097 + $0x53] sm:$0xff]
      %v10896 = vld [vmem:[%s10097 + $0x6b] sm:$0xff]
      %v10897 = vld [vmem:[%s10097 + $0x73] sm:$0xff]
      %v10898 = vld [vmem:[%s10097 + $0x8b] sm:$0xff]
      %v10899 = vld [vmem:[%s10097 + $0x93] sm:$0xff]
      %v10900 = vld [vmem:[%s10097 + $0xab] sm:$0xff]
      %v10901 = vld [vmem:[%s10097 + $0xb3] sm:$0xff]
      %v10902 = vld [vmem:[%s10097 + $0xcb] sm:$0xff]
      %v10903 = vld [vmem:[%s10097 + $0xd3] sm:$0xff]
      %v10904 = vld [vmem:[%s10097 + $0xeb] sm:$0xff]
      %v10905 = vld [vmem:[%s10097 + $0xf3] sm:$0xff]
      %v10906 = vld [vmem:[%s10097 + $0x10b] sm:$0xff]
      %v10907 = vld [vmem:[%s10097 + $0x113] sm:$0xff]
      %v10908 = vld [vmem:[%s10097 + $0x12b] sm:$0xff]
      %v10909 = vld [vmem:[%s10097 + $0x133] sm:$0xff]
      %v10910 = vpack.c.bf16 %v10891, %v10890
      %v10911 = vpack.c.bf16 %v10893, %v10892
      %v10912 = vpack.c.bf16 %v10895, %v10894
      %v10913 = vpack.c.bf16 %v10897, %v10896
      %v10914 = vpack.c.bf16 %v10899, %v10898
      %v10915 = vpack.c.bf16 %v10901, %v10900
      %v10916 = vpack.c.bf16 %v10903, %v10902
      %v10917 = vpack.c.bf16 %v10905, %v10904
      %v10918 = vpack.c.bf16 %v10907, %v10906
      %v10919 = vpack.c.bf16 %v10909, %v10908
      %s10920 = scalar_lea.vmem %s3, 184
      %v10921 = vld [vmem:[%s10920] sm:$0x7]
      %v10923 = vsel %vm1722, %v10910, 0
      %v10926 = vsel %vm1722, %v10911, 0
      %v10929 = vsel %vm1722, %v10912, 0
      %v10932 = vsel %vm1722, %v10913, 0
      %v10935 = vsel %vm1722, %v10914, 0
      %v10938 = vsel %vm1722, %v10915, 0
      %v10941 = vsel %vm1722, %v10916, 0
      %v10944 = vsel %vm1722, %v10917, 0
      %v10947 = vsel %vm1722, %v10918, 0
      %v10950 = vsel %vm1722, %v10919, 0
      %v10953 = vsel %vm1910, %v10921, 0
      %10955 = vmatprep.subr.bf16.mxu0 0
      %10956 = vmatpush1.bf16.msra.mxu0 %v10953
      %10957 = vmatprep.subr.bf16.mxu0 0
      %10958 = vmatpush1.bf16.msra.mxu0 0
      %10959 = vmatprep.subr.bf16.mxu0 0
      %10960 = vmatpush1.bf16.msra.mxu0 0
      %10961 = vmatprep.subr.bf16.mxu0 0
      %10962 = vmatpush1.bf16.msra.mxu0 0
      %10963 = vmatprep.subr.bf16.mxu0 0
      %10964 = vmatpush1.bf16.msra.mxu0 0
      %10965 = vmatprep.subr.bf16.mxu0 0
      %10966 = vmatpush1.bf16.msra.mxu0 0
      %10967 = vmatprep.subr.bf16.mxu0 0
      %10968 = vmatpush1.bf16.msra.mxu0 0
      %10969 = vmatprep.subr.bf16.mxu0 0
      %10970 = vmatpush1.bf16.msra.mxu0 0
      %10971 = vmatprep.subr.bf16.mxu0 0
      %10972 = vmatpush1.bf16.msra.mxu0 0
      %10973 = vmatprep.subr.bf16.mxu0 0
      %10974 = vmatpush1.bf16.msra.mxu0 0
      %10975 = vmatprep.subr.bf16.mxu0 0
      %10976 = vmatpush1.bf16.msra.mxu0 0
      %10977 = vmatprep.subr.bf16.mxu0 0
      %10978 = vmatpush1.bf16.msra.mxu0 0
      %10979 = vmatprep.subr.bf16.mxu0 0
      %10980 = vmatpush1.bf16.msra.mxu0 0
      %10981 = vmatprep.subr.bf16.mxu0 0
      %10982 = vmatpush1.bf16.msra.mxu0 0
      %10983 = vmatprep.subr.bf16.mxu0 0
      %10984 = vmatpush1.bf16.msra.mxu0 0
      %10985 = vmatprep.subr.bf16.mxu0 0
      %10986 = vmatpush1.bf16.msra.mxu0 0
      %10987 = vmatprep.mubr.bf16.mxu0 0
      %10988 = vmatmul.mubr.bf16.gmra.mrb[0].mxu0 %v10923
      %v10989 = vpop.f32.mrb[0].mxu0
      %v10990 = vadd.f32 0.0, %v10989
      %v10991 = vpop.f32.mrb[0].mxu0
      %v10992 = vpop.f32.mrb[0].mxu0
      %v10993 = vadd.f32 0.0, %v10992
      %v10994 = vpop.f32.mrb[0].mxu0
      %10995 = vmatprep.mubr.bf16.mxu0 0
      %10996 = vmatmul.mubr.bf16.gmra.mrb[0].mxu0 %v10926
      %v10997 = vpop.f32.mrb[0].mxu0
      %v10998 = vadd.f32 0.0, %v10997
      %v10999 = vpop.f32.mrb[0].mxu0
      %v11000 = vpop.f32.mrb[0].mxu0
      %v11001 = vadd.f32 0.0, %v11000
      %v11002 = vpop.f32.mrb[0].mxu0
      %11003 = vmatprep.mubr.bf16.mxu0 0
      %11004 = vmatmul.mubr.bf16.gmra.mrb[0].mxu0 %v10929
      %v11005 = vpop.f32.mrb[0].mxu0
      %v11006 = vadd.f32 0.0, %v11005
      %v11007 = vpop.f32.mrb[0].mxu0
      %v11008 = vpop.f32.mrb[0].mxu0
      %v11009 = vadd.f32 0.0, %v11008
      %v11010 = vpop.f32.mrb[0].mxu0
      %11011 = vmatprep.mubr.bf16.mxu0 0
      %11012 = vmatmul.mubr.bf16.gmra.mrb[0].mxu0 %v10932
      %v11013 = vpop.f32.mrb[0].mxu0
      %v11014 = vadd.f32 0.0, %v11013
      %v11015 = vpop.f32.mrb[0].mxu0
      %v11016 = vpop.f32.mrb[0].mxu0
      %v11017 = vadd.f32 0.0, %v11016
      %v11018 = vpop.f32.mrb[0].mxu0
      %11019 = vmatprep.mubr.bf16.mxu0 0
      %11020 = vmatmul.mubr.bf16.gmra.mrb[0].mxu0 %v10935
      %v11021 = vpop.f32.mrb[0].mxu0
      %v11022 = vadd.f32 0.0, %v11021
      %v11023 = vpop.f32.mrb[0].mxu0
      %v11024 = vpop.f32.mrb[0].mxu0
      %v11025 = vadd.f32 0.0, %v11024
      %v11026 = vpop.f32.mrb[0].mxu0
      %11027 = vmatprep.mubr.bf16.mxu0 0
      %11028 = vmatmul.mubr.bf16.gmra.mrb[0].mxu0 %v10938
      %v11029 = vpop.f32.mrb[0].mxu0
      %v11030 = vadd.f32 0.0, %v11029
      %v11031 = vpop.f32.mrb[0].mxu0
      %v11032 = vpop.f32.mrb[0].mxu0
      %v11033 = vadd.f32 0.0, %v11032
      %v11034 = vpop.f32.mrb[0].mxu0
      %11035 = vmatprep.mubr.bf16.mxu0 0
      %11036 = vmatmul.mubr.bf16.gmra.mrb[0].mxu0 %v10941
      %v11037 = vpop.f32.mrb[0].mxu0
      %v11038 = vadd.f32 0.0, %v11037
      %v11039 = vpop.f32.mrb[0].mxu0
      %v11040 = vpop.f32.mrb[0].mxu0
      %v11041 = vadd.f32 0.0, %v11040
      %v11042 = vpop.f32.mrb[0].mxu0
      %11043 = vmatprep.mubr.bf16.mxu0 0
      %11044 = vmatmul.mubr.bf16.gmra.mrb[0].mxu0 %v10944
      %v11045 = vpop.f32.mrb[0].mxu0
      %v11046 = vadd.f32 0.0, %v11045
      %v11047 = vpop.f32.mrb[0].mxu0
      %v11048 = vpop.f32.mrb[0].mxu0
      %v11049 = vadd.f32 0.0, %v11048
      %v11050 = vpop.f32.mrb[0].mxu0
      %11051 = vmatprep.mubr.bf16.mxu0 0
      %11052 = vmatmul.mubr.bf16.gmra.mrb[0].mxu0 %v10947
      %v11053 = vpop.f32.mrb[0].mxu0
      %v11054 = vadd.f32 0.0, %v11053
      %v11055 = vpop.f32.mrb[0].mxu0
      %v11056 = vpop.f32.mrb[0].mxu0
      %v11057 = vadd.f32 0.0, %v11056
      %v11058 = vpop.f32.mrb[0].mxu0
      %11059 = vmatprep.mubr.bf16.mxu0 0
      %11060 = vmatmul.mubr.bf16.gmra.mrb[0].mxu0 %v10950
      %v11061 = vpop.f32.mrb[0].mxu0
      %v11062 = vadd.f32 0.0, %v11061
      %v11063 = vpop.f32.mrb[0].mxu0
      %v11064 = vpop.f32.mrb[0].mxu0
      %v11065 = vadd.f32 0.0, %v11064
      %v11066 = vpop.f32.mrb[0].mxu0
      %11067 = vdwg.mxu0
      %v11068 = vadd.f32 %v10870, %v10990
      %v11069 = vadd.f32 %v10871, %v10993
      %v11070 = vadd.f32 %v10872, %v10998
      %v11071 = vadd.f32 %v10873, %v11001
      %v11072 = vadd.f32 %v10874, %v11006
      %v11073 = vadd.f32 %v10875, %v11009
      %v11074 = vadd.f32 %v10876, %v11014
      %v11075 = vadd.f32 %v10877, %v11017
      %v11076 = vadd.f32 %v10878, %v11022
      %v11077 = vadd.f32 %v10879, %v11025
      %v11078 = vadd.f32 %v10880, %v11030
      %v11079 = vadd.f32 %v10881, %v11033
      %v11080 = vadd.f32 %v10882, %v11038
      %v11081 = vadd.f32 %v10883, %v11041
      %v11082 = vadd.f32 %v10884, %v11046
      %v11083 = vadd.f32 %v10885, %v11049
      %v11084 = vadd.f32 %v10886, %v11054
      %v11085 = vadd.f32 %v10887, %v11057
      %v11086 = vadd.f32 %v10888, %v11062
      %v11087 = vadd.f32 %v10889, %v11065
      %v11088 = vld [vmem:[%s10097 + $0xc] sm:$0xff]
      %v11089 = vld [vmem:[%s10097 + $0x14] sm:$0xff]
      %v11090 = vld [vmem:[%s10097 + $0x2c] sm:$0xff]
      %v11091 = vld [vmem:[%s10097 + $0x34] sm:$0xff]
      %v11092 = vld [vmem:[%s10097 + $0x4c] sm:$0xff]
      %v11093 = vld [vmem:[%s10097 + $0x54] sm:$0xff]
      %v11094 = vld [vmem:[%s10097 + $0x6c] sm:$0xff]
      %v11095 = vld [vmem:[%s10097 + $0x74] sm:$0xff]
      %v11096 = vld [vmem:[%s10097 + $0x8c] sm:$0xff]
      %v11097 = vld [vmem:[%s10097 + $0x94] sm:$0xff]
      %v11098 = vld [vmem:[%s10097 + $0xac] sm:$0xff]
      %v11099 = vld [vmem:[%s10097 + $0xb4] sm:$0xff]
      %v11100 = vld [vmem:[%s10097 + $0xcc] sm:$0xff]
      %v11101 = vld [vmem:[%s10097 + $0xd4] sm:$0xff]
      %v11102 = vld [vmem:[%s10097 + $0xec] sm:$0xff]
      %v11103 = vld [vmem:[%s10097 + $0xf4] sm:$0xff]
      %v11104 = vld [vmem:[%s10097 + $0x10c] sm:$0xff]
      %v11105 = vld [vmem:[%s10097 + $0x114] sm:$0xff]
      %v11106 = vld [vmem:[%s10097 + $0x12c] sm:$0xff]
      %v11107 = vld [vmem:[%s10097 + $0x134] sm:$0xff]
      %v11108 = vpack.c.bf16 %v11089, %v11088
      %v11109 = vpack.c.bf16 %v11091, %v11090
      %v11110 = vpack.c.bf16 %v11093, %v11092
      %v11111 = vpack.c.bf16 %v11095, %v11094
      %v11112 = vpack.c.bf16 %v11097, %v11096
      %v11113 = vpack.c.bf16 %v11099, %v11098
      %v11114 = vpack.c.bf16 %v11101, %v11100
      %v11115 = vpack.c.bf16 %v11103, %v11102
      %v11116 = vpack.c.bf16 %v11105, %v11104
      %v11117 = vpack.c.bf16 %v11107, %v11106
      %s11118 = scalar_lea.vmem %s3, 188
      %v11119 = vld [vmem:[%s11118] sm:$0x7]
      %v11121 = vsel %vm1722, %v11108, 0
      %v11124 = vsel %vm1722, %v11109, 0
      %v11127 = vsel %vm1722, %v11110, 0
      %v11130 = vsel %vm1722, %v11111, 0
      %v11133 = vsel %vm1722, %v11112, 0
      %v11136 = vsel %vm1722, %v11113, 0
      %v11139 = vsel %vm1722, %v11114, 0
      %v11142 = vsel %vm1722, %v11115, 0
      %v11145 = vsel %vm1722, %v11116, 0
      %v11148 = vsel %vm1722, %v11117, 0
      %v11151 = vsel %vm1910, %v11119, 0
      %11153 = vmatprep.subr.bf16.mxu0 0
      %11154 = vmatpush1.bf16.msra.mxu0 %v11151
      %11155 = vmatprep.subr.bf16.mxu0 0
      %11156 = vmatpush1.bf16.msra.mxu0 0
      %11157 = vmatprep.subr.bf16.mxu0 0
      %11158 = vmatpush1.bf16.msra.mxu0 0
      %11159 = vmatprep.subr.bf16.mxu0 0
      %11160 = vmatpush1.bf16.msra.mxu0 0
      %11161 = vmatprep.subr.bf16.mxu0 0
      %11162 = vmatpush1.bf16.msra.mxu0 0
      %11163 = vmatprep.subr.bf16.mxu0 0
      %11164 = vmatpush1.bf16.msra.mxu0 0
      %11165 = vmatprep.subr.bf16.mxu0 0
      %11166 = vmatpush1.bf16.msra.mxu0 0
      %11167 = vmatprep.subr.bf16.mxu0 0
      %11168 = vmatpush1.bf16.msra.mxu0 0
      %11169 = vmatprep.subr.bf16.mxu0 0
      %11170 = vmatpush1.bf16.msra.mxu0 0
      %11171 = vmatprep.subr.bf16.mxu0 0
      %11172 = vmatpush1.bf16.msra.mxu0 0
      %11173 = vmatprep.subr.bf16.mxu0 0
      %11174 = vmatpush1.bf16.msra.mxu0 0
      %11175 = vmatprep.subr.bf16.mxu0 0
      %11176 = vmatpush1.bf16.msra.mxu0 0
      %11177 = vmatprep.subr.bf16.mxu0 0
      %11178 = vmatpush1.bf16.msra.mxu0 0
      %11179 = vmatprep.subr.bf16.mxu0 0
      %11180 = vmatpush1.bf16.msra.mxu0 0
      %11181 = vmatprep.subr.bf16.mxu0 0
      %11182 = vmatpush1.bf16.msra.mxu0 0
      %11183 = vmatprep.subr.bf16.mxu0 0
      %11184 = vmatpush1.bf16.msra.mxu0 0
      %11185 = vmatprep.mubr.bf16.mxu0 0
      %11186 = vmatmul.mubr.bf16.gmra.mrb[0].mxu0 %v11121
      %v11187 = vpop.f32.mrb[0].mxu0
      %v11188 = vadd.f32 0.0, %v11187
      %v11189 = vpop.f32.mrb[0].mxu0
      %v11190 = vpop.f32.mrb[0].mxu0
      %v11191 = vadd.f32 0.0, %v11190
      %v11192 = vpop.f32.mrb[0].mxu0
      %11193 = vmatprep.mubr.bf16.mxu0 0
      %11194 = vmatmul.mubr.bf16.gmra.mrb[0].mxu0 %v11124
      %v11195 = vpop.f32.mrb[0].mxu0
      %v11196 = vadd.f32 0.0, %v11195
      %v11197 = vpop.f32.mrb[0].mxu0
      %v11198 = vpop.f32.mrb[0].mxu0
      %v11199 = vadd.f32 0.0, %v11198
      %v11200 = vpop.f32.mrb[0].mxu0
      %11201 = vmatprep.mubr.bf16.mxu0 0
      %11202 = vmatmul.mubr.bf16.gmra.mrb[0].mxu0 %v11127
      %v11203 = vpop.f32.mrb[0].mxu0
      %v11204 = vadd.f32 0.0, %v11203
      %v11205 = vpop.f32.mrb[0].mxu0
      %v11206 = vpop.f32.mrb[0].mxu0
      %v11207 = vadd.f32 0.0, %v11206
      %v11208 = vpop.f32.mrb[0].mxu0
      %11209 = vmatprep.mubr.bf16.mxu0 0
      %11210 = vmatmul.mubr.bf16.gmra.mrb[0].mxu0 %v11130
      %v11211 = vpop.f32.mrb[0].mxu0
      %v11212 = vadd.f32 0.0, %v11211
      %v11213 = vpop.f32.mrb[0].mxu0
      %v11214 = vpop.f32.mrb[0].mxu0
      %v11215 = vadd.f32 0.0, %v11214
      %v11216 = vpop.f32.mrb[0].mxu0
      %11217 = vmatprep.mubr.bf16.mxu0 0
      %11218 = vmatmul.mubr.bf16.gmra.mrb[0].mxu0 %v11133
      %v11219 = vpop.f32.mrb[0].mxu0
      %v11220 = vadd.f32 0.0, %v11219
      %v11221 = vpop.f32.mrb[0].mxu0
      %v11222 = vpop.f32.mrb[0].mxu0
      %v11223 = vadd.f32 0.0, %v11222
      %v11224 = vpop.f32.mrb[0].mxu0
      %11225 = vmatprep.mubr.bf16.mxu0 0
      %11226 = vmatmul.mubr.bf16.gmra.mrb[0].mxu0 %v11136
      %v11227 = vpop.f32.mrb[0].mxu0
      %v11228 = vadd.f32 0.0, %v11227
      %v11229 = vpop.f32.mrb[0].mxu0
      %v11230 = vpop.f32.mrb[0].mxu0
      %v11231 = vadd.f32 0.0, %v11230
      %v11232 = vpop.f32.mrb[0].mxu0
      %11233 = vmatprep.mubr.bf16.mxu0 0
      %11234 = vmatmul.mubr.bf16.gmra.mrb[0].mxu0 %v11139
      %v11235 = vpop.f32.mrb[0].mxu0
      %v11236 = vadd.f32 0.0, %v11235
      %v11237 = vpop.f32.mrb[0].mxu0
      %v11238 = vpop.f32.mrb[0].mxu0
      %v11239 = vadd.f32 0.0, %v11238
      %v11240 = vpop.f32.mrb[0].mxu0
      %11241 = vmatprep.mubr.bf16.mxu0 0
      %11242 = vmatmul.mubr.bf16.gmra.mrb[0].mxu0 %v11142
      %v11243 = vpop.f32.mrb[0].mxu0
      %v11244 = vadd.f32 0.0, %v11243
      %v11245 = vpop.f32.mrb[0].mxu0
      %v11246 = vpop.f32.mrb[0].mxu0
      %v11247 = vadd.f32 0.0, %v11246
      %v11248 = vpop.f32.mrb[0].mxu0
      %11249 = vmatprep.mubr.bf16.mxu0 0
      %11250 = vmatmul.mubr.bf16.gmra.mrb[0].mxu0 %v11145
      %v11251 = vpop.f32.mrb[0].mxu0
      %v11252 = vadd.f32 0.0, %v11251
      %v11253 = vpop.f32.mrb[0].mxu0
      %v11254 = vpop.f32.mrb[0].mxu0
      %v11255 = vadd.f32 0.0, %v11254
      %v11256 = vpop.f32.mrb[0].mxu0
      %11257 = vmatprep.mubr.bf16.mxu0 0
      %11258 = vmatmul.mubr.bf16.gmra.mrb[0].mxu0 %v11148
      %v11259 = vpop.f32.mrb[0].mxu0
      %v11260 = vadd.f32 0.0, %v11259
      %v11261 = vpop.f32.mrb[0].mxu0
      %v11262 = vpop.f32.mrb[0].mxu0
      %v11263 = vadd.f32 0.0, %v11262
      %v11264 = vpop.f32.mrb[0].mxu0
      %11265 = vdwg.mxu0
      %v11266 = vadd.f32 %v11068, %v11188
      %v11267 = vadd.f32 %v11069, %v11191
      %v11268 = vadd.f32 %v11070, %v11196
      %v11269 = vadd.f32 %v11071, %v11199
      %v11270 = vadd.f32 %v11072, %v11204
      %v11271 = vadd.f32 %v11073, %v11207
      %v11272 = vadd.f32 %v11074, %v11212
      %v11273 = vadd.f32 %v11075, %v11215
      %v11274 = vadd.f32 %v11076, %v11220
      %v11275 = vadd.f32 %v11077, %v11223
      %v11276 = vadd.f32 %v11078, %v11228
      %v11277 = vadd.f32 %v11079, %v11231
      %v11278 = vadd.f32 %v11080, %v11236
      %v11279 = vadd.f32 %v11081, %v11239
      %v11280 = vadd.f32 %v11082, %v11244
      %v11281 = vadd.f32 %v11083, %v11247
      %v11282 = vadd.f32 %v11084, %v11252
      %v11283 = vadd.f32 %v11085, %v11255
      %v11284 = vadd.f32 %v11086, %v11260
      %v11285 = vadd.f32 %v11087, %v11263
      %v11286 = vld [vmem:[%s10097 + $0xd] sm:$0xff]
      %v11287 = vld [vmem:[%s10097 + $0x15] sm:$0xff]
      %v11288 = vld [vmem:[%s10097 + $0x2d] sm:$0xff]
      %v11289 = vld [vmem:[%s10097 + $0x35] sm:$0xff]
      %v11290 = vld [vmem:[%s10097 + $0x4d] sm:$0xff]
      %v11291 = vld [vmem:[%s10097 + $0x55] sm:$0xff]
      %v11292 = vld [vmem:[%s10097 + $0x6d] sm:$0xff]
      %v11293 = vld [vmem:[%s10097 + $0x75] sm:$0xff]
      %v11294 = vld [vmem:[%s10097 + $0x8d] sm:$0xff]
      %v11295 = vld [vmem:[%s10097 + $0x95] sm:$0xff]
      %v11296 = vld [vmem:[%s10097 + $0xad] sm:$0xff]
      %v11297 = vld [vmem:[%s10097 + $0xb5] sm:$0xff]
      %v11298 = vld [vmem:[%s10097 + $0xcd] sm:$0xff]
      %v11299 = vld [vmem:[%s10097 + $0xd5] sm:$0xff]
      %v11300 = vld [vmem:[%s10097 + $0xed] sm:$0xff]
      %v11301 = vld [vmem:[%s10097 + $0xf5] sm:$0xff]
      %v11302 = vld [vmem:[%s10097 + $0x10d] sm:$0xff]
      %v11303 = vld [vmem:[%s10097 + $0x115] sm:$0xff]
      %v11304 = vld [vmem:[%s10097 + $0x12d] sm:$0xff]
      %v11305 = vld [vmem:[%s10097 + $0x135] sm:$0xff]
      %v11306 = vpack.c.bf16 %v11287, %v11286
      %v11307 = vpack.c.bf16 %v11289, %v11288
      %v11308 = vpack.c.bf16 %v11291, %v11290
      %v11309 = vpack.c.bf16 %v11293, %v11292
      %v11310 = vpack.c.bf16 %v11295, %v11294
      %v11311 = vpack.c.bf16 %v11297, %v11296
      %v11312 = vpack.c.bf16 %v11299, %v11298
      %v11313 = vpack.c.bf16 %v11301, %v11300
      %v11314 = vpack.c.bf16 %v11303, %v11302
      %v11315 = vpack.c.bf16 %v11305, %v11304
      %s11316 = scalar_lea.vmem %s3, 192
      %v11317 = vld [vmem:[%s11316] sm:$0x7]
      %v11319 = vsel %vm1722, %v11306, 0
      %v11322 = vsel %vm1722, %v11307, 0
      %v11325 = vsel %vm1722, %v11308, 0
      %v11328 = vsel %vm1722, %v11309, 0
      %v11331 = vsel %vm1722, %v11310, 0
      %v11334 = vsel %vm1722, %v11311, 0
      %v11337 = vsel %vm1722, %v11312, 0
      %v11340 = vsel %vm1722, %v11313, 0
      %v11343 = vsel %vm1722, %v11314, 0
      %v11346 = vsel %vm1722, %v11315, 0
      %v11349 = vsel %vm1910, %v11317, 0
      %11351 = vmatprep.subr.bf16.mxu0 0
      %11352 = vmatpush1.bf16.msra.mxu0 %v11349
      %11353 = vmatprep.subr.bf16.mxu0 0
      %11354 = vmatpush1.bf16.msra.mxu0 0
      %11355 = vmatprep.subr.bf16.mxu0 0
      %11356 = vmatpush1.bf16.msra.mxu0 0
      %11357 = vmatprep.subr.bf16.mxu0 0
      %11358 = vmatpush1.bf16.msra.mxu0 0
      %11359 = vmatprep.subr.bf16.mxu0 0
      %11360 = vmatpush1.bf16.msra.mxu0 0
      %11361 = vmatprep.subr.bf16.mxu0 0
      %11362 = vmatpush1.bf16.msra.mxu0 0
      %11363 = vmatprep.subr.bf16.mxu0 0
      %11364 = vmatpush1.bf16.msra.mxu0 0
      %11365 = vmatprep.subr.bf16.mxu0 0
      %11366 = vmatpush1.bf16.msra.mxu0 0
      %11367 = vmatprep.subr.bf16.mxu0 0
      %11368 = vmatpush1.bf16.msra.mxu0 0
      %11369 = vmatprep.subr.bf16.mxu0 0
      %11370 = vmatpush1.bf16.msra.mxu0 0
      %11371 = vmatprep.subr.bf16.mxu0 0
      %11372 = vmatpush1.bf16.msra.mxu0 0
      %11373 = vmatprep.subr.bf16.mxu0 0
      %11374 = vmatpush1.bf16.msra.mxu0 0
      %11375 = vmatprep.subr.bf16.mxu0 0
      %11376 = vmatpush1.bf16.msra.mxu0 0
      %11377 = vmatprep.subr.bf16.mxu0 0
      %11378 = vmatpush1.bf16.msra.mxu0 0
      %11379 = vmatprep.subr.bf16.mxu0 0
      %11380 = vmatpush1.bf16.msra.mxu0 0
      %11381 = vmatprep.subr.bf16.mxu0 0
      %11382 = vmatpush1.bf16.msra.mxu0 0
      %11383 = vmatprep.mubr.bf16.mxu0 0
      %11384 = vmatmul.mubr.bf16.gmra.mrb[0].mxu0 %v11319
      %v11385 = vpop.f32.mrb[0].mxu0
      %v11386 = vadd.f32 0.0, %v11385
      %v11387 = vpop.f32.mrb[0].mxu0
      %v11388 = vpop.f32.mrb[0].mxu0
      %v11389 = vadd.f32 0.0, %v11388
      %v11390 = vpop.f32.mrb[0].mxu0
      %11391 = vmatprep.mubr.bf16.mxu0 0
      %11392 = vmatmul.mubr.bf16.gmra.mrb[0].mxu0 %v11322
      %v11393 = vpop.f32.mrb[0].mxu0
      %v11394 = vadd.f32 0.0, %v11393
      %v11395 = vpop.f32.mrb[0].mxu0
      %v11396 = vpop.f32.mrb[0].mxu0
      %v11397 = vadd.f32 0.0, %v11396
      %v11398 = vpop.f32.mrb[0].mxu0
      %11399 = vmatprep.mubr.bf16.mxu0 0
      %11400 = vmatmul.mubr.bf16.gmra.mrb[0].mxu0 %v11325
      %v11401 = vpop.f32.mrb[0].mxu0
      %v11402 = vadd.f32 0.0, %v11401
      %v11403 = vpop.f32.mrb[0].mxu0
      %v11404 = vpop.f32.mrb[0].mxu0
      %v11405 = vadd.f32 0.0, %v11404
      %v11406 = vpop.f32.mrb[0].mxu0
      %11407 = vmatprep.mubr.bf16.mxu0 0
      %11408 = vmatmul.mubr.bf16.gmra.mrb[0].mxu0 %v11328
      %v11409 = vpop.f32.mrb[0].mxu0
      %v11410 = vadd.f32 0.0, %v11409
      %v11411 = vpop.f32.mrb[0].mxu0
      %v11412 = vpop.f32.mrb[0].mxu0
      %v11413 = vadd.f32 0.0, %v11412
      %v11414 = vpop.f32.mrb[0].mxu0
      %11415 = vmatprep.mubr.bf16.mxu0 0
      %11416 = vmatmul.mubr.bf16.gmra.mrb[0].mxu0 %v11331
      %v11417 = vpop.f32.mrb[0].mxu0
      %v11418 = vadd.f32 0.0, %v11417
      %v11419 = vpop.f32.mrb[0].mxu0
      %v11420 = vpop.f32.mrb[0].mxu0
      %v11421 = vadd.f32 0.0, %v11420
      %v11422 = vpop.f32.mrb[0].mxu0
      %11423 = vmatprep.mubr.bf16.mxu0 0
      %11424 = vmatmul.mubr.bf16.gmra.mrb[0].mxu0 %v11334
      %v11425 = vpop.f32.mrb[0].mxu0
      %v11426 = vadd.f32 0.0, %v11425
      %v11427 = vpop.f32.mrb[0].mxu0
      %v11428 = vpop.f32.mrb[0].mxu0
      %v11429 = vadd.f32 0.0, %v11428
      %v11430 = vpop.f32.mrb[0].mxu0
      %11431 = vmatprep.mubr.bf16.mxu0 0
      %11432 = vmatmul.mubr.bf16.gmra.mrb[0].mxu0 %v11337
      %v11433 = vpop.f32.mrb[0].mxu0
      %v11434 = vadd.f32 0.0, %v11433
      %v11435 = vpop.f32.mrb[0].mxu0
      %v11436 = vpop.f32.mrb[0].mxu0
      %v11437 = vadd.f32 0.0, %v11436
      %v11438 = vpop.f32.mrb[0].mxu0
      %11439 = vmatprep.mubr.bf16.mxu0 0
      %11440 = vmatmul.mubr.bf16.gmra.mrb[0].mxu0 %v11340
      %v11441 = vpop.f32.mrb[0].mxu0
      %v11442 = vadd.f32 0.0, %v11441
      %v11443 = vpop.f32.mrb[0].mxu0
      %v11444 = vpop.f32.mrb[0].mxu0
      %v11445 = vadd.f32 0.0, %v11444
      %v11446 = vpop.f32.mrb[0].mxu0
      %11447 = vmatprep.mubr.bf16.mxu0 0
      %11448 = vmatmul.mubr.bf16.gmra.mrb[0].mxu0 %v11343
      %v11449 = vpop.f32.mrb[0].mxu0
      %v11450 = vadd.f32 0.0, %v11449
      %v11451 = vpop.f32.mrb[0].mxu0
      %v11452 = vpop.f32.mrb[0].mxu0
      %v11453 = vadd.f32 0.0, %v11452
      %v11454 = vpop.f32.mrb[0].mxu0
      %11455 = vmatprep.mubr.bf16.mxu0 0
      %11456 = vmatmul.mubr.bf16.gmra.mrb[0].mxu0 %v11346
      %v11457 = vpop.f32.mrb[0].mxu0
      %v11458 = vadd.f32 0.0, %v11457
      %v11459 = vpop.f32.mrb[0].mxu0
      %v11460 = vpop.f32.mrb[0].mxu0
      %v11461 = vadd.f32 0.0, %v11460
      %v11462 = vpop.f32.mrb[0].mxu0
      %11463 = vdwg.mxu0
      %v11464 = vadd.f32 %v11266, %v11386
      %v11465 = vadd.f32 %v11267, %v11389
      %v11466 = vadd.f32 %v11268, %v11394
      %v11467 = vadd.f32 %v11269, %v11397
      %v11468 = vadd.f32 %v11270, %v11402
      %v11469 = vadd.f32 %v11271, %v11405
      %v11470 = vadd.f32 %v11272, %v11410
      %v11471 = vadd.f32 %v11273, %v11413
      %v11472 = vadd.f32 %v11274, %v11418
      %v11473 = vadd.f32 %v11275, %v11421
      %v11474 = vadd.f32 %v11276, %v11426
      %v11475 = vadd.f32 %v11277, %v11429
      %v11476 = vadd.f32 %v11278, %v11434
      %v11477 = vadd.f32 %v11279, %v11437
      %v11478 = vadd.f32 %v11280, %v11442
      %v11479 = vadd.f32 %v11281, %v11445
      %v11480 = vadd.f32 %v11282, %v11450
      %v11481 = vadd.f32 %v11283, %v11453
      %v11482 = vadd.f32 %v11284, %v11458
      %v11483 = vadd.f32 %v11285, %v11461
      %v11484 = vmax.f32 %v11464, %v11466
      %v11485 = vmax.f32 %v11465, %v11467
      %v11486 = vmax.f32 %v11468, %v11470
      %v11487 = vmax.f32 %v11469, %v11471
      %v11488 = vmax.f32 %v11472, %v11474
      %v11489 = vmax.f32 %v11473, %v11475
      %v11490 = vmax.f32 %v11476, %v11478
      %v11491 = vmax.f32 %v11477, %v11479
      %v11492 = vmax.f32 %v11480, %v11482
      %v11493 = vmax.f32 %v11481, %v11483
      %v11494 = vld [vmem:[%s4] sm:$0x1]
      %v11496 = vlaneseq
      %v11497 = vshrl.u32 %v11496, 7
      %v11498 = vsub.s32 0, %v11497
      %v11499 = vrot.slane %v11494, %v11498
      %v11501 = vadd.f32 %v11484, %v11499
      %v11502 = vadd.f32 %v11485, %v11499
      %v11503 = vadd.f32 %v11486, %v11499
      %v11504 = vadd.f32 %v11487, %v11499
      %v11505 = vadd.f32 %v11488, %v11499
      %v11506 = vadd.f32 %v11489, %v11499
      %v11507 = vadd.f32 %v11490, %v11499
      %v11508 = vadd.f32 %v11491, %v11499
      %v11509 = vadd.f32 %v11492, %v11499
      %v11510 = vadd.f32 %v11493, %v11499
      %v11511 = vmax.f32 %v11501, 0.0
      %v11512 = vmax.f32 %v11502, 0.0
      %v11513 = vmax.f32 %v11503, 0.0
      %v11514 = vmax.f32 %v11504, 0.0
      %v11515 = vmax.f32 %v11505, 0.0
      %v11516 = vmax.f32 %v11506, 0.0
      %v11517 = vmax.f32 %v11507, 0.0
      %v11518 = vmax.f32 %v11508, 0.0
      %v11519 = vmax.f32 %v11509, 0.0
      %v11520 = vmax.f32 %v11510, 0.0
      %11521 = vst [vmem:[%s224] sm:$0xff] %v11511
      %11522 = vst [vmem:[%s224 + $0x8] sm:$0xff] %v11512
      %11523 = vst [vmem:[%s224 + $0x10] sm:$0xff] %v11513
      %11524 = vst [vmem:[%s224 + $0x18] sm:$0xff] %v11514
      %11525 = vst [vmem:[%s224 + $0x20] sm:$0xff] %v11515
      %11526 = vst [vmem:[%s224 + $0x28] sm:$0xff] %v11516
      %11527 = vst [vmem:[%s224 + $0x30] sm:$0xff] %v11517
      %11528 = vst [vmem:[%s224 + $0x38] sm:$0xff] %v11518
      %11529 = vst [vmem:[%s224 + $0x40] sm:$0xff] %v11519
      %11530 = vst [vmem:[%s224 + $0x48] sm:$0xff] %v11520
      %p11531 = scmp.lt.s32.totalorder %s16, 1
      %s11532 = scalar_select %p11531, %s16, 1
      %s11533 = smul.addr %s11532, 10
      %s11534 = smul.addr %s11533, 8
      %s11535 = scalar_lea.vmem %s5, %s11534
      // Predicated region
      $region41: #{lenet5_forward.1} parent=39 // pred_check
        %p11536 = pneg %p144
      $region42: #{lenet5_forward.1} parent=39 // pred_check_branch
        %11538 = sbr.rel (%p11536) target = $region44
      $region43: #{lenet5_forward.1} parent=39 // pred_region
        _
      $region44: #{lenet5_forward.1} parent=39 // pred_fallthru
        _
    $region40: #{lenet5_forward.1} parent=5 // pred_fallthru
      _
    %p11539 = scmp.le.s32.totalorder 2, %s11
    // Predicated region
    $region45: #{lenet5_forward.1} parent=5 // pred_check
      %p11540 = pneg %p11539
    $region46: #{lenet5_forward.1} parent=5 // pred_check_branch
      %11542 = sbr.rel (%p11540) target = $region48
    $region47: #{lenet5_forward.1} parent=5 // pred_region
      %s11543 = ssub.s32 %s11, 2
      // Predicated region
      $region49: #{lenet5_forward.1} parent=47 // pred_check
        %p11544 = pneg %p150
      $region50: #{lenet5_forward.1} parent=47 // pred_check_branch
        %11546 = sbr.rel (%p11544) target = $region52
      $region51: #{lenet5_forward.1} parent=47 // pred_region
        %p11547 = scmp.lt.s32.totalorder %s17, 1
        %s11548 = scalar_select %p11547, %s17, 1
        %s11549 = smul.addr %s11548, 10
        %s11550 = smul.addr %s11549, 8
        %s11551 = scalar_lea.vmem %s5, %s11550
      $region52: #{lenet5_forward.1} parent=47 // pred_fallthru
        _
    $region48: #{lenet5_forward.1} parent=5 // pred_fallthru
      _
  $region6: #{lenet5_forward.1} parent=0 // loop_footer
    %s15 = sadd.s32 1, %s11
  $region7: #{lenet5_forward.1} parent=0 // loop_footer_branch
    %10 = sbr.rel target = $region3
  $region8: #{lenet5_forward.1} parent=0 // loop_exit
    _

</llo_original>
